<compile_context>
chip_gen: v6e
topology: v6e:2x2x1
jax: 0.10.0
libtpu: 0.0.40
codegen_flags: <defaults>
</compile_context>

<pallas_src>
import jax
import jax.numpy as jnp
from jax.experimental import pallas as pl
from jax.experimental.pallas import tpu as pltpu


# ----------------------------------------------------------------------------
# helpers
# ----------------------------------------------------------------------------
_VMEM_LIMIT = None


def _vmem_limit_bytes():
    """3/4 of physical VMEM (capped at 96 MiB); 48 MiB fallback (v7x-safe)."""
    global _VMEM_LIMIT
    if _VMEM_LIMIT is None:
        limit = 48 * 1024 * 1024
        try:
            info = pltpu.get_tpu_info()
            cap = int(getattr(info, "vmem_capacity_bytes", 0) or 0)
            if cap > 0:
                limit = int(min(cap * 3 // 4, 96 * 1024 * 1024))
        except Exception:  # pragma: no cover - conservative fallback
            pass
        _VMEM_LIMIT = limit
    return _VMEM_LIMIT


def _batch_tile(b, cap):
    """Largest exact divisor of b that is <= cap (prefer multiples of 8).

    Keeps >=2 grid steps when b is large enough (both v7x TensorCores get
    work) and never returns an oversized block for awkward batch sizes.
    """
    cap = max(1, min(cap, b))
    if b >= 16:
        cap = min(cap, b // 2)
    for t in range(cap, 0, -1):
        if b % t == 0 and t % 8 == 0:
            return t
    for t in range(cap, 0, -1):
        if b % t == 0:
            return t
    return 1


def _pool_perm(side):
    """Column permutation: node h*side+w -> 4 contiguous pooled slabs.

    Output position j*(side/2)^2 + (ho*(side/2)+wo) holds original node
    (2*ho+dh)*side + (2*wo+dw), slab j = dh*2+dw.  A 2x2 max-pool becomes an
    elementwise max of the 4 slabs; pooled positions stay row-major.
    """
    half = side // 2
    ho, wo = jnp.meshgrid(jnp.arange(half), jnp.arange(half), indexing="ij")
    slabs = [((2 * ho + dh) * side + (2 * wo + dw)).reshape(-1)
             for dh in (0, 1) for dw in (0, 1)]
    return jnp.concatenate(slabs)  # (side*side,), int32


# ----------------------------------------------------------------------------
# Kernel 1: GraphConv(1->50 pad 64)+ReLU+pool  ->  GraphConv(64->100)+ReLU+pool
# ----------------------------------------------------------------------------
def _gcn12_kernel(x_ref, adj1_ref, w1_ref, b1_ref, adj2_ref, w2_ref, b2_ref,
                  o_ref, xa2_ref):
    # x: (tb,784) f32 | adj1: (784,784) bf16 | w1,b1: (64,1) f32
    # adj2: (196,196) bf16 | w2: (100,64) f32 | b2: (100,1) f32
    # o: (tb,100,49) bf16 | xa2 scratch: (tb,64,196) f32
    tb, n1 = x_ref.shape
    np1 = n1 // 4                       # 196
    cin2 = xa2_ref.shape[1]             # 64
    np2 = np1 // 4                      # 49

    # ---- gcn1: batch-folded x @ A1 (pool-permuted columns), MXU ----
    xa1 = jnp.dot(x_ref[...].astype(jnp.bfloat16), adj1_ref[...],
                  preferred_element_type=jnp.float32)            # (tb, 784)
    s0 = xa1[:, 0 * np1:1 * np1]
    s1 = xa1[:, 1 * np1:2 * np1]
    s2 = xa1[:, 2 * np1:3 * np1]
    s3 = xa1[:, 3 * np1:4 * np1]
    xmax = jnp.maximum(jnp.maximum(s0, s1), jnp.maximum(s2, s3))  # (tb, 196)
    xmin = jnp.minimum(jnp.minimum(s0, s1), jnp.minimum(s2, s3))

    # maxpool(relu(w*v + b)) == relu(w * (w>0 ? max_w v : min_w v) + b)
    w1 = w1_ref[...].reshape(1, cin2, 1)
    b1 = b1_ref[...].reshape(1, cin2, 1)
    xsel = jnp.where(w1 > 0.0, xmax[:, None, :], xmin[:, None, :])  # (tb,64,196)
    h1 = jnp.maximum(w1 * xsel + b1, 0.0).astype(jnp.bfloat16)      # (tb,64,196)

    # ---- gcn2 adjacency: batch*channels folded into M (layout-free merge) ----
    xa2 = jnp.dot(h1.reshape(tb * cin2, np1), adj2_ref[...],
                  preferred_element_type=jnp.float32)            # (tb*64, 196)
    xa2_ref[...] = xa2.reshape(tb, cin2, np1)

    # ---- gcn2 channel mix + pool + bias + ReLU, bounded per-sample loop ----
    w2 = w2_ref[...]                    # (100, 64) f32
    b2 = b2_ref[...]                    # (100, 1)  f32

    def body(b, carry):
        y = jnp.dot(w2, xa2_ref[b], preferred_element_type=jnp.float32)  # (100,196)
        p = jnp.maximum(
            jnp.maximum(y[:, 0 * np2:1 * np2], y[:, 1 * np2:2 * np2]),
            jnp.maximum(y[:, 2 * np2:3 * np2], y[:, 3 * np2:4 * np2]))
        # bias add commutes with max; ReLU after pool == pool after ReLU
        o_ref[b] = jnp.maximum(p + b2, 0.0).astype(o_ref.dtype)          # (100,49)
        return carry

    jax.lax.fori_loop(0, tb, body, 0)


def gcn12_fused(x2d, adj1p, w1, b1, adj2p, w2, b2):
    # x2d: (B,784) f32 -> (B,100,49) bf16 (pooled gcn2 output, never stores h1)
    B, N1 = x2d.shape
    Cin2 = w1.shape[0]                  # 64 (padded)
    C2 = w2.shape[0]                    # 100
    NP1 = N1 // 4                       # 196
    NP2 = NP1 // 4                      # 49
    tb = _batch_tile(B, cap=32)
    return pl.pallas_call(
        _gcn12_kernel,
        out_shape=jax.ShapeDtypeStruct((B, C2, NP2), jnp.bfloat16),
        grid_spec=pltpu.PrefetchScalarGridSpec(
            num_scalar_prefetch=0,
            grid=(B // tb,),
            in_specs=[
                pl.BlockSpec((tb, N1), lambda i: (i, 0)),
                pl.BlockSpec((N1, N1), lambda i: (0, 0)),
                pl.BlockSpec((Cin2, 1), lambda i: (0, 0)),
                pl.BlockSpec((Cin2, 1), lambda i: (0, 0)),
                pl.BlockSpec((NP1, NP1), lambda i: (0, 0)),
                pl.BlockSpec((C2, Cin2), lambda i: (0, 0)),
                pl.BlockSpec((C2, 1), lambda i: (0, 0)),
            ],
            out_specs=pl.BlockSpec((tb, C2, NP2), lambda i: (i, 0, 0)),
            scratch_shapes=[pltpu.VMEM((tb, Cin2, NP1), jnp.float32)],
        ),
        compiler_params=pltpu.CompilerParams(
            dimension_semantics=("parallel",),
            vmem_limit_bytes=_vmem_limit_bytes()),
    )(x2d, adj1p, w1, b1, adj2p, w2, b2)


# ----------------------------------------------------------------------------
# Kernel 2: fused MLP head  fc1 + ReLU + fc2
# ----------------------------------------------------------------------------
def _head_kernel(x_ref, w1_ref, b1_ref, w2_ref, b2_ref, o_ref):
    h = jnp.dot(x_ref[...], w1_ref[...], preferred_element_type=jnp.float32)
    h = jnp.maximum(h + b1_ref[...], 0.0)                         # (tb, 128)
    o_ref[...] = jnp.dot(h, w2_ref[...],
                         preferred_element_type=jnp.float32) + b2_ref[...]


def mlp_head(h2f, fc1_w, fc1_b, fc2_w, fc2_b):
    # h2f: (B,4900) bf16; fc1_w: (4900,128) bf16; fc2_w: (128,10) f32
    B, K = h2f.shape
    H = fc1_w.shape[1]
    O = fc2_w.shape[1]
    tb = _batch_tile(B, cap=128)
    return pl.pallas_call(
        _head_kernel,
        out_shape=jax.ShapeDtypeStruct((B, O), jnp.float32),
        grid_spec=pltpu.PrefetchScalarGridSpec(
            num_scalar_prefetch=0,
            grid=(B // tb,),
            in_specs=[
                pl.BlockSpec((tb, K), lambda i: (i, 0)),
                pl.BlockSpec((K, H), lambda i: (0, 0)),
                pl.BlockSpec((1, H), lambda i: (0, 0)),
                pl.BlockSpec((H, O), lambda i: (0, 0)),
                pl.BlockSpec((1, O), lambda i: (0, 0)),
            ],
            out_specs=pl.BlockSpec((tb, O), lambda i: (i, 0)),
        ),
        compiler_params=pltpu.CompilerParams(
            dimension_semantics=("parallel",),
            vmem_limit_bytes=_vmem_limit_bytes()),
    )(h2f, fc1_w, fc1_b, fc2_w, fc2_b)


# ----------------------------------------------------------------------------
# Full GCN forward (matches the PyTorch module's forward semantics)
# ----------------------------------------------------------------------------
def gcn_forward(x, kp):
    B = x.shape[0]
    x2d = x.reshape(B, 784).astype(jnp.float32)          # view(-1, 1, 784), Cin=1

    # gcn1 + pool1 + gcn2 + pool2 fused (h1 never leaves VMEM)
    h2 = gcn12_fused(x2d, kp["adj1p"], kp["w1"], kp["b1"],
                     kp["adj2p"], kp["w2"], kp["b2"])     # (B, 100, 49) bf16
    # TODO(synk): F.dropout(p=0.25) (functional default training=True) is
    # stochastic; treated as identity here (applies to all 3 dropout sites).

    h2f = h2.reshape(B, 4900)                             # == torch view(-1, 4900)
    out = mlp_head(h2f, kp["fc1_w"], kp["fc1_b"], kp["fc2_w"], kp["fc2_b"])
    return out                                            # (B, 10) f32


# ----------------------------------------------------------------------------
# Parameter construction (PyTorch-shaped) + one-time kernel-ready packing
# ----------------------------------------------------------------------------
def init_params(key):
    ks = jax.random.split(key, 10)
    scale = 0.1
    return {
        # adjacency matrices (fixed buffers in the PyTorch module)
        "adj1": jax.random.normal(ks[0], (784, 784), jnp.float32) / 28.0,
        "adj2": jax.random.normal(ks[1], (196, 196), jnp.float32) / 14.0,
        # gcn1 Conv2d(1, 50, 1x1): weight (50,1,1,1) -> (50,1); bias -> (50,1)
        "w1": jax.random.normal(ks[2], (50, 1), jnp.float32) * scale,
        "b1": jax.random.normal(ks[3], (50, 1), jnp.float32) * scale,
        # gcn2 Conv2d(50, 100, 1x1): weight (100,50,1,1) -> (100,50); bias (100,1)
        "w2": jax.random.normal(ks[4], (100, 50), jnp.float32) * scale,
        "b2": jax.random.normal(ks[5], (100, 1), jnp.float32) * scale,
        # fc1: Linear(4900,128) stored (K,N); fc2: Linear(128,10)
        "fc1_w": jax.random.normal(ks[6], (4900, 128), jnp.float32) * scale,
        "fc1_b": jax.random.normal(ks[7], (1, 128), jnp.float32) * scale,
        "fc2_w": jax.random.normal(ks[8], (128, 10), jnp.float32) * scale,
        "fc2_b": jax.random.normal(ks[9], (1, 10), jnp.float32) * scale,
    }


def pack_params(raw):
    """One-time host-side packing: pool-permute adjacency columns, cast the
    heavy operands to bf16, zero-pad gcn1's Cout 50 -> 64 (sublane aligned)."""
    p784 = _pool_perm(28)
    p196 = _pool_perm(14)
    w1 = jnp.zeros((64, 1), jnp.float32).at[:50].set(raw["w1"])
    b1 = jnp.zeros((64, 1), jnp.float32).at[:50].set(raw["b1"])
    w2 = jnp.zeros((100, 64), jnp.float32).at[:, :50].set(raw["w2"])
    return {
        "adj1p": raw["adj1"][:, p784].astype(jnp.bfloat16),
        "adj2p": raw["adj2"][:, p196].astype(jnp.bfloat16),
        "w1": w1, "b1": b1,
        "w2": w2, "b2": raw["b2"],
        "fc1_w": raw["fc1_w"].astype(jnp.bfloat16), "fc1_b": raw["fc1_b"],
        "fc2_w": raw["fc2_w"], "fc2_b": raw["fc2_b"],
    }


# ----------------------------------------------------------------------------
# Pure-JAX reference (dropout as identity) for a loose numerical check
# ----------------------------------------------------------------------------
def _reference_forward(x, raw):
    B = x.shape[0]
    h = x.reshape(B, 784).astype(jnp.float32)
    xa = h @ raw["adj1"]                                          # (B, 784)
    y = raw["w1"].reshape(1, 50, 1) * xa[:, None, :] + raw["b1"].reshape(1, 50, 1)
    y = jax.nn.relu(y)                                            # (B, 50, 784)
    y = y.reshape(B, 50, 14, 2, 14, 2).max(axis=(3, 5))           # pool -> (B,50,14,14)
    y = y.reshape(B * 50, 196) @ raw["adj2"]
    y = y.reshape(B, 50, 196)
    z = jnp.einsum("oc,bcn->bon", raw["w2"], y) + raw["b2"].reshape(1, 100, 1)
    z = jax.nn.relu(z).reshape(B, 100, 7, 2, 7, 2).max(axis=(3, 5))
    z = z.reshape(B, 4900)
    z = jax.nn.relu(z @ raw["fc1_w"] + raw["fc1_b"])
    return z @ raw["fc2_w"] + raw["fc2_b"]


if __name__ == "__main__":
    key = jax.random.PRNGKey(0)
    pkey, xkey = jax.random.split(key)
    raw_params = init_params(pkey)
    kparams = pack_params(raw_params)

    # MNIST-like input: NCHW (2, 1, 28, 28); the model views it as (-1, 1, 784).
    x = jax.random.normal(xkey, (2, 1, 28, 28), jnp.float32)

    fwd = jax.jit(gcn_forward)
    out = jax.block_until_ready(fwd(x, kparams))
    assert out.shape == (2, 10), out.shape
    assert bool(jnp.all(jnp.isfinite(out)))

    # Loose check vs f32 reference (bf16 operands -> ~1% expected error).
    ref = _reference_forward(x, raw_params)
    rel = jnp.linalg.norm(out - ref) / (jnp.linalg.norm(ref) + 1e-6)
    assert float(rel) < 3e-2, float(rel)

    print("KERNEL_OK")
</pallas_src>

<mosaic_0001>
module attributes {stable_mosaic.version = 11 : i64} {
  func.func @_gcn12_kernel(%arg0: i32, %arg1: memref<2x784xf32, #tpu.memory_space<vmem>>, %arg2: memref<784x784xbf16, #tpu.memory_space<vmem>>, %arg3: memref<64x1xf32, #tpu.memory_space<vmem>>, %arg4: memref<64x1xf32, #tpu.memory_space<vmem>>, %arg5: memref<196x196xbf16, #tpu.memory_space<vmem>>, %arg6: memref<100x64xf32, #tpu.memory_space<vmem>>, %arg7: memref<100x1xf32, #tpu.memory_space<vmem>>, %arg8: memref<2x100x49xbf16, #tpu.memory_space<vmem>>, %arg9: memref<2x64x196xf32, #tpu.memory_space<vmem>>) attributes {dimension_semantics = [#tpu.dimension_semantics<parallel>], iteration_bounds = array<i64: 1>, scalar_prefetch = 0 : i64, scratch_operands = 1 : i64, tpu.core_type = #tpu.core_type<tc>, window_params = [{transform_indices = @transform_0, window_bounds = array<i64: 2, 784>}, {pipeline_mode = #tpu.pipeline_mode<synchronous>, transform_indices = @transform_1, window_bounds = array<i64: 784, 784>}, {pipeline_mode = #tpu.pipeline_mode<synchronous>, transform_indices = @transform_2, window_bounds = array<i64: 64, 1>}, {pipeline_mode = #tpu.pipeline_mode<synchronous>, transform_indices = @transform_3, window_bounds = array<i64: 64, 1>}, {pipeline_mode = #tpu.pipeline_mode<synchronous>, transform_indices = @transform_4, window_bounds = array<i64: 196, 196>}, {pipeline_mode = #tpu.pipeline_mode<synchronous>, transform_indices = @transform_5, window_bounds = array<i64: 100, 64>}, {pipeline_mode = #tpu.pipeline_mode<synchronous>, transform_indices = @transform_6, window_bounds = array<i64: 100, 1>}, {transform_indices = @transform_7, window_bounds = array<i64: 2, 100, 49>}]} {
    %c0 = arith.constant 0 : index
    %c0_0 = arith.constant 0 : index
    %0 = vector.load %arg1[%c0, %c0_0] : memref<2x784xf32, #tpu.memory_space<vmem>>, vector<2x784xf32>
    %1 = arith.truncf %0 : vector<2x784xf32> to vector<2x784xbf16>
    %c0_1 = arith.constant 0 : index
    %c0_2 = arith.constant 0 : index
    %2 = vector.load %arg2[%c0_1, %c0_2] : memref<784x784xbf16, #tpu.memory_space<vmem>>, vector<784x784xbf16>
    %cst = arith.constant dense<0.000000e+00> : vector<2x784xf32>
    %3 = tpu.matmul %1, %2, %cst {dimension_numbers = #tpu.dot_dimension_numbers<[1], [0], [0], [1], [0, 0, 1, 1], [], []>} : vector<2x784xbf16>, vector<784x784xbf16>, vector<2x784xf32> -> vector<2x784xf32>
    %4 = vector.extract_strided_slice %3 {offsets = [0, 0], sizes = [2, 196], strides = [1, 1]} : vector<2x784xf32> to vector<2x196xf32>
    %5 = vector.extract_strided_slice %3 {offsets = [0, 196], sizes = [2, 196], strides = [1, 1]} : vector<2x784xf32> to vector<2x196xf32>
    %6 = vector.extract_strided_slice %3 {offsets = [0, 392], sizes = [2, 196], strides = [1, 1]} : vector<2x784xf32> to vector<2x196xf32>
    %7 = vector.extract_strided_slice %3 {offsets = [0, 588], sizes = [2, 196], strides = [1, 1]} : vector<2x784xf32> to vector<2x196xf32>
    %8 = arith.maximumf %4, %5 : vector<2x196xf32>
    %9 = arith.maximumf %6, %7 : vector<2x196xf32>
    %10 = arith.maximumf %8, %9 : vector<2x196xf32>
    %11 = arith.minimumf %4, %5 : vector<2x196xf32>
    %12 = arith.minimumf %6, %7 : vector<2x196xf32>
    %13 = arith.minimumf %11, %12 : vector<2x196xf32>
    %c0_3 = arith.constant 0 : index
    %c0_4 = arith.constant 0 : index
    %14 = vector.load %arg3[%c0_3, %c0_4] : memref<64x1xf32, #tpu.memory_space<vmem>>, vector<64x1xf32>
    %15 = vector.shape_cast %14 : vector<64x1xf32> to vector<1x64x1xf32>
    %c0_5 = arith.constant 0 : index
    %c0_6 = arith.constant 0 : index
    %16 = vector.load %arg4[%c0_5, %c0_6] : memref<64x1xf32, #tpu.memory_space<vmem>>, vector<64x1xf32>
    %17 = vector.shape_cast %16 : vector<64x1xf32> to vector<1x64x1xf32>
    %cst_7 = arith.constant 0.000000e+00 : f32
    %18 = vector.broadcast %cst_7 : f32 to vector<1x64x1xf32>
    %19 = arith.cmpf ogt, %15, %18 : vector<1x64x1xf32>
    %20 = vector.shape_cast %10 : vector<2x196xf32> to vector<2x1x196xf32>
    %21 = vector.shape_cast %13 : vector<2x196xf32> to vector<2x1x196xf32>
    %22 = vector.shape_cast %19 : vector<1x64x1xi1> to vector<1x64x1xi1>
    %23 = vector.broadcast %22 : vector<1x64x1xi1> to vector<2x64x196xi1>
    %24 = vector.shape_cast %20 : vector<2x1x196xf32> to vector<2x1x196xf32>
    %25 = vector.broadcast %24 : vector<2x1x196xf32> to vector<2x64x196xf32>
    %26 = vector.shape_cast %21 : vector<2x1x196xf32> to vector<2x1x196xf32>
    %27 = vector.broadcast %26 : vector<2x1x196xf32> to vector<2x64x196xf32>
    %28 = arith.select %23, %25, %27 : vector<2x64x196xi1>, vector<2x64x196xf32>
    %29 = vector.broadcast %15 : vector<1x64x1xf32> to vector<2x64x196xf32>
    %30 = arith.mulf %29, %28 : vector<2x64x196xf32>
    %31 = vector.broadcast %17 : vector<1x64x1xf32> to vector<2x64x196xf32>
    %32 = arith.addf %30, %31 : vector<2x64x196xf32>
    %cst_8 = arith.constant 0.000000e+00 : f32
    %33 = vector.broadcast %cst_8 : f32 to vector<2x64x196xf32>
    %34 = arith.maximumf %32, %33 : vector<2x64x196xf32>
    %35 = arith.truncf %34 : vector<2x64x196xf32> to vector<2x64x196xbf16>
    %36 = vector.shape_cast %35 : vector<2x64x196xbf16> to vector<128x196xbf16>
    %c0_9 = arith.constant 0 : index
    %c0_10 = arith.constant 0 : index
    %37 = vector.load %arg5[%c0_9, %c0_10] : memref<196x196xbf16, #tpu.memory_space<vmem>>, vector<196x196xbf16>
    %cst_11 = arith.constant dense<0.000000e+00> : vector<128x196xf32>
    %38 = tpu.matmul %36, %37, %cst_11 {dimension_numbers = #tpu.dot_dimension_numbers<[1], [0], [0], [1], [0, 0, 1, 1], [], []>} : vector<128x196xbf16>, vector<196x196xbf16>, vector<128x196xf32> -> vector<128x196xf32>
    %39 = vector.shape_cast %38 : vector<128x196xf32> to vector<2x64x196xf32>
    %c0_12 = arith.constant 0 : index
    %c0_13 = arith.constant 0 : index
    %c0_14 = arith.constant 0 : index
    %40 = vector.load %arg9[%c0_12, %c0_13, %c0_14] : memref<2x64x196xf32, #tpu.memory_space<vmem>>, vector<2x64x196xf32>
    tpu.vector_store %arg9[%c0_12, %c0_13, %c0_14], %39 {strides = array<i32>} : memref<2x64x196xf32, #tpu.memory_space<vmem>>, vector<2x64x196xf32>,
    %c0_15 = arith.constant 0 : index
    %c0_16 = arith.constant 0 : index
    %41 = vector.load %arg6[%c0_15, %c0_16] : memref<100x64xf32, #tpu.memory_space<vmem>>, vector<100x64xf32>
    %c0_17 = arith.constant 0 : index
    %c0_18 = arith.constant 0 : index
    %42 = vector.load %arg7[%c0_17, %c0_18] : memref<100x1xf32, #tpu.memory_space<vmem>>, vector<100x1xf32>
    %c0_i32 = arith.constant 0 : i32
    %c2_i32 = arith.constant 2 : i32
    %43 = arith.addi %c0_i32, %c2_i32 : i32
    %c1_i32 = arith.constant 1 : i32
    scf.for %arg10 = %c0_i32 to %43 step %c1_i32  : i32 {
      %44 = arith.index_cast %arg10 : i32 to index
      %c0_20 = arith.constant 0 : index
      %c0_21 = arith.constant 0 : index
      %45 = vector.load %arg9[%44, %c0_20, %c0_21] : memref<2x64x196xf32, #tpu.memory_space<vmem>>, vector<1x64x196xf32>
      %46 = vector.shape_cast %45 : vector<1x64x196xf32> to vector<64x196xf32>
      %cst_22 = arith.constant dense<0.000000e+00> : vector<100x196xf32>
      %47 = tpu.matmul %41, %46, %cst_22 {dimension_numbers = #tpu.dot_dimension_numbers<[1], [0], [0], [1], [0, 0, 1, 1], [], []>} : vector<100x64xf32>, vector<64x196xf32>, vector<100x196xf32> -> vector<100x196xf32>
      %48 = vector.extract_strided_slice %47 {offsets = [0, 0], sizes = [100, 49], strides = [1, 1]} : vector<100x196xf32> to vector<100x49xf32>
      %49 = vector.extract_strided_slice %47 {offsets = [0, 49], sizes = [100, 49], strides = [1, 1]} : vector<100x196xf32> to vector<100x49xf32>
      %50 = arith.maximumf %48, %49 : vector<100x49xf32>
      %51 = vector.extract_strided_slice %47 {offsets = [0, 98], sizes = [100, 49], strides = [1, 1]} : vector<100x196xf32> to vector<100x49xf32>
      %52 = vector.extract_strided_slice %47 {offsets = [0, 147], sizes = [100, 49], strides = [1, 1]} : vector<100x196xf32> to vector<100x49xf32>
      %53 = arith.maximumf %51, %52 : vector<100x49xf32>
      %54 = arith.maximumf %50, %53 : vector<100x49xf32>
      %55 = vector.broadcast %42 : vector<100x1xf32> to vector<100x49xf32>
      %56 = arith.addf %54, %55 : vector<100x49xf32>
      %cst_23 = arith.constant 0.000000e+00 : f32
      %57 = vector.broadcast %cst_23 : f32 to vector<100x49xf32>
      %58 = arith.maximumf %56, %57 : vector<100x49xf32>
      %59 = arith.truncf %58 : vector<100x49xf32> to vector<100x49xbf16>
      %60 = arith.index_cast %arg10 : i32 to index
      %c0_24 = arith.constant 0 : index
      %c0_25 = arith.constant 0 : index
      %61 = vector.load %arg8[%60, %c0_24, %c0_25] : memref<2x100x49xbf16, #tpu.memory_space<vmem>>, vector<1x100x49xbf16>
      %62 = vector.shape_cast %61 : vector<1x100x49xbf16> to vector<100x49xbf16>
      %63 = vector.shape_cast %59 : vector<100x49xbf16> to vector<1x100x49xbf16>
      tpu.vector_store %arg8[%60, %c0_24, %c0_25], %63 {strides = array<i32>} : memref<2x100x49xbf16, #tpu.memory_space<vmem>>, vector<1x100x49xbf16>,
    }
    %c2_i32_19 = arith.constant 2 : i32
    return
  }
  func.func @transform_0(%arg0: i32) -> (i32, i32) {
    %c0_i32 = arith.constant 0 : i32
    %c0_i32_0 = arith.constant 0 : i32
    return %arg0, %c0_i32 : i32, i32
  }
  func.func @transform_1(%arg0: i32) -> (i32, i32) {
    %c0_i32 = arith.constant 0 : i32
    %c0_i32_0 = arith.constant 0 : i32
    %c0_i32_1 = arith.constant 0 : i32
    return %c0_i32, %c0_i32_0 : i32, i32
  }
  func.func @transform_2(%arg0: i32) -> (i32, i32) {
    %c0_i32 = arith.constant 0 : i32
    %c0_i32_0 = arith.constant 0 : i32
    %c0_i32_1 = arith.constant 0 : i32
    return %c0_i32, %c0_i32_0 : i32, i32
  }
  func.func @transform_3(%arg0: i32) -> (i32, i32) {
    %c0_i32 = arith.constant 0 : i32
    %c0_i32_0 = arith.constant 0 : i32
    %c0_i32_1 = arith.constant 0 : i32
    return %c0_i32, %c0_i32_0 : i32, i32
  }
  func.func @transform_4(%arg0: i32) -> (i32, i32) {
    %c0_i32 = arith.constant 0 : i32
    %c0_i32_0 = arith.constant 0 : i32
    %c0_i32_1 = arith.constant 0 : i32
    return %c0_i32, %c0_i32_0 : i32, i32
  }
  func.func @transform_5(%arg0: i32) -> (i32, i32) {
    %c0_i32 = arith.constant 0 : i32
    %c0_i32_0 = arith.constant 0 : i32
    %c0_i32_1 = arith.constant 0 : i32
    return %c0_i32, %c0_i32_0 : i32, i32
  }
  func.func @transform_6(%arg0: i32) -> (i32, i32) {
    %c0_i32 = arith.constant 0 : i32
    %c0_i32_0 = arith.constant 0 : i32
    %c0_i32_1 = arith.constant 0 : i32
    return %c0_i32, %c0_i32_0 : i32, i32
  }
  func.func @transform_7(%arg0: i32) -> (i32, i32, i32) {
    %c0_i32 = arith.constant 0 : i32
    %c0_i32_0 = arith.constant 0 : i32
    %c0_i32_1 = arith.constant 0 : i32
    return %arg0, %c0_i32, %c0_i32_0 : i32, i32, i32
  }
}

module attributes {stable_mosaic.version = 11 : i64} {
  func.func @_head_kernel(%arg0: i32, %arg1: memref<2x4900xbf16, #tpu.memory_space<vmem>>, %arg2: memref<4900x128xbf16, #tpu.memory_space<vmem>>, %arg3: memref<1x128xf32, #tpu.memory_space<vmem>>, %arg4: memref<128x10xf32, #tpu.memory_space<vmem>>, %arg5: memref<1x10xf32, #tpu.memory_space<vmem>>, %arg6: memref<2x10xf32, #tpu.memory_space<vmem>>) attributes {dimension_semantics = [#tpu.dimension_semantics<parallel>], iteration_bounds = array<i64: 1>, scalar_prefetch = 0 : i64, scratch_operands = 0 : i64, tpu.core_type = #tpu.core_type<tc>, window_params = [{transform_indices = @transform_0, window_bounds = array<i64: 2, 4900>}, {pipeline_mode = #tpu.pipeline_mode<synchronous>, transform_indices = @transform_1, window_bounds = array<i64: 4900, 128>}, {pipeline_mode = #tpu.pipeline_mode<synchronous>, transform_indices = @transform_2, window_bounds = array<i64: 1, 128>}, {pipeline_mode = #tpu.pipeline_mode<synchronous>, transform_indices = @transform_3, window_bounds = array<i64: 128, 10>}, {pipeline_mode = #tpu.pipeline_mode<synchronous>, transform_indices = @transform_4, window_bounds = array<i64: 1, 10>}, {transform_indices = @transform_5, window_bounds = array<i64: 2, 10>}]} {
    %c0 = arith.constant 0 : index
    %c0_0 = arith.constant 0 : index
    %0 = vector.load %arg1[%c0, %c0_0] : memref<2x4900xbf16, #tpu.memory_space<vmem>>, vector<2x4900xbf16>
    %c0_1 = arith.constant 0 : index
    %c0_2 = arith.constant 0 : index
    %1 = vector.load %arg2[%c0_1, %c0_2] : memref<4900x128xbf16, #tpu.memory_space<vmem>>, vector<4900x128xbf16>
    %cst = arith.constant dense<0.000000e+00> : vector<2x128xf32>
    %2 = tpu.matmul %0, %1, %cst {dimension_numbers = #tpu.dot_dimension_numbers<[1], [0], [0], [1], [0, 0, 1, 1], [], []>} : vector<2x4900xbf16>, vector<4900x128xbf16>, vector<2x128xf32> -> vector<2x128xf32>
    %c0_3 = arith.constant 0 : index
    %c0_4 = arith.constant 0 : index
    %3 = vector.load %arg3[%c0_3, %c0_4] : memref<1x128xf32, #tpu.memory_space<vmem>>, vector<1x128xf32>
    %4 = vector.broadcast %3 : vector<1x128xf32> to vector<2x128xf32>
    %5 = arith.addf %2, %4 : vector<2x128xf32>
    %cst_5 = arith.constant 0.000000e+00 : f32
    %6 = vector.broadcast %cst_5 : f32 to vector<2x128xf32>
    %7 = arith.maximumf %5, %6 : vector<2x128xf32>
    %c0_6 = arith.constant 0 : index
    %c0_7 = arith.constant 0 : index
    %8 = vector.load %arg4[%c0_6, %c0_7] : memref<128x10xf32, #tpu.memory_space<vmem>>, vector<128x10xf32>
    %cst_8 = arith.constant dense<0.000000e+00> : vector<2x10xf32>
    %9 = tpu.matmul %7, %8, %cst_8 {dimension_numbers = #tpu.dot_dimension_numbers<[1], [0], [0], [1], [0, 0, 1, 1], [], []>} : vector<2x128xf32>, vector<128x10xf32>, vector<2x10xf32> -> vector<2x10xf32>
    %c0_9 = arith.constant 0 : index
    %c0_10 = arith.constant 0 : index
    %10 = vector.load %arg5[%c0_9, %c0_10] : memref<1x10xf32, #tpu.memory_space<vmem>>, vector<1x10xf32>
    %11 = vector.broadcast %10 : vector<1x10xf32> to vector<2x10xf32>
    %12 = arith.addf %9, %11 : vector<2x10xf32>
    %c0_11 = arith.constant 0 : index
    %c0_12 = arith.constant 0 : index
    %13 = vector.load %arg6[%c0_11, %c0_12] : memref<2x10xf32, #tpu.memory_space<vmem>>, vector<2x10xf32>
    tpu.vector_store %arg6[%c0_11, %c0_12], %12 {strides = array<i32>} : memref<2x10xf32, #tpu.memory_space<vmem>>, vector<2x10xf32>,
    return
  }
  func.func @transform_0(%arg0: i32) -> (i32, i32) {
    %c0_i32 = arith.constant 0 : i32
    %c0_i32_0 = arith.constant 0 : i32
    return %arg0, %c0_i32 : i32, i32
  }
  func.func @transform_1(%arg0: i32) -> (i32, i32) {
    %c0_i32 = arith.constant 0 : i32
    %c0_i32_0 = arith.constant 0 : i32
    %c0_i32_1 = arith.constant 0 : i32
    return %c0_i32, %c0_i32_0 : i32, i32
  }
  func.func @transform_2(%arg0: i32) -> (i32, i32) {
    %c0_i32 = arith.constant 0 : i32
    %c0_i32_0 = arith.constant 0 : i32
    %c0_i32_1 = arith.constant 0 : i32
    return %c0_i32, %c0_i32_0 : i32, i32
  }
  func.func @transform_3(%arg0: i32) -> (i32, i32) {
    %c0_i32 = arith.constant 0 : i32
    %c0_i32_0 = arith.constant 0 : i32
    %c0_i32_1 = arith.constant 0 : i32
    return %c0_i32, %c0_i32_0 : i32, i32
  }
  func.func @transform_4(%arg0: i32) -> (i32, i32) {
    %c0_i32 = arith.constant 0 : i32
    %c0_i32_0 = arith.constant 0 : i32
    %c0_i32_1 = arith.constant 0 : i32
    return %c0_i32, %c0_i32_0 : i32, i32
  }
  func.func @transform_5(%arg0: i32) -> (i32, i32) {
    %c0_i32 = arith.constant 0 : i32
    %c0_i32_0 = arith.constant 0 : i32
    return %arg0, %c0_i32 : i32, i32
  }
}

</mosaic_0001>

<llo_original>
// kernel: gcn_forward.2
$region0: #{gcn_forward.2}
  #allocation0 [shape = 'u32[]', space=smem, size = 0x4, offset = 0x4, fixed_abs, tag = 'smem constant byte address 0x4 - core index']
  #allocation1 [shape = 'u32[144,128]{1,0:T(1,128)}', space=vmem, size = 0x12000, scoped, tag = 'internal scratch']
  #allocation2 [shape = 'f32[2,64,196]{2,1,0:T(8,128)}', space=vmem, size = 0x20000, scoped, tag = 'scratch operand']
  %s0 = inlined_call_operand.vmem [shape: f32[2,784], index: 0, kind: input, shape index: {}]
  %s1 = inlined_call_operand.hbm [shape: bf16[784,784], index: 1, kind: input, shape index: {}]
  %s2 = inlined_call_operand.vmem [shape: f32[64,1], index: 2, kind: input, shape index: {}]
  %s3 = inlined_call_operand.vmem [shape: f32[64,1], index: 3, kind: input, shape index: {}]
  %s4 = inlined_call_operand.hbm [shape: bf16[196,196], index: 4, kind: input, shape index: {}]
  %s5 = inlined_call_operand.vmem [shape: f32[100,64], index: 5, kind: input, shape index: {}]
  %s6 = inlined_call_operand.vmem [shape: f32[100,1], index: 6, kind: input, shape index: {}]
  %s7 = inlined_call_operand.vmem [shape: bf16[2,100,49], index: 7, kind: output, shape index: {}]
  %s8 = sld [smem:[#allocation0]]
  $region53: #{gcn_forward.2} parent=0
    _
  %s10 = ssub.s32 1, %s8
  %s11 = scalar_select 0, %s10, %s8
  $region1: #{gcn_forward.2} parent=0
    #allocation3 [shape = 'u8[1404928]{0}', space=vmem, size = 0x157000, scoped, tag = 'input window, operand 1, single buffered']
    #allocation4 [shape = 's32[1]{0}', space=sflag, size = 0x4, scoped, tag = 'scoped memory for gcn_forward.2']
    #allocation5 [shape = 'u8[102400]{0}', space=vmem, size = 0x19000, scoped, tag = 'input window, operand 4, single buffered']
    #allocation6 [shape = 's32[1]{0}', space=sflag, size = 0x4, scoped, tag = 'scoped memory for gcn_forward.2']
    %12 = vsyncpa [#allocation4], 0
    %13 = vsyncpa [#allocation6], 0
    // Predicated region
    $region2: #{gcn_forward.2} parent=1 // pred_check
      _
    $region3: #{gcn_forward.2} parent=1 // pred_check_branch
      %15 = sbr.rel (0) target = $region5
    $region4: #{gcn_forward.2} parent=1 // pred_region
      _
    $region5: #{gcn_forward.2} parent=1 // pred_fallthru
      _
    // Predicated region
    $region6: #{gcn_forward.2} parent=1 // pred_check
      _
    $region7: #{gcn_forward.2} parent=1 // pred_check_branch
      %17 = sbr.rel (0) target = $region9
    $region8: #{gcn_forward.2} parent=1 // pred_region
      %s19 = ssub.s32 43904, 43904
      %20 = vsyncadd [#allocation4], %s19
      %s21 = sshll.u32 [#allocation3], 4
      %s22 = int_to_ptr.vmem [resolvable:$true] %s21
      %27 = dma.hbm_to_vmem [thread:$0]  %s1, 43904, %s22, [#allocation4], 448, 448, 28
    $region9: #{gcn_forward.2} parent=1 // pred_fallthru
      _
    // Predicated region
    $region10: #{gcn_forward.2} parent=1 // pred_check
      _
    $region11: #{gcn_forward.2} parent=1 // pred_check_branch
      %29 = sbr.rel (0) target = $region13
    $region12: #{gcn_forward.2} parent=1 // pred_region
      _
    $region13: #{gcn_forward.2} parent=1 // pred_fallthru
      _
    // Predicated region
    $region14: #{gcn_forward.2} parent=1 // pred_check
      _
    $region15: #{gcn_forward.2} parent=1 // pred_check_branch
      %31 = sbr.rel (0) target = $region17
    $region16: #{gcn_forward.2} parent=1 // pred_region
      _
    $region17: #{gcn_forward.2} parent=1 // pred_fallthru
      _
    // Predicated region
    $region18: #{gcn_forward.2} parent=1 // pred_check
      _
    $region19: #{gcn_forward.2} parent=1 // pred_check_branch
      %33 = sbr.rel (0) target = $region21
    $region20: #{gcn_forward.2} parent=1 // pred_region
      %s35 = ssub.s32 3200, 3200
      %36 = vsyncadd [#allocation6], %s35
      %s37 = sshll.u32 [#allocation5], 4
      %s38 = int_to_ptr.vmem [resolvable:$true] %s37
      %43 = dma.hbm_to_vmem [thread:$0]  %s4, 3200, %s38, [#allocation6], 128, 128, 8
    $region21: #{gcn_forward.2} parent=1 // pred_fallthru
      _
    // Predicated region
    $region22: #{gcn_forward.2} parent=1 // pred_check
      _
    $region23: #{gcn_forward.2} parent=1 // pred_check_branch
      %45 = sbr.rel (0) target = $region25
    $region24: #{gcn_forward.2} parent=1 // pred_region
      _
    $region25: #{gcn_forward.2} parent=1 // pred_fallthru
      _
    // Predicated region
    $region26: #{gcn_forward.2} parent=1 // pred_check
      _
    $region27: #{gcn_forward.2} parent=1 // pred_check_branch
      %47 = sbr.rel (0) target = $region29
    $region28: #{gcn_forward.2} parent=1 // pred_region
      _
    $region29: #{gcn_forward.2} parent=1 // pred_fallthru
      _
    // Predicated region
    $region30: #{gcn_forward.2} parent=1 // pred_check
      _
    $region31: #{gcn_forward.2} parent=1 // pred_check_branch
      %49 = sbr.rel (0) target = $region33
    $region32: #{gcn_forward.2} parent=1 // pred_region
      %50 = dma.done [#allocation4], 43904
    $region33: #{gcn_forward.2} parent=1 // pred_fallthru
      _
    // Predicated region
    $region34: #{gcn_forward.2} parent=1 // pred_check
      _
    $region35: #{gcn_forward.2} parent=1 // pred_check_branch
      %52 = sbr.rel (0) target = $region37
    $region36: #{gcn_forward.2} parent=1 // pred_region
      %53 = dma.done [#allocation6], 3200
    $region37: #{gcn_forward.2} parent=1 // pred_fallthru
      _
    %v55 = vld [vmem:[%s0] sm:$0xff]
    %v56 = vld [vmem:[%s0 + $0x8] sm:$0x3f]
    %v59 = vcombine.high %v55, %v55
    %v61 = vunpack.c.l.s4 1983009808
    %v62 = vunpack.c.0.s8 %v61
    %v63 = vlaneseq
    %v64 = vshrl.u32 %v63, 7
    %v65 = vsub.s32 %v62, %v64
    %v66 = vrot.slane %v55, %v65
    %v68 = vunpack.c.l.s4 1983009808
    %v69 = vunpack.c.0.s8 %v68
    %v70 = vlaneseq
    %v71 = vshrl.u32 %v70, 7
    %v72 = vsub.s32 %v69, %v71
    %v73 = vrot.slane %v59, %v72
    %v74 = vcombine.high %v66, %v66
    %v75 = vcombine.high %v73, %v73
    %v76 = vcombine.high %v56, %v56
    %v78 = vunpack.c.l.s4 1983009808
    %v79 = vunpack.c.0.s8 %v78
    %v80 = vlaneseq
    %v81 = vshrl.u32 %v80, 7
    %v82 = vsub.s32 %v79, %v81
    %v83 = vrot.slane %v56, %v82
    %v85 = vunpack.c.l.s4 1983009808
    %v86 = vunpack.c.0.s8 %v85
    %v87 = vlaneseq
    %v88 = vshrl.u32 %v87, 7
    %v89 = vsub.s32 %v86, %v88
    %v90 = vrot.slane %v76, %v89
    %v91 = vcombine.high %v83, %v83
    %v99 = vpack.c.bf16 %v66, %v66
    %v100 = vpack.c.bf16 %v74, %v74
    %v101 = vpack.c.bf16 %v73, %v73
    %v102 = vpack.c.bf16 %v75, %v75
    %v103 = vpack.c.bf16 %v83, %v83
    %v104 = vpack.c.bf16 %v91, %v91
    %v105 = vpack.c.bf16 %v90, %v90
    %v106 = vld [vmem:[#allocation3] sm:$0xff]
    %v107 = vld [vmem:[#allocation3 + $0x8] sm:$0xff]
    %v108 = vld [vmem:[#allocation3 + $0x10] sm:$0xff]
    %v109 = vld [vmem:[#allocation3 + $0x18] sm:$0xf]
    %v110 = vld [vmem:[#allocation3 + $0x1c] sm:$0xff]
    %v111 = vld [vmem:[#allocation3 + $0x24] sm:$0xff]
    %v112 = vld [vmem:[#allocation3 + $0x2c] sm:$0xff]
    %v113 = vld [vmem:[#allocation3 + $0x34] sm:$0xf]
    %v114 = vld [vmem:[#allocation3 + $0x38] sm:$0xff]
    %v115 = vld [vmem:[#allocation3 + $0x40] sm:$0xff]
    %v116 = vld [vmem:[#allocation3 + $0x48] sm:$0xff]
    %v117 = vld [vmem:[#allocation3 + $0x50] sm:$0xf]
    %v118 = vld [vmem:[#allocation3 + $0x54] sm:$0xff]
    %v119 = vld [vmem:[#allocation3 + $0x5c] sm:$0xff]
    %v120 = vld [vmem:[#allocation3 + $0x64] sm:$0xff]
    %v121 = vld [vmem:[#allocation3 + $0x6c] sm:$0xf]
    %v122 = vld [vmem:[#allocation3 + $0x70] sm:$0xff]
    %v123 = vld [vmem:[#allocation3 + $0x78] sm:$0xff]
    %v124 = vld [vmem:[#allocation3 + $0x80] sm:$0xff]
    %v125 = vld [vmem:[#allocation3 + $0x88] sm:$0xf]
    %v126 = vld [vmem:[#allocation3 + $0x8c] sm:$0xff]
    %v127 = vld [vmem:[#allocation3 + $0x94] sm:$0xff]
    %v128 = vld [vmem:[#allocation3 + $0x9c] sm:$0xff]
    %v129 = vld [vmem:[#allocation3 + $0xa4] sm:$0xf]
    %v130 = vld [vmem:[#allocation3 + $0xa8] sm:$0xff]
    %v131 = vld [vmem:[#allocation3 + $0xb0] sm:$0xff]
    %v132 = vld [vmem:[#allocation3 + $0xb8] sm:$0xff]
    %v133 = vld [vmem:[#allocation3 + $0xc0] sm:$0xf]
    %v134 = vld [vmem:[#allocation3 + $0xc4] sm:$0xff]
    %v135 = vld [vmem:[#allocation3 + $0xcc] sm:$0xff]
    %v136 = vld [vmem:[#allocation3 + $0xd4] sm:$0xff]
    %v137 = vld [vmem:[#allocation3 + $0xdc] sm:$0xf]
    %v138 = vld [vmem:[#allocation3 + $0xe0] sm:$0xff]
    %v139 = vld [vmem:[#allocation3 + $0xe8] sm:$0xff]
    %v140 = vld [vmem:[#allocation3 + $0xf0] sm:$0xff]
    %v141 = vld [vmem:[#allocation3 + $0xf8] sm:$0xf]
    %v142 = vld [vmem:[#allocation3 + $0xfc] sm:$0xff]
    %v143 = vld [vmem:[#allocation3 + $0x104] sm:$0xff]
    %v144 = vld [vmem:[#allocation3 + $0x10c] sm:$0xff]
    %v145 = vld [vmem:[#allocation3 + $0x114] sm:$0xf]
    %v146 = vld [vmem:[#allocation3 + $0x118] sm:$0xff]
    %v147 = vld [vmem:[#allocation3 + $0x120] sm:$0xff]
    %v148 = vld [vmem:[#allocation3 + $0x128] sm:$0xff]
    %v149 = vld [vmem:[#allocation3 + $0x130] sm:$0xf]
    %v150 = vld [vmem:[#allocation3 + $0x134] sm:$0xff]
    %v151 = vld [vmem:[#allocation3 + $0x13c] sm:$0xff]
    %v152 = vld [vmem:[#allocation3 + $0x144] sm:$0xff]
    %v153 = vld [vmem:[#allocation3 + $0x14c] sm:$0xf]
    %v154 = vld [vmem:[#allocation3 + $0x150] sm:$0xff]
    %v155 = vld [vmem:[#allocation3 + $0x158] sm:$0xff]
    %v156 = vld [vmem:[#allocation3 + $0x160] sm:$0xff]
    %v157 = vld [vmem:[#allocation3 + $0x168] sm:$0xf]
    %v158 = vld [vmem:[#allocation3 + $0x16c] sm:$0xff]
    %v159 = vld [vmem:[#allocation3 + $0x174] sm:$0xff]
    %v160 = vld [vmem:[#allocation3 + $0x17c] sm:$0xff]
    %v161 = vld [vmem:[#allocation3 + $0x184] sm:$0xf]
    %v162 = vld [vmem:[#allocation3 + $0x188] sm:$0xff]
    %v163 = vld [vmem:[#allocation3 + $0x190] sm:$0xff]
    %v164 = vld [vmem:[#allocation3 + $0x198] sm:$0xff]
    %v165 = vld [vmem:[#allocation3 + $0x1a0] sm:$0xf]
    %v166 = vld [vmem:[#allocation3 + $0x1a4] sm:$0xff]
    %v167 = vld [vmem:[#allocation3 + $0x1ac] sm:$0xff]
    %v168 = vld [vmem:[#allocation3 + $0x1b4] sm:$0xff]
    %v169 = vld [vmem:[#allocation3 + $0x1bc] sm:$0xf]
    %v170 = vld [vmem:[#allocation3 + $0x1c0] sm:$0xff]
    %v171 = vld [vmem:[#allocation3 + $0x1c8] sm:$0xff]
    %v172 = vld [vmem:[#allocation3 + $0x1d0] sm:$0xff]
    %v173 = vld [vmem:[#allocation3 + $0x1d8] sm:$0xf]
    %v174 = vld [vmem:[#allocation3 + $0x1dc] sm:$0xff]
    %v175 = vld [vmem:[#allocation3 + $0x1e4] sm:$0xff]
    %v176 = vld [vmem:[#allocation3 + $0x1ec] sm:$0xff]
    %v177 = vld [vmem:[#allocation3 + $0x1f4] sm:$0xf]
    %v178 = vld [vmem:[#allocation3 + $0x1f8] sm:$0xff]
    %v179 = vld [vmem:[#allocation3 + $0x200] sm:$0xff]
    %v180 = vld [vmem:[#allocation3 + $0x208] sm:$0xff]
    %v181 = vld [vmem:[#allocation3 + $0x210] sm:$0xf]
    %v182 = vld [vmem:[#allocation3 + $0x214] sm:$0xff]
    %v183 = vld [vmem:[#allocation3 + $0x21c] sm:$0xff]
    %v184 = vld [vmem:[#allocation3 + $0x224] sm:$0xff]
    %v185 = vld [vmem:[#allocation3 + $0x22c] sm:$0xf]
    %v186 = vld [vmem:[#allocation3 + $0x230] sm:$0xff]
    %v187 = vld [vmem:[#allocation3 + $0x238] sm:$0xff]
    %v188 = vld [vmem:[#allocation3 + $0x240] sm:$0xff]
    %v189 = vld [vmem:[#allocation3 + $0x248] sm:$0xf]
    %v190 = vld [vmem:[#allocation3 + $0x24c] sm:$0xff]
    %v191 = vld [vmem:[#allocation3 + $0x254] sm:$0xff]
    %v192 = vld [vmem:[#allocation3 + $0x25c] sm:$0xff]
    %v193 = vld [vmem:[#allocation3 + $0x264] sm:$0xf]
    %v194 = vld [vmem:[#allocation3 + $0x268] sm:$0xff]
    %v195 = vld [vmem:[#allocation3 + $0x270] sm:$0xff]
    %v196 = vld [vmem:[#allocation3 + $0x278] sm:$0xff]
    %v197 = vld [vmem:[#allocation3 + $0x280] sm:$0xf]
    %v198 = vld [vmem:[#allocation3 + $0x284] sm:$0xff]
    %v199 = vld [vmem:[#allocation3 + $0x28c] sm:$0xff]
    %v200 = vld [vmem:[#allocation3 + $0x294] sm:$0xff]
    %v201 = vld [vmem:[#allocation3 + $0x29c] sm:$0xf]
    %v202 = vld [vmem:[#allocation3 + $0x2a0] sm:$0xff]
    %v203 = vld [vmem:[#allocation3 + $0x2a8] sm:$0xff]
    %v204 = vld [vmem:[#allocation3 + $0x2b0] sm:$0xff]
    %v205 = vld [vmem:[#allocation3 + $0x2b8] sm:$0xf]
    %v206 = vld [vmem:[#allocation3 + $0x2bc] sm:$0xff]
    %v207 = vld [vmem:[#allocation3 + $0x2c4] sm:$0xff]
    %v208 = vld [vmem:[#allocation3 + $0x2cc] sm:$0xff]
    %v209 = vld [vmem:[#allocation3 + $0x2d4] sm:$0xf]
    %v210 = vld [vmem:[#allocation3 + $0x2d8] sm:$0xff]
    %v211 = vld [vmem:[#allocation3 + $0x2e0] sm:$0xff]
    %v212 = vld [vmem:[#allocation3 + $0x2e8] sm:$0xff]
    %v213 = vld [vmem:[#allocation3 + $0x2f0] sm:$0xf]
    %v214 = vld [vmem:[#allocation3 + $0x2f4] sm:$0xff]
    %v215 = vld [vmem:[#allocation3 + $0x2fc] sm:$0xff]
    %v216 = vld [vmem:[#allocation3 + $0x304] sm:$0xff]
    %v217 = vld [vmem:[#allocation3 + $0x30c] sm:$0xf]
    %v218 = vld [vmem:[#allocation3 + $0x310] sm:$0xff]
    %v219 = vld [vmem:[#allocation3 + $0x318] sm:$0xff]
    %v220 = vld [vmem:[#allocation3 + $0x320] sm:$0xff]
    %v221 = vld [vmem:[#allocation3 + $0x328] sm:$0xf]
    %v222 = vld [vmem:[#allocation3 + $0x32c] sm:$0xff]
    %v223 = vld [vmem:[#allocation3 + $0x334] sm:$0xff]
    %v224 = vld [vmem:[#allocation3 + $0x33c] sm:$0xff]
    %v225 = vld [vmem:[#allocation3 + $0x344] sm:$0xf]
    %v226 = vld [vmem:[#allocation3 + $0x348] sm:$0xff]
    %v227 = vld [vmem:[#allocation3 + $0x350] sm:$0xff]
    %v228 = vld [vmem:[#allocation3 + $0x358] sm:$0xff]
    %v229 = vld [vmem:[#allocation3 + $0x360] sm:$0xf]
    %v230 = vld [vmem:[#allocation3 + $0x364] sm:$0xff]
    %v231 = vld [vmem:[#allocation3 + $0x36c] sm:$0xff]
    %v232 = vld [vmem:[#allocation3 + $0x374] sm:$0xff]
    %v233 = vld [vmem:[#allocation3 + $0x37c] sm:$0xf]
    %v234 = vld [vmem:[#allocation3 + $0x380] sm:$0xff]
    %v235 = vld [vmem:[#allocation3 + $0x388] sm:$0xff]
    %v236 = vld [vmem:[#allocation3 + $0x390] sm:$0xff]
    %v237 = vld [vmem:[#allocation3 + $0x398] sm:$0xf]
    %v238 = vld [vmem:[#allocation3 + $0x39c] sm:$0xff]
    %v239 = vld [vmem:[#allocation3 + $0x3a4] sm:$0xff]
    %v240 = vld [vmem:[#allocation3 + $0x3ac] sm:$0xff]
    %v241 = vld [vmem:[#allocation3 + $0x3b4] sm:$0xf]
    %v242 = vld [vmem:[#allocation3 + $0x3b8] sm:$0xff]
    %v243 = vld [vmem:[#allocation3 + $0x3c0] sm:$0xff]
    %v244 = vld [vmem:[#allocation3 + $0x3c8] sm:$0xff]
    %v245 = vld [vmem:[#allocation3 + $0x3d0] sm:$0xf]
    %v246 = vld [vmem:[#allocation3 + $0x3d4] sm:$0xff]
    %v247 = vld [vmem:[#allocation3 + $0x3dc] sm:$0xff]
    %v248 = vld [vmem:[#allocation3 + $0x3e4] sm:$0xff]
    %v249 = vld [vmem:[#allocation3 + $0x3ec] sm:$0xf]
    %v250 = vld [vmem:[#allocation3 + $0x3f0] sm:$0xff]
    %v251 = vld [vmem:[#allocation3 + $0x3f8] sm:$0xff]
    %v252 = vld [vmem:[#allocation3 + $0x400] sm:$0xff]
    %v253 = vld [vmem:[#allocation3 + $0x408] sm:$0xf]
    %v254 = vld [vmem:[#allocation3 + $0x40c] sm:$0xff]
    %v255 = vld [vmem:[#allocation3 + $0x414] sm:$0xff]
    %v256 = vld [vmem:[#allocation3 + $0x41c] sm:$0xff]
    %v257 = vld [vmem:[#allocation3 + $0x424] sm:$0xf]
    %v258 = vld [vmem:[#allocation3 + $0x428] sm:$0xff]
    %v259 = vld [vmem:[#allocation3 + $0x430] sm:$0xff]
    %v260 = vld [vmem:[#allocation3 + $0x438] sm:$0xff]
    %v261 = vld [vmem:[#allocation3 + $0x440] sm:$0xf]
    %v262 = vld [vmem:[#allocation3 + $0x444] sm:$0xff]
    %v263 = vld [vmem:[#allocation3 + $0x44c] sm:$0xff]
    %v264 = vld [vmem:[#allocation3 + $0x454] sm:$0xff]
    %v265 = vld [vmem:[#allocation3 + $0x45c] sm:$0xf]
    %v266 = vld [vmem:[#allocation3 + $0x460] sm:$0xff]
    %v267 = vld [vmem:[#allocation3 + $0x468] sm:$0xff]
    %v268 = vld [vmem:[#allocation3 + $0x470] sm:$0xff]
    %v269 = vld [vmem:[#allocation3 + $0x478] sm:$0xf]
    %v270 = vld [vmem:[#allocation3 + $0x47c] sm:$0xff]
    %v271 = vld [vmem:[#allocation3 + $0x484] sm:$0xff]
    %v272 = vld [vmem:[#allocation3 + $0x48c] sm:$0xff]
    %v273 = vld [vmem:[#allocation3 + $0x494] sm:$0xf]
    %v274 = vld [vmem:[#allocation3 + $0x498] sm:$0xff]
    %v275 = vld [vmem:[#allocation3 + $0x4a0] sm:$0xff]
    %v276 = vld [vmem:[#allocation3 + $0x4a8] sm:$0xff]
    %v277 = vld [vmem:[#allocation3 + $0x4b0] sm:$0xf]
    %v278 = vld [vmem:[#allocation3 + $0x4b4] sm:$0xff]
    %v279 = vld [vmem:[#allocation3 + $0x4bc] sm:$0xff]
    %v280 = vld [vmem:[#allocation3 + $0x4c4] sm:$0xff]
    %v281 = vld [vmem:[#allocation3 + $0x4cc] sm:$0xf]
    %v282 = vld [vmem:[#allocation3 + $0x4d0] sm:$0xff]
    %v283 = vld [vmem:[#allocation3 + $0x4d8] sm:$0xff]
    %v284 = vld [vmem:[#allocation3 + $0x4e0] sm:$0xff]
    %v285 = vld [vmem:[#allocation3 + $0x4e8] sm:$0xf]
    %v286 = vld [vmem:[#allocation3 + $0x4ec] sm:$0xff]
    %v287 = vld [vmem:[#allocation3 + $0x4f4] sm:$0xff]
    %v288 = vld [vmem:[#allocation3 + $0x4fc] sm:$0xff]
    %v289 = vld [vmem:[#allocation3 + $0x504] sm:$0xf]
    %v290 = vld [vmem:[#allocation3 + $0x508] sm:$0xff]
    %v291 = vld [vmem:[#allocation3 + $0x510] sm:$0xff]
    %v292 = vld [vmem:[#allocation3 + $0x518] sm:$0xff]
    %v293 = vld [vmem:[#allocation3 + $0x520] sm:$0xf]
    %v294 = vld [vmem:[#allocation3 + $0x524] sm:$0xff]
    %v295 = vld [vmem:[#allocation3 + $0x52c] sm:$0xff]
    %v296 = vld [vmem:[#allocation3 + $0x534] sm:$0xff]
    %v297 = vld [vmem:[#allocation3 + $0x53c] sm:$0xf]
    %v298 = vld [vmem:[#allocation3 + $0x540] sm:$0xff]
    %v299 = vld [vmem:[#allocation3 + $0x548] sm:$0xff]
    %v300 = vld [vmem:[#allocation3 + $0x550] sm:$0xff]
    %v301 = vld [vmem:[#allocation3 + $0x558] sm:$0xf]
    %v302 = vld [vmem:[#allocation3 + $0x55c] sm:$0xff]
    %v303 = vld [vmem:[#allocation3 + $0x564] sm:$0xff]
    %v304 = vld [vmem:[#allocation3 + $0x56c] sm:$0xff]
    %v305 = vld [vmem:[#allocation3 + $0x574] sm:$0xf]
    %v306 = vld [vmem:[#allocation3 + $0x578] sm:$0xff]
    %v307 = vld [vmem:[#allocation3 + $0x580] sm:$0xff]
    %v308 = vld [vmem:[#allocation3 + $0x588] sm:$0xff]
    %v309 = vld [vmem:[#allocation3 + $0x590] sm:$0xf]
    %v310 = vld [vmem:[#allocation3 + $0x594] sm:$0xff]
    %v311 = vld [vmem:[#allocation3 + $0x59c] sm:$0xff]
    %v312 = vld [vmem:[#allocation3 + $0x5a4] sm:$0xff]
    %v313 = vld [vmem:[#allocation3 + $0x5ac] sm:$0xf]
    %v314 = vld [vmem:[#allocation3 + $0x5b0] sm:$0xff]
    %v315 = vld [vmem:[#allocation3 + $0x5b8] sm:$0xff]
    %v316 = vld [vmem:[#allocation3 + $0x5c0] sm:$0xff]
    %v317 = vld [vmem:[#allocation3 + $0x5c8] sm:$0xf]
    %v318 = vld [vmem:[#allocation3 + $0x5cc] sm:$0xff]
    %v319 = vld [vmem:[#allocation3 + $0x5d4] sm:$0xff]
    %v320 = vld [vmem:[#allocation3 + $0x5dc] sm:$0xff]
    %v321 = vld [vmem:[#allocation3 + $0x5e4] sm:$0xf]
    %v322 = vld [vmem:[#allocation3 + $0x5e8] sm:$0xff]
    %v323 = vld [vmem:[#allocation3 + $0x5f0] sm:$0xff]
    %v324 = vld [vmem:[#allocation3 + $0x5f8] sm:$0xff]
    %v325 = vld [vmem:[#allocation3 + $0x600] sm:$0xf]
    %v326 = vld [vmem:[#allocation3 + $0x604] sm:$0xff]
    %v327 = vld [vmem:[#allocation3 + $0x60c] sm:$0xff]
    %v328 = vld [vmem:[#allocation3 + $0x614] sm:$0xff]
    %v329 = vld [vmem:[#allocation3 + $0x61c] sm:$0xf]
    %v330 = vld [vmem:[#allocation3 + $0x620] sm:$0xff]
    %v331 = vld [vmem:[#allocation3 + $0x628] sm:$0xff]
    %v332 = vld [vmem:[#allocation3 + $0x630] sm:$0xff]
    %v333 = vld [vmem:[#allocation3 + $0x638] sm:$0xf]
    %v334 = vld [vmem:[#allocation3 + $0x63c] sm:$0xff]
    %v335 = vld [vmem:[#allocation3 + $0x644] sm:$0xff]
    %v336 = vld [vmem:[#allocation3 + $0x64c] sm:$0xff]
    %v337 = vld [vmem:[#allocation3 + $0x654] sm:$0xf]
    %v338 = vld [vmem:[#allocation3 + $0x658] sm:$0xff]
    %v339 = vld [vmem:[#allocation3 + $0x660] sm:$0xff]
    %v340 = vld [vmem:[#allocation3 + $0x668] sm:$0xff]
    %v341 = vld [vmem:[#allocation3 + $0x670] sm:$0xf]
    %v342 = vld [vmem:[#allocation3 + $0x674] sm:$0xff]
    %v343 = vld [vmem:[#allocation3 + $0x67c] sm:$0xff]
    %v344 = vld [vmem:[#allocation3 + $0x684] sm:$0xff]
    %v345 = vld [vmem:[#allocation3 + $0x68c] sm:$0xf]
    %v346 = vld [vmem:[#allocation3 + $0x690] sm:$0xff]
    %v347 = vld [vmem:[#allocation3 + $0x698] sm:$0xff]
    %v348 = vld [vmem:[#allocation3 + $0x6a0] sm:$0xff]
    %v349 = vld [vmem:[#allocation3 + $0x6a8] sm:$0xf]
    %v350 = vld [vmem:[#allocation3 + $0x6ac] sm:$0xff]
    %v351 = vld [vmem:[#allocation3 + $0x6b4] sm:$0xff]
    %v352 = vld [vmem:[#allocation3 + $0x6bc] sm:$0xff]
    %v353 = vld [vmem:[#allocation3 + $0x6c4] sm:$0xf]
    %v354 = vld [vmem:[#allocation3 + $0x6c8] sm:$0xff]
    %v355 = vld [vmem:[#allocation3 + $0x6d0] sm:$0xff]
    %v356 = vld [vmem:[#allocation3 + $0x6d8] sm:$0xff]
    %v357 = vld [vmem:[#allocation3 + $0x6e0] sm:$0xf]
    %v358 = vld [vmem:[#allocation3 + $0x6e4] sm:$0xff]
    %v359 = vld [vmem:[#allocation3 + $0x6ec] sm:$0xff]
    %v360 = vld [vmem:[#allocation3 + $0x6f4] sm:$0xff]
    %v361 = vld [vmem:[#allocation3 + $0x6fc] sm:$0xf]
    %v362 = vld [vmem:[#allocation3 + $0x700] sm:$0xff]
    %v363 = vld [vmem:[#allocation3 + $0x708] sm:$0xff]
    %v364 = vld [vmem:[#allocation3 + $0x710] sm:$0xff]
    %v365 = vld [vmem:[#allocation3 + $0x718] sm:$0xf]
    %v366 = vld [vmem:[#allocation3 + $0x71c] sm:$0xff]
    %v367 = vld [vmem:[#allocation3 + $0x724] sm:$0xff]
    %v368 = vld [vmem:[#allocation3 + $0x72c] sm:$0xff]
    %v369 = vld [vmem:[#allocation3 + $0x734] sm:$0xf]
    %v370 = vld [vmem:[#allocation3 + $0x738] sm:$0xff]
    %v371 = vld [vmem:[#allocation3 + $0x740] sm:$0xff]
    %v372 = vld [vmem:[#allocation3 + $0x748] sm:$0xff]
    %v373 = vld [vmem:[#allocation3 + $0x750] sm:$0xf]
    %v374 = vld [vmem:[#allocation3 + $0x754] sm:$0xff]
    %v375 = vld [vmem:[#allocation3 + $0x75c] sm:$0xff]
    %v376 = vld [vmem:[#allocation3 + $0x764] sm:$0xff]
    %v377 = vld [vmem:[#allocation3 + $0x76c] sm:$0xf]
    %v378 = vld [vmem:[#allocation3 + $0x770] sm:$0xff]
    %v379 = vld [vmem:[#allocation3 + $0x778] sm:$0xff]
    %v380 = vld [vmem:[#allocation3 + $0x780] sm:$0xff]
    %v381 = vld [vmem:[#allocation3 + $0x788] sm:$0xf]
    %v382 = vld [vmem:[#allocation3 + $0x78c] sm:$0xff]
    %v383 = vld [vmem:[#allocation3 + $0x794] sm:$0xff]
    %v384 = vld [vmem:[#allocation3 + $0x79c] sm:$0xff]
    %v385 = vld [vmem:[#allocation3 + $0x7a4] sm:$0xf]
    %v386 = vld [vmem:[#allocation3 + $0x7a8] sm:$0xff]
    %v387 = vld [vmem:[#allocation3 + $0x7b0] sm:$0xff]
    %v388 = vld [vmem:[#allocation3 + $0x7b8] sm:$0xff]
    %v389 = vld [vmem:[#allocation3 + $0x7c0] sm:$0xf]
    %v390 = vld [vmem:[#allocation3 + $0x7c4] sm:$0xff]
    %v391 = vld [vmem:[#allocation3 + $0x7cc] sm:$0xff]
    %v392 = vld [vmem:[#allocation3 + $0x7d4] sm:$0xff]
    %v393 = vld [vmem:[#allocation3 + $0x7dc] sm:$0xf]
    %v394 = vld [vmem:[#allocation3 + $0x7e0] sm:$0xff]
    %v395 = vld [vmem:[#allocation3 + $0x7e8] sm:$0xff]
    %v396 = vld [vmem:[#allocation3 + $0x7f0] sm:$0xff]
    %v397 = vld [vmem:[#allocation3 + $0x7f8] sm:$0xf]
    %v398 = vld [vmem:[#allocation3 + $0x7fc] sm:$0xff]
    %v399 = vld [vmem:[#allocation3 + $0x804] sm:$0xff]
    %v400 = vld [vmem:[#allocation3 + $0x80c] sm:$0xff]
    %v401 = vld [vmem:[#allocation3 + $0x814] sm:$0xf]
    %v402 = vld [vmem:[#allocation3 + $0x818] sm:$0xff]
    %v403 = vld [vmem:[#allocation3 + $0x820] sm:$0xff]
    %v404 = vld [vmem:[#allocation3 + $0x828] sm:$0xff]
    %v405 = vld [vmem:[#allocation3 + $0x830] sm:$0xf]
    %v406 = vld [vmem:[#allocation3 + $0x834] sm:$0xff]
    %v407 = vld [vmem:[#allocation3 + $0x83c] sm:$0xff]
    %v408 = vld [vmem:[#allocation3 + $0x844] sm:$0xff]
    %v409 = vld [vmem:[#allocation3 + $0x84c] sm:$0xf]
    %v410 = vld [vmem:[#allocation3 + $0x850] sm:$0xff]
    %v411 = vld [vmem:[#allocation3 + $0x858] sm:$0xff]
    %v412 = vld [vmem:[#allocation3 + $0x860] sm:$0xff]
    %v413 = vld [vmem:[#allocation3 + $0x868] sm:$0xf]
    %v414 = vld [vmem:[#allocation3 + $0x86c] sm:$0xff]
    %v415 = vld [vmem:[#allocation3 + $0x874] sm:$0xff]
    %v416 = vld [vmem:[#allocation3 + $0x87c] sm:$0xff]
    %v417 = vld [vmem:[#allocation3 + $0x884] sm:$0xf]
    %v418 = vld [vmem:[#allocation3 + $0x888] sm:$0xff]
    %v419 = vld [vmem:[#allocation3 + $0x890] sm:$0xff]
    %v420 = vld [vmem:[#allocation3 + $0x898] sm:$0xff]
    %v421 = vld [vmem:[#allocation3 + $0x8a0] sm:$0xf]
    %v422 = vld [vmem:[#allocation3 + $0x8a4] sm:$0xff]
    %v423 = vld [vmem:[#allocation3 + $0x8ac] sm:$0xff]
    %v424 = vld [vmem:[#allocation3 + $0x8b4] sm:$0xff]
    %v425 = vld [vmem:[#allocation3 + $0x8bc] sm:$0xf]
    %v426 = vld [vmem:[#allocation3 + $0x8c0] sm:$0xff]
    %v427 = vld [vmem:[#allocation3 + $0x8c8] sm:$0xff]
    %v428 = vld [vmem:[#allocation3 + $0x8d0] sm:$0xff]
    %v429 = vld [vmem:[#allocation3 + $0x8d8] sm:$0xf]
    %v430 = vld [vmem:[#allocation3 + $0x8dc] sm:$0xff]
    %v431 = vld [vmem:[#allocation3 + $0x8e4] sm:$0xff]
    %v432 = vld [vmem:[#allocation3 + $0x8ec] sm:$0xff]
    %v433 = vld [vmem:[#allocation3 + $0x8f4] sm:$0xf]
    %v434 = vld [vmem:[#allocation3 + $0x8f8] sm:$0xff]
    %v435 = vld [vmem:[#allocation3 + $0x900] sm:$0xff]
    %v436 = vld [vmem:[#allocation3 + $0x908] sm:$0xff]
    %v437 = vld [vmem:[#allocation3 + $0x910] sm:$0xf]
    %v438 = vld [vmem:[#allocation3 + $0x914] sm:$0xff]
    %v439 = vld [vmem:[#allocation3 + $0x91c] sm:$0xff]
    %v440 = vld [vmem:[#allocation3 + $0x924] sm:$0xff]
    %v441 = vld [vmem:[#allocation3 + $0x92c] sm:$0xf]
    %v442 = vld [vmem:[#allocation3 + $0x930] sm:$0xff]
    %v443 = vld [vmem:[#allocation3 + $0x938] sm:$0xff]
    %v444 = vld [vmem:[#allocation3 + $0x940] sm:$0xff]
    %v445 = vld [vmem:[#allocation3 + $0x948] sm:$0xf]
    %v446 = vld [vmem:[#allocation3 + $0x94c] sm:$0xff]
    %v447 = vld [vmem:[#allocation3 + $0x954] sm:$0xff]
    %v448 = vld [vmem:[#allocation3 + $0x95c] sm:$0xff]
    %v449 = vld [vmem:[#allocation3 + $0x964] sm:$0xf]
    %v450 = vld [vmem:[#allocation3 + $0x968] sm:$0xff]
    %v451 = vld [vmem:[#allocation3 + $0x970] sm:$0xff]
    %v452 = vld [vmem:[#allocation3 + $0x978] sm:$0xff]
    %v453 = vld [vmem:[#allocation3 + $0x980] sm:$0xf]
    %v454 = vld [vmem:[#allocation3 + $0x984] sm:$0xff]
    %v455 = vld [vmem:[#allocation3 + $0x98c] sm:$0xff]
    %v456 = vld [vmem:[#allocation3 + $0x994] sm:$0xff]
    %v457 = vld [vmem:[#allocation3 + $0x99c] sm:$0xf]
    %v458 = vld [vmem:[#allocation3 + $0x9a0] sm:$0xff]
    %v459 = vld [vmem:[#allocation3 + $0x9a8] sm:$0xff]
    %v460 = vld [vmem:[#allocation3 + $0x9b0] sm:$0xff]
    %v461 = vld [vmem:[#allocation3 + $0x9b8] sm:$0xf]
    %v462 = vld [vmem:[#allocation3 + $0x9bc] sm:$0xff]
    %v463 = vld [vmem:[#allocation3 + $0x9c4] sm:$0xff]
    %v464 = vld [vmem:[#allocation3 + $0x9cc] sm:$0xff]
    %v465 = vld [vmem:[#allocation3 + $0x9d4] sm:$0xf]
    %v466 = vld [vmem:[#allocation3 + $0x9d8] sm:$0xff]
    %v467 = vld [vmem:[#allocation3 + $0x9e0] sm:$0xff]
    %v468 = vld [vmem:[#allocation3 + $0x9e8] sm:$0xff]
    %v469 = vld [vmem:[#allocation3 + $0x9f0] sm:$0xf]
    %v470 = vld [vmem:[#allocation3 + $0x9f4] sm:$0xff]
    %v471 = vld [vmem:[#allocation3 + $0x9fc] sm:$0xff]
    %v472 = vld [vmem:[#allocation3 + $0xa04] sm:$0xff]
    %v473 = vld [vmem:[#allocation3 + $0xa0c] sm:$0xf]
    %v474 = vld [vmem:[#allocation3 + $0xa10] sm:$0xff]
    %v475 = vld [vmem:[#allocation3 + $0xa18] sm:$0xff]
    %v476 = vld [vmem:[#allocation3 + $0xa20] sm:$0xff]
    %v477 = vld [vmem:[#allocation3 + $0xa28] sm:$0xf]
    %v478 = vld [vmem:[#allocation3 + $0xa2c] sm:$0xff]
    %v479 = vld [vmem:[#allocation3 + $0xa34] sm:$0xff]
    %v480 = vld [vmem:[#allocation3 + $0xa3c] sm:$0xff]
    %v481 = vld [vmem:[#allocation3 + $0xa44] sm:$0xf]
    %v482 = vld [vmem:[#allocation3 + $0xa48] sm:$0xff]
    %v483 = vld [vmem:[#allocation3 + $0xa50] sm:$0xff]
    %v484 = vld [vmem:[#allocation3 + $0xa58] sm:$0xff]
    %v485 = vld [vmem:[#allocation3 + $0xa60] sm:$0xf]
    %v486 = vld [vmem:[#allocation3 + $0xa64] sm:$0xff]
    %v487 = vld [vmem:[#allocation3 + $0xa6c] sm:$0xff]
    %v488 = vld [vmem:[#allocation3 + $0xa74] sm:$0xff]
    %v489 = vld [vmem:[#allocation3 + $0xa7c] sm:$0xf]
    %v490 = vld [vmem:[#allocation3 + $0xa80] sm:$0xff]
    %v491 = vld [vmem:[#allocation3 + $0xa88] sm:$0xff]
    %v492 = vld [vmem:[#allocation3 + $0xa90] sm:$0xff]
    %v493 = vld [vmem:[#allocation3 + $0xa98] sm:$0xf]
    %v494 = vld [vmem:[#allocation3 + $0xa9c] sm:$0xff]
    %v495 = vld [vmem:[#allocation3 + $0xaa4] sm:$0xff]
    %v496 = vld [vmem:[#allocation3 + $0xaac] sm:$0xff]
    %v497 = vld [vmem:[#allocation3 + $0xab4] sm:$0xf]
    %v890 = vunpack.c.l.b16 %v106
    %v891 = vunpack.c.h.b16 %v106
    %v892 = vunpack.c.l.b16 %v107
    %v893 = vunpack.c.h.b16 %v107
    %v894 = vunpack.c.l.b16 %v108
    %v895 = vunpack.c.h.b16 %v108
    %v896 = vunpack.c.l.b16 %v109
    %v897 = vunpack.c.l.b16 %v110
    %v898 = vunpack.c.h.b16 %v110
    %v899 = vunpack.c.l.b16 %v111
    %v900 = vunpack.c.h.b16 %v111
    %v901 = vunpack.c.l.b16 %v112
    %v902 = vunpack.c.h.b16 %v112
    %v903 = vunpack.c.l.b16 %v113
    %v904 = vunpack.c.l.b16 %v114
    %v905 = vunpack.c.h.b16 %v114
    %v906 = vunpack.c.l.b16 %v115
    %v907 = vunpack.c.h.b16 %v115
    %v908 = vunpack.c.l.b16 %v116
    %v909 = vunpack.c.h.b16 %v116
    %v910 = vunpack.c.l.b16 %v117
    %v911 = vunpack.c.l.b16 %v118
    %v912 = vunpack.c.h.b16 %v118
    %v913 = vunpack.c.l.b16 %v119
    %v914 = vunpack.c.h.b16 %v119
    %v915 = vunpack.c.l.b16 %v120
    %v916 = vunpack.c.h.b16 %v120
    %v917 = vunpack.c.l.b16 %v121
    %v918 = vunpack.c.l.b16 %v122
    %v919 = vunpack.c.h.b16 %v122
    %v920 = vunpack.c.l.b16 %v123
    %v921 = vunpack.c.h.b16 %v123
    %v922 = vunpack.c.l.b16 %v124
    %v923 = vunpack.c.h.b16 %v124
    %v924 = vunpack.c.l.b16 %v125
    %v925 = vunpack.c.l.b16 %v126
    %v926 = vunpack.c.h.b16 %v126
    %v927 = vunpack.c.l.b16 %v127
    %v928 = vunpack.c.h.b16 %v127
    %v929 = vunpack.c.l.b16 %v128
    %v930 = vunpack.c.h.b16 %v128
    %v931 = vunpack.c.l.b16 %v129
    %v932 = vunpack.c.l.b16 %v130
    %v933 = vunpack.c.h.b16 %v130
    %v934 = vunpack.c.l.b16 %v131
    %v935 = vunpack.c.h.b16 %v131
    %v936 = vunpack.c.l.b16 %v132
    %v937 = vunpack.c.h.b16 %v132
    %v938 = vunpack.c.l.b16 %v133
    %v939 = vunpack.c.l.b16 %v134
    %v940 = vunpack.c.h.b16 %v134
    %v941 = vunpack.c.l.b16 %v135
    %v942 = vunpack.c.h.b16 %v135
    %v943 = vunpack.c.l.b16 %v136
    %v944 = vunpack.c.h.b16 %v136
    %v945 = vunpack.c.l.b16 %v137
    %v946 = vunpack.c.l.b16 %v138
    %v947 = vunpack.c.h.b16 %v138
    %v948 = vunpack.c.l.b16 %v139
    %v949 = vunpack.c.h.b16 %v139
    %v950 = vunpack.c.l.b16 %v140
    %v951 = vunpack.c.h.b16 %v140
    %v952 = vunpack.c.l.b16 %v141
    %v953 = vunpack.c.l.b16 %v142
    %v954 = vunpack.c.h.b16 %v142
    %v955 = vunpack.c.l.b16 %v143
    %v956 = vunpack.c.h.b16 %v143
    %v957 = vunpack.c.l.b16 %v144
    %v958 = vunpack.c.h.b16 %v144
    %v959 = vunpack.c.l.b16 %v145
    %v960 = vunpack.c.l.b16 %v146
    %v961 = vunpack.c.h.b16 %v146
    %v962 = vunpack.c.l.b16 %v147
    %v963 = vunpack.c.h.b16 %v147
    %v964 = vunpack.c.l.b16 %v148
    %v965 = vunpack.c.h.b16 %v148
    %v966 = vunpack.c.l.b16 %v149
    %v967 = vunpack.c.l.b16 %v150
    %v968 = vunpack.c.h.b16 %v150
    %v969 = vunpack.c.l.b16 %v151
    %v970 = vunpack.c.h.b16 %v151
    %v971 = vunpack.c.l.b16 %v152
    %v972 = vunpack.c.h.b16 %v152
    %v973 = vunpack.c.l.b16 %v153
    %v974 = vunpack.c.l.b16 %v154
    %v975 = vunpack.c.h.b16 %v154
    %v976 = vunpack.c.l.b16 %v155
    %v977 = vunpack.c.h.b16 %v155
    %v978 = vunpack.c.l.b16 %v156
    %v979 = vunpack.c.h.b16 %v156
    %v980 = vunpack.c.l.b16 %v157
    %v981 = vunpack.c.l.b16 %v158
    %v982 = vunpack.c.h.b16 %v158
    %v983 = vunpack.c.l.b16 %v159
    %v984 = vunpack.c.h.b16 %v159
    %v985 = vunpack.c.l.b16 %v160
    %v986 = vunpack.c.h.b16 %v160
    %v987 = vunpack.c.l.b16 %v161
    %v988 = vunpack.c.l.b16 %v162
    %v989 = vunpack.c.h.b16 %v162
    %v990 = vunpack.c.l.b16 %v163
    %v991 = vunpack.c.h.b16 %v163
    %v992 = vunpack.c.l.b16 %v164
    %v993 = vunpack.c.h.b16 %v164
    %v994 = vunpack.c.l.b16 %v165
    %v995 = vunpack.c.l.b16 %v166
    %v996 = vunpack.c.h.b16 %v166
    %v997 = vunpack.c.l.b16 %v167
    %v998 = vunpack.c.h.b16 %v167
    %v999 = vunpack.c.l.b16 %v168
    %v1000 = vunpack.c.h.b16 %v168
    %v1001 = vunpack.c.l.b16 %v169
    %v1002 = vunpack.c.l.b16 %v170
    %v1003 = vunpack.c.h.b16 %v170
    %v1004 = vunpack.c.l.b16 %v171
    %v1005 = vunpack.c.h.b16 %v171
    %v1006 = vunpack.c.l.b16 %v172
    %v1007 = vunpack.c.h.b16 %v172
    %v1008 = vunpack.c.l.b16 %v173
    %v1009 = vunpack.c.l.b16 %v174
    %v1010 = vunpack.c.h.b16 %v174
    %v1011 = vunpack.c.l.b16 %v175
    %v1012 = vunpack.c.h.b16 %v175
    %v1013 = vunpack.c.l.b16 %v176
    %v1014 = vunpack.c.h.b16 %v176
    %v1015 = vunpack.c.l.b16 %v177
    %v1016 = vunpack.c.l.b16 %v178
    %v1017 = vunpack.c.h.b16 %v178
    %v1018 = vunpack.c.l.b16 %v179
    %v1019 = vunpack.c.h.b16 %v179
    %v1020 = vunpack.c.l.b16 %v180
    %v1021 = vunpack.c.h.b16 %v180
    %v1022 = vunpack.c.l.b16 %v181
    %v1023 = vunpack.c.l.b16 %v182
    %v1024 = vunpack.c.h.b16 %v182
    %v1025 = vunpack.c.l.b16 %v183
    %v1026 = vunpack.c.h.b16 %v183
    %v1027 = vunpack.c.l.b16 %v184
    %v1028 = vunpack.c.h.b16 %v184
    %v1029 = vunpack.c.l.b16 %v185
    %v1030 = vunpack.c.l.b16 %v186
    %v1031 = vunpack.c.h.b16 %v186
    %v1032 = vunpack.c.l.b16 %v187
    %v1033 = vunpack.c.h.b16 %v187
    %v1034 = vunpack.c.l.b16 %v188
    %v1035 = vunpack.c.h.b16 %v188
    %v1036 = vunpack.c.l.b16 %v189
    %v1037 = vunpack.c.l.b16 %v190
    %v1038 = vunpack.c.h.b16 %v190
    %v1039 = vunpack.c.l.b16 %v191
    %v1040 = vunpack.c.h.b16 %v191
    %v1041 = vunpack.c.l.b16 %v192
    %v1042 = vunpack.c.h.b16 %v192
    %v1043 = vunpack.c.l.b16 %v193
    %v1044 = vunpack.c.l.b16 %v194
    %v1045 = vunpack.c.h.b16 %v194
    %v1046 = vunpack.c.l.b16 %v195
    %v1047 = vunpack.c.h.b16 %v195
    %v1048 = vunpack.c.l.b16 %v196
    %v1049 = vunpack.c.h.b16 %v196
    %v1050 = vunpack.c.l.b16 %v197
    %v1051 = vunpack.c.l.b16 %v198
    %v1052 = vunpack.c.h.b16 %v198
    %v1053 = vunpack.c.l.b16 %v199
    %v1054 = vunpack.c.h.b16 %v199
    %v1055 = vunpack.c.l.b16 %v200
    %v1056 = vunpack.c.h.b16 %v200
    %v1057 = vunpack.c.l.b16 %v201
    %v1058 = vunpack.c.l.b16 %v202
    %v1059 = vunpack.c.h.b16 %v202
    %v1060 = vunpack.c.l.b16 %v203
    %v1061 = vunpack.c.h.b16 %v203
    %v1062 = vunpack.c.l.b16 %v204
    %v1063 = vunpack.c.h.b16 %v204
    %v1064 = vunpack.c.l.b16 %v205
    %v1065 = vunpack.c.l.b16 %v206
    %v1066 = vunpack.c.h.b16 %v206
    %v1067 = vunpack.c.l.b16 %v207
    %v1068 = vunpack.c.h.b16 %v207
    %v1069 = vunpack.c.l.b16 %v208
    %v1070 = vunpack.c.h.b16 %v208
    %v1071 = vunpack.c.l.b16 %v209
    %v1072 = vunpack.c.l.b16 %v210
    %v1073 = vunpack.c.h.b16 %v210
    %v1074 = vunpack.c.l.b16 %v211
    %v1075 = vunpack.c.h.b16 %v211
    %v1076 = vunpack.c.l.b16 %v212
    %v1077 = vunpack.c.h.b16 %v212
    %v1078 = vunpack.c.l.b16 %v213
    %v1079 = vunpack.c.l.b16 %v214
    %v1080 = vunpack.c.h.b16 %v214
    %v1081 = vunpack.c.l.b16 %v215
    %v1082 = vunpack.c.h.b16 %v215
    %v1083 = vunpack.c.l.b16 %v216
    %v1084 = vunpack.c.h.b16 %v216
    %v1085 = vunpack.c.l.b16 %v217
    %v1086 = vunpack.c.l.b16 %v218
    %v1087 = vunpack.c.h.b16 %v218
    %v1088 = vunpack.c.l.b16 %v219
    %v1089 = vunpack.c.h.b16 %v219
    %v1090 = vunpack.c.l.b16 %v220
    %v1091 = vunpack.c.h.b16 %v220
    %v1092 = vunpack.c.l.b16 %v221
    %v1093 = vunpack.c.l.b16 %v222
    %v1094 = vunpack.c.h.b16 %v222
    %v1095 = vunpack.c.l.b16 %v223
    %v1096 = vunpack.c.h.b16 %v223
    %v1097 = vunpack.c.l.b16 %v224
    %v1098 = vunpack.c.h.b16 %v224
    %v1099 = vunpack.c.l.b16 %v225
    %v1100 = vunpack.c.l.b16 %v226
    %v1101 = vunpack.c.h.b16 %v226
    %v1102 = vunpack.c.l.b16 %v227
    %v1103 = vunpack.c.h.b16 %v227
    %v1104 = vunpack.c.l.b16 %v228
    %v1105 = vunpack.c.h.b16 %v228
    %v1106 = vunpack.c.l.b16 %v229
    %v1107 = vunpack.c.l.b16 %v230
    %v1108 = vunpack.c.h.b16 %v230
    %v1109 = vunpack.c.l.b16 %v231
    %v1110 = vunpack.c.h.b16 %v231
    %v1111 = vunpack.c.l.b16 %v232
    %v1112 = vunpack.c.h.b16 %v232
    %v1113 = vunpack.c.l.b16 %v233
    %v1114 = vunpack.c.l.b16 %v234
    %v1115 = vunpack.c.h.b16 %v234
    %v1116 = vunpack.c.l.b16 %v235
    %v1117 = vunpack.c.h.b16 %v235
    %v1118 = vunpack.c.l.b16 %v236
    %v1119 = vunpack.c.h.b16 %v236
    %v1120 = vunpack.c.l.b16 %v237
    %v1121 = vunpack.c.l.b16 %v238
    %v1122 = vunpack.c.h.b16 %v238
    %v1123 = vunpack.c.l.b16 %v239
    %v1124 = vunpack.c.h.b16 %v239
    %v1125 = vunpack.c.l.b16 %v240
    %v1126 = vunpack.c.h.b16 %v240
    %v1127 = vunpack.c.l.b16 %v241
    %v1128 = vunpack.c.l.b16 %v242
    %v1129 = vunpack.c.h.b16 %v242
    %v1130 = vunpack.c.l.b16 %v243
    %v1131 = vunpack.c.h.b16 %v243
    %v1132 = vunpack.c.l.b16 %v244
    %v1133 = vunpack.c.h.b16 %v244
    %v1134 = vunpack.c.l.b16 %v245
    %v1135 = vunpack.c.l.b16 %v246
    %v1136 = vunpack.c.h.b16 %v246
    %v1137 = vunpack.c.l.b16 %v247
    %v1138 = vunpack.c.h.b16 %v247
    %v1139 = vunpack.c.l.b16 %v248
    %v1140 = vunpack.c.h.b16 %v248
    %v1141 = vunpack.c.l.b16 %v249
    %v1142 = vunpack.c.l.b16 %v250
    %v1143 = vunpack.c.h.b16 %v250
    %v1144 = vunpack.c.l.b16 %v251
    %v1145 = vunpack.c.h.b16 %v251
    %v1146 = vunpack.c.l.b16 %v252
    %v1147 = vunpack.c.h.b16 %v252
    %v1148 = vunpack.c.l.b16 %v253
    %v1149 = vunpack.c.l.b16 %v254
    %v1150 = vunpack.c.h.b16 %v254
    %v1151 = vunpack.c.l.b16 %v255
    %v1152 = vunpack.c.h.b16 %v255
    %v1153 = vunpack.c.l.b16 %v256
    %v1154 = vunpack.c.h.b16 %v256
    %v1155 = vunpack.c.l.b16 %v257
    %v1156 = vunpack.c.l.b16 %v258
    %v1157 = vunpack.c.h.b16 %v258
    %v1158 = vunpack.c.l.b16 %v259
    %v1159 = vunpack.c.h.b16 %v259
    %v1160 = vunpack.c.l.b16 %v260
    %v1161 = vunpack.c.h.b16 %v260
    %v1162 = vunpack.c.l.b16 %v261
    %v1163 = vunpack.c.l.b16 %v262
    %v1164 = vunpack.c.h.b16 %v262
    %v1165 = vunpack.c.l.b16 %v263
    %v1166 = vunpack.c.h.b16 %v263
    %v1167 = vunpack.c.l.b16 %v264
    %v1168 = vunpack.c.h.b16 %v264
    %v1169 = vunpack.c.l.b16 %v265
    %v1170 = vunpack.c.l.b16 %v266
    %v1171 = vunpack.c.h.b16 %v266
    %v1172 = vunpack.c.l.b16 %v267
    %v1173 = vunpack.c.h.b16 %v267
    %v1174 = vunpack.c.l.b16 %v268
    %v1175 = vunpack.c.h.b16 %v268
    %v1176 = vunpack.c.l.b16 %v269
    %v1177 = vunpack.c.l.b16 %v270
    %v1178 = vunpack.c.h.b16 %v270
    %v1179 = vunpack.c.l.b16 %v271
    %v1180 = vunpack.c.h.b16 %v271
    %v1181 = vunpack.c.l.b16 %v272
    %v1182 = vunpack.c.h.b16 %v272
    %v1183 = vunpack.c.l.b16 %v273
    %v1184 = vunpack.c.l.b16 %v274
    %v1185 = vunpack.c.h.b16 %v274
    %v1186 = vunpack.c.l.b16 %v275
    %v1187 = vunpack.c.h.b16 %v275
    %v1188 = vunpack.c.l.b16 %v276
    %v1189 = vunpack.c.h.b16 %v276
    %v1190 = vunpack.c.l.b16 %v277
    %v1191 = vunpack.c.l.b16 %v278
    %v1192 = vunpack.c.h.b16 %v278
    %v1193 = vunpack.c.l.b16 %v279
    %v1194 = vunpack.c.h.b16 %v279
    %v1195 = vunpack.c.l.b16 %v280
    %v1196 = vunpack.c.h.b16 %v280
    %v1197 = vunpack.c.l.b16 %v281
    %v1198 = vunpack.c.l.b16 %v282
    %v1199 = vunpack.c.h.b16 %v282
    %v1200 = vunpack.c.l.b16 %v283
    %v1201 = vunpack.c.h.b16 %v283
    %v1202 = vunpack.c.l.b16 %v284
    %v1203 = vunpack.c.h.b16 %v284
    %v1204 = vunpack.c.l.b16 %v285
    %v1205 = vunpack.c.l.b16 %v286
    %v1206 = vunpack.c.h.b16 %v286
    %v1207 = vunpack.c.l.b16 %v287
    %v1208 = vunpack.c.h.b16 %v287
    %v1209 = vunpack.c.l.b16 %v288
    %v1210 = vunpack.c.h.b16 %v288
    %v1211 = vunpack.c.l.b16 %v289
    %v1212 = vunpack.c.l.b16 %v290
    %v1213 = vunpack.c.h.b16 %v290
    %v1214 = vunpack.c.l.b16 %v291
    %v1215 = vunpack.c.h.b16 %v291
    %v1216 = vunpack.c.l.b16 %v292
    %v1217 = vunpack.c.h.b16 %v292
    %v1218 = vunpack.c.l.b16 %v293
    %v1219 = vunpack.c.l.b16 %v294
    %v1220 = vunpack.c.h.b16 %v294
    %v1221 = vunpack.c.l.b16 %v295
    %v1222 = vunpack.c.h.b16 %v295
    %v1223 = vunpack.c.l.b16 %v296
    %v1224 = vunpack.c.h.b16 %v296
    %v1225 = vunpack.c.l.b16 %v297
    %v1226 = vunpack.c.l.b16 %v298
    %v1227 = vunpack.c.h.b16 %v298
    %v1228 = vunpack.c.l.b16 %v299
    %v1229 = vunpack.c.h.b16 %v299
    %v1230 = vunpack.c.l.b16 %v300
    %v1231 = vunpack.c.h.b16 %v300
    %v1232 = vunpack.c.l.b16 %v301
    %v1233 = vunpack.c.l.b16 %v302
    %v1234 = vunpack.c.h.b16 %v302
    %v1235 = vunpack.c.l.b16 %v303
    %v1236 = vunpack.c.h.b16 %v303
    %v1237 = vunpack.c.l.b16 %v304
    %v1238 = vunpack.c.h.b16 %v304
    %v1239 = vunpack.c.l.b16 %v305
    %v1240 = vunpack.c.l.b16 %v306
    %v1241 = vunpack.c.h.b16 %v306
    %v1242 = vunpack.c.l.b16 %v307
    %v1243 = vunpack.c.h.b16 %v307
    %v1244 = vunpack.c.l.b16 %v308
    %v1245 = vunpack.c.h.b16 %v308
    %v1246 = vunpack.c.l.b16 %v309
    %v1247 = vunpack.c.l.b16 %v310
    %v1248 = vunpack.c.h.b16 %v310
    %v1249 = vunpack.c.l.b16 %v311
    %v1250 = vunpack.c.h.b16 %v311
    %v1251 = vunpack.c.l.b16 %v312
    %v1252 = vunpack.c.h.b16 %v312
    %v1253 = vunpack.c.l.b16 %v313
    %v1254 = vunpack.c.l.b16 %v314
    %v1255 = vunpack.c.h.b16 %v314
    %v1256 = vunpack.c.l.b16 %v315
    %v1257 = vunpack.c.h.b16 %v315
    %v1258 = vunpack.c.l.b16 %v316
    %v1259 = vunpack.c.h.b16 %v316
    %v1260 = vunpack.c.l.b16 %v317
    %v1261 = vunpack.c.l.b16 %v318
    %v1262 = vunpack.c.h.b16 %v318
    %v1263 = vunpack.c.l.b16 %v319
    %v1264 = vunpack.c.h.b16 %v319
    %v1265 = vunpack.c.l.b16 %v320
    %v1266 = vunpack.c.h.b16 %v320
    %v1267 = vunpack.c.l.b16 %v321
    %v1268 = vunpack.c.l.b16 %v322
    %v1269 = vunpack.c.h.b16 %v322
    %v1270 = vunpack.c.l.b16 %v323
    %v1271 = vunpack.c.h.b16 %v323
    %v1272 = vunpack.c.l.b16 %v324
    %v1273 = vunpack.c.h.b16 %v324
    %v1274 = vunpack.c.l.b16 %v325
    %v1275 = vunpack.c.l.b16 %v326
    %v1276 = vunpack.c.h.b16 %v326
    %v1277 = vunpack.c.l.b16 %v327
    %v1278 = vunpack.c.h.b16 %v327
    %v1279 = vunpack.c.l.b16 %v328
    %v1280 = vunpack.c.h.b16 %v328
    %v1281 = vunpack.c.l.b16 %v329
    %v1282 = vunpack.c.l.b16 %v330
    %v1283 = vunpack.c.h.b16 %v330
    %v1284 = vunpack.c.l.b16 %v331
    %v1285 = vunpack.c.h.b16 %v331
    %v1286 = vunpack.c.l.b16 %v332
    %v1287 = vunpack.c.h.b16 %v332
    %v1288 = vunpack.c.l.b16 %v333
    %v1289 = vunpack.c.l.b16 %v334
    %v1290 = vunpack.c.h.b16 %v334
    %v1291 = vunpack.c.l.b16 %v335
    %v1292 = vunpack.c.h.b16 %v335
    %v1293 = vunpack.c.l.b16 %v336
    %v1294 = vunpack.c.h.b16 %v336
    %v1295 = vunpack.c.l.b16 %v337
    %v1296 = vunpack.c.l.b16 %v338
    %v1297 = vunpack.c.h.b16 %v338
    %v1298 = vunpack.c.l.b16 %v339
    %v1299 = vunpack.c.h.b16 %v339
    %v1300 = vunpack.c.l.b16 %v340
    %v1301 = vunpack.c.h.b16 %v340
    %v1302 = vunpack.c.l.b16 %v341
    %v1303 = vunpack.c.l.b16 %v342
    %v1304 = vunpack.c.h.b16 %v342
    %v1305 = vunpack.c.l.b16 %v343
    %v1306 = vunpack.c.h.b16 %v343
    %v1307 = vunpack.c.l.b16 %v344
    %v1308 = vunpack.c.h.b16 %v344
    %v1309 = vunpack.c.l.b16 %v345
    %v1310 = vunpack.c.l.b16 %v346
    %v1311 = vunpack.c.h.b16 %v346
    %v1312 = vunpack.c.l.b16 %v347
    %v1313 = vunpack.c.h.b16 %v347
    %v1314 = vunpack.c.l.b16 %v348
    %v1315 = vunpack.c.h.b16 %v348
    %v1316 = vunpack.c.l.b16 %v349
    %v1317 = vunpack.c.l.b16 %v350
    %v1318 = vunpack.c.h.b16 %v350
    %v1319 = vunpack.c.l.b16 %v351
    %v1320 = vunpack.c.h.b16 %v351
    %v1321 = vunpack.c.l.b16 %v352
    %v1322 = vunpack.c.h.b16 %v352
    %v1323 = vunpack.c.l.b16 %v353
    %v1324 = vunpack.c.l.b16 %v354
    %v1325 = vunpack.c.h.b16 %v354
    %v1326 = vunpack.c.l.b16 %v355
    %v1327 = vunpack.c.h.b16 %v355
    %v1328 = vunpack.c.l.b16 %v356
    %v1329 = vunpack.c.h.b16 %v356
    %v1330 = vunpack.c.l.b16 %v357
    %v1331 = vunpack.c.l.b16 %v358
    %v1332 = vunpack.c.h.b16 %v358
    %v1333 = vunpack.c.l.b16 %v359
    %v1334 = vunpack.c.h.b16 %v359
    %v1335 = vunpack.c.l.b16 %v360
    %v1336 = vunpack.c.h.b16 %v360
    %v1337 = vunpack.c.l.b16 %v361
    %v1338 = vunpack.c.l.b16 %v362
    %v1339 = vunpack.c.h.b16 %v362
    %v1340 = vunpack.c.l.b16 %v363
    %v1341 = vunpack.c.h.b16 %v363
    %v1342 = vunpack.c.l.b16 %v364
    %v1343 = vunpack.c.h.b16 %v364
    %v1344 = vunpack.c.l.b16 %v365
    %v1345 = vunpack.c.l.b16 %v366
    %v1346 = vunpack.c.h.b16 %v366
    %v1347 = vunpack.c.l.b16 %v367
    %v1348 = vunpack.c.h.b16 %v367
    %v1349 = vunpack.c.l.b16 %v368
    %v1350 = vunpack.c.h.b16 %v368
    %v1351 = vunpack.c.l.b16 %v369
    %v1352 = vunpack.c.l.b16 %v370
    %v1353 = vunpack.c.h.b16 %v370
    %v1354 = vunpack.c.l.b16 %v371
    %v1355 = vunpack.c.h.b16 %v371
    %v1356 = vunpack.c.l.b16 %v372
    %v1357 = vunpack.c.h.b16 %v372
    %v1358 = vunpack.c.l.b16 %v373
    %v1359 = vunpack.c.l.b16 %v374
    %v1360 = vunpack.c.h.b16 %v374
    %v1361 = vunpack.c.l.b16 %v375
    %v1362 = vunpack.c.h.b16 %v375
    %v1363 = vunpack.c.l.b16 %v376
    %v1364 = vunpack.c.h.b16 %v376
    %v1365 = vunpack.c.l.b16 %v377
    %v1366 = vunpack.c.l.b16 %v378
    %v1367 = vunpack.c.h.b16 %v378
    %v1368 = vunpack.c.l.b16 %v379
    %v1369 = vunpack.c.h.b16 %v379
    %v1370 = vunpack.c.l.b16 %v380
    %v1371 = vunpack.c.h.b16 %v380
    %v1372 = vunpack.c.l.b16 %v381
    %v1373 = vunpack.c.l.b16 %v382
    %v1374 = vunpack.c.h.b16 %v382
    %v1375 = vunpack.c.l.b16 %v383
    %v1376 = vunpack.c.h.b16 %v383
    %v1377 = vunpack.c.l.b16 %v384
    %v1378 = vunpack.c.h.b16 %v384
    %v1379 = vunpack.c.l.b16 %v385
    %v1380 = vunpack.c.l.b16 %v386
    %v1381 = vunpack.c.h.b16 %v386
    %v1382 = vunpack.c.l.b16 %v387
    %v1383 = vunpack.c.h.b16 %v387
    %v1384 = vunpack.c.l.b16 %v388
    %v1385 = vunpack.c.h.b16 %v388
    %v1386 = vunpack.c.l.b16 %v389
    %v1387 = vunpack.c.l.b16 %v390
    %v1388 = vunpack.c.h.b16 %v390
    %v1389 = vunpack.c.l.b16 %v391
    %v1390 = vunpack.c.h.b16 %v391
    %v1391 = vunpack.c.l.b16 %v392
    %v1392 = vunpack.c.h.b16 %v392
    %v1393 = vunpack.c.l.b16 %v393
    %v1394 = vunpack.c.l.b16 %v394
    %v1395 = vunpack.c.h.b16 %v394
    %v1396 = vunpack.c.l.b16 %v395
    %v1397 = vunpack.c.h.b16 %v395
    %v1398 = vunpack.c.l.b16 %v396
    %v1399 = vunpack.c.h.b16 %v396
    %v1400 = vunpack.c.l.b16 %v397
    %v1401 = vunpack.c.l.b16 %v398
    %v1402 = vunpack.c.h.b16 %v398
    %v1403 = vunpack.c.l.b16 %v399
    %v1404 = vunpack.c.h.b16 %v399
    %v1405 = vunpack.c.l.b16 %v400
    %v1406 = vunpack.c.h.b16 %v400
    %v1407 = vunpack.c.l.b16 %v401
    %v1408 = vunpack.c.l.b16 %v402
    %v1409 = vunpack.c.h.b16 %v402
    %v1410 = vunpack.c.l.b16 %v403
    %v1411 = vunpack.c.h.b16 %v403
    %v1412 = vunpack.c.l.b16 %v404
    %v1413 = vunpack.c.h.b16 %v404
    %v1414 = vunpack.c.l.b16 %v405
    %v1415 = vunpack.c.l.b16 %v406
    %v1416 = vunpack.c.h.b16 %v406
    %v1417 = vunpack.c.l.b16 %v407
    %v1418 = vunpack.c.h.b16 %v407
    %v1419 = vunpack.c.l.b16 %v408
    %v1420 = vunpack.c.h.b16 %v408
    %v1421 = vunpack.c.l.b16 %v409
    %v1422 = vunpack.c.l.b16 %v410
    %v1423 = vunpack.c.h.b16 %v410
    %v1424 = vunpack.c.l.b16 %v411
    %v1425 = vunpack.c.h.b16 %v411
    %v1426 = vunpack.c.l.b16 %v412
    %v1427 = vunpack.c.h.b16 %v412
    %v1428 = vunpack.c.l.b16 %v413
    %v1429 = vunpack.c.l.b16 %v414
    %v1430 = vunpack.c.h.b16 %v414
    %v1431 = vunpack.c.l.b16 %v415
    %v1432 = vunpack.c.h.b16 %v415
    %v1433 = vunpack.c.l.b16 %v416
    %v1434 = vunpack.c.h.b16 %v416
    %v1435 = vunpack.c.l.b16 %v417
    %v1436 = vunpack.c.l.b16 %v418
    %v1437 = vunpack.c.h.b16 %v418
    %v1438 = vunpack.c.l.b16 %v419
    %v1439 = vunpack.c.h.b16 %v419
    %v1440 = vunpack.c.l.b16 %v420
    %v1441 = vunpack.c.h.b16 %v420
    %v1442 = vunpack.c.l.b16 %v421
    %v1443 = vunpack.c.l.b16 %v422
    %v1444 = vunpack.c.h.b16 %v422
    %v1445 = vunpack.c.l.b16 %v423
    %v1446 = vunpack.c.h.b16 %v423
    %v1447 = vunpack.c.l.b16 %v424
    %v1448 = vunpack.c.h.b16 %v424
    %v1449 = vunpack.c.l.b16 %v425
    %v1450 = vunpack.c.l.b16 %v426
    %v1451 = vunpack.c.h.b16 %v426
    %v1452 = vunpack.c.l.b16 %v427
    %v1453 = vunpack.c.h.b16 %v427
    %v1454 = vunpack.c.l.b16 %v428
    %v1455 = vunpack.c.h.b16 %v428
    %v1456 = vunpack.c.l.b16 %v429
    %v1457 = vunpack.c.l.b16 %v430
    %v1458 = vunpack.c.h.b16 %v430
    %v1459 = vunpack.c.l.b16 %v431
    %v1460 = vunpack.c.h.b16 %v431
    %v1461 = vunpack.c.l.b16 %v432
    %v1462 = vunpack.c.h.b16 %v432
    %v1463 = vunpack.c.l.b16 %v433
    %v1464 = vunpack.c.l.b16 %v434
    %v1465 = vunpack.c.h.b16 %v434
    %v1466 = vunpack.c.l.b16 %v435
    %v1467 = vunpack.c.h.b16 %v435
    %v1468 = vunpack.c.l.b16 %v436
    %v1469 = vunpack.c.h.b16 %v436
    %v1470 = vunpack.c.l.b16 %v437
    %v1471 = vunpack.c.l.b16 %v438
    %v1472 = vunpack.c.h.b16 %v438
    %v1473 = vunpack.c.l.b16 %v439
    %v1474 = vunpack.c.h.b16 %v439
    %v1475 = vunpack.c.l.b16 %v440
    %v1476 = vunpack.c.h.b16 %v440
    %v1477 = vunpack.c.l.b16 %v441
    %v1478 = vunpack.c.l.b16 %v442
    %v1479 = vunpack.c.h.b16 %v442
    %v1480 = vunpack.c.l.b16 %v443
    %v1481 = vunpack.c.h.b16 %v443
    %v1482 = vunpack.c.l.b16 %v444
    %v1483 = vunpack.c.h.b16 %v444
    %v1484 = vunpack.c.l.b16 %v445
    %v1485 = vunpack.c.l.b16 %v446
    %v1486 = vunpack.c.h.b16 %v446
    %v1487 = vunpack.c.l.b16 %v447
    %v1488 = vunpack.c.h.b16 %v447
    %v1489 = vunpack.c.l.b16 %v448
    %v1490 = vunpack.c.h.b16 %v448
    %v1491 = vunpack.c.l.b16 %v449
    %v1492 = vunpack.c.l.b16 %v450
    %v1493 = vunpack.c.h.b16 %v450
    %v1494 = vunpack.c.l.b16 %v451
    %v1495 = vunpack.c.h.b16 %v451
    %v1496 = vunpack.c.l.b16 %v452
    %v1497 = vunpack.c.h.b16 %v452
    %v1498 = vunpack.c.l.b16 %v453
    %v1499 = vunpack.c.l.b16 %v454
    %v1500 = vunpack.c.h.b16 %v454
    %v1501 = vunpack.c.l.b16 %v455
    %v1502 = vunpack.c.h.b16 %v455
    %v1503 = vunpack.c.l.b16 %v456
    %v1504 = vunpack.c.h.b16 %v456
    %v1505 = vunpack.c.l.b16 %v457
    %v1506 = vunpack.c.l.b16 %v458
    %v1507 = vunpack.c.h.b16 %v458
    %v1508 = vunpack.c.l.b16 %v459
    %v1509 = vunpack.c.h.b16 %v459
    %v1510 = vunpack.c.l.b16 %v460
    %v1511 = vunpack.c.h.b16 %v460
    %v1512 = vunpack.c.l.b16 %v461
    %v1513 = vunpack.c.l.b16 %v462
    %v1514 = vunpack.c.h.b16 %v462
    %v1515 = vunpack.c.l.b16 %v463
    %v1516 = vunpack.c.h.b16 %v463
    %v1517 = vunpack.c.l.b16 %v464
    %v1518 = vunpack.c.h.b16 %v464
    %v1519 = vunpack.c.l.b16 %v465
    %v1520 = vunpack.c.l.b16 %v466
    %v1521 = vunpack.c.h.b16 %v466
    %v1522 = vunpack.c.l.b16 %v467
    %v1523 = vunpack.c.h.b16 %v467
    %v1524 = vunpack.c.l.b16 %v468
    %v1525 = vunpack.c.h.b16 %v468
    %v1526 = vunpack.c.l.b16 %v469
    %v1527 = vunpack.c.l.b16 %v470
    %v1528 = vunpack.c.h.b16 %v470
    %v1529 = vunpack.c.l.b16 %v471
    %v1530 = vunpack.c.h.b16 %v471
    %v1531 = vunpack.c.l.b16 %v472
    %v1532 = vunpack.c.h.b16 %v472
    %v1533 = vunpack.c.l.b16 %v473
    %v1534 = vunpack.c.l.b16 %v474
    %v1535 = vunpack.c.h.b16 %v474
    %v1536 = vunpack.c.l.b16 %v475
    %v1537 = vunpack.c.h.b16 %v475
    %v1538 = vunpack.c.l.b16 %v476
    %v1539 = vunpack.c.h.b16 %v476
    %v1540 = vunpack.c.l.b16 %v477
    %v1541 = vunpack.c.l.b16 %v478
    %v1542 = vunpack.c.h.b16 %v478
    %v1543 = vunpack.c.l.b16 %v479
    %v1544 = vunpack.c.h.b16 %v479
    %v1545 = vunpack.c.l.b16 %v480
    %v1546 = vunpack.c.h.b16 %v480
    %v1547 = vunpack.c.l.b16 %v481
    %v1548 = vunpack.c.l.b16 %v482
    %v1549 = vunpack.c.h.b16 %v482
    %v1550 = vunpack.c.l.b16 %v483
    %v1551 = vunpack.c.h.b16 %v483
    %v1552 = vunpack.c.l.b16 %v484
    %v1553 = vunpack.c.h.b16 %v484
    %v1554 = vunpack.c.l.b16 %v485
    %v1555 = vunpack.c.l.b16 %v486
    %v1556 = vunpack.c.h.b16 %v486
    %v1557 = vunpack.c.l.b16 %v487
    %v1558 = vunpack.c.h.b16 %v487
    %v1559 = vunpack.c.l.b16 %v488
    %v1560 = vunpack.c.h.b16 %v488
    %v1561 = vunpack.c.l.b16 %v489
    %v1562 = vunpack.c.l.b16 %v490
    %v1563 = vunpack.c.h.b16 %v490
    %v1564 = vunpack.c.l.b16 %v491
    %v1565 = vunpack.c.h.b16 %v491
    %v1566 = vunpack.c.l.b16 %v492
    %v1567 = vunpack.c.h.b16 %v492
    %v1568 = vunpack.c.l.b16 %v493
    %v1569 = vunpack.c.l.b16 %v494
    %v1570 = vunpack.c.h.b16 %v494
    %v1571 = vunpack.c.l.b16 %v495
    %v1572 = vunpack.c.h.b16 %v495
    %v1573 = vunpack.c.l.b16 %v496
    %v1574 = vunpack.c.h.b16 %v496
    %v1575 = vunpack.c.l.b16 %v497
    %v1576 = vpack.c.b16 %v897, %v890
    %v1577 = vpack.c.b16 %v898, %v891
    %v1578 = vpack.c.b16 %v899, %v892
    %v1579 = vpack.c.b16 %v900, %v893
    %v1580 = vpack.c.b16 %v901, %v894
    %v1581 = vpack.c.b16 %v902, %v895
    %v1582 = vpack.c.b16 %v903, %v896
    %v1583 = vpack.c.b16 %v911, %v904
    %v1584 = vpack.c.b16 %v912, %v905
    %v1585 = vpack.c.b16 %v913, %v906
    %v1586 = vpack.c.b16 %v914, %v907
    %v1587 = vpack.c.b16 %v915, %v908
    %v1588 = vpack.c.b16 %v916, %v909
    %v1589 = vpack.c.b16 %v917, %v910
    %v1590 = vpack.c.b16 %v925, %v918
    %v1591 = vpack.c.b16 %v926, %v919
    %v1592 = vpack.c.b16 %v927, %v920
    %v1593 = vpack.c.b16 %v928, %v921
    %v1594 = vpack.c.b16 %v929, %v922
    %v1595 = vpack.c.b16 %v930, %v923
    %v1596 = vpack.c.b16 %v931, %v924
    %v1597 = vpack.c.b16 %v939, %v932
    %v1598 = vpack.c.b16 %v940, %v933
    %v1599 = vpack.c.b16 %v941, %v934
    %v1600 = vpack.c.b16 %v942, %v935
    %v1601 = vpack.c.b16 %v943, %v936
    %v1602 = vpack.c.b16 %v944, %v937
    %v1603 = vpack.c.b16 %v945, %v938
    %v1604 = vpack.c.b16 %v953, %v946
    %v1605 = vpack.c.b16 %v954, %v947
    %v1606 = vpack.c.b16 %v955, %v948
    %v1607 = vpack.c.b16 %v956, %v949
    %v1608 = vpack.c.b16 %v957, %v950
    %v1609 = vpack.c.b16 %v958, %v951
    %v1610 = vpack.c.b16 %v959, %v952
    %v1611 = vpack.c.b16 %v967, %v960
    %v1612 = vpack.c.b16 %v968, %v961
    %v1613 = vpack.c.b16 %v969, %v962
    %v1614 = vpack.c.b16 %v970, %v963
    %v1615 = vpack.c.b16 %v971, %v964
    %v1616 = vpack.c.b16 %v972, %v965
    %v1617 = vpack.c.b16 %v973, %v966
    %v1618 = vpack.c.b16 %v981, %v974
    %v1619 = vpack.c.b16 %v982, %v975
    %v1620 = vpack.c.b16 %v983, %v976
    %v1621 = vpack.c.b16 %v984, %v977
    %v1622 = vpack.c.b16 %v985, %v978
    %v1623 = vpack.c.b16 %v986, %v979
    %v1624 = vpack.c.b16 %v987, %v980
    %v1625 = vpack.c.b16 %v995, %v988
    %v1626 = vpack.c.b16 %v996, %v989
    %v1627 = vpack.c.b16 %v997, %v990
    %v1628 = vpack.c.b16 %v998, %v991
    %v1629 = vpack.c.b16 %v999, %v992
    %v1630 = vpack.c.b16 %v1000, %v993
    %v1631 = vpack.c.b16 %v1001, %v994
    %v1632 = vpack.c.b16 %v1009, %v1002
    %v1633 = vpack.c.b16 %v1010, %v1003
    %v1634 = vpack.c.b16 %v1011, %v1004
    %v1635 = vpack.c.b16 %v1012, %v1005
    %v1636 = vpack.c.b16 %v1013, %v1006
    %v1637 = vpack.c.b16 %v1014, %v1007
    %v1638 = vpack.c.b16 %v1015, %v1008
    %v1639 = vpack.c.b16 %v1023, %v1016
    %v1640 = vpack.c.b16 %v1024, %v1017
    %v1641 = vpack.c.b16 %v1025, %v1018
    %v1642 = vpack.c.b16 %v1026, %v1019
    %v1643 = vpack.c.b16 %v1027, %v1020
    %v1644 = vpack.c.b16 %v1028, %v1021
    %v1645 = vpack.c.b16 %v1029, %v1022
    %v1646 = vpack.c.b16 %v1037, %v1030
    %v1647 = vpack.c.b16 %v1038, %v1031
    %v1648 = vpack.c.b16 %v1039, %v1032
    %v1649 = vpack.c.b16 %v1040, %v1033
    %v1650 = vpack.c.b16 %v1041, %v1034
    %v1651 = vpack.c.b16 %v1042, %v1035
    %v1652 = vpack.c.b16 %v1043, %v1036
    %v1653 = vpack.c.b16 %v1051, %v1044
    %v1654 = vpack.c.b16 %v1052, %v1045
    %v1655 = vpack.c.b16 %v1053, %v1046
    %v1656 = vpack.c.b16 %v1054, %v1047
    %v1657 = vpack.c.b16 %v1055, %v1048
    %v1658 = vpack.c.b16 %v1056, %v1049
    %v1659 = vpack.c.b16 %v1057, %v1050
    %v1660 = vpack.c.b16 %v1065, %v1058
    %v1661 = vpack.c.b16 %v1066, %v1059
    %v1662 = vpack.c.b16 %v1067, %v1060
    %v1663 = vpack.c.b16 %v1068, %v1061
    %v1664 = vpack.c.b16 %v1069, %v1062
    %v1665 = vpack.c.b16 %v1070, %v1063
    %v1666 = vpack.c.b16 %v1071, %v1064
    %v1667 = vpack.c.b16 %v1079, %v1072
    %v1668 = vpack.c.b16 %v1080, %v1073
    %v1669 = vpack.c.b16 %v1081, %v1074
    %v1670 = vpack.c.b16 %v1082, %v1075
    %v1671 = vpack.c.b16 %v1083, %v1076
    %v1672 = vpack.c.b16 %v1084, %v1077
    %v1673 = vpack.c.b16 %v1085, %v1078
    %v1674 = vpack.c.b16 %v1093, %v1086
    %v1675 = vpack.c.b16 %v1094, %v1087
    %v1676 = vpack.c.b16 %v1095, %v1088
    %v1677 = vpack.c.b16 %v1096, %v1089
    %v1678 = vpack.c.b16 %v1097, %v1090
    %v1679 = vpack.c.b16 %v1098, %v1091
    %v1680 = vpack.c.b16 %v1099, %v1092
    %v1681 = vpack.c.b16 %v1107, %v1100
    %v1682 = vpack.c.b16 %v1108, %v1101
    %v1683 = vpack.c.b16 %v1109, %v1102
    %v1684 = vpack.c.b16 %v1110, %v1103
    %v1685 = vpack.c.b16 %v1111, %v1104
    %v1686 = vpack.c.b16 %v1112, %v1105
    %v1687 = vpack.c.b16 %v1113, %v1106
    %v1688 = vpack.c.b16 %v1121, %v1114
    %v1689 = vpack.c.b16 %v1122, %v1115
    %v1690 = vpack.c.b16 %v1123, %v1116
    %v1691 = vpack.c.b16 %v1124, %v1117
    %v1692 = vpack.c.b16 %v1125, %v1118
    %v1693 = vpack.c.b16 %v1126, %v1119
    %v1694 = vpack.c.b16 %v1127, %v1120
    %v1695 = vpack.c.b16 %v1135, %v1128
    %v1696 = vpack.c.b16 %v1136, %v1129
    %v1697 = vpack.c.b16 %v1137, %v1130
    %v1698 = vpack.c.b16 %v1138, %v1131
    %v1699 = vpack.c.b16 %v1139, %v1132
    %v1700 = vpack.c.b16 %v1140, %v1133
    %v1701 = vpack.c.b16 %v1141, %v1134
    %v1702 = vpack.c.b16 %v1149, %v1142
    %v1703 = vpack.c.b16 %v1150, %v1143
    %v1704 = vpack.c.b16 %v1151, %v1144
    %v1705 = vpack.c.b16 %v1152, %v1145
    %v1706 = vpack.c.b16 %v1153, %v1146
    %v1707 = vpack.c.b16 %v1154, %v1147
    %v1708 = vpack.c.b16 %v1155, %v1148
    %v1709 = vpack.c.b16 %v1163, %v1156
    %v1710 = vpack.c.b16 %v1164, %v1157
    %v1711 = vpack.c.b16 %v1165, %v1158
    %v1712 = vpack.c.b16 %v1166, %v1159
    %v1713 = vpack.c.b16 %v1167, %v1160
    %v1714 = vpack.c.b16 %v1168, %v1161
    %v1715 = vpack.c.b16 %v1169, %v1162
    %v1716 = vpack.c.b16 %v1177, %v1170
    %v1717 = vpack.c.b16 %v1178, %v1171
    %v1718 = vpack.c.b16 %v1179, %v1172
    %v1719 = vpack.c.b16 %v1180, %v1173
    %v1720 = vpack.c.b16 %v1181, %v1174
    %v1721 = vpack.c.b16 %v1182, %v1175
    %v1722 = vpack.c.b16 %v1183, %v1176
    %v1723 = vpack.c.b16 %v1191, %v1184
    %v1724 = vpack.c.b16 %v1192, %v1185
    %v1725 = vpack.c.b16 %v1193, %v1186
    %v1726 = vpack.c.b16 %v1194, %v1187
    %v1727 = vpack.c.b16 %v1195, %v1188
    %v1728 = vpack.c.b16 %v1196, %v1189
    %v1729 = vpack.c.b16 %v1197, %v1190
    %v1730 = vpack.c.b16 %v1205, %v1198
    %v1731 = vpack.c.b16 %v1206, %v1199
    %v1732 = vpack.c.b16 %v1207, %v1200
    %v1733 = vpack.c.b16 %v1208, %v1201
    %v1734 = vpack.c.b16 %v1209, %v1202
    %v1735 = vpack.c.b16 %v1210, %v1203
    %v1736 = vpack.c.b16 %v1211, %v1204
    %v1737 = vpack.c.b16 %v1219, %v1212
    %v1738 = vpack.c.b16 %v1220, %v1213
    %v1739 = vpack.c.b16 %v1221, %v1214
    %v1740 = vpack.c.b16 %v1222, %v1215
    %v1741 = vpack.c.b16 %v1223, %v1216
    %v1742 = vpack.c.b16 %v1224, %v1217
    %v1743 = vpack.c.b16 %v1225, %v1218
    %v1744 = vpack.c.b16 %v1233, %v1226
    %v1745 = vpack.c.b16 %v1234, %v1227
    %v1746 = vpack.c.b16 %v1235, %v1228
    %v1747 = vpack.c.b16 %v1236, %v1229
    %v1748 = vpack.c.b16 %v1237, %v1230
    %v1749 = vpack.c.b16 %v1238, %v1231
    %v1750 = vpack.c.b16 %v1239, %v1232
    %v1751 = vpack.c.b16 %v1247, %v1240
    %v1752 = vpack.c.b16 %v1248, %v1241
    %v1753 = vpack.c.b16 %v1249, %v1242
    %v1754 = vpack.c.b16 %v1250, %v1243
    %v1755 = vpack.c.b16 %v1251, %v1244
    %v1756 = vpack.c.b16 %v1252, %v1245
    %v1757 = vpack.c.b16 %v1253, %v1246
    %v1758 = vpack.c.b16 %v1261, %v1254
    %v1759 = vpack.c.b16 %v1262, %v1255
    %v1760 = vpack.c.b16 %v1263, %v1256
    %v1761 = vpack.c.b16 %v1264, %v1257
    %v1762 = vpack.c.b16 %v1265, %v1258
    %v1763 = vpack.c.b16 %v1266, %v1259
    %v1764 = vpack.c.b16 %v1267, %v1260
    %v1765 = vpack.c.b16 %v1275, %v1268
    %v1766 = vpack.c.b16 %v1276, %v1269
    %v1767 = vpack.c.b16 %v1277, %v1270
    %v1768 = vpack.c.b16 %v1278, %v1271
    %v1769 = vpack.c.b16 %v1279, %v1272
    %v1770 = vpack.c.b16 %v1280, %v1273
    %v1771 = vpack.c.b16 %v1281, %v1274
    %v1772 = vpack.c.b16 %v1289, %v1282
    %v1773 = vpack.c.b16 %v1290, %v1283
    %v1774 = vpack.c.b16 %v1291, %v1284
    %v1775 = vpack.c.b16 %v1292, %v1285
    %v1776 = vpack.c.b16 %v1293, %v1286
    %v1777 = vpack.c.b16 %v1294, %v1287
    %v1778 = vpack.c.b16 %v1295, %v1288
    %v1779 = vpack.c.b16 %v1303, %v1296
    %v1780 = vpack.c.b16 %v1304, %v1297
    %v1781 = vpack.c.b16 %v1305, %v1298
    %v1782 = vpack.c.b16 %v1306, %v1299
    %v1783 = vpack.c.b16 %v1307, %v1300
    %v1784 = vpack.c.b16 %v1308, %v1301
    %v1785 = vpack.c.b16 %v1309, %v1302
    %v1786 = vpack.c.b16 %v1317, %v1310
    %v1787 = vpack.c.b16 %v1318, %v1311
    %v1788 = vpack.c.b16 %v1319, %v1312
    %v1789 = vpack.c.b16 %v1320, %v1313
    %v1790 = vpack.c.b16 %v1321, %v1314
    %v1791 = vpack.c.b16 %v1322, %v1315
    %v1792 = vpack.c.b16 %v1323, %v1316
    %v1793 = vpack.c.b16 %v1331, %v1324
    %v1794 = vpack.c.b16 %v1332, %v1325
    %v1795 = vpack.c.b16 %v1333, %v1326
    %v1796 = vpack.c.b16 %v1334, %v1327
    %v1797 = vpack.c.b16 %v1335, %v1328
    %v1798 = vpack.c.b16 %v1336, %v1329
    %v1799 = vpack.c.b16 %v1337, %v1330
    %v1800 = vpack.c.b16 %v1345, %v1338
    %v1801 = vpack.c.b16 %v1346, %v1339
    %v1802 = vpack.c.b16 %v1347, %v1340
    %v1803 = vpack.c.b16 %v1348, %v1341
    %v1804 = vpack.c.b16 %v1349, %v1342
    %v1805 = vpack.c.b16 %v1350, %v1343
    %v1806 = vpack.c.b16 %v1351, %v1344
    %v1807 = vpack.c.b16 %v1359, %v1352
    %v1808 = vpack.c.b16 %v1360, %v1353
    %v1809 = vpack.c.b16 %v1361, %v1354
    %v1810 = vpack.c.b16 %v1362, %v1355
    %v1811 = vpack.c.b16 %v1363, %v1356
    %v1812 = vpack.c.b16 %v1364, %v1357
    %v1813 = vpack.c.b16 %v1365, %v1358
    %v1814 = vpack.c.b16 %v1373, %v1366
    %v1815 = vpack.c.b16 %v1374, %v1367
    %v1816 = vpack.c.b16 %v1375, %v1368
    %v1817 = vpack.c.b16 %v1376, %v1369
    %v1818 = vpack.c.b16 %v1377, %v1370
    %v1819 = vpack.c.b16 %v1378, %v1371
    %v1820 = vpack.c.b16 %v1379, %v1372
    %v1821 = vpack.c.b16 %v1387, %v1380
    %v1822 = vpack.c.b16 %v1388, %v1381
    %v1823 = vpack.c.b16 %v1389, %v1382
    %v1824 = vpack.c.b16 %v1390, %v1383
    %v1825 = vpack.c.b16 %v1391, %v1384
    %v1826 = vpack.c.b16 %v1392, %v1385
    %v1827 = vpack.c.b16 %v1393, %v1386
    %v1828 = vpack.c.b16 %v1401, %v1394
    %v1829 = vpack.c.b16 %v1402, %v1395
    %v1830 = vpack.c.b16 %v1403, %v1396
    %v1831 = vpack.c.b16 %v1404, %v1397
    %v1832 = vpack.c.b16 %v1405, %v1398
    %v1833 = vpack.c.b16 %v1406, %v1399
    %v1834 = vpack.c.b16 %v1407, %v1400
    %v1835 = vpack.c.b16 %v1415, %v1408
    %v1836 = vpack.c.b16 %v1416, %v1409
    %v1837 = vpack.c.b16 %v1417, %v1410
    %v1838 = vpack.c.b16 %v1418, %v1411
    %v1839 = vpack.c.b16 %v1419, %v1412
    %v1840 = vpack.c.b16 %v1420, %v1413
    %v1841 = vpack.c.b16 %v1421, %v1414
    %v1842 = vpack.c.b16 %v1429, %v1422
    %v1843 = vpack.c.b16 %v1430, %v1423
    %v1844 = vpack.c.b16 %v1431, %v1424
    %v1845 = vpack.c.b16 %v1432, %v1425
    %v1846 = vpack.c.b16 %v1433, %v1426
    %v1847 = vpack.c.b16 %v1434, %v1427
    %v1848 = vpack.c.b16 %v1435, %v1428
    %v1849 = vpack.c.b16 %v1443, %v1436
    %v1850 = vpack.c.b16 %v1444, %v1437
    %v1851 = vpack.c.b16 %v1445, %v1438
    %v1852 = vpack.c.b16 %v1446, %v1439
    %v1853 = vpack.c.b16 %v1447, %v1440
    %v1854 = vpack.c.b16 %v1448, %v1441
    %v1855 = vpack.c.b16 %v1449, %v1442
    %v1856 = vpack.c.b16 %v1457, %v1450
    %v1857 = vpack.c.b16 %v1458, %v1451
    %v1858 = vpack.c.b16 %v1459, %v1452
    %v1859 = vpack.c.b16 %v1460, %v1453
    %v1860 = vpack.c.b16 %v1461, %v1454
    %v1861 = vpack.c.b16 %v1462, %v1455
    %v1862 = vpack.c.b16 %v1463, %v1456
    %v1863 = vpack.c.b16 %v1471, %v1464
    %v1864 = vpack.c.b16 %v1472, %v1465
    %v1865 = vpack.c.b16 %v1473, %v1466
    %v1866 = vpack.c.b16 %v1474, %v1467
    %v1867 = vpack.c.b16 %v1475, %v1468
    %v1868 = vpack.c.b16 %v1476, %v1469
    %v1869 = vpack.c.b16 %v1477, %v1470
    %v1870 = vpack.c.b16 %v1485, %v1478
    %v1871 = vpack.c.b16 %v1486, %v1479
    %v1872 = vpack.c.b16 %v1487, %v1480
    %v1873 = vpack.c.b16 %v1488, %v1481
    %v1874 = vpack.c.b16 %v1489, %v1482
    %v1875 = vpack.c.b16 %v1490, %v1483
    %v1876 = vpack.c.b16 %v1491, %v1484
    %v1877 = vpack.c.b16 %v1499, %v1492
    %v1878 = vpack.c.b16 %v1500, %v1493
    %v1879 = vpack.c.b16 %v1501, %v1494
    %v1880 = vpack.c.b16 %v1502, %v1495
    %v1881 = vpack.c.b16 %v1503, %v1496
    %v1882 = vpack.c.b16 %v1504, %v1497
    %v1883 = vpack.c.b16 %v1505, %v1498
    %v1884 = vpack.c.b16 %v1513, %v1506
    %v1885 = vpack.c.b16 %v1514, %v1507
    %v1886 = vpack.c.b16 %v1515, %v1508
    %v1887 = vpack.c.b16 %v1516, %v1509
    %v1888 = vpack.c.b16 %v1517, %v1510
    %v1889 = vpack.c.b16 %v1518, %v1511
    %v1890 = vpack.c.b16 %v1519, %v1512
    %v1891 = vpack.c.b16 %v1527, %v1520
    %v1892 = vpack.c.b16 %v1528, %v1521
    %v1893 = vpack.c.b16 %v1529, %v1522
    %v1894 = vpack.c.b16 %v1530, %v1523
    %v1895 = vpack.c.b16 %v1531, %v1524
    %v1896 = vpack.c.b16 %v1532, %v1525
    %v1897 = vpack.c.b16 %v1533, %v1526
    %v1898 = vpack.c.b16 %v1541, %v1534
    %v1899 = vpack.c.b16 %v1542, %v1535
    %v1900 = vpack.c.b16 %v1543, %v1536
    %v1901 = vpack.c.b16 %v1544, %v1537
    %v1902 = vpack.c.b16 %v1545, %v1538
    %v1903 = vpack.c.b16 %v1546, %v1539
    %v1904 = vpack.c.b16 %v1547, %v1540
    %v1905 = vpack.c.b16 %v1555, %v1548
    %v1906 = vpack.c.b16 %v1556, %v1549
    %v1907 = vpack.c.b16 %v1557, %v1550
    %v1908 = vpack.c.b16 %v1558, %v1551
    %v1909 = vpack.c.b16 %v1559, %v1552
    %v1910 = vpack.c.b16 %v1560, %v1553
    %v1911 = vpack.c.b16 %v1561, %v1554
    %v1912 = vpack.c.b16 %v1569, %v1562
    %v1913 = vpack.c.b16 %v1570, %v1563
    %v1914 = vpack.c.b16 %v1571, %v1564
    %v1915 = vpack.c.b16 %v1572, %v1565
    %v1916 = vpack.c.b16 %v1573, %v1566
    %v1917 = vpack.c.b16 %v1574, %v1567
    %v1918 = vpack.c.b16 %v1575, %v1568
    %vm2262 = vcmask 130048
    %v2264 = vsel %vm2262, %v105, 0
    %2266 = vmatprep.subr.bf16.mxu0 %v1626
    %2267 = vmatpush1.bf16.msra.mxu0 %v1625
    %2268 = vmatprep.subr.bf16.mxu0 %v1619
    %2269 = vmatpush1.bf16.msra.mxu0 %v1618
    %2270 = vmatprep.subr.bf16.mxu0 %v1612
    %2271 = vmatpush1.bf16.msra.mxu0 %v1611
    %2272 = vmatprep.subr.bf16.mxu0 %v1605
    %2273 = vmatpush1.bf16.msra.mxu0 %v1604
    %2274 = vmatprep.subr.bf16.mxu0 %v1598
    %2275 = vmatpush1.bf16.msra.mxu0 %v1597
    %2276 = vmatprep.subr.bf16.mxu0 %v1591
    %2277 = vmatpush1.bf16.msra.mxu0 %v1590
    %2278 = vmatprep.subr.bf16.mxu0 %v1584
    %2279 = vmatpush1.bf16.msra.mxu0 %v1583
    %2280 = vmatprep.subr.bf16.mxu0 %v1577
    %2281 = vmatpush1.bf16.msra.mxu0 %v1576
    %2282 = vmatprep.subr.bf16.mxu0 %v1682
    %2283 = vmatpush2.bf16.msra.mxu0 %v1681
    %2284 = vmatprep.subr.bf16.mxu0 %v1675
    %2285 = vmatpush2.bf16.msra.mxu0 %v1674
    %2286 = vmatprep.subr.bf16.mxu0 %v1668
    %2287 = vmatpush2.bf16.msra.mxu0 %v1667
    %2288 = vmatprep.subr.bf16.mxu0 %v1661
    %2289 = vmatpush2.bf16.msra.mxu0 %v1660
    %2290 = vmatprep.subr.bf16.mxu0 %v1654
    %2291 = vmatpush2.bf16.msra.mxu0 %v1653
    %2292 = vmatprep.subr.bf16.mxu0 %v1647
    %2293 = vmatpush2.bf16.msra.mxu0 %v1646
    %2294 = vmatprep.subr.bf16.mxu0 %v1640
    %2295 = vmatpush2.bf16.msra.mxu0 %v1639
    %2296 = vmatprep.subr.bf16.mxu0 %v1633
    %2297 = vmatpush2.bf16.msra.mxu0 %v1632
    %2298 = vmatprep.mubr.bf16.mxu0 %v100
    %2299 = vmatmul.mubr.bf16.gmra.mxu0 %v99
    %v2300 = vpop.f32.mrf.mxu0
    %v2301 = vadd.f32 0.0, %v2300
    %v2302 = vpop.f32.mrf.mxu0
    %v2303 = vadd.f32 0.0, %v2302
    %v2304 = vpop.f32.mrf.mxu0
    %v2305 = vpop.f32.mrf.mxu0
    %2306 = vdwg.mxu0
    %2307 = vmatprep.subr.bf16.mxu0 %v1738
    %2308 = vmatpush1.bf16.msra.mxu0 %v1737
    %2309 = vmatprep.subr.bf16.mxu0 %v1731
    %2310 = vmatpush1.bf16.msra.mxu0 %v1730
    %2311 = vmatprep.subr.bf16.mxu0 %v1724
    %2312 = vmatpush1.bf16.msra.mxu0 %v1723
    %2313 = vmatprep.subr.bf16.mxu0 %v1717
    %2314 = vmatpush1.bf16.msra.mxu0 %v1716
    %2315 = vmatprep.subr.bf16.mxu0 %v1710
    %2316 = vmatpush1.bf16.msra.mxu0 %v1709
    %2317 = vmatprep.subr.bf16.mxu0 %v1703
    %2318 = vmatpush1.bf16.msra.mxu0 %v1702
    %2319 = vmatprep.subr.bf16.mxu0 %v1696
    %2320 = vmatpush1.bf16.msra.mxu0 %v1695
    %2321 = vmatprep.subr.bf16.mxu0 %v1689
    %2322 = vmatpush1.bf16.msra.mxu0 %v1688
    %2323 = vmatprep.subr.bf16.mxu0 %v1794
    %2324 = vmatpush2.bf16.msra.mxu0 %v1793
    %2325 = vmatprep.subr.bf16.mxu0 %v1787
    %2326 = vmatpush2.bf16.msra.mxu0 %v1786
    %2327 = vmatprep.subr.bf16.mxu0 %v1780
    %2328 = vmatpush2.bf16.msra.mxu0 %v1779
    %2329 = vmatprep.subr.bf16.mxu0 %v1773
    %2330 = vmatpush2.bf16.msra.mxu0 %v1772
    %2331 = vmatprep.subr.bf16.mxu0 %v1766
    %2332 = vmatpush2.bf16.msra.mxu0 %v1765
    %2333 = vmatprep.subr.bf16.mxu0 %v1759
    %2334 = vmatpush2.bf16.msra.mxu0 %v1758
    %2335 = vmatprep.subr.bf16.mxu0 %v1752
    %2336 = vmatpush2.bf16.msra.mxu0 %v1751
    %2337 = vmatprep.subr.bf16.mxu0 %v1745
    %2338 = vmatpush2.bf16.msra.mxu0 %v1744
    %2339 = vmatprep.mubr.bf16.mxu0 %v102
    %2340 = vmatmul.mubr.bf16.gmra.mxu0 %v101
    %v2341 = vpop.f32.mrf.mxu0
    %v2342 = vadd.f32 %v2301, %v2341
    %v2343 = vpop.f32.mrf.mxu0
    %v2344 = vadd.f32 %v2303, %v2343
    %v2345 = vpop.f32.mrf.mxu0
    %v2346 = vpop.f32.mrf.mxu0
    %2347 = vdwg.mxu0
    %2348 = vmatprep.subr.bf16.mxu0 %v1850
    %2349 = vmatpush1.bf16.msra.mxu0 %v1849
    %2350 = vmatprep.subr.bf16.mxu0 %v1843
    %2351 = vmatpush1.bf16.msra.mxu0 %v1842
    %2352 = vmatprep.subr.bf16.mxu0 %v1836
    %2353 = vmatpush1.bf16.msra.mxu0 %v1835
    %2354 = vmatprep.subr.bf16.mxu0 %v1829
    %2355 = vmatpush1.bf16.msra.mxu0 %v1828
    %2356 = vmatprep.subr.bf16.mxu0 %v1822
    %2357 = vmatpush1.bf16.msra.mxu0 %v1821
    %2358 = vmatprep.subr.bf16.mxu0 %v1815
    %2359 = vmatpush1.bf16.msra.mxu0 %v1814
    %2360 = vmatprep.subr.bf16.mxu0 %v1808
    %2361 = vmatpush1.bf16.msra.mxu0 %v1807
    %2362 = vmatprep.subr.bf16.mxu0 %v1801
    %2363 = vmatpush1.bf16.msra.mxu0 %v1800
    %2364 = vmatprep.subr.bf16.mxu0 %v1906
    %2365 = vmatpush2.bf16.msra.mxu0 %v1905
    %2366 = vmatprep.subr.bf16.mxu0 %v1899
    %2367 = vmatpush2.bf16.msra.mxu0 %v1898
    %2368 = vmatprep.subr.bf16.mxu0 %v1892
    %2369 = vmatpush2.bf16.msra.mxu0 %v1891
    %2370 = vmatprep.subr.bf16.mxu0 %v1885
    %2371 = vmatpush2.bf16.msra.mxu0 %v1884
    %2372 = vmatprep.subr.bf16.mxu0 %v1878
    %2373 = vmatpush2.bf16.msra.mxu0 %v1877
    %2374 = vmatprep.subr.bf16.mxu0 %v1871
    %2375 = vmatpush2.bf16.msra.mxu0 %v1870
    %2376 = vmatprep.subr.bf16.mxu0 %v1864
    %2377 = vmatpush2.bf16.msra.mxu0 %v1863
    %2378 = vmatprep.subr.bf16.mxu0 %v1857
    %2379 = vmatpush2.bf16.msra.mxu0 %v1856
    %2380 = vmatprep.mubr.bf16.mxu0 %v104
    %2381 = vmatmul.mubr.bf16.gmra.mxu0 %v103
    %v2382 = vpop.f32.mrf.mxu0
    %v2383 = vadd.f32 %v2342, %v2382
    %v2384 = vpop.f32.mrf.mxu0
    %v2385 = vadd.f32 %v2344, %v2384
    %v2386 = vpop.f32.mrf.mxu0
    %v2387 = vpop.f32.mrf.mxu0
    %2388 = vdwg.mxu0
    %2389 = vmatprep.subr.bf16.mxu0 0
    %2390 = vmatpush1.bf16.msra.mxu0 0
    %2391 = vmatprep.subr.bf16.mxu0 0
    %2392 = vmatpush1.bf16.msra.mxu0 0
    %2393 = vmatprep.subr.bf16.mxu0 0
    %2394 = vmatpush1.bf16.msra.mxu0 0
    %2395 = vmatprep.subr.bf16.mxu0 0
    %2396 = vmatpush1.bf16.msra.mxu0 0
    %2397 = vmatprep.subr.bf16.mxu0 0
    %2398 = vmatpush1.bf16.msra.mxu0 0
    %2399 = vmatprep.subr.bf16.mxu0 0
    %2400 = vmatpush1.bf16.msra.mxu0 0
    %2401 = vmatprep.subr.bf16.mxu0 0
    %2402 = vmatpush1.bf16.msra.mxu0 0
    %2403 = vmatprep.subr.bf16.mxu0 %v1913
    %2404 = vmatpush1.bf16.msra.mxu0 %v1912
    %2405 = vmatprep.subr.bf16.mxu0 0
    %2406 = vmatpush2.bf16.msra.mxu0 0
    %2407 = vmatprep.subr.bf16.mxu0 0
    %2408 = vmatpush2.bf16.msra.mxu0 0
    %2409 = vmatprep.subr.bf16.mxu0 0
    %2410 = vmatpush2.bf16.msra.mxu0 0
    %2411 = vmatprep.subr.bf16.mxu0 0
    %2412 = vmatpush2.bf16.msra.mxu0 0
    %2413 = vmatprep.subr.bf16.mxu0 0
    %2414 = vmatpush2.bf16.msra.mxu0 0
    %2415 = vmatprep.subr.bf16.mxu0 0
    %2416 = vmatpush2.bf16.msra.mxu0 0
    %2417 = vmatprep.subr.bf16.mxu0 0
    %2418 = vmatpush2.bf16.msra.mxu0 0
    %2419 = vmatprep.subr.bf16.mxu0 0
    %2420 = vmatpush2.bf16.msra.mxu0 0
    %2421 = vmatprep.mubr.bf16.mxu0 0
    %2422 = vmatmul.mubr.bf16.gmra.mxu0 %v2264
    %v2423 = vpop.f32.mrf.mxu0
    %v2424 = vadd.f32 %v2383, %v2423
    %v2425 = vpop.f32.mrf.mxu0
    %v2426 = vadd.f32 %v2385, %v2425
    %v2427 = vpop.f32.mrf.mxu0
    %v2428 = vpop.f32.mrf.mxu0
    %2429 = vdwg.mxu0
    %2430 = vmatprep.subr.bf16.mxu0 %v1628
    %2431 = vmatpush1.bf16.msra.mxu0 %v1627
    %2432 = vmatprep.subr.bf16.mxu0 %v1621
    %2433 = vmatpush1.bf16.msra.mxu0 %v1620
    %2434 = vmatprep.subr.bf16.mxu0 %v1614
    %2435 = vmatpush1.bf16.msra.mxu0 %v1613
    %2436 = vmatprep.subr.bf16.mxu0 %v1607
    %2437 = vmatpush1.bf16.msra.mxu0 %v1606
    %2438 = vmatprep.subr.bf16.mxu0 %v1600
    %2439 = vmatpush1.bf16.msra.mxu0 %v1599
    %2440 = vmatprep.subr.bf16.mxu0 %v1593
    %2441 = vmatpush1.bf16.msra.mxu0 %v1592
    %2442 = vmatprep.subr.bf16.mxu0 %v1586
    %2443 = vmatpush1.bf16.msra.mxu0 %v1585
    %2444 = vmatprep.subr.bf16.mxu0 %v1579
    %2445 = vmatpush1.bf16.msra.mxu0 %v1578
    %2446 = vmatprep.subr.bf16.mxu0 %v1684
    %2447 = vmatpush2.bf16.msra.mxu0 %v1683
    %2448 = vmatprep.subr.bf16.mxu0 %v1677
    %2449 = vmatpush2.bf16.msra.mxu0 %v1676
    %2450 = vmatprep.subr.bf16.mxu0 %v1670
    %2451 = vmatpush2.bf16.msra.mxu0 %v1669
    %2452 = vmatprep.subr.bf16.mxu0 %v1663
    %2453 = vmatpush2.bf16.msra.mxu0 %v1662
    %2454 = vmatprep.subr.bf16.mxu0 %v1656
    %2455 = vmatpush2.bf16.msra.mxu0 %v1655
    %2456 = vmatprep.subr.bf16.mxu0 %v1649
    %2457 = vmatpush2.bf16.msra.mxu0 %v1648
    %2458 = vmatprep.subr.bf16.mxu0 %v1642
    %2459 = vmatpush2.bf16.msra.mxu0 %v1641
    %2460 = vmatprep.subr.bf16.mxu0 %v1635
    %2461 = vmatpush2.bf16.msra.mxu0 %v1634
    %2462 = vmatprep.mubr.bf16.mxu0 %v100
    %2463 = vmatmul.mubr.bf16.gmra.mxu0 %v99
    %v2464 = vpop.f32.mrf.mxu0
    %v2465 = vadd.f32 0.0, %v2464
    %v2466 = vpop.f32.mrf.mxu0
    %v2467 = vadd.f32 0.0, %v2466
    %v2468 = vpop.f32.mrf.mxu0
    %v2469 = vpop.f32.mrf.mxu0
    %2470 = vdwg.mxu0
    %2471 = vmatprep.subr.bf16.mxu0 %v1740
    %2472 = vmatpush1.bf16.msra.mxu0 %v1739
    %2473 = vmatprep.subr.bf16.mxu0 %v1733
    %2474 = vmatpush1.bf16.msra.mxu0 %v1732
    %2475 = vmatprep.subr.bf16.mxu0 %v1726
    %2476 = vmatpush1.bf16.msra.mxu0 %v1725
    %2477 = vmatprep.subr.bf16.mxu0 %v1719
    %2478 = vmatpush1.bf16.msra.mxu0 %v1718
    %2479 = vmatprep.subr.bf16.mxu0 %v1712
    %2480 = vmatpush1.bf16.msra.mxu0 %v1711
    %2481 = vmatprep.subr.bf16.mxu0 %v1705
    %2482 = vmatpush1.bf16.msra.mxu0 %v1704
    %2483 = vmatprep.subr.bf16.mxu0 %v1698
    %2484 = vmatpush1.bf16.msra.mxu0 %v1697
    %2485 = vmatprep.subr.bf16.mxu0 %v1691
    %2486 = vmatpush1.bf16.msra.mxu0 %v1690
    %2487 = vmatprep.subr.bf16.mxu0 %v1796
    %2488 = vmatpush2.bf16.msra.mxu0 %v1795
    %2489 = vmatprep.subr.bf16.mxu0 %v1789
    %2490 = vmatpush2.bf16.msra.mxu0 %v1788
    %2491 = vmatprep.subr.bf16.mxu0 %v1782
    %2492 = vmatpush2.bf16.msra.mxu0 %v1781
    %2493 = vmatprep.subr.bf16.mxu0 %v1775
    %2494 = vmatpush2.bf16.msra.mxu0 %v1774
    %2495 = vmatprep.subr.bf16.mxu0 %v1768
    %2496 = vmatpush2.bf16.msra.mxu0 %v1767
    %2497 = vmatprep.subr.bf16.mxu0 %v1761
    %2498 = vmatpush2.bf16.msra.mxu0 %v1760
    %2499 = vmatprep.subr.bf16.mxu0 %v1754
    %2500 = vmatpush2.bf16.msra.mxu0 %v1753
    %2501 = vmatprep.subr.bf16.mxu0 %v1747
    %2502 = vmatpush2.bf16.msra.mxu0 %v1746
    %2503 = vmatprep.mubr.bf16.mxu0 %v102
    %2504 = vmatmul.mubr.bf16.gmra.mxu0 %v101
    %v2505 = vpop.f32.mrf.mxu0
    %v2506 = vadd.f32 %v2465, %v2505
    %v2507 = vpop.f32.mrf.mxu0
    %v2508 = vadd.f32 %v2467, %v2507
    %v2509 = vpop.f32.mrf.mxu0
    %v2510 = vpop.f32.mrf.mxu0
    %2511 = vdwg.mxu0
    %2512 = vmatprep.subr.bf16.mxu0 %v1852
    %2513 = vmatpush1.bf16.msra.mxu0 %v1851
    %2514 = vmatprep.subr.bf16.mxu0 %v1845
    %2515 = vmatpush1.bf16.msra.mxu0 %v1844
    %2516 = vmatprep.subr.bf16.mxu0 %v1838
    %2517 = vmatpush1.bf16.msra.mxu0 %v1837
    %2518 = vmatprep.subr.bf16.mxu0 %v1831
    %2519 = vmatpush1.bf16.msra.mxu0 %v1830
    %2520 = vmatprep.subr.bf16.mxu0 %v1824
    %2521 = vmatpush1.bf16.msra.mxu0 %v1823
    %2522 = vmatprep.subr.bf16.mxu0 %v1817
    %2523 = vmatpush1.bf16.msra.mxu0 %v1816
    %2524 = vmatprep.subr.bf16.mxu0 %v1810
    %2525 = vmatpush1.bf16.msra.mxu0 %v1809
    %2526 = vmatprep.subr.bf16.mxu0 %v1803
    %2527 = vmatpush1.bf16.msra.mxu0 %v1802
    %2528 = vmatprep.subr.bf16.mxu0 %v1908
    %2529 = vmatpush2.bf16.msra.mxu0 %v1907
    %2530 = vmatprep.subr.bf16.mxu0 %v1901
    %2531 = vmatpush2.bf16.msra.mxu0 %v1900
    %2532 = vmatprep.subr.bf16.mxu0 %v1894
    %2533 = vmatpush2.bf16.msra.mxu0 %v1893
    %2534 = vmatprep.subr.bf16.mxu0 %v1887
    %2535 = vmatpush2.bf16.msra.mxu0 %v1886
    %2536 = vmatprep.subr.bf16.mxu0 %v1880
    %2537 = vmatpush2.bf16.msra.mxu0 %v1879
    %2538 = vmatprep.subr.bf16.mxu0 %v1873
    %2539 = vmatpush2.bf16.msra.mxu0 %v1872
    %2540 = vmatprep.subr.bf16.mxu0 %v1866
    %2541 = vmatpush2.bf16.msra.mxu0 %v1865
    %2542 = vmatprep.subr.bf16.mxu0 %v1859
    %2543 = vmatpush2.bf16.msra.mxu0 %v1858
    %2544 = vmatprep.mubr.bf16.mxu0 %v104
    %2545 = vmatmul.mubr.bf16.gmra.mxu0 %v103
    %v2546 = vpop.f32.mrf.mxu0
    %v2547 = vadd.f32 %v2506, %v2546
    %v2548 = vpop.f32.mrf.mxu0
    %v2549 = vadd.f32 %v2508, %v2548
    %v2550 = vpop.f32.mrf.mxu0
    %v2551 = vpop.f32.mrf.mxu0
    %2552 = vdwg.mxu0
    %2553 = vmatprep.subr.bf16.mxu0 0
    %2554 = vmatpush1.bf16.msra.mxu0 0
    %2555 = vmatprep.subr.bf16.mxu0 0
    %2556 = vmatpush1.bf16.msra.mxu0 0
    %2557 = vmatprep.subr.bf16.mxu0 0
    %2558 = vmatpush1.bf16.msra.mxu0 0
    %2559 = vmatprep.subr.bf16.mxu0 0
    %2560 = vmatpush1.bf16.msra.mxu0 0
    %2561 = vmatprep.subr.bf16.mxu0 0
    %2562 = vmatpush1.bf16.msra.mxu0 0
    %2563 = vmatprep.subr.bf16.mxu0 0
    %2564 = vmatpush1.bf16.msra.mxu0 0
    %2565 = vmatprep.subr.bf16.mxu0 0
    %2566 = vmatpush1.bf16.msra.mxu0 0
    %2567 = vmatprep.subr.bf16.mxu0 %v1915
    %2568 = vmatpush1.bf16.msra.mxu0 %v1914
    %2569 = vmatprep.subr.bf16.mxu0 0
    %2570 = vmatpush2.bf16.msra.mxu0 0
    %2571 = vmatprep.subr.bf16.mxu0 0
    %2572 = vmatpush2.bf16.msra.mxu0 0
    %2573 = vmatprep.subr.bf16.mxu0 0
    %2574 = vmatpush2.bf16.msra.mxu0 0
    %2575 = vmatprep.subr.bf16.mxu0 0
    %2576 = vmatpush2.bf16.msra.mxu0 0
    %2577 = vmatprep.subr.bf16.mxu0 0
    %2578 = vmatpush2.bf16.msra.mxu0 0
    %2579 = vmatprep.subr.bf16.mxu0 0
    %2580 = vmatpush2.bf16.msra.mxu0 0
    %2581 = vmatprep.subr.bf16.mxu0 0
    %2582 = vmatpush2.bf16.msra.mxu0 0
    %2583 = vmatprep.subr.bf16.mxu0 0
    %2584 = vmatpush2.bf16.msra.mxu0 0
    %2585 = vmatprep.mubr.bf16.mxu0 0
    %2586 = vmatmul.mubr.bf16.gmra.mxu0 %v2264
    %v2587 = vpop.f32.mrf.mxu0
    %v2588 = vadd.f32 %v2547, %v2587
    %v2589 = vpop.f32.mrf.mxu0
    %v2590 = vadd.f32 %v2549, %v2589
    %v2591 = vpop.f32.mrf.mxu0
    %v2592 = vpop.f32.mrf.mxu0
    %2593 = vdwg.mxu0
    %2594 = vmatprep.subr.bf16.mxu0 %v1630
    %2595 = vmatpush1.bf16.msra.mxu0 %v1629
    %2596 = vmatprep.subr.bf16.mxu0 %v1623
    %2597 = vmatpush1.bf16.msra.mxu0 %v1622
    %2598 = vmatprep.subr.bf16.mxu0 %v1616
    %2599 = vmatpush1.bf16.msra.mxu0 %v1615
    %2600 = vmatprep.subr.bf16.mxu0 %v1609
    %2601 = vmatpush1.bf16.msra.mxu0 %v1608
    %2602 = vmatprep.subr.bf16.mxu0 %v1602
    %2603 = vmatpush1.bf16.msra.mxu0 %v1601
    %2604 = vmatprep.subr.bf16.mxu0 %v1595
    %2605 = vmatpush1.bf16.msra.mxu0 %v1594
    %2606 = vmatprep.subr.bf16.mxu0 %v1588
    %2607 = vmatpush1.bf16.msra.mxu0 %v1587
    %2608 = vmatprep.subr.bf16.mxu0 %v1581
    %2609 = vmatpush1.bf16.msra.mxu0 %v1580
    %2610 = vmatprep.subr.bf16.mxu0 %v1686
    %2611 = vmatpush2.bf16.msra.mxu0 %v1685
    %2612 = vmatprep.subr.bf16.mxu0 %v1679
    %2613 = vmatpush2.bf16.msra.mxu0 %v1678
    %2614 = vmatprep.subr.bf16.mxu0 %v1672
    %2615 = vmatpush2.bf16.msra.mxu0 %v1671
    %2616 = vmatprep.subr.bf16.mxu0 %v1665
    %2617 = vmatpush2.bf16.msra.mxu0 %v1664
    %2618 = vmatprep.subr.bf16.mxu0 %v1658
    %2619 = vmatpush2.bf16.msra.mxu0 %v1657
    %2620 = vmatprep.subr.bf16.mxu0 %v1651
    %2621 = vmatpush2.bf16.msra.mxu0 %v1650
    %2622 = vmatprep.subr.bf16.mxu0 %v1644
    %2623 = vmatpush2.bf16.msra.mxu0 %v1643
    %2624 = vmatprep.subr.bf16.mxu0 %v1637
    %2625 = vmatpush2.bf16.msra.mxu0 %v1636
    %2626 = vmatprep.mubr.bf16.mxu0 %v100
    %2627 = vmatmul.mubr.bf16.gmra.mxu0 %v99
    %v2628 = vpop.f32.mrf.mxu0
    %v2629 = vadd.f32 0.0, %v2628
    %v2630 = vpop.f32.mrf.mxu0
    %v2631 = vadd.f32 0.0, %v2630
    %v2632 = vpop.f32.mrf.mxu0
    %v2633 = vpop.f32.mrf.mxu0
    %2634 = vdwg.mxu0
    %2635 = vmatprep.subr.bf16.mxu0 %v1742
    %2636 = vmatpush1.bf16.msra.mxu0 %v1741
    %2637 = vmatprep.subr.bf16.mxu0 %v1735
    %2638 = vmatpush1.bf16.msra.mxu0 %v1734
    %2639 = vmatprep.subr.bf16.mxu0 %v1728
    %2640 = vmatpush1.bf16.msra.mxu0 %v1727
    %2641 = vmatprep.subr.bf16.mxu0 %v1721
    %2642 = vmatpush1.bf16.msra.mxu0 %v1720
    %2643 = vmatprep.subr.bf16.mxu0 %v1714
    %2644 = vmatpush1.bf16.msra.mxu0 %v1713
    %2645 = vmatprep.subr.bf16.mxu0 %v1707
    %2646 = vmatpush1.bf16.msra.mxu0 %v1706
    %2647 = vmatprep.subr.bf16.mxu0 %v1700
    %2648 = vmatpush1.bf16.msra.mxu0 %v1699
    %2649 = vmatprep.subr.bf16.mxu0 %v1693
    %2650 = vmatpush1.bf16.msra.mxu0 %v1692
    %2651 = vmatprep.subr.bf16.mxu0 %v1798
    %2652 = vmatpush2.bf16.msra.mxu0 %v1797
    %2653 = vmatprep.subr.bf16.mxu0 %v1791
    %2654 = vmatpush2.bf16.msra.mxu0 %v1790
    %2655 = vmatprep.subr.bf16.mxu0 %v1784
    %2656 = vmatpush2.bf16.msra.mxu0 %v1783
    %2657 = vmatprep.subr.bf16.mxu0 %v1777
    %2658 = vmatpush2.bf16.msra.mxu0 %v1776
    %2659 = vmatprep.subr.bf16.mxu0 %v1770
    %2660 = vmatpush2.bf16.msra.mxu0 %v1769
    %2661 = vmatprep.subr.bf16.mxu0 %v1763
    %2662 = vmatpush2.bf16.msra.mxu0 %v1762
    %2663 = vmatprep.subr.bf16.mxu0 %v1756
    %2664 = vmatpush2.bf16.msra.mxu0 %v1755
    %2665 = vmatprep.subr.bf16.mxu0 %v1749
    %2666 = vmatpush2.bf16.msra.mxu0 %v1748
    %2667 = vmatprep.mubr.bf16.mxu0 %v102
    %2668 = vmatmul.mubr.bf16.gmra.mxu0 %v101
    %v2669 = vpop.f32.mrf.mxu0
    %v2670 = vadd.f32 %v2629, %v2669
    %v2671 = vpop.f32.mrf.mxu0
    %v2672 = vadd.f32 %v2631, %v2671
    %v2673 = vpop.f32.mrf.mxu0
    %v2674 = vpop.f32.mrf.mxu0
    %2675 = vdwg.mxu0
    %2676 = vmatprep.subr.bf16.mxu0 %v1854
    %2677 = vmatpush1.bf16.msra.mxu0 %v1853
    %2678 = vmatprep.subr.bf16.mxu0 %v1847
    %2679 = vmatpush1.bf16.msra.mxu0 %v1846
    %2680 = vmatprep.subr.bf16.mxu0 %v1840
    %2681 = vmatpush1.bf16.msra.mxu0 %v1839
    %2682 = vmatprep.subr.bf16.mxu0 %v1833
    %2683 = vmatpush1.bf16.msra.mxu0 %v1832
    %2684 = vmatprep.subr.bf16.mxu0 %v1826
    %2685 = vmatpush1.bf16.msra.mxu0 %v1825
    %2686 = vmatprep.subr.bf16.mxu0 %v1819
    %2687 = vmatpush1.bf16.msra.mxu0 %v1818
    %2688 = vmatprep.subr.bf16.mxu0 %v1812
    %2689 = vmatpush1.bf16.msra.mxu0 %v1811
    %2690 = vmatprep.subr.bf16.mxu0 %v1805
    %2691 = vmatpush1.bf16.msra.mxu0 %v1804
    %2692 = vmatprep.subr.bf16.mxu0 %v1910
    %2693 = vmatpush2.bf16.msra.mxu0 %v1909
    %2694 = vmatprep.subr.bf16.mxu0 %v1903
    %2695 = vmatpush2.bf16.msra.mxu0 %v1902
    %2696 = vmatprep.subr.bf16.mxu0 %v1896
    %2697 = vmatpush2.bf16.msra.mxu0 %v1895
    %2698 = vmatprep.subr.bf16.mxu0 %v1889
    %2699 = vmatpush2.bf16.msra.mxu0 %v1888
    %2700 = vmatprep.subr.bf16.mxu0 %v1882
    %2701 = vmatpush2.bf16.msra.mxu0 %v1881
    %2702 = vmatprep.subr.bf16.mxu0 %v1875
    %2703 = vmatpush2.bf16.msra.mxu0 %v1874
    %2704 = vmatprep.subr.bf16.mxu0 %v1868
    %2705 = vmatpush2.bf16.msra.mxu0 %v1867
    %2706 = vmatprep.subr.bf16.mxu0 %v1861
    %2707 = vmatpush2.bf16.msra.mxu0 %v1860
    %2708 = vmatprep.mubr.bf16.mxu0 %v104
    %2709 = vmatmul.mubr.bf16.gmra.mxu0 %v103
    %v2710 = vpop.f32.mrf.mxu0
    %v2711 = vadd.f32 %v2670, %v2710
    %v2712 = vpop.f32.mrf.mxu0
    %v2713 = vadd.f32 %v2672, %v2712
    %v2714 = vpop.f32.mrf.mxu0
    %v2715 = vpop.f32.mrf.mxu0
    %2716 = vdwg.mxu0
    %2717 = vmatprep.subr.bf16.mxu0 0
    %2718 = vmatpush1.bf16.msra.mxu0 0
    %2719 = vmatprep.subr.bf16.mxu0 0
    %2720 = vmatpush1.bf16.msra.mxu0 0
    %2721 = vmatprep.subr.bf16.mxu0 0
    %2722 = vmatpush1.bf16.msra.mxu0 0
    %2723 = vmatprep.subr.bf16.mxu0 0
    %2724 = vmatpush1.bf16.msra.mxu0 0
    %2725 = vmatprep.subr.bf16.mxu0 0
    %2726 = vmatpush1.bf16.msra.mxu0 0
    %2727 = vmatprep.subr.bf16.mxu0 0
    %2728 = vmatpush1.bf16.msra.mxu0 0
    %2729 = vmatprep.subr.bf16.mxu0 0
    %2730 = vmatpush1.bf16.msra.mxu0 0
    %2731 = vmatprep.subr.bf16.mxu0 %v1917
    %2732 = vmatpush1.bf16.msra.mxu0 %v1916
    %2733 = vmatprep.subr.bf16.mxu0 0
    %2734 = vmatpush2.bf16.msra.mxu0 0
    %2735 = vmatprep.subr.bf16.mxu0 0
    %2736 = vmatpush2.bf16.msra.mxu0 0
    %2737 = vmatprep.subr.bf16.mxu0 0
    %2738 = vmatpush2.bf16.msra.mxu0 0
    %2739 = vmatprep.subr.bf16.mxu0 0
    %2740 = vmatpush2.bf16.msra.mxu0 0
    %2741 = vmatprep.subr.bf16.mxu0 0
    %2742 = vmatpush2.bf16.msra.mxu0 0
    %2743 = vmatprep.subr.bf16.mxu0 0
    %2744 = vmatpush2.bf16.msra.mxu0 0
    %2745 = vmatprep.subr.bf16.mxu0 0
    %2746 = vmatpush2.bf16.msra.mxu0 0
    %2747 = vmatprep.subr.bf16.mxu0 0
    %2748 = vmatpush2.bf16.msra.mxu0 0
    %2749 = vmatprep.mubr.bf16.mxu0 0
    %2750 = vmatmul.mubr.bf16.gmra.mxu0 %v2264
    %v2751 = vpop.f32.mrf.mxu0
    %v2752 = vadd.f32 %v2711, %v2751
    %v2753 = vpop.f32.mrf.mxu0
    %v2754 = vadd.f32 %v2713, %v2753
    %v2755 = vpop.f32.mrf.mxu0
    %v2756 = vpop.f32.mrf.mxu0
    %2757 = vdwg.mxu0
    %2758 = vmatprep.subr.bf16.mxu0 0
    %2759 = vmatpush1.bf16.msra.mxu0 %v1631
    %2760 = vmatprep.subr.bf16.mxu0 0
    %2761 = vmatpush1.bf16.msra.mxu0 %v1624
    %2762 = vmatprep.subr.bf16.mxu0 0
    %2763 = vmatpush1.bf16.msra.mxu0 %v1617
    %2764 = vmatprep.subr.bf16.mxu0 0
    %2765 = vmatpush1.bf16.msra.mxu0 %v1610
    %2766 = vmatprep.subr.bf16.mxu0 0
    %2767 = vmatpush1.bf16.msra.mxu0 %v1603
    %2768 = vmatprep.subr.bf16.mxu0 0
    %2769 = vmatpush1.bf16.msra.mxu0 %v1596
    %2770 = vmatprep.subr.bf16.mxu0 0
    %2771 = vmatpush1.bf16.msra.mxu0 %v1589
    %2772 = vmatprep.subr.bf16.mxu0 0
    %2773 = vmatpush1.bf16.msra.mxu0 %v1582
    %2774 = vmatprep.subr.bf16.mxu0 0
    %2775 = vmatpush2.bf16.msra.mxu0 %v1687
    %2776 = vmatprep.subr.bf16.mxu0 0
    %2777 = vmatpush2.bf16.msra.mxu0 %v1680
    %2778 = vmatprep.subr.bf16.mxu0 0
    %2779 = vmatpush2.bf16.msra.mxu0 %v1673
    %2780 = vmatprep.subr.bf16.mxu0 0
    %2781 = vmatpush2.bf16.msra.mxu0 %v1666
    %2782 = vmatprep.subr.bf16.mxu0 0
    %2783 = vmatpush2.bf16.msra.mxu0 %v1659
    %2784 = vmatprep.subr.bf16.mxu0 0
    %2785 = vmatpush2.bf16.msra.mxu0 %v1652
    %2786 = vmatprep.subr.bf16.mxu0 0
    %2787 = vmatpush2.bf16.msra.mxu0 %v1645
    %2788 = vmatprep.subr.bf16.mxu0 0
    %2789 = vmatpush2.bf16.msra.mxu0 %v1638
    %2790 = vmatprep.mubr.bf16.mxu0 %v100
    %2791 = vmatmul.mubr.bf16.gmra.mxu0 %v99
    %v2792 = vpop.f32.mrf.mxu0
    %v2793 = vadd.f32 0.0, %v2792
    %v2794 = vpop.f32.mrf.mxu0
    %v2795 = vpop.f32.mrf.mxu0
    %v2796 = vpop.f32.mrf.mxu0
    %2797 = vdwg.mxu0
    %2798 = vmatprep.subr.bf16.mxu0 0
    %2799 = vmatpush1.bf16.msra.mxu0 %v1743
    %2800 = vmatprep.subr.bf16.mxu0 0
    %2801 = vmatpush1.bf16.msra.mxu0 %v1736
    %2802 = vmatprep.subr.bf16.mxu0 0
    %2803 = vmatpush1.bf16.msra.mxu0 %v1729
    %2804 = vmatprep.subr.bf16.mxu0 0
    %2805 = vmatpush1.bf16.msra.mxu0 %v1722
    %2806 = vmatprep.subr.bf16.mxu0 0
    %2807 = vmatpush1.bf16.msra.mxu0 %v1715
    %2808 = vmatprep.subr.bf16.mxu0 0
    %2809 = vmatpush1.bf16.msra.mxu0 %v1708
    %2810 = vmatprep.subr.bf16.mxu0 0
    %2811 = vmatpush1.bf16.msra.mxu0 %v1701
    %2812 = vmatprep.subr.bf16.mxu0 0
    %2813 = vmatpush1.bf16.msra.mxu0 %v1694
    %2814 = vmatprep.subr.bf16.mxu0 0
    %2815 = vmatpush2.bf16.msra.mxu0 %v1799
    %2816 = vmatprep.subr.bf16.mxu0 0
    %2817 = vmatpush2.bf16.msra.mxu0 %v1792
    %2818 = vmatprep.subr.bf16.mxu0 0
    %2819 = vmatpush2.bf16.msra.mxu0 %v1785
    %2820 = vmatprep.subr.bf16.mxu0 0
    %2821 = vmatpush2.bf16.msra.mxu0 %v1778
    %2822 = vmatprep.subr.bf16.mxu0 0
    %2823 = vmatpush2.bf16.msra.mxu0 %v1771
    %2824 = vmatprep.subr.bf16.mxu0 0
    %2825 = vmatpush2.bf16.msra.mxu0 %v1764
    %2826 = vmatprep.subr.bf16.mxu0 0
    %2827 = vmatpush2.bf16.msra.mxu0 %v1757
    %2828 = vmatprep.subr.bf16.mxu0 0
    %2829 = vmatpush2.bf16.msra.mxu0 %v1750
    %2830 = vmatprep.mubr.bf16.mxu0 %v102
    %2831 = vmatmul.mubr.bf16.gmra.mxu0 %v101
    %v2832 = vpop.f32.mrf.mxu0
    %v2833 = vadd.f32 %v2793, %v2832
    %v2834 = vpop.f32.mrf.mxu0
    %v2835 = vpop.f32.mrf.mxu0
    %v2836 = vpop.f32.mrf.mxu0
    %2837 = vdwg.mxu0
    %2838 = vmatprep.subr.bf16.mxu0 0
    %2839 = vmatpush1.bf16.msra.mxu0 %v1855
    %2840 = vmatprep.subr.bf16.mxu0 0
    %2841 = vmatpush1.bf16.msra.mxu0 %v1848
    %2842 = vmatprep.subr.bf16.mxu0 0
    %2843 = vmatpush1.bf16.msra.mxu0 %v1841
    %2844 = vmatprep.subr.bf16.mxu0 0
    %2845 = vmatpush1.bf16.msra.mxu0 %v1834
    %2846 = vmatprep.subr.bf16.mxu0 0
    %2847 = vmatpush1.bf16.msra.mxu0 %v1827
    %2848 = vmatprep.subr.bf16.mxu0 0
    %2849 = vmatpush1.bf16.msra.mxu0 %v1820
    %2850 = vmatprep.subr.bf16.mxu0 0
    %2851 = vmatpush1.bf16.msra.mxu0 %v1813
    %2852 = vmatprep.subr.bf16.mxu0 0
    %2853 = vmatpush1.bf16.msra.mxu0 %v1806
    %2854 = vmatprep.subr.bf16.mxu0 0
    %2855 = vmatpush2.bf16.msra.mxu0 %v1911
    %2856 = vmatprep.subr.bf16.mxu0 0
    %2857 = vmatpush2.bf16.msra.mxu0 %v1904
    %2858 = vmatprep.subr.bf16.mxu0 0
    %2859 = vmatpush2.bf16.msra.mxu0 %v1897
    %2860 = vmatprep.subr.bf16.mxu0 0
    %2861 = vmatpush2.bf16.msra.mxu0 %v1890
    %2862 = vmatprep.subr.bf16.mxu0 0
    %2863 = vmatpush2.bf16.msra.mxu0 %v1883
    %2864 = vmatprep.subr.bf16.mxu0 0
    %2865 = vmatpush2.bf16.msra.mxu0 %v1876
    %2866 = vmatprep.subr.bf16.mxu0 0
    %2867 = vmatpush2.bf16.msra.mxu0 %v1869
    %2868 = vmatprep.subr.bf16.mxu0 0
    %2869 = vmatpush2.bf16.msra.mxu0 %v1862
    %2870 = vmatprep.mubr.bf16.mxu0 %v104
    %2871 = vmatmul.mubr.bf16.gmra.mxu0 %v103
    %v2872 = vpop.f32.mrf.mxu0
    %v2873 = vadd.f32 %v2833, %v2872
    %v2874 = vpop.f32.mrf.mxu0
    %v2875 = vpop.f32.mrf.mxu0
    %v2876 = vpop.f32.mrf.mxu0
    %2877 = vdwg.mxu0
    %2878 = vmatprep.subr.bf16.mxu0 0
    %2879 = vmatpush1.bf16.msra.mxu0 0
    %2880 = vmatprep.subr.bf16.mxu0 0
    %2881 = vmatpush1.bf16.msra.mxu0 0
    %2882 = vmatprep.subr.bf16.mxu0 0
    %2883 = vmatpush1.bf16.msra.mxu0 0
    %2884 = vmatprep.subr.bf16.mxu0 0
    %2885 = vmatpush1.bf16.msra.mxu0 0
    %2886 = vmatprep.subr.bf16.mxu0 0
    %2887 = vmatpush1.bf16.msra.mxu0 0
    %2888 = vmatprep.subr.bf16.mxu0 0
    %2889 = vmatpush1.bf16.msra.mxu0 0
    %2890 = vmatprep.subr.bf16.mxu0 0
    %2891 = vmatpush1.bf16.msra.mxu0 0
    %2892 = vmatprep.subr.bf16.mxu0 0
    %2893 = vmatpush1.bf16.msra.mxu0 %v1918
    %2894 = vmatprep.subr.bf16.mxu0 0
    %2895 = vmatpush2.bf16.msra.mxu0 0
    %2896 = vmatprep.subr.bf16.mxu0 0
    %2897 = vmatpush2.bf16.msra.mxu0 0
    %2898 = vmatprep.subr.bf16.mxu0 0
    %2899 = vmatpush2.bf16.msra.mxu0 0
    %2900 = vmatprep.subr.bf16.mxu0 0
    %2901 = vmatpush2.bf16.msra.mxu0 0
    %2902 = vmatprep.subr.bf16.mxu0 0
    %2903 = vmatpush2.bf16.msra.mxu0 0
    %2904 = vmatprep.subr.bf16.mxu0 0
    %2905 = vmatpush2.bf16.msra.mxu0 0
    %2906 = vmatprep.subr.bf16.mxu0 0
    %2907 = vmatpush2.bf16.msra.mxu0 0
    %2908 = vmatprep.subr.bf16.mxu0 0
    %2909 = vmatpush2.bf16.msra.mxu0 0
    %2910 = vmatprep.mubr.bf16.mxu0 0
    %2911 = vmatmul.mubr.bf16.gmra.mxu0 %v2264
    %v2912 = vpop.f32.mrf.mxu0
    %v2913 = vadd.f32 %v2873, %v2912
    %v2914 = vpop.f32.mrf.mxu0
    %v2915 = vpop.f32.mrf.mxu0
    %v2916 = vpop.f32.mrf.mxu0
    %2917 = vdwg.mxu0
    %2921 = vrot.lane.b32.xlu0 %v2426, 60
    %v2922 = vpop.permute.xlu0 %2921
    %2923 = vrot.lane.b32.xlu0 %v2588, 60
    %v2924 = vpop.permute.xlu0 %2923
    %2925 = vrot.lane.b32.xlu0 %v2590, 60
    %v2926 = vpop.permute.xlu0 %2925
    %vm2927 = vcmask 490496
    %v2928 = vsel %vm2927, %v2922, %v2924
    %v2929 = vsel %vm2927, %v2924, %v2926
    %v2932 = vmax.f32 %v2424, %v2928
    %v2933 = vmax.f32 %v2426, %v2929
    %2937 = vrot.lane.b32.xlu0 %v2752, 60
    %v2938 = vpop.permute.xlu0 %2937
    %2939 = vrot.lane.b32.xlu0 %v2754, 60
    %v2940 = vpop.permute.xlu0 %2939
    %2941 = vrot.lane.b32.xlu0 %v2913, 60
    %v2942 = vpop.permute.xlu0 %2941
    %v2943 = vsel %vm2927, %v2938, %v2940
    %v2944 = vsel %vm2927, %v2940, %v2942
    %v2947 = vmax.f32 %v2590, %v2943
    %v2948 = vmax.f32 %v2752, %v2944
    %2951 = vrot.lane.b32.xlu0 %v2947, 120
    %v2952 = vpop.permute.xlu0 %2951
    %2953 = vrot.lane.b32.xlu0 %v2948, 120
    %v2954 = vpop.permute.xlu0 %2953
    %vm2955 = vcmask 982016
    %v2956 = vsel %vm2955, %v2952, %v2954
    %v2959 = vmax.f32 %v2932, %v2956
    %v2960 = vmax.f32 %v2933, %v2954
    %v2961 = vmin.f32 %v2424, %v2928
    %v2962 = vmin.f32 %v2426, %v2929
    %v2963 = vmin.f32 %v2590, %v2943
    %v2964 = vmin.f32 %v2752, %v2944
    %2967 = vrot.lane.b32.xlu0 %v2963, 120
    %v2968 = vpop.permute.xlu0 %2967
    %2969 = vrot.lane.b32.xlu0 %v2964, 120
    %v2970 = vpop.permute.xlu0 %2969
    %v2971 = vsel %vm2955, %v2968, %v2970
    %v2974 = vmin.f32 %v2961, %v2971
    %v2975 = vmin.f32 %v2962, %v2970
    %v2976 = vld [vmem:[%s2] sm:$0xff]
    %v2977 = vld [vmem:[%s2 + $0x8] sm:$0xff]
    %v2978 = vld [vmem:[%s2 + $0x10] sm:$0xff]
    %v2979 = vld [vmem:[%s2 + $0x18] sm:$0xff]
    %v2980 = vld [vmem:[%s2 + $0x20] sm:$0xff]
    %v2981 = vld [vmem:[%s2 + $0x28] sm:$0xff]
    %v2982 = vld [vmem:[%s2 + $0x30] sm:$0xff]
    %v2983 = vld [vmem:[%s2 + $0x38] sm:$0xff]
    %v2984 = vld [vmem:[%s3] sm:$0xff]
    %v2985 = vld [vmem:[%s3 + $0x8] sm:$0xff]
    %v2986 = vld [vmem:[%s3 + $0x10] sm:$0xff]
    %v2987 = vld [vmem:[%s3 + $0x18] sm:$0xff]
    %v2988 = vld [vmem:[%s3 + $0x20] sm:$0xff]
    %v2989 = vld [vmem:[%s3 + $0x28] sm:$0xff]
    %v2990 = vld [vmem:[%s3 + $0x30] sm:$0xff]
    %v2991 = vld [vmem:[%s3 + $0x38] sm:$0xff]
    %vm2992 = vcmp.gt.f32.partialorder %v2976, 0.0
    %vm2993 = vcmp.gt.f32.partialorder %v2977, 0.0
    %vm2994 = vcmp.gt.f32.partialorder %v2978, 0.0
    %vm2995 = vcmp.gt.f32.partialorder %v2979, 0.0
    %vm2996 = vcmp.gt.f32.partialorder %v2980, 0.0
    %vm2997 = vcmp.gt.f32.partialorder %v2981, 0.0
    %vm2998 = vcmp.gt.f32.partialorder %v2982, 0.0
    %vm2999 = vcmp.gt.f32.partialorder %v2983, 0.0
    %v3002 = vcombine.low %v2959, %v2960
    %v3004 = vunpack.c.l.s4 1966171168
    %v3005 = vunpack.c.0.s8 %v3004
    %v3006 = vlaneseq
    %v3007 = vshrl.u32 %v3006, 7
    %v3008 = vsub.s32 %v3005, %v3007
    %v3009 = vrot.slane %v3002, %v3008
    %v3010 = vcombine.high %v3009, %v3009
    %v3012 = vunpack.c.l.s4 1966171168
    %v3013 = vunpack.c.0.s8 %v3012
    %v3014 = vlaneseq
    %v3015 = vshrl.u32 %v3014, 7
    %v3016 = vsub.s32 %v3013, %v3015
    %v3017 = vrot.slane %v3009, %v3016
    %v3019 = vunpack.c.l.s4 1966171168
    %v3020 = vunpack.c.0.s8 %v3019
    %v3021 = vlaneseq
    %v3022 = vshrl.u32 %v3021, 7
    %v3023 = vsub.s32 %v3020, %v3022
    %v3024 = vrot.slane %v3010, %v3023
    %v3027 = vcombine.low %v2974, %v2975
    %v3029 = vunpack.c.l.s4 1966171168
    %v3030 = vunpack.c.0.s8 %v3029
    %v3031 = vlaneseq
    %v3032 = vshrl.u32 %v3031, 7
    %v3033 = vsub.s32 %v3030, %v3032
    %v3034 = vrot.slane %v3027, %v3033
    %v3035 = vcombine.high %v3034, %v3034
    %v3037 = vunpack.c.l.s4 1966171168
    %v3038 = vunpack.c.0.s8 %v3037
    %v3039 = vlaneseq
    %v3040 = vshrl.u32 %v3039, 7
    %v3041 = vsub.s32 %v3038, %v3040
    %v3042 = vrot.slane %v3034, %v3041
    %v3044 = vunpack.c.l.s4 1966171168
    %v3045 = vunpack.c.0.s8 %v3044
    %v3046 = vlaneseq
    %v3047 = vshrl.u32 %v3046, 7
    %v3048 = vsub.s32 %v3045, %v3047
    %v3049 = vrot.slane %v3035, %v3048
    %v3050 = vsel %vm2992, 1, 0
    %v3051 = vsel %vm2993, 1, 0
    %v3052 = vsel %vm2994, 1, 0
    %v3053 = vsel %vm2995, 1, 0
    %v3054 = vsel %vm2996, 1, 0
    %v3055 = vsel %vm2997, 1, 0
    %v3056 = vsel %vm2998, 1, 0
    %v3057 = vsel %vm2999, 1, 0
    %3058 = vset.pattern.permute.xlu0 0
    %3059 = vperm.xlu0 %3058, %v3050
    %v3060 = vpop.permute.xlu0 %3059
    %3061 = vset.pattern.permute.xlu0 0
    %3062 = vperm.xlu0 %3061, %v3051
    %v3063 = vpop.permute.xlu0 %3062
    %3064 = vset.pattern.permute.xlu0 0
    %3065 = vperm.xlu0 %3064, %v3052
    %v3066 = vpop.permute.xlu0 %3065
    %3067 = vset.pattern.permute.xlu0 0
    %3068 = vperm.xlu0 %3067, %v3053
    %v3069 = vpop.permute.xlu0 %3068
    %3070 = vset.pattern.permute.xlu0 0
    %3071 = vperm.xlu0 %3070, %v3054
    %v3072 = vpop.permute.xlu0 %3071
    %3073 = vset.pattern.permute.xlu0 0
    %3074 = vperm.xlu0 %3073, %v3055
    %v3075 = vpop.permute.xlu0 %3074
    %3076 = vset.pattern.permute.xlu0 0
    %3077 = vperm.xlu0 %3076, %v3056
    %v3078 = vpop.permute.xlu0 %3077
    %3079 = vset.pattern.permute.xlu0 0
    %3080 = vperm.xlu0 %3079, %v3057
    %v3081 = vpop.permute.xlu0 %3080
    %vm3082 = vcmp.eq.s32.totalorder %v3060, 1
    %vm3083 = vcmp.eq.s32.totalorder %v3063, 1
    %vm3084 = vcmp.eq.s32.totalorder %v3066, 1
    %vm3085 = vcmp.eq.s32.totalorder %v3069, 1
    %vm3086 = vcmp.eq.s32.totalorder %v3072, 1
    %vm3087 = vcmp.eq.s32.totalorder %v3075, 1
    %vm3088 = vcmp.eq.s32.totalorder %v3078, 1
    %vm3089 = vcmp.eq.s32.totalorder %v3081, 1
    %v3090 = vlaneseq
    %v3091 = vshrl.u32 %v3090, 7
    %v3092 = vsub.s32 0, %v3091
    %v3093 = vrot.slane %v3017, %v3092
    %v3094 = vlaneseq
    %v3095 = vshrl.u32 %v3094, 7
    %v3096 = vsub.s32 1, %v3095
    %v3097 = vrot.slane %v3017, %v3096
    %v3098 = vlaneseq
    %v3099 = vshrl.u32 %v3098, 7
    %v3100 = vsub.s32 0, %v3099
    %v3101 = vrot.slane %v3024, %v3100
    %v3102 = vlaneseq
    %v3103 = vshrl.u32 %v3102, 7
    %v3104 = vsub.s32 1, %v3103
    %v3105 = vrot.slane %v3024, %v3104
    %v3110 = vlaneseq
    %v3111 = vshrl.u32 %v3110, 7
    %v3112 = vsub.s32 0, %v3111
    %v3113 = vrot.slane %v3042, %v3112
    %v3114 = vlaneseq
    %v3115 = vshrl.u32 %v3114, 7
    %v3116 = vsub.s32 1, %v3115
    %v3117 = vrot.slane %v3042, %v3116
    %v3118 = vlaneseq
    %v3119 = vshrl.u32 %v3118, 7
    %v3120 = vsub.s32 0, %v3119
    %v3121 = vrot.slane %v3049, %v3120
    %v3122 = vlaneseq
    %v3123 = vshrl.u32 %v3122, 7
    %v3124 = vsub.s32 1, %v3123
    %v3125 = vrot.slane %v3049, %v3124
    %v3130 = vsel %vm3082, %v3093, %v3113
    %v3131 = vsel %vm3082, %v3097, %v3117
    %v3132 = vsel %vm3083, %v3093, %v3113
    %v3133 = vsel %vm3083, %v3097, %v3117
    %v3134 = vsel %vm3084, %v3093, %v3113
    %v3135 = vsel %vm3084, %v3097, %v3117
    %v3136 = vsel %vm3085, %v3093, %v3113
    %v3137 = vsel %vm3085, %v3097, %v3117
    %v3138 = vsel %vm3086, %v3093, %v3113
    %v3139 = vsel %vm3086, %v3097, %v3117
    %v3140 = vsel %vm3087, %v3093, %v3113
    %v3141 = vsel %vm3087, %v3097, %v3117
    %v3142 = vsel %vm3088, %v3093, %v3113
    %v3143 = vsel %vm3088, %v3097, %v3117
    %v3144 = vsel %vm3089, %v3093, %v3113
    %v3145 = vsel %vm3089, %v3097, %v3117
    %v3146 = vsel %vm3082, %v3101, %v3121
    %v3147 = vsel %vm3082, %v3105, %v3125
    %v3148 = vsel %vm3083, %v3101, %v3121
    %v3149 = vsel %vm3083, %v3105, %v3125
    %v3150 = vsel %vm3084, %v3101, %v3121
    %v3151 = vsel %vm3084, %v3105, %v3125
    %v3152 = vsel %vm3085, %v3101, %v3121
    %v3153 = vsel %vm3085, %v3105, %v3125
    %v3154 = vsel %vm3086, %v3101, %v3121
    %v3155 = vsel %vm3086, %v3105, %v3125
    %v3156 = vsel %vm3087, %v3101, %v3121
    %v3157 = vsel %vm3087, %v3105, %v3125
    %v3158 = vsel %vm3088, %v3101, %v3121
    %v3159 = vsel %vm3088, %v3105, %v3125
    %v3160 = vsel %vm3089, %v3101, %v3121
    %v3161 = vsel %vm3089, %v3105, %v3125
    %3163 = vset.pattern.permute.xlu0 0
    %3164 = vperm.xlu0 %3163, %v2976
    %v3165 = vpop.permute.xlu0 %3164
    %3168 = vset.pattern.permute.xlu0 0
    %3169 = vperm.xlu0 %3168, %v2977
    %v3170 = vpop.permute.xlu0 %3169
    %3173 = vset.pattern.permute.xlu0 0
    %3174 = vperm.xlu0 %3173, %v2978
    %v3175 = vpop.permute.xlu0 %3174
    %3178 = vset.pattern.permute.xlu0 0
    %3179 = vperm.xlu0 %3178, %v2979
    %v3180 = vpop.permute.xlu0 %3179
    %3183 = vset.pattern.permute.xlu0 0
    %3184 = vperm.xlu0 %3183, %v2980
    %v3185 = vpop.permute.xlu0 %3184
    %3188 = vset.pattern.permute.xlu0 0
    %3189 = vperm.xlu0 %3188, %v2981
    %v3190 = vpop.permute.xlu0 %3189
    %3193 = vset.pattern.permute.xlu0 0
    %3194 = vperm.xlu0 %3193, %v2982
    %v3195 = vpop.permute.xlu0 %3194
    %3198 = vset.pattern.permute.xlu0 0
    %3199 = vperm.xlu0 %3198, %v2983
    %v3200 = vpop.permute.xlu0 %3199
    %v3202 = vmul.f32 %v3165, %v3130
    %v3203 = vmul.f32 %v3165, %v3131
    %v3204 = vmul.f32 %v3170, %v3132
    %v3205 = vmul.f32 %v3170, %v3133
    %v3206 = vmul.f32 %v3175, %v3134
    %v3207 = vmul.f32 %v3175, %v3135
    %v3208 = vmul.f32 %v3180, %v3136
    %v3209 = vmul.f32 %v3180, %v3137
    %v3210 = vmul.f32 %v3185, %v3138
    %v3211 = vmul.f32 %v3185, %v3139
    %v3212 = vmul.f32 %v3190, %v3140
    %v3213 = vmul.f32 %v3190, %v3141
    %v3214 = vmul.f32 %v3195, %v3142
    %v3215 = vmul.f32 %v3195, %v3143
    %v3216 = vmul.f32 %v3200, %v3144
    %v3217 = vmul.f32 %v3200, %v3145
    %v3218 = vmul.f32 %v3165, %v3146
    %v3219 = vmul.f32 %v3165, %v3147
    %v3220 = vmul.f32 %v3170, %v3148
    %v3221 = vmul.f32 %v3170, %v3149
    %v3222 = vmul.f32 %v3175, %v3150
    %v3223 = vmul.f32 %v3175, %v3151
    %v3224 = vmul.f32 %v3180, %v3152
    %v3225 = vmul.f32 %v3180, %v3153
    %v3226 = vmul.f32 %v3185, %v3154
    %v3227 = vmul.f32 %v3185, %v3155
    %v3228 = vmul.f32 %v3190, %v3156
    %v3229 = vmul.f32 %v3190, %v3157
    %v3230 = vmul.f32 %v3195, %v3158
    %v3231 = vmul.f32 %v3195, %v3159
    %v3232 = vmul.f32 %v3200, %v3160
    %v3233 = vmul.f32 %v3200, %v3161
    %3235 = vset.pattern.permute.xlu0 0
    %3236 = vperm.xlu0 %3235, %v2984
    %v3237 = vpop.permute.xlu0 %3236
    %3240 = vset.pattern.permute.xlu0 0
    %3241 = vperm.xlu0 %3240, %v2985
    %v3242 = vpop.permute.xlu0 %3241
    %3245 = vset.pattern.permute.xlu0 0
    %3246 = vperm.xlu0 %3245, %v2986
    %v3247 = vpop.permute.xlu0 %3246
    %3250 = vset.pattern.permute.xlu0 0
    %3251 = vperm.xlu0 %3250, %v2987
    %v3252 = vpop.permute.xlu0 %3251
    %3255 = vset.pattern.permute.xlu0 0
    %3256 = vperm.xlu0 %3255, %v2988
    %v3257 = vpop.permute.xlu0 %3256
    %3260 = vset.pattern.permute.xlu0 0
    %3261 = vperm.xlu0 %3260, %v2989
    %v3262 = vpop.permute.xlu0 %3261
    %3265 = vset.pattern.permute.xlu0 0
    %3266 = vperm.xlu0 %3265, %v2990
    %v3267 = vpop.permute.xlu0 %3266
    %3270 = vset.pattern.permute.xlu0 0
    %3271 = vperm.xlu0 %3270, %v2991
    %v3272 = vpop.permute.xlu0 %3271
    %v3274 = vadd.f32 %v3202, %v3237
    %v3275 = vadd.f32 %v3203, %v3237
    %v3276 = vadd.f32 %v3204, %v3242
    %v3277 = vadd.f32 %v3205, %v3242
    %v3278 = vadd.f32 %v3206, %v3247
    %v3279 = vadd.f32 %v3207, %v3247
    %v3280 = vadd.f32 %v3208, %v3252
    %v3281 = vadd.f32 %v3209, %v3252
    %v3282 = vadd.f32 %v3210, %v3257
    %v3283 = vadd.f32 %v3211, %v3257
    %v3284 = vadd.f32 %v3212, %v3262
    %v3285 = vadd.f32 %v3213, %v3262
    %v3286 = vadd.f32 %v3214, %v3267
    %v3287 = vadd.f32 %v3215, %v3267
    %v3288 = vadd.f32 %v3216, %v3272
    %v3289 = vadd.f32 %v3217, %v3272
    %v3290 = vadd.f32 %v3218, %v3237
    %v3291 = vadd.f32 %v3219, %v3237
    %v3292 = vadd.f32 %v3220, %v3242
    %v3293 = vadd.f32 %v3221, %v3242
    %v3294 = vadd.f32 %v3222, %v3247
    %v3295 = vadd.f32 %v3223, %v3247
    %v3296 = vadd.f32 %v3224, %v3252
    %v3297 = vadd.f32 %v3225, %v3252
    %v3298 = vadd.f32 %v3226, %v3257
    %v3299 = vadd.f32 %v3227, %v3257
    %v3300 = vadd.f32 %v3228, %v3262
    %v3301 = vadd.f32 %v3229, %v3262
    %v3302 = vadd.f32 %v3230, %v3267
    %v3303 = vadd.f32 %v3231, %v3267
    %v3304 = vadd.f32 %v3232, %v3272
    %v3305 = vadd.f32 %v3233, %v3272
    %v3306 = vmax.f32 %v3274, 0.0
    %v3307 = vmax.f32 %v3275, 0.0
    %v3308 = vmax.f32 %v3276, 0.0
    %v3309 = vmax.f32 %v3277, 0.0
    %v3310 = vmax.f32 %v3278, 0.0
    %v3311 = vmax.f32 %v3279, 0.0
    %v3312 = vmax.f32 %v3280, 0.0
    %v3313 = vmax.f32 %v3281, 0.0
    %v3314 = vmax.f32 %v3282, 0.0
    %v3315 = vmax.f32 %v3283, 0.0
    %v3316 = vmax.f32 %v3284, 0.0
    %v3317 = vmax.f32 %v3285, 0.0
    %v3318 = vmax.f32 %v3286, 0.0
    %v3319 = vmax.f32 %v3287, 0.0
    %v3320 = vmax.f32 %v3288, 0.0
    %v3321 = vmax.f32 %v3289, 0.0
    %v3322 = vmax.f32 %v3290, 0.0
    %v3323 = vmax.f32 %v3291, 0.0
    %v3324 = vmax.f32 %v3292, 0.0
    %v3325 = vmax.f32 %v3293, 0.0
    %v3326 = vmax.f32 %v3294, 0.0
    %v3327 = vmax.f32 %v3295, 0.0
    %v3328 = vmax.f32 %v3296, 0.0
    %v3329 = vmax.f32 %v3297, 0.0
    %v3330 = vmax.f32 %v3298, 0.0
    %v3331 = vmax.f32 %v3299, 0.0
    %v3332 = vmax.f32 %v3300, 0.0
    %v3333 = vmax.f32 %v3301, 0.0
    %v3334 = vmax.f32 %v3302, 0.0
    %v3335 = vmax.f32 %v3303, 0.0
    %v3336 = vmax.f32 %v3304, 0.0
    %v3337 = vmax.f32 %v3305, 0.0
    %v3338 = vpack.c.bf16 %v3308, %v3306
    %v3339 = vpack.c.bf16 %v3309, %v3307
    %v3340 = vpack.c.bf16 %v3312, %v3310
    %v3341 = vpack.c.bf16 %v3313, %v3311
    %v3342 = vpack.c.bf16 %v3316, %v3314
    %v3343 = vpack.c.bf16 %v3317, %v3315
    %v3344 = vpack.c.bf16 %v3320, %v3318
    %v3345 = vpack.c.bf16 %v3321, %v3319
    %v3346 = vpack.c.bf16 %v3324, %v3322
    %v3347 = vpack.c.bf16 %v3325, %v3323
    %v3348 = vpack.c.bf16 %v3328, %v3326
    %v3349 = vpack.c.bf16 %v3329, %v3327
    %v3350 = vpack.c.bf16 %v3332, %v3330
    %v3351 = vpack.c.bf16 %v3333, %v3331
    %v3352 = vpack.c.bf16 %v3336, %v3334
    %v3353 = vpack.c.bf16 %v3337, %v3335
    %v3354 = vld [vmem:[#allocation5] sm:$0xff]
    %v3355 = vld [vmem:[#allocation5 + $0x8] sm:$0xff]
    %v3356 = vld [vmem:[#allocation5 + $0x10] sm:$0xff]
    %v3357 = vld [vmem:[#allocation5 + $0x18] sm:$0xff]
    %v3358 = vld [vmem:[#allocation5 + $0x20] sm:$0xff]
    %v3359 = vld [vmem:[#allocation5 + $0x28] sm:$0xff]
    %v3360 = vld [vmem:[#allocation5 + $0x30] sm:$0xff]
    %v3361 = vld [vmem:[#allocation5 + $0x38] sm:$0xff]
    %v3362 = vld [vmem:[#allocation5 + $0x40] sm:$0xff]
    %v3363 = vld [vmem:[#allocation5 + $0x48] sm:$0xff]
    %v3364 = vld [vmem:[#allocation5 + $0x50] sm:$0xff]
    %v3365 = vld [vmem:[#allocation5 + $0x58] sm:$0xff]
    %v3366 = vld [vmem:[#allocation5 + $0x60] sm:$0xff]
    %v3367 = vld [vmem:[#allocation5 + $0x68] sm:$0xff]
    %v3368 = vld [vmem:[#allocation5 + $0x70] sm:$0xff]
    %v3369 = vld [vmem:[#allocation5 + $0x78] sm:$0xff]
    %v3370 = vld [vmem:[#allocation5 + $0x80] sm:$0xff]
    %v3371 = vld [vmem:[#allocation5 + $0x88] sm:$0xff]
    %v3372 = vld [vmem:[#allocation5 + $0x90] sm:$0xff]
    %v3373 = vld [vmem:[#allocation5 + $0x98] sm:$0xff]
    %v3374 = vld [vmem:[#allocation5 + $0xa0] sm:$0xff]
    %v3375 = vld [vmem:[#allocation5 + $0xa8] sm:$0xff]
    %v3376 = vld [vmem:[#allocation5 + $0xb0] sm:$0xff]
    %v3377 = vld [vmem:[#allocation5 + $0xb8] sm:$0xff]
    %v3378 = vld [vmem:[#allocation5 + $0xc0] sm:$0x33]
    %v3404 = vunpack.c.l.b16 %v3354
    %v3405 = vunpack.c.h.b16 %v3354
    %v3406 = vunpack.c.l.b16 %v3355
    %v3407 = vunpack.c.h.b16 %v3355
    %v3408 = vunpack.c.l.b16 %v3356
    %v3409 = vunpack.c.h.b16 %v3356
    %v3410 = vunpack.c.l.b16 %v3357
    %v3411 = vunpack.c.h.b16 %v3357
    %v3412 = vunpack.c.l.b16 %v3358
    %v3413 = vunpack.c.h.b16 %v3358
    %v3414 = vunpack.c.l.b16 %v3359
    %v3415 = vunpack.c.h.b16 %v3359
    %v3416 = vunpack.c.l.b16 %v3360
    %v3417 = vunpack.c.h.b16 %v3360
    %v3418 = vunpack.c.l.b16 %v3361
    %v3419 = vunpack.c.h.b16 %v3361
    %v3420 = vunpack.c.l.b16 %v3362
    %v3421 = vunpack.c.h.b16 %v3362
    %v3422 = vunpack.c.l.b16 %v3363
    %v3423 = vunpack.c.h.b16 %v3363
    %v3424 = vunpack.c.l.b16 %v3364
    %v3425 = vunpack.c.h.b16 %v3364
    %v3426 = vunpack.c.l.b16 %v3365
    %v3427 = vunpack.c.h.b16 %v3365
    %v3428 = vunpack.c.l.b16 %v3366
    %v3429 = vunpack.c.h.b16 %v3366
    %v3430 = vunpack.c.l.b16 %v3367
    %v3431 = vunpack.c.h.b16 %v3367
    %v3432 = vunpack.c.l.b16 %v3368
    %v3433 = vunpack.c.h.b16 %v3368
    %v3434 = vunpack.c.l.b16 %v3369
    %v3435 = vunpack.c.h.b16 %v3369
    %v3436 = vunpack.c.l.b16 %v3370
    %v3437 = vunpack.c.h.b16 %v3370
    %v3438 = vunpack.c.l.b16 %v3371
    %v3439 = vunpack.c.h.b16 %v3371
    %v3440 = vunpack.c.l.b16 %v3372
    %v3441 = vunpack.c.h.b16 %v3372
    %v3442 = vunpack.c.l.b16 %v3373
    %v3443 = vunpack.c.h.b16 %v3373
    %v3444 = vunpack.c.l.b16 %v3374
    %v3445 = vunpack.c.h.b16 %v3374
    %v3446 = vunpack.c.l.b16 %v3375
    %v3447 = vunpack.c.h.b16 %v3375
    %v3448 = vunpack.c.l.b16 %v3376
    %v3449 = vunpack.c.h.b16 %v3376
    %v3450 = vunpack.c.l.b16 %v3377
    %v3451 = vunpack.c.h.b16 %v3377
    %v3452 = vunpack.c.l.b16 %v3378
    %v3453 = vunpack.c.h.b16 %v3378
    %v3454 = vpack.c.b16 %v3406, %v3404
    %v3455 = vpack.c.b16 %v3407, %v3405
    %v3456 = vpack.c.b16 %v3410, %v3408
    %v3457 = vpack.c.b16 %v3411, %v3409
    %v3458 = vpack.c.b16 %v3414, %v3412
    %v3459 = vpack.c.b16 %v3415, %v3413
    %v3460 = vpack.c.b16 %v3418, %v3416
    %v3461 = vpack.c.b16 %v3419, %v3417
    %v3462 = vpack.c.b16 %v3422, %v3420
    %v3463 = vpack.c.b16 %v3423, %v3421
    %v3464 = vpack.c.b16 %v3426, %v3424
    %v3465 = vpack.c.b16 %v3427, %v3425
    %v3466 = vpack.c.b16 %v3430, %v3428
    %v3467 = vpack.c.b16 %v3431, %v3429
    %v3468 = vpack.c.b16 %v3434, %v3432
    %v3469 = vpack.c.b16 %v3435, %v3433
    %v3470 = vpack.c.b16 %v3438, %v3436
    %v3471 = vpack.c.b16 %v3439, %v3437
    %v3472 = vpack.c.b16 %v3442, %v3440
    %v3473 = vpack.c.b16 %v3443, %v3441
    %v3474 = vpack.c.b16 %v3446, %v3444
    %v3475 = vpack.c.b16 %v3447, %v3445
    %v3476 = vpack.c.b16 %v3450, %v3448
    %v3477 = vpack.c.b16 %v3451, %v3449
    %v3478 = vpack.c.b16 %v3452, %v3452
    %v3479 = vpack.c.b16 %v3453, %v3453
    %vm3504 = vcmask 556032
    %v3506 = vsel %vm3504, %v3339, 0
    %v3509 = vsel %vm3504, %v3341, 0
    %v3512 = vsel %vm3504, %v3343, 0
    %v3515 = vsel %vm3504, %v3345, 0
    %v3518 = vsel %vm3504, %v3347, 0
    %v3521 = vsel %vm3504, %v3349, 0
    %v3524 = vsel %vm3504, %v3351, 0
    %v3527 = vsel %vm3504, %v3353, 0
    %vm3529 = vcmask 1041408
    %v3531 = vsel %vm3529, %v3478, 0
    %v3534 = vsel %vm3529, %v3479, 0
    %3536 = vmatprep.subr.bf16.mxu0 %v3469
    %3537 = vmatpush1.bf16.msra.mxu0 %v3468
    %3538 = vmatprep.subr.bf16.mxu0 %v3467
    %3539 = vmatpush1.bf16.msra.mxu0 %v3466
    %3540 = vmatprep.subr.bf16.mxu0 %v3465
    %3541 = vmatpush1.bf16.msra.mxu0 %v3464
    %3542 = vmatprep.subr.bf16.mxu0 %v3463
    %3543 = vmatpush1.bf16.msra.mxu0 %v3462
    %3544 = vmatprep.subr.bf16.mxu0 %v3461
    %3545 = vmatpush1.bf16.msra.mxu0 %v3460
    %3546 = vmatprep.subr.bf16.mxu0 %v3459
    %3547 = vmatpush1.bf16.msra.mxu0 %v3458
    %3548 = vmatprep.subr.bf16.mxu0 %v3457
    %3549 = vmatpush1.bf16.msra.mxu0 %v3456
    %3550 = vmatprep.subr.bf16.mxu0 %v3455
    %3551 = vmatpush1.bf16.msra.mxu0 %v3454
    %3552 = vmatprep.subr.bf16.mxu0 0
    %3553 = vmatpush2.bf16.msra.mxu0 0
    %3554 = vmatprep.subr.bf16.mxu0 0
    %3555 = vmatpush2.bf16.msra.mxu0 0
    %3556 = vmatprep.subr.bf16.mxu0 0
    %3557 = vmatpush2.bf16.msra.mxu0 0
    %3558 = vmatprep.subr.bf16.mxu0 %v3534
    %3559 = vmatpush2.bf16.msra.mxu0 %v3531
    %3560 = vmatprep.subr.bf16.mxu0 %v3477
    %3561 = vmatpush2.bf16.msra.mxu0 %v3476
    %3562 = vmatprep.subr.bf16.mxu0 %v3475
    %3563 = vmatpush2.bf16.msra.mxu0 %v3474
    %3564 = vmatprep.subr.bf16.mxu0 %v3473
    %3565 = vmatpush2.bf16.msra.mxu0 %v3472
    %3566 = vmatprep.subr.bf16.mxu0 %v3471
    %3567 = vmatpush2.bf16.msra.mxu0 %v3470
    %3568 = vmatprep.mubr.bf16.mxu0 %v3506
    %3569 = vmatmul.mubr.bf16.gmra.mxu0 %v3338
    %v3570 = vpop.f32.mrf.mxu0
    %v3571 = vadd.f32 0.0, %v3570
    %v3572 = vpop.f32.mrf.mxu0
    %v3573 = vadd.f32 0.0, %v3572
    %v3574 = vpop.f32.mrf.mxu0
    %v3575 = vadd.f32 0.0, %v3574
    %v3576 = vpop.f32.mrf.mxu0
    %v3577 = vadd.f32 0.0, %v3576
    %3578 = vmatprep.mubr.bf16.mxu0 %v3509
    %3579 = vmatmul.mubr.bf16.gmra.mxu0 %v3340
    %v3580 = vpop.f32.mrf.mxu0
    %v3581 = vadd.f32 0.0, %v3580
    %v3582 = vpop.f32.mrf.mxu0
    %v3583 = vadd.f32 0.0, %v3582
    %v3584 = vpop.f32.mrf.mxu0
    %v3585 = vadd.f32 0.0, %v3584
    %v3586 = vpop.f32.mrf.mxu0
    %v3587 = vadd.f32 0.0, %v3586
    %3588 = vmatprep.mubr.bf16.mxu0 %v3512
    %3589 = vmatmul.mubr.bf16.gmra.mxu0 %v3342
    %v3590 = vpop.f32.mrf.mxu0
    %v3591 = vadd.f32 0.0, %v3590
    %v3592 = vpop.f32.mrf.mxu0
    %v3593 = vadd.f32 0.0, %v3592
    %v3594 = vpop.f32.mrf.mxu0
    %v3595 = vadd.f32 0.0, %v3594
    %v3596 = vpop.f32.mrf.mxu0
    %v3597 = vadd.f32 0.0, %v3596
    %3598 = vmatprep.mubr.bf16.mxu0 %v3515
    %3599 = vmatmul.mubr.bf16.gmra.mxu0 %v3344
    %v3600 = vpop.f32.mrf.mxu0
    %v3601 = vadd.f32 0.0, %v3600
    %v3602 = vpop.f32.mrf.mxu0
    %v3603 = vadd.f32 0.0, %v3602
    %v3604 = vpop.f32.mrf.mxu0
    %v3605 = vadd.f32 0.0, %v3604
    %v3606 = vpop.f32.mrf.mxu0
    %v3607 = vadd.f32 0.0, %v3606
    %3608 = vmatprep.mubr.bf16.mxu0 %v3518
    %3609 = vmatmul.mubr.bf16.gmra.mxu0 %v3346
    %v3610 = vpop.f32.mrf.mxu0
    %v3611 = vadd.f32 0.0, %v3610
    %v3612 = vpop.f32.mrf.mxu0
    %v3613 = vadd.f32 0.0, %v3612
    %v3614 = vpop.f32.mrf.mxu0
    %v3615 = vadd.f32 0.0, %v3614
    %v3616 = vpop.f32.mrf.mxu0
    %v3617 = vadd.f32 0.0, %v3616
    %3618 = vmatprep.mubr.bf16.mxu0 %v3521
    %3619 = vmatmul.mubr.bf16.gmra.mxu0 %v3348
    %v3620 = vpop.f32.mrf.mxu0
    %v3621 = vadd.f32 0.0, %v3620
    %v3622 = vpop.f32.mrf.mxu0
    %v3623 = vadd.f32 0.0, %v3622
    %v3624 = vpop.f32.mrf.mxu0
    %v3625 = vadd.f32 0.0, %v3624
    %v3626 = vpop.f32.mrf.mxu0
    %v3627 = vadd.f32 0.0, %v3626
    %3628 = vmatprep.mubr.bf16.mxu0 %v3524
    %3629 = vmatmul.mubr.bf16.gmra.mxu0 %v3350
    %v3630 = vpop.f32.mrf.mxu0
    %v3631 = vadd.f32 0.0, %v3630
    %v3632 = vpop.f32.mrf.mxu0
    %v3633 = vadd.f32 0.0, %v3632
    %v3634 = vpop.f32.mrf.mxu0
    %v3635 = vadd.f32 0.0, %v3634
    %v3636 = vpop.f32.mrf.mxu0
    %v3637 = vadd.f32 0.0, %v3636
    %3638 = vmatprep.mubr.bf16.mxu0 %v3527
    %3639 = vmatmul.mubr.bf16.gmra.mxu0 %v3352
    %v3640 = vpop.f32.mrf.mxu0
    %v3641 = vadd.f32 0.0, %v3640
    %v3642 = vpop.f32.mrf.mxu0
    %v3643 = vadd.f32 0.0, %v3642
    %v3644 = vpop.f32.mrf.mxu0
    %v3645 = vadd.f32 0.0, %v3644
    %v3646 = vpop.f32.mrf.mxu0
    %v3647 = vadd.f32 0.0, %v3646
    %3648 = vdwg.mxu0
    %3649 = vst [vmem:[#allocation2] sm:$0xff] %v3571
    %3650 = vst.msk [vmem:[#allocation2 + $0x8] sm:$0xff] %vm3504, %v3573
    %3651 = vst [vmem:[#allocation2 + $0x10] sm:$0xff] %v3575
    %3652 = vst.msk [vmem:[#allocation2 + $0x18] sm:$0xff] %vm3504, %v3577
    %3653 = vst [vmem:[#allocation2 + $0x20] sm:$0xff] %v3581
    %3654 = vst.msk [vmem:[#allocation2 + $0x28] sm:$0xff] %vm3504, %v3583
    %3655 = vst [vmem:[#allocation2 + $0x30] sm:$0xff] %v3585
    %3656 = vst.msk [vmem:[#allocation2 + $0x38] sm:$0xff] %vm3504, %v3587
    %3657 = vst [vmem:[#allocation2 + $0x40] sm:$0xff] %v3591
    %3658 = vst.msk [vmem:[#allocation2 + $0x48] sm:$0xff] %vm3504, %v3593
    %3659 = vst [vmem:[#allocation2 + $0x50] sm:$0xff] %v3595
    %3660 = vst.msk [vmem:[#allocation2 + $0x58] sm:$0xff] %vm3504, %v3597
    %3661 = vst [vmem:[#allocation2 + $0x60] sm:$0xff] %v3601
    %3662 = vst.msk [vmem:[#allocation2 + $0x68] sm:$0xff] %vm3504, %v3603
    %3663 = vst [vmem:[#allocation2 + $0x70] sm:$0xff] %v3605
    %3664 = vst.msk [vmem:[#allocation2 + $0x78] sm:$0xff] %vm3504, %v3607
    %3665 = vst [vmem:[#allocation2 + $0x80] sm:$0xff] %v3611
    %3666 = vst.msk [vmem:[#allocation2 + $0x88] sm:$0xff] %vm3504, %v3613
    %3667 = vst [vmem:[#allocation2 + $0x90] sm:$0xff] %v3615
    %3668 = vst.msk [vmem:[#allocation2 + $0x98] sm:$0xff] %vm3504, %v3617
    %3669 = vst [vmem:[#allocation2 + $0xa0] sm:$0xff] %v3621
    %3670 = vst.msk [vmem:[#allocation2 + $0xa8] sm:$0xff] %vm3504, %v3623
    %3671 = vst [vmem:[#allocation2 + $0xb0] sm:$0xff] %v3625
    %3672 = vst.msk [vmem:[#allocation2 + $0xb8] sm:$0xff] %vm3504, %v3627
    %3673 = vst [vmem:[#allocation2 + $0xc0] sm:$0xff] %v3631
    %3674 = vst.msk [vmem:[#allocation2 + $0xc8] sm:$0xff] %vm3504, %v3633
    %3675 = vst [vmem:[#allocation2 + $0xd0] sm:$0xff] %v3635
    %3676 = vst.msk [vmem:[#allocation2 + $0xd8] sm:$0xff] %vm3504, %v3637
    %3677 = vst [vmem:[#allocation2 + $0xe0] sm:$0xff] %v3641
    %3678 = vst.msk [vmem:[#allocation2 + $0xe8] sm:$0xff] %vm3504, %v3643
    %3679 = vst [vmem:[#allocation2 + $0xf0] sm:$0xff] %v3645
    %3680 = vst.msk [vmem:[#allocation2 + $0xf8] sm:$0xff] %vm3504, %v3647
    %v3681 = vld [vmem:[%s5] sm:$0xff]
    %v3682 = vld [vmem:[%s5 + $0x8] sm:$0xff]
    %v3683 = vld [vmem:[%s5 + $0x10] sm:$0xff]
    %v3684 = vld [vmem:[%s5 + $0x18] sm:$0xff]
    %v3685 = vld [vmem:[%s5 + $0x20] sm:$0xff]
    %v3686 = vld [vmem:[%s5 + $0x28] sm:$0xff]
    %v3687 = vld [vmem:[%s5 + $0x30] sm:$0xff]
    %v3688 = vld [vmem:[%s5 + $0x38] sm:$0xff]
    %v3689 = vld [vmem:[%s5 + $0x40] sm:$0xff]
    %v3690 = vld [vmem:[%s5 + $0x48] sm:$0xff]
    %v3691 = vld [vmem:[%s5 + $0x50] sm:$0xff]
    %v3692 = vld [vmem:[%s5 + $0x58] sm:$0xff]
    %v3693 = vld [vmem:[%s5 + $0x60] sm:$0xf]
    %v3694 = vld [vmem:[%s6] sm:$0xff]
    %v3695 = vld [vmem:[%s6 + $0x8] sm:$0xff]
    %v3696 = vld [vmem:[%s6 + $0x10] sm:$0xff]
    %v3697 = vld [vmem:[%s6 + $0x18] sm:$0xff]
    %v3698 = vld [vmem:[%s6 + $0x20] sm:$0xff]
    %v3699 = vld [vmem:[%s6 + $0x28] sm:$0xff]
    %v3700 = vld [vmem:[%s6 + $0x30] sm:$0xff]
    %v3701 = vld [vmem:[%s6 + $0x38] sm:$0xff]
    %v3702 = vld [vmem:[%s6 + $0x40] sm:$0xff]
    %v3703 = vld [vmem:[%s6 + $0x48] sm:$0xff]
    %v3704 = vld [vmem:[%s6 + $0x50] sm:$0xff]
    %v3705 = vld [vmem:[%s6 + $0x58] sm:$0xff]
    %v3706 = vld [vmem:[%s6 + $0x60] sm:$0xf]
    loop: start=0, step=1, limit=2
    $region38: #{gcn_forward.2} parent=1 // loop_pre_header
      _
    $region39: #{gcn_forward.2} parent=1 // loop_header
      %s3708 = sphi 0, %s3712
      %p3709 = scmp.ge.s32.totalorder %s3708, 2
    $region40: #{gcn_forward.2} parent=1 // loop_header_branch
      %3711 = sbr.rel (%p3709) target = $region44
    $region41: #{gcn_forward.2} parent=1 // loop_body
      %s3713 = smul.u32 %s3708, 16
      %s3714 = smul.addr %s3713, 8
      %s3715 = scalar_lea.vmem [#allocation2], %s3714
      %v3716 = vld [vmem:[%s3715] sm:$0xff]
      %v3717 = vld [vmem:[%s3715 + $0x8] sm:$0xff]
      %v3718 = vld [vmem:[%s3715 + $0x10] sm:$0xff]
      %v3719 = vld [vmem:[%s3715 + $0x18] sm:$0xff]
      %v3720 = vld [vmem:[%s3715 + $0x20] sm:$0xff]
      %v3721 = vld [vmem:[%s3715 + $0x28] sm:$0xff]
      %v3722 = vld [vmem:[%s3715 + $0x30] sm:$0xff]
      %v3723 = vld [vmem:[%s3715 + $0x38] sm:$0xff]
      %v3724 = vld [vmem:[%s3715 + $0x40] sm:$0xff]
      %v3725 = vld [vmem:[%s3715 + $0x48] sm:$0xff]
      %v3726 = vld [vmem:[%s3715 + $0x50] sm:$0xff]
      %v3727 = vld [vmem:[%s3715 + $0x58] sm:$0xff]
      %v3728 = vld [vmem:[%s3715 + $0x60] sm:$0xff]
      %v3729 = vld [vmem:[%s3715 + $0x68] sm:$0xff]
      %v3730 = vld [vmem:[%s3715 + $0x70] sm:$0xff]
      %v3731 = vld [vmem:[%s3715 + $0x78] sm:$0xff]
      %vm3732 = vcmask 523264
      %v3734 = vsel %vm3732, %v3681, 0
      %v3737 = vsel %vm3732, %v3682, 0
      %v3740 = vsel %vm3732, %v3683, 0
      %v3743 = vsel %vm3732, %v3684, 0
      %v3746 = vsel %vm3732, %v3685, 0
      %v3749 = vsel %vm3732, %v3686, 0
      %v3752 = vsel %vm3732, %v3687, 0
      %v3755 = vsel %vm3732, %v3688, 0
      %v3758 = vsel %vm3732, %v3689, 0
      %v3761 = vsel %vm3732, %v3690, 0
      %v3764 = vsel %vm3732, %v3691, 0
      %v3767 = vsel %vm3732, %v3692, 0
      %v3770 = vsel %vm3732, %v3693, 0
      %3772 = vmatprep.subr.mxu0 0.0
      %3773 = vmatpush1.msra.mxu0 0.0
      %3774 = vmatprep.subr.mxu0 0.0
      %3775 = vmatpush1.msra.mxu0 0.0
      %3776 = vmatprep.subr.mxu0 0.0
      %3777 = vmatpush1.msra.mxu0 0.0
      %3778 = vmatprep.subr.mxu0 0.0
      %3779 = vmatpush1.msra.mxu0 0.0
      %3780 = vmatprep.subr.mxu0 0.0
      %3781 = vmatpush1.msra.mxu0 0.0
      %3782 = vmatprep.subr.mxu0 0.0
      %3783 = vmatpush1.msra.mxu0 0.0
      %3784 = vmatprep.subr.mxu0 0.0
      %3785 = vmatpush1.msra.mxu0 0.0
      %3786 = vmatprep.subr.mxu0 0.0
      %3787 = vmatpush1.msra.mxu0 0.0
      %3788 = vmatprep.subr.mxu0 %v3731
      %3789 = vmatpush1.msra.mxu0 %v3730
      %3790 = vmatprep.subr.mxu0 %v3729
      %3791 = vmatpush1.msra.mxu0 %v3728
      %3792 = vmatprep.subr.mxu0 %v3727
      %3793 = vmatpush1.msra.mxu0 %v3726
      %3794 = vmatprep.subr.mxu0 %v3725
      %3795 = vmatpush1.msra.mxu0 %v3724
      %3796 = vmatprep.subr.mxu0 %v3723
      %3797 = vmatpush1.msra.mxu0 %v3722
      %3798 = vmatprep.subr.mxu0 %v3721
      %3799 = vmatpush1.msra.mxu0 %v3720
      %3800 = vmatprep.subr.mxu0 %v3719
      %3801 = vmatpush1.msra.mxu0 %v3718
      %3802 = vmatprep.subr.mxu0 %v3717
      %3803 = vmatpush1.msra.mxu0 %v3716
      %3804 = vmatprep.subr.mxu0 0.0
      %3805 = vmatpush2.msra.mxu0 0.0
      %3806 = vmatprep.subr.mxu0 0.0
      %3807 = vmatpush2.msra.mxu0 0.0
      %3808 = vmatprep.subr.mxu0 0.0
      %3809 = vmatpush2.msra.mxu0 0.0
      %3810 = vmatprep.subr.mxu0 0.0
      %3811 = vmatpush2.msra.mxu0 0.0
      %3812 = vmatprep.subr.mxu0 0.0
      %3813 = vmatpush2.msra.mxu0 0.0
      %3814 = vmatprep.subr.mxu0 0.0
      %3815 = vmatpush2.msra.mxu0 0.0
      %3816 = vmatprep.subr.mxu0 0.0
      %3817 = vmatpush2.msra.mxu0 0.0
      %3818 = vmatprep.subr.mxu0 0.0
      %3819 = vmatpush2.msra.mxu0 0.0
      %3820 = vmatprep.subr.mxu0 0.0
      %3821 = vmatpush2.msra.mxu0 0.0
      %3822 = vmatprep.subr.mxu0 0.0
      %3823 = vmatpush2.msra.mxu0 0.0
      %3824 = vmatprep.subr.mxu0 0.0
      %3825 = vmatpush2.msra.mxu0 0.0
      %3826 = vmatprep.subr.mxu0 0.0
      %3827 = vmatpush2.msra.mxu0 0.0
      %3828 = vmatprep.subr.mxu0 0.0
      %3829 = vmatpush2.msra.mxu0 0.0
      %3830 = vmatprep.subr.mxu0 0.0
      %3831 = vmatpush2.msra.mxu0 0.0
      %3832 = vmatprep.subr.mxu0 0.0
      %3833 = vmatpush2.msra.mxu0 0.0
      %3834 = vmatprep.subr.mxu0 0.0
      %3835 = vmatpush2.msra.mxu0 0.0
      %3836 = vmatprep.mubr.f32.mxu0 0.0
      %3837 = vmatmul.mubr.f32.gmra.mxu0 %v3734
      %v3838 = vpop.f32.mrf.mxu0
      %v3839 = vadd.f32 0.0, %v3838
      %v3840 = vpop.f32.mrf.mxu0
      %v3841 = vadd.f32 0.0, %v3840
      %3842 = vmatprep.mubr.f32.mxu0 0.0
      %3843 = vmatmul.mubr.f32.gmra.mxu0 %v3737
      %v3844 = vpop.f32.mrf.mxu0
      %v3845 = vadd.f32 0.0, %v3844
      %v3846 = vpop.f32.mrf.mxu0
      %v3847 = vadd.f32 0.0, %v3846
      %3848 = vmatprep.mubr.f32.mxu0 0.0
      %3849 = vmatmul.mubr.f32.gmra.mxu0 %v3740
      %v3850 = vpop.f32.mrf.mxu0
      %v3851 = vadd.f32 0.0, %v3850
      %v3852 = vpop.f32.mrf.mxu0
      %v3853 = vadd.f32 0.0, %v3852
      %3854 = vmatprep.mubr.f32.mxu0 0.0
      %3855 = vmatmul.mubr.f32.gmra.mxu0 %v3743
      %v3856 = vpop.f32.mrf.mxu0
      %v3857 = vadd.f32 0.0, %v3856
      %v3858 = vpop.f32.mrf.mxu0
      %v3859 = vadd.f32 0.0, %v3858
      %3860 = vmatprep.mubr.f32.mxu0 0.0
      %3861 = vmatmul.mubr.f32.gmra.mxu0 %v3746
      %v3862 = vpop.f32.mrf.mxu0
      %v3863 = vadd.f32 0.0, %v3862
      %v3864 = vpop.f32.mrf.mxu0
      %v3865 = vadd.f32 0.0, %v3864
      %3866 = vmatprep.mubr.f32.mxu0 0.0
      %3867 = vmatmul.mubr.f32.gmra.mxu0 %v3749
      %v3868 = vpop.f32.mrf.mxu0
      %v3869 = vadd.f32 0.0, %v3868
      %v3870 = vpop.f32.mrf.mxu0
      %v3871 = vadd.f32 0.0, %v3870
      %3872 = vmatprep.mubr.f32.mxu0 0.0
      %3873 = vmatmul.mubr.f32.gmra.mxu0 %v3752
      %v3874 = vpop.f32.mrf.mxu0
      %v3875 = vadd.f32 0.0, %v3874
      %v3876 = vpop.f32.mrf.mxu0
      %v3877 = vadd.f32 0.0, %v3876
      %3878 = vmatprep.mubr.f32.mxu0 0.0
      %3879 = vmatmul.mubr.f32.gmra.mxu0 %v3755
      %v3880 = vpop.f32.mrf.mxu0
      %v3881 = vadd.f32 0.0, %v3880
      %v3882 = vpop.f32.mrf.mxu0
      %v3883 = vadd.f32 0.0, %v3882
      %3884 = vmatprep.mubr.f32.mxu0 0.0
      %3885 = vmatmul.mubr.f32.gmra.mxu0 %v3758
      %v3886 = vpop.f32.mrf.mxu0
      %v3887 = vadd.f32 0.0, %v3886
      %v3888 = vpop.f32.mrf.mxu0
      %v3889 = vadd.f32 0.0, %v3888
      %3890 = vmatprep.mubr.f32.mxu0 0.0
      %3891 = vmatmul.mubr.f32.gmra.mxu0 %v3761
      %v3892 = vpop.f32.mrf.mxu0
      %v3893 = vadd.f32 0.0, %v3892
      %v3894 = vpop.f32.mrf.mxu0
      %v3895 = vadd.f32 0.0, %v3894
      %3896 = vmatprep.mubr.f32.mxu0 0.0
      %3897 = vmatmul.mubr.f32.gmra.mxu0 %v3764
      %v3898 = vpop.f32.mrf.mxu0
      %v3899 = vadd.f32 0.0, %v3898
      %v3900 = vpop.f32.mrf.mxu0
      %v3901 = vadd.f32 0.0, %v3900
      %3902 = vmatprep.mubr.f32.mxu0 0.0
      %3903 = vmatmul.mubr.f32.gmra.mxu0 %v3767
      %v3904 = vpop.f32.mrf.mxu0
      %v3905 = vadd.f32 0.0, %v3904
      %v3906 = vpop.f32.mrf.mxu0
      %v3907 = vadd.f32 0.0, %v3906
      %3908 = vmatprep.mubr.f32.mxu0 0.0
      %3909 = vmatmul.mubr.f32.gmra.mxu0 %v3770
      %v3910 = vpop.f32.mrf.mxu0
      %v3911 = vadd.f32 0.0, %v3910
      %v3912 = vpop.f32.mrf.mxu0
      %v3913 = vadd.f32 0.0, %v3912
      %3914 = vdwg.mxu0
      %3928 = vrot.lane.b32.xlu0 %v3839, 79
      %v3929 = vpop.permute.xlu0 %3928
      %3930 = vrot.lane.b32.xlu0 %v3845, 79
      %v3931 = vpop.permute.xlu0 %3930
      %3932 = vrot.lane.b32.xlu0 %v3851, 79
      %v3933 = vpop.permute.xlu0 %3932
      %3934 = vrot.lane.b32.xlu0 %v3857, 79
      %v3935 = vpop.permute.xlu0 %3934
      %3936 = vrot.lane.b32.xlu0 %v3863, 79
      %v3937 = vpop.permute.xlu0 %3936
      %3938 = vrot.lane.b32.xlu0 %v3869, 79
      %v3939 = vpop.permute.xlu0 %3938
      %3940 = vrot.lane.b32.xlu0 %v3875, 79
      %v3941 = vpop.permute.xlu0 %3940
      %3942 = vrot.lane.b32.xlu0 %v3881, 79
      %v3943 = vpop.permute.xlu0 %3942
      %3944 = vrot.lane.b32.xlu0 %v3887, 79
      %v3945 = vpop.permute.xlu0 %3944
      %3946 = vrot.lane.b32.xlu0 %v3893, 79
      %v3947 = vpop.permute.xlu0 %3946
      %3948 = vrot.lane.b32.xlu0 %v3899, 79
      %v3949 = vpop.permute.xlu0 %3948
      %3950 = vrot.lane.b32.xlu0 %v3905, 79
      %v3951 = vpop.permute.xlu0 %3950
      %3952 = vrot.lane.b32.xlu0 %v3911, 79
      %v3953 = vpop.permute.xlu0 %3952
      %v3967 = vmax.f32 %v3839, %v3929
      %v3968 = vmax.f32 %v3845, %v3931
      %v3969 = vmax.f32 %v3851, %v3933
      %v3970 = vmax.f32 %v3857, %v3935
      %v3971 = vmax.f32 %v3863, %v3937
      %v3972 = vmax.f32 %v3869, %v3939
      %v3973 = vmax.f32 %v3875, %v3941
      %v3974 = vmax.f32 %v3881, %v3943
      %v3975 = vmax.f32 %v3887, %v3945
      %v3976 = vmax.f32 %v3893, %v3947
      %v3977 = vmax.f32 %v3899, %v3949
      %v3978 = vmax.f32 %v3905, %v3951
      %v3979 = vmax.f32 %v3911, %v3953
      %3993 = vrot.lane.b32.xlu0 %v3841, 79
      %v3994 = vpop.permute.xlu0 %3993
      %3995 = vrot.lane.b32.xlu0 %v3847, 79
      %v3996 = vpop.permute.xlu0 %3995
      %3997 = vrot.lane.b32.xlu0 %v3853, 79
      %v3998 = vpop.permute.xlu0 %3997
      %3999 = vrot.lane.b32.xlu0 %v3859, 79
      %v4000 = vpop.permute.xlu0 %3999
      %4001 = vrot.lane.b32.xlu0 %v3865, 79
      %v4002 = vpop.permute.xlu0 %4001
      %4003 = vrot.lane.b32.xlu0 %v3871, 79
      %v4004 = vpop.permute.xlu0 %4003
      %4005 = vrot.lane.b32.xlu0 %v3877, 79
      %v4006 = vpop.permute.xlu0 %4005
      %4007 = vrot.lane.b32.xlu0 %v3883, 79
      %v4008 = vpop.permute.xlu0 %4007
      %4009 = vrot.lane.b32.xlu0 %v3889, 79
      %v4010 = vpop.permute.xlu0 %4009
      %4011 = vrot.lane.b32.xlu0 %v3895, 79
      %v4012 = vpop.permute.xlu0 %4011
      %4013 = vrot.lane.b32.xlu0 %v3901, 79
      %v4014 = vpop.permute.xlu0 %4013
      %4015 = vrot.lane.b32.xlu0 %v3907, 79
      %v4016 = vpop.permute.xlu0 %4015
      %4017 = vrot.lane.b32.xlu0 %v3913, 79
      %v4018 = vpop.permute.xlu0 %4017
      %v4032 = vmax.f32 %v3839, %v3994
      %v4033 = vmax.f32 %v3841, %v3994
      %v4034 = vmax.f32 %v3845, %v3996
      %v4035 = vmax.f32 %v3847, %v3996
      %v4036 = vmax.f32 %v3851, %v3998
      %v4037 = vmax.f32 %v3853, %v3998
      %v4038 = vmax.f32 %v3857, %v4000
      %v4039 = vmax.f32 %v3859, %v4000
      %v4040 = vmax.f32 %v3863, %v4002
      %v4041 = vmax.f32 %v3865, %v4002
      %v4042 = vmax.f32 %v3869, %v4004
      %v4043 = vmax.f32 %v3871, %v4004
      %v4044 = vmax.f32 %v3875, %v4006
      %v4045 = vmax.f32 %v3877, %v4006
      %v4046 = vmax.f32 %v3881, %v4008
      %v4047 = vmax.f32 %v3883, %v4008
      %v4048 = vmax.f32 %v3887, %v4010
      %v4049 = vmax.f32 %v3889, %v4010
      %v4050 = vmax.f32 %v3893, %v4012
      %v4051 = vmax.f32 %v3895, %v4012
      %v4052 = vmax.f32 %v3899, %v4014
      %v4053 = vmax.f32 %v3901, %v4014
      %v4054 = vmax.f32 %v3905, %v4016
      %v4055 = vmax.f32 %v3907, %v4016
      %v4056 = vmax.f32 %v3911, %v4018
      %v4057 = vmax.f32 %v3913, %v4018
      %4084 = vrot.lane.b32.xlu0 %v4032, 30
      %v4085 = vpop.permute.xlu0 %4084
      %4086 = vrot.lane.b32.xlu0 %v4033, 30
      %v4087 = vpop.permute.xlu0 %4086
      %4088 = vrot.lane.b32.xlu0 %v4034, 30
      %v4089 = vpop.permute.xlu0 %4088
      %4090 = vrot.lane.b32.xlu0 %v4035, 30
      %v4091 = vpop.permute.xlu0 %4090
      %4092 = vrot.lane.b32.xlu0 %v4036, 30
      %v4093 = vpop.permute.xlu0 %4092
      %4094 = vrot.lane.b32.xlu0 %v4037, 30
      %v4095 = vpop.permute.xlu0 %4094
      %4096 = vrot.lane.b32.xlu0 %v4038, 30
      %v4097 = vpop.permute.xlu0 %4096
      %4098 = vrot.lane.b32.xlu0 %v4039, 30
      %v4099 = vpop.permute.xlu0 %4098
      %4100 = vrot.lane.b32.xlu0 %v4040, 30
      %v4101 = vpop.permute.xlu0 %4100
      %4102 = vrot.lane.b32.xlu0 %v4041, 30
      %v4103 = vpop.permute.xlu0 %4102
      %4104 = vrot.lane.b32.xlu0 %v4042, 30
      %v4105 = vpop.permute.xlu0 %4104
      %4106 = vrot.lane.b32.xlu0 %v4043, 30
      %v4107 = vpop.permute.xlu0 %4106
      %4108 = vrot.lane.b32.xlu0 %v4044, 30
      %v4109 = vpop.permute.xlu0 %4108
      %4110 = vrot.lane.b32.xlu0 %v4045, 30
      %v4111 = vpop.permute.xlu0 %4110
      %4112 = vrot.lane.b32.xlu0 %v4046, 30
      %v4113 = vpop.permute.xlu0 %4112
      %4114 = vrot.lane.b32.xlu0 %v4047, 30
      %v4115 = vpop.permute.xlu0 %4114
      %4116 = vrot.lane.b32.xlu0 %v4048, 30
      %v4117 = vpop.permute.xlu0 %4116
      %4118 = vrot.lane.b32.xlu0 %v4049, 30
      %v4119 = vpop.permute.xlu0 %4118
      %4120 = vrot.lane.b32.xlu0 %v4050, 30
      %v4121 = vpop.permute.xlu0 %4120
      %4122 = vrot.lane.b32.xlu0 %v4051, 30
      %v4123 = vpop.permute.xlu0 %4122
      %4124 = vrot.lane.b32.xlu0 %v4052, 30
      %v4125 = vpop.permute.xlu0 %4124
      %4126 = vrot.lane.b32.xlu0 %v4053, 30
      %v4127 = vpop.permute.xlu0 %4126
      %4128 = vrot.lane.b32.xlu0 %v4054, 30
      %v4129 = vpop.permute.xlu0 %4128
      %4130 = vrot.lane.b32.xlu0 %v4055, 30
      %v4131 = vpop.permute.xlu0 %4130
      %4132 = vrot.lane.b32.xlu0 %v4056, 30
      %v4133 = vpop.permute.xlu0 %4132
      %4134 = vrot.lane.b32.xlu0 %v4057, 30
      %v4135 = vpop.permute.xlu0 %4134
      %vm4136 = vcmask 244736
      %v4137 = vsel %vm4136, %v4085, %v4087
      %v4138 = vsel %vm4136, %v4089, %v4091
      %v4139 = vsel %vm4136, %v4093, %v4095
      %v4140 = vsel %vm4136, %v4097, %v4099
      %v4141 = vsel %vm4136, %v4101, %v4103
      %v4142 = vsel %vm4136, %v4105, %v4107
      %v4143 = vsel %vm4136, %v4109, %v4111
      %v4144 = vsel %vm4136, %v4113, %v4115
      %v4145 = vsel %vm4136, %v4117, %v4119
      %v4146 = vsel %vm4136, %v4121, %v4123
      %v4147 = vsel %vm4136, %v4125, %v4127
      %v4148 = vsel %vm4136, %v4129, %v4131
      %v4149 = vsel %vm4136, %v4133, %v4135
      %v4163 = vmax.f32 %v3967, %v4137
      %v4164 = vmax.f32 %v3968, %v4138
      %v4165 = vmax.f32 %v3969, %v4139
      %v4166 = vmax.f32 %v3970, %v4140
      %v4167 = vmax.f32 %v3971, %v4141
      %v4168 = vmax.f32 %v3972, %v4142
      %v4169 = vmax.f32 %v3973, %v4143
      %v4170 = vmax.f32 %v3974, %v4144
      %v4171 = vmax.f32 %v3975, %v4145
      %v4172 = vmax.f32 %v3976, %v4146
      %v4173 = vmax.f32 %v3977, %v4147
      %v4174 = vmax.f32 %v3978, %v4148
      %v4175 = vmax.f32 %v3979, %v4149
      %4177 = vset.pattern.permute.xlu0 0
      %4178 = vperm.xlu0 %4177, %v3694
      %v4179 = vpop.permute.xlu0 %4178
      %4182 = vset.pattern.permute.xlu0 0
      %4183 = vperm.xlu0 %4182, %v3695
      %v4184 = vpop.permute.xlu0 %4183
      %4187 = vset.pattern.permute.xlu0 0
      %4188 = vperm.xlu0 %4187, %v3696
      %v4189 = vpop.permute.xlu0 %4188
      %4192 = vset.pattern.permute.xlu0 0
      %4193 = vperm.xlu0 %4192, %v3697
      %v4194 = vpop.permute.xlu0 %4193
      %4197 = vset.pattern.permute.xlu0 0
      %4198 = vperm.xlu0 %4197, %v3698
      %v4199 = vpop.permute.xlu0 %4198
      %4202 = vset.pattern.permute.xlu0 0
      %4203 = vperm.xlu0 %4202, %v3699
      %v4204 = vpop.permute.xlu0 %4203
      %4207 = vset.pattern.permute.xlu0 0
      %4208 = vperm.xlu0 %4207, %v3700
      %v4209 = vpop.permute.xlu0 %4208
      %4212 = vset.pattern.permute.xlu0 0
      %4213 = vperm.xlu0 %4212, %v3701
      %v4214 = vpop.permute.xlu0 %4213
      %4217 = vset.pattern.permute.xlu0 0
      %4218 = vperm.xlu0 %4217, %v3702
      %v4219 = vpop.permute.xlu0 %4218
      %4222 = vset.pattern.permute.xlu0 0
      %4223 = vperm.xlu0 %4222, %v3703
      %v4224 = vpop.permute.xlu0 %4223
      %4227 = vset.pattern.permute.xlu0 0
      %4228 = vperm.xlu0 %4227, %v3704
      %v4229 = vpop.permute.xlu0 %4228
      %4232 = vset.pattern.permute.xlu0 0
      %4233 = vperm.xlu0 %4232, %v3705
      %v4234 = vpop.permute.xlu0 %4233
      %4237 = vset.pattern.permute.xlu0 0
      %4238 = vperm.xlu0 %4237, %v3706
      %v4239 = vpop.permute.xlu0 %4238
      %v4241 = vadd.f32 %v4163, %v4179
      %v4242 = vadd.f32 %v4164, %v4184
      %v4243 = vadd.f32 %v4165, %v4189
      %v4244 = vadd.f32 %v4166, %v4194
      %v4245 = vadd.f32 %v4167, %v4199
      %v4246 = vadd.f32 %v4168, %v4204
      %v4247 = vadd.f32 %v4169, %v4209
      %v4248 = vadd.f32 %v4170, %v4214
      %v4249 = vadd.f32 %v4171, %v4219
      %v4250 = vadd.f32 %v4172, %v4224
      %v4251 = vadd.f32 %v4173, %v4229
      %v4252 = vadd.f32 %v4174, %v4234
      %v4253 = vadd.f32 %v4175, %v4239
      %v4254 = vmax.f32 %v4241, 0.0
      %v4255 = vmax.f32 %v4242, 0.0
      %v4256 = vmax.f32 %v4243, 0.0
      %v4257 = vmax.f32 %v4244, 0.0
      %v4258 = vmax.f32 %v4245, 0.0
      %v4259 = vmax.f32 %v4246, 0.0
      %v4260 = vmax.f32 %v4247, 0.0
      %v4261 = vmax.f32 %v4248, 0.0
      %v4262 = vmax.f32 %v4249, 0.0
      %v4263 = vmax.f32 %v4250, 0.0
      %v4264 = vmax.f32 %v4251, 0.0
      %v4265 = vmax.f32 %v4252, 0.0
      %v4266 = vmax.f32 %v4253, 0.0
      %v4267 = vpack.c.bf16 %v4255, %v4254
      %v4268 = vpack.c.bf16 %v4257, %v4256
      %v4269 = vpack.c.bf16 %v4259, %v4258
      %v4270 = vpack.c.bf16 %v4261, %v4260
      %v4271 = vpack.c.bf16 %v4263, %v4262
      %v4272 = vpack.c.bf16 %v4265, %v4264
      %v4273 = vpack.c.bf16 %v4266, %v4266
      %v4281 = vunpack.c.l.b16 %v4267
      %v4282 = vunpack.c.h.b16 %v4267
      %v4283 = vunpack.c.l.b16 %v4268
      %v4284 = vunpack.c.h.b16 %v4268
      %v4285 = vunpack.c.l.b16 %v4269
      %v4286 = vunpack.c.h.b16 %v4269
      %v4287 = vunpack.c.l.b16 %v4270
      %v4288 = vunpack.c.h.b16 %v4270
      %v4289 = vunpack.c.l.b16 %v4271
      %v4290 = vunpack.c.h.b16 %v4271
      %v4291 = vunpack.c.l.b16 %v4272
      %v4292 = vunpack.c.h.b16 %v4272
      %v4293 = vunpack.c.l.b16 %v4273
      %v4294 = vpack.c.b16 %v4281, %v4281
      %v4295 = vpack.c.b16 %v4282, %v4282
      %v4296 = vpack.c.b16 %v4283, %v4283
      %v4297 = vpack.c.b16 %v4284, %v4284
      %v4298 = vpack.c.b16 %v4285, %v4285
      %v4299 = vpack.c.b16 %v4286, %v4286
      %v4300 = vpack.c.b16 %v4287, %v4287
      %v4301 = vpack.c.b16 %v4288, %v4288
      %v4302 = vpack.c.b16 %v4289, %v4289
      %v4303 = vpack.c.b16 %v4290, %v4290
      %v4304 = vpack.c.b16 %v4291, %v4291
      %v4305 = vpack.c.b16 %v4292, %v4292
      %v4306 = vpack.c.b16 %v4293, %v4293
      %s4320 = smul.u32 %s3708, 13
      %s4321 = smul.addr %s4320, 4
      %s4322 = scalar_lea.vmem %s7, %s4321
      %vm4323 = vcmask 396288
      %4324 = vst.msk [vmem:[%s4322] sm:$0xf] %vm4323, %v4294
      %4325 = vst.msk [vmem:[%s4322 + $0x4] sm:$0xf] %vm4323, %v4295
      %4326 = vst.msk [vmem:[%s4322 + $0x8] sm:$0xf] %vm4323, %v4296
      %4327 = vst.msk [vmem:[%s4322 + $0xc] sm:$0xf] %vm4323, %v4297
      %4328 = vst.msk [vmem:[%s4322 + $0x10] sm:$0xf] %vm4323, %v4298
      %4329 = vst.msk [vmem:[%s4322 + $0x14] sm:$0xf] %vm4323, %v4299
      %4330 = vst.msk [vmem:[%s4322 + $0x18] sm:$0xf] %vm4323, %v4300
      %4331 = vst.msk [vmem:[%s4322 + $0x1c] sm:$0xf] %vm4323, %v4301
      %4332 = vst.msk [vmem:[%s4322 + $0x20] sm:$0xf] %vm4323, %v4302
      %4333 = vst.msk [vmem:[%s4322 + $0x24] sm:$0xf] %vm4323, %v4303
      %4334 = vst.msk [vmem:[%s4322 + $0x28] sm:$0xf] %vm4323, %v4304
      %4335 = vst.msk [vmem:[%s4322 + $0x2c] sm:$0xf] %vm4323, %v4305
      %vm4336 = vcmask 394240
      %4337 = vst.msk [vmem:[%s4322 + $0x30] sm:$0x3] %vm4336, %v4306
    $region42: #{gcn_forward.2} parent=1 // loop_footer
      %s3712 = sadd.s32 1, %s3708
    $region43: #{gcn_forward.2} parent=1 // loop_footer_branch
      %3707 = sbr.rel target = $region39
    $region44: #{gcn_forward.2} parent=1 // loop_exit
      _
    // Predicated region
    $region45: #{gcn_forward.2} parent=1 // pred_check
      _
    $region46: #{gcn_forward.2} parent=1 // pred_check_branch
      %4339 = sbr.rel (0) target = $region48
    $region47: #{gcn_forward.2} parent=1 // pred_region
      _
    $region48: #{gcn_forward.2} parent=1 // pred_fallthru
      _
    // Predicated region
    $region49: #{gcn_forward.2} parent=1 // pred_check
      _
    $region50: #{gcn_forward.2} parent=1 // pred_check_branch
      %4341 = sbr.rel (0) target = $region52
    $region51: #{gcn_forward.2} parent=1 // pred_region
      _
    $region52: #{gcn_forward.2} parent=1 // pred_fallthru
      _
    %4342 = vsyncpa [#allocation4], 1
    %4343 = vsyncpa [#allocation6], 1

// kernel: gcn_forward.3
$region0: #{gcn_forward.3}
  #allocation0 [shape = 'u32[]', space=smem, size = 0x4, offset = 0x4, fixed_abs, tag = 'smem constant byte address 0x4 - core index']
  #allocation1 [shape = 'u32[144,128]{1,0:T(1,128)}', space=vmem, size = 0x12000, scoped, tag = 'internal scratch']
  %s0 = inlined_call_operand.vmem [shape: bf16[2,4900], index: 0, kind: input, shape index: {}]
  %s1 = inlined_call_operand.vmem [shape: bf16[4900,128], index: 1, kind: input, shape index: {}]
  %s2 = inlined_call_operand.vmem [shape: f32[1,128], index: 2, kind: input, shape index: {}]
  %s3 = inlined_call_operand.vmem [shape: f32[128,10], index: 3, kind: input, shape index: {}]
  %s4 = inlined_call_operand.vmem [shape: f32[1,10], index: 4, kind: input, shape index: {}]
  %s5 = inlined_call_operand.hbm [shape: f32[2,10], index: 5, kind: output, shape index: {}]
  %s6 = sld [smem:[#allocation0]]
  $region30: #{gcn_forward.3} parent=0
    _
  %s8 = ssub.s32 1, %s6
  %s9 = scalar_select 0, %s8, %s6
  $region1: #{gcn_forward.3} parent=0
    #allocation2 [shape = 'u8[1024]{0}', space=vmem, size = 0x400, scoped, tag = 'output window, operand 0, single buffered']
    #allocation3 [shape = 's32[1]{0}', space=sflag, size = 0x4, scoped, tag = 'scoped memory for gcn_forward.3']
    %10 = vsyncpa [#allocation3], 0
    // Predicated region
    $region2: #{gcn_forward.3} parent=1 // pred_check
      _
    $region3: #{gcn_forward.3} parent=1 // pred_check_branch
      %12 = sbr.rel (0) target = $region5
    $region4: #{gcn_forward.3} parent=1 // pred_region
      _
    $region5: #{gcn_forward.3} parent=1 // pred_fallthru
      _
    // Predicated region
    $region6: #{gcn_forward.3} parent=1 // pred_check
      _
    $region7: #{gcn_forward.3} parent=1 // pred_check_branch
      %14 = sbr.rel (0) target = $region9
    $region8: #{gcn_forward.3} parent=1 // pred_region
      _
    $region9: #{gcn_forward.3} parent=1 // pred_fallthru
      _
    // Predicated region
    $region10: #{gcn_forward.3} parent=1 // pred_check
      _
    $region11: #{gcn_forward.3} parent=1 // pred_check_branch
      %16 = sbr.rel (0) target = $region13
    $region12: #{gcn_forward.3} parent=1 // pred_region
      _
    $region13: #{gcn_forward.3} parent=1 // pred_fallthru
      _
    // Predicated region
    $region14: #{gcn_forward.3} parent=1 // pred_check
      _
    $region15: #{gcn_forward.3} parent=1 // pred_check_branch
      %18 = sbr.rel (0) target = $region17
    $region16: #{gcn_forward.3} parent=1 // pred_region
      _
    $region17: #{gcn_forward.3} parent=1 // pred_fallthru
      _
    // Predicated region
    $region18: #{gcn_forward.3} parent=1 // pred_check
      _
    $region19: #{gcn_forward.3} parent=1 // pred_check_branch
      %20 = sbr.rel (0) target = $region21
    $region20: #{gcn_forward.3} parent=1 // pred_region
      _
    $region21: #{gcn_forward.3} parent=1 // pred_fallthru
      _
    %v22 = vld [vmem:[%s0] sm:$0xff]
    %v23 = vld [vmem:[%s0 + $0x8] sm:$0xff]
    %v24 = vld [vmem:[%s0 + $0x10] sm:$0xff]
    %v25 = vld [vmem:[%s0 + $0x18] sm:$0xff]
    %v26 = vld [vmem:[%s0 + $0x20] sm:$0x7f]
    %v27 = vld [vmem:[%s1] sm:$0xf]
    %v28 = vld [vmem:[%s1 + $0x4] sm:$0xf]
    %v29 = vld [vmem:[%s1 + $0x8] sm:$0xf]
    %v30 = vld [vmem:[%s1 + $0xc] sm:$0xf]
    %v31 = vld [vmem:[%s1 + $0x10] sm:$0xf]
    %v32 = vld [vmem:[%s1 + $0x14] sm:$0xf]
    %v33 = vld [vmem:[%s1 + $0x18] sm:$0xf]
    %v34 = vld [vmem:[%s1 + $0x1c] sm:$0xf]
    %v35 = vld [vmem:[%s1 + $0x20] sm:$0xf]
    %v36 = vld [vmem:[%s1 + $0x24] sm:$0xf]
    %v37 = vld [vmem:[%s1 + $0x28] sm:$0xf]
    %v38 = vld [vmem:[%s1 + $0x2c] sm:$0xf]
    %v39 = vld [vmem:[%s1 + $0x30] sm:$0xf]
    %v40 = vld [vmem:[%s1 + $0x34] sm:$0xf]
    %v41 = vld [vmem:[%s1 + $0x38] sm:$0xf]
    %v42 = vld [vmem:[%s1 + $0x3c] sm:$0xf]
    %v43 = vld [vmem:[%s1 + $0x40] sm:$0xf]
    %v44 = vld [vmem:[%s1 + $0x44] sm:$0xf]
    %v45 = vld [vmem:[%s1 + $0x48] sm:$0xf]
    %v46 = vld [vmem:[%s1 + $0x4c] sm:$0xf]
    %v47 = vld [vmem:[%s1 + $0x50] sm:$0xf]
    %v48 = vld [vmem:[%s1 + $0x54] sm:$0xf]
    %v49 = vld [vmem:[%s1 + $0x58] sm:$0xf]
    %v50 = vld [vmem:[%s1 + $0x5c] sm:$0xf]
    %v51 = vld [vmem:[%s1 + $0x60] sm:$0xf]
    %v52 = vld [vmem:[%s1 + $0x64] sm:$0xf]
    %v53 = vld [vmem:[%s1 + $0x68] sm:$0xf]
    %v54 = vld [vmem:[%s1 + $0x6c] sm:$0xf]
    %v55 = vld [vmem:[%s1 + $0x70] sm:$0xf]
    %v56 = vld [vmem:[%s1 + $0x74] sm:$0xf]
    %v57 = vld [vmem:[%s1 + $0x78] sm:$0xf]
    %v58 = vld [vmem:[%s1 + $0x7c] sm:$0xf]
    %v59 = vld [vmem:[%s1 + $0x80] sm:$0xf]
    %v60 = vld [vmem:[%s1 + $0x84] sm:$0xf]
    %v61 = vld [vmem:[%s1 + $0x88] sm:$0xf]
    %v62 = vld [vmem:[%s1 + $0x8c] sm:$0xf]
    %v63 = vld [vmem:[%s1 + $0x90] sm:$0xf]
    %v64 = vld [vmem:[%s1 + $0x94] sm:$0xf]
    %v65 = vld [vmem:[%s1 + $0x98] sm:$0xf]
    %v66 = vld [vmem:[%s1 + $0x9c] sm:$0xf]
    %v67 = vld [vmem:[%s1 + $0xa0] sm:$0xf]
    %v68 = vld [vmem:[%s1 + $0xa4] sm:$0xf]
    %v69 = vld [vmem:[%s1 + $0xa8] sm:$0xf]
    %v70 = vld [vmem:[%s1 + $0xac] sm:$0xf]
    %v71 = vld [vmem:[%s1 + $0xb0] sm:$0xf]
    %v72 = vld [vmem:[%s1 + $0xb4] sm:$0xf]
    %v73 = vld [vmem:[%s1 + $0xb8] sm:$0xf]
    %v74 = vld [vmem:[%s1 + $0xbc] sm:$0xf]
    %v75 = vld [vmem:[%s1 + $0xc0] sm:$0xf]
    %v76 = vld [vmem:[%s1 + $0xc4] sm:$0xf]
    %v77 = vld [vmem:[%s1 + $0xc8] sm:$0xf]
    %v78 = vld [vmem:[%s1 + $0xcc] sm:$0xf]
    %v79 = vld [vmem:[%s1 + $0xd0] sm:$0xf]
    %v80 = vld [vmem:[%s1 + $0xd4] sm:$0xf]
    %v81 = vld [vmem:[%s1 + $0xd8] sm:$0xf]
    %v82 = vld [vmem:[%s1 + $0xdc] sm:$0xf]
    %v83 = vld [vmem:[%s1 + $0xe0] sm:$0xf]
    %v84 = vld [vmem:[%s1 + $0xe4] sm:$0xf]
    %v85 = vld [vmem:[%s1 + $0xe8] sm:$0xf]
    %v86 = vld [vmem:[%s1 + $0xec] sm:$0xf]
    %v87 = vld [vmem:[%s1 + $0xf0] sm:$0xf]
    %v88 = vld [vmem:[%s1 + $0xf4] sm:$0xf]
    %v89 = vld [vmem:[%s1 + $0xf8] sm:$0xf]
    %v90 = vld [vmem:[%s1 + $0xfc] sm:$0xf]
    %v91 = vld [vmem:[%s1 + $0x100] sm:$0xf]
    %v92 = vld [vmem:[%s1 + $0x104] sm:$0xf]
    %v93 = vld [vmem:[%s1 + $0x108] sm:$0xf]
    %v94 = vld [vmem:[%s1 + $0x10c] sm:$0xf]
    %v95 = vld [vmem:[%s1 + $0x110] sm:$0xf]
    %v96 = vld [vmem:[%s1 + $0x114] sm:$0xf]
    %v97 = vld [vmem:[%s1 + $0x118] sm:$0xf]
    %v98 = vld [vmem:[%s1 + $0x11c] sm:$0xf]
    %v99 = vld [vmem:[%s1 + $0x120] sm:$0xf]
    %v100 = vld [vmem:[%s1 + $0x124] sm:$0xf]
    %v101 = vld [vmem:[%s1 + $0x128] sm:$0xf]
    %v102 = vld [vmem:[%s1 + $0x12c] sm:$0xf]
    %v103 = vld [vmem:[%s1 + $0x130] sm:$0xf]
    %v104 = vld [vmem:[%s1 + $0x134] sm:$0xf]
    %v105 = vld [vmem:[%s1 + $0x138] sm:$0xf]
    %v106 = vld [vmem:[%s1 + $0x13c] sm:$0xf]
    %v107 = vld [vmem:[%s1 + $0x140] sm:$0xf]
    %v108 = vld [vmem:[%s1 + $0x144] sm:$0xf]
    %v109 = vld [vmem:[%s1 + $0x148] sm:$0xf]
    %v110 = vld [vmem:[%s1 + $0x14c] sm:$0xf]
    %v111 = vld [vmem:[%s1 + $0x150] sm:$0xf]
    %v112 = vld [vmem:[%s1 + $0x154] sm:$0xf]
    %v113 = vld [vmem:[%s1 + $0x158] sm:$0xf]
    %v114 = vld [vmem:[%s1 + $0x15c] sm:$0xf]
    %v115 = vld [vmem:[%s1 + $0x160] sm:$0xf]
    %v116 = vld [vmem:[%s1 + $0x164] sm:$0xf]
    %v117 = vld [vmem:[%s1 + $0x168] sm:$0xf]
    %v118 = vld [vmem:[%s1 + $0x16c] sm:$0xf]
    %v119 = vld [vmem:[%s1 + $0x170] sm:$0xf]
    %v120 = vld [vmem:[%s1 + $0x174] sm:$0xf]
    %v121 = vld [vmem:[%s1 + $0x178] sm:$0xf]
    %v122 = vld [vmem:[%s1 + $0x17c] sm:$0xf]
    %v123 = vld [vmem:[%s1 + $0x180] sm:$0xf]
    %v124 = vld [vmem:[%s1 + $0x184] sm:$0xf]
    %v125 = vld [vmem:[%s1 + $0x188] sm:$0xf]
    %v126 = vld [vmem:[%s1 + $0x18c] sm:$0xf]
    %v127 = vld [vmem:[%s1 + $0x190] sm:$0xf]
    %v128 = vld [vmem:[%s1 + $0x194] sm:$0xf]
    %v129 = vld [vmem:[%s1 + $0x198] sm:$0xf]
    %v130 = vld [vmem:[%s1 + $0x19c] sm:$0xf]
    %v131 = vld [vmem:[%s1 + $0x1a0] sm:$0xf]
    %v132 = vld [vmem:[%s1 + $0x1a4] sm:$0xf]
    %v133 = vld [vmem:[%s1 + $0x1a8] sm:$0xf]
    %v134 = vld [vmem:[%s1 + $0x1ac] sm:$0xf]
    %v135 = vld [vmem:[%s1 + $0x1b0] sm:$0xf]
    %v136 = vld [vmem:[%s1 + $0x1b4] sm:$0xf]
    %v137 = vld [vmem:[%s1 + $0x1b8] sm:$0xf]
    %v138 = vld [vmem:[%s1 + $0x1bc] sm:$0xf]
    %v139 = vld [vmem:[%s1 + $0x1c0] sm:$0xf]
    %v140 = vld [vmem:[%s1 + $0x1c4] sm:$0xf]
    %v141 = vld [vmem:[%s1 + $0x1c8] sm:$0xf]
    %v142 = vld [vmem:[%s1 + $0x1cc] sm:$0xf]
    %v143 = vld [vmem:[%s1 + $0x1d0] sm:$0xf]
    %v144 = vld [vmem:[%s1 + $0x1d4] sm:$0xf]
    %v145 = vld [vmem:[%s1 + $0x1d8] sm:$0xf]
    %v146 = vld [vmem:[%s1 + $0x1dc] sm:$0xf]
    %v147 = vld [vmem:[%s1 + $0x1e0] sm:$0xf]
    %v148 = vld [vmem:[%s1 + $0x1e4] sm:$0xf]
    %v149 = vld [vmem:[%s1 + $0x1e8] sm:$0xf]
    %v150 = vld [vmem:[%s1 + $0x1ec] sm:$0xf]
    %v151 = vld [vmem:[%s1 + $0x1f0] sm:$0xf]
    %v152 = vld [vmem:[%s1 + $0x1f4] sm:$0xf]
    %v153 = vld [vmem:[%s1 + $0x1f8] sm:$0xf]
    %v154 = vld [vmem:[%s1 + $0x1fc] sm:$0xf]
    %v155 = vld [vmem:[%s1 + $0x200] sm:$0xf]
    %v156 = vld [vmem:[%s1 + $0x204] sm:$0xf]
    %v157 = vld [vmem:[%s1 + $0x208] sm:$0xf]
    %v158 = vld [vmem:[%s1 + $0x20c] sm:$0xf]
    %v159 = vld [vmem:[%s1 + $0x210] sm:$0xf]
    %v160 = vld [vmem:[%s1 + $0x214] sm:$0xf]
    %v161 = vld [vmem:[%s1 + $0x218] sm:$0xf]
    %v162 = vld [vmem:[%s1 + $0x21c] sm:$0xf]
    %v163 = vld [vmem:[%s1 + $0x220] sm:$0xf]
    %v164 = vld [vmem:[%s1 + $0x224] sm:$0xf]
    %v165 = vld [vmem:[%s1 + $0x228] sm:$0xf]
    %v166 = vld [vmem:[%s1 + $0x22c] sm:$0xf]
    %v167 = vld [vmem:[%s1 + $0x230] sm:$0xf]
    %v168 = vld [vmem:[%s1 + $0x234] sm:$0xf]
    %v169 = vld [vmem:[%s1 + $0x238] sm:$0xf]
    %v170 = vld [vmem:[%s1 + $0x23c] sm:$0xf]
    %v171 = vld [vmem:[%s1 + $0x240] sm:$0xf]
    %v172 = vld [vmem:[%s1 + $0x244] sm:$0xf]
    %v173 = vld [vmem:[%s1 + $0x248] sm:$0xf]
    %v174 = vld [vmem:[%s1 + $0x24c] sm:$0xf]
    %v175 = vld [vmem:[%s1 + $0x250] sm:$0xf]
    %v176 = vld [vmem:[%s1 + $0x254] sm:$0xf]
    %v177 = vld [vmem:[%s1 + $0x258] sm:$0xf]
    %v178 = vld [vmem:[%s1 + $0x25c] sm:$0xf]
    %v179 = vld [vmem:[%s1 + $0x260] sm:$0xf]
    %v180 = vld [vmem:[%s1 + $0x264] sm:$0xf]
    %v181 = vld [vmem:[%s1 + $0x268] sm:$0xf]
    %v182 = vld [vmem:[%s1 + $0x26c] sm:$0xf]
    %v183 = vld [vmem:[%s1 + $0x270] sm:$0xf]
    %v184 = vld [vmem:[%s1 + $0x274] sm:$0xf]
    %v185 = vld [vmem:[%s1 + $0x278] sm:$0xf]
    %v186 = vld [vmem:[%s1 + $0x27c] sm:$0xf]
    %v187 = vld [vmem:[%s1 + $0x280] sm:$0xf]
    %v188 = vld [vmem:[%s1 + $0x284] sm:$0xf]
    %v189 = vld [vmem:[%s1 + $0x288] sm:$0xf]
    %v190 = vld [vmem:[%s1 + $0x28c] sm:$0xf]
    %v191 = vld [vmem:[%s1 + $0x290] sm:$0xf]
    %v192 = vld [vmem:[%s1 + $0x294] sm:$0xf]
    %v193 = vld [vmem:[%s1 + $0x298] sm:$0xf]
    %v194 = vld [vmem:[%s1 + $0x29c] sm:$0xf]
    %v195 = vld [vmem:[%s1 + $0x2a0] sm:$0xf]
    %v196 = vld [vmem:[%s1 + $0x2a4] sm:$0xf]
    %v197 = vld [vmem:[%s1 + $0x2a8] sm:$0xf]
    %v198 = vld [vmem:[%s1 + $0x2ac] sm:$0xf]
    %v199 = vld [vmem:[%s1 + $0x2b0] sm:$0xf]
    %v200 = vld [vmem:[%s1 + $0x2b4] sm:$0xf]
    %v201 = vld [vmem:[%s1 + $0x2b8] sm:$0xf]
    %v202 = vld [vmem:[%s1 + $0x2bc] sm:$0xf]
    %v203 = vld [vmem:[%s1 + $0x2c0] sm:$0xf]
    %v204 = vld [vmem:[%s1 + $0x2c4] sm:$0xf]
    %v205 = vld [vmem:[%s1 + $0x2c8] sm:$0xf]
    %v206 = vld [vmem:[%s1 + $0x2cc] sm:$0xf]
    %v207 = vld [vmem:[%s1 + $0x2d0] sm:$0xf]
    %v208 = vld [vmem:[%s1 + $0x2d4] sm:$0xf]
    %v209 = vld [vmem:[%s1 + $0x2d8] sm:$0xf]
    %v210 = vld [vmem:[%s1 + $0x2dc] sm:$0xf]
    %v211 = vld [vmem:[%s1 + $0x2e0] sm:$0xf]
    %v212 = vld [vmem:[%s1 + $0x2e4] sm:$0xf]
    %v213 = vld [vmem:[%s1 + $0x2e8] sm:$0xf]
    %v214 = vld [vmem:[%s1 + $0x2ec] sm:$0xf]
    %v215 = vld [vmem:[%s1 + $0x2f0] sm:$0xf]
    %v216 = vld [vmem:[%s1 + $0x2f4] sm:$0xf]
    %v217 = vld [vmem:[%s1 + $0x2f8] sm:$0xf]
    %v218 = vld [vmem:[%s1 + $0x2fc] sm:$0xf]
    %v219 = vld [vmem:[%s1 + $0x300] sm:$0xf]
    %v220 = vld [vmem:[%s1 + $0x304] sm:$0xf]
    %v221 = vld [vmem:[%s1 + $0x308] sm:$0xf]
    %v222 = vld [vmem:[%s1 + $0x30c] sm:$0xf]
    %v223 = vld [vmem:[%s1 + $0x310] sm:$0xf]
    %v224 = vld [vmem:[%s1 + $0x314] sm:$0xf]
    %v225 = vld [vmem:[%s1 + $0x318] sm:$0xf]
    %v226 = vld [vmem:[%s1 + $0x31c] sm:$0xf]
    %v227 = vld [vmem:[%s1 + $0x320] sm:$0xf]
    %v228 = vld [vmem:[%s1 + $0x324] sm:$0xf]
    %v229 = vld [vmem:[%s1 + $0x328] sm:$0xf]
    %v230 = vld [vmem:[%s1 + $0x32c] sm:$0xf]
    %v231 = vld [vmem:[%s1 + $0x330] sm:$0xf]
    %v232 = vld [vmem:[%s1 + $0x334] sm:$0xf]
    %v233 = vld [vmem:[%s1 + $0x338] sm:$0xf]
    %v234 = vld [vmem:[%s1 + $0x33c] sm:$0xf]
    %v235 = vld [vmem:[%s1 + $0x340] sm:$0xf]
    %v236 = vld [vmem:[%s1 + $0x344] sm:$0xf]
    %v237 = vld [vmem:[%s1 + $0x348] sm:$0xf]
    %v238 = vld [vmem:[%s1 + $0x34c] sm:$0xf]
    %v239 = vld [vmem:[%s1 + $0x350] sm:$0xf]
    %v240 = vld [vmem:[%s1 + $0x354] sm:$0xf]
    %v241 = vld [vmem:[%s1 + $0x358] sm:$0xf]
    %v242 = vld [vmem:[%s1 + $0x35c] sm:$0xf]
    %v243 = vld [vmem:[%s1 + $0x360] sm:$0xf]
    %v244 = vld [vmem:[%s1 + $0x364] sm:$0xf]
    %v245 = vld [vmem:[%s1 + $0x368] sm:$0xf]
    %v246 = vld [vmem:[%s1 + $0x36c] sm:$0xf]
    %v247 = vld [vmem:[%s1 + $0x370] sm:$0xf]
    %v248 = vld [vmem:[%s1 + $0x374] sm:$0xf]
    %v249 = vld [vmem:[%s1 + $0x378] sm:$0xf]
    %v250 = vld [vmem:[%s1 + $0x37c] sm:$0xf]
    %v251 = vld [vmem:[%s1 + $0x380] sm:$0xf]
    %v252 = vld [vmem:[%s1 + $0x384] sm:$0xf]
    %v253 = vld [vmem:[%s1 + $0x388] sm:$0xf]
    %v254 = vld [vmem:[%s1 + $0x38c] sm:$0xf]
    %v255 = vld [vmem:[%s1 + $0x390] sm:$0xf]
    %v256 = vld [vmem:[%s1 + $0x394] sm:$0xf]
    %v257 = vld [vmem:[%s1 + $0x398] sm:$0xf]
    %v258 = vld [vmem:[%s1 + $0x39c] sm:$0xf]
    %v259 = vld [vmem:[%s1 + $0x3a0] sm:$0xf]
    %v260 = vld [vmem:[%s1 + $0x3a4] sm:$0xf]
    %v261 = vld [vmem:[%s1 + $0x3a8] sm:$0xf]
    %v262 = vld [vmem:[%s1 + $0x3ac] sm:$0xf]
    %v263 = vld [vmem:[%s1 + $0x3b0] sm:$0xf]
    %v264 = vld [vmem:[%s1 + $0x3b4] sm:$0xf]
    %v265 = vld [vmem:[%s1 + $0x3b8] sm:$0xf]
    %v266 = vld [vmem:[%s1 + $0x3bc] sm:$0xf]
    %v267 = vld [vmem:[%s1 + $0x3c0] sm:$0xf]
    %v268 = vld [vmem:[%s1 + $0x3c4] sm:$0xf]
    %v269 = vld [vmem:[%s1 + $0x3c8] sm:$0xf]
    %v270 = vld [vmem:[%s1 + $0x3cc] sm:$0xf]
    %v271 = vld [vmem:[%s1 + $0x3d0] sm:$0xf]
    %v272 = vld [vmem:[%s1 + $0x3d4] sm:$0xf]
    %v273 = vld [vmem:[%s1 + $0x3d8] sm:$0xf]
    %v274 = vld [vmem:[%s1 + $0x3dc] sm:$0xf]
    %v275 = vld [vmem:[%s1 + $0x3e0] sm:$0xf]
    %v276 = vld [vmem:[%s1 + $0x3e4] sm:$0xf]
    %v277 = vld [vmem:[%s1 + $0x3e8] sm:$0xf]
    %v278 = vld [vmem:[%s1 + $0x3ec] sm:$0xf]
    %v279 = vld [vmem:[%s1 + $0x3f0] sm:$0xf]
    %v280 = vld [vmem:[%s1 + $0x3f4] sm:$0xf]
    %v281 = vld [vmem:[%s1 + $0x3f8] sm:$0xf]
    %v282 = vld [vmem:[%s1 + $0x3fc] sm:$0xf]
    %v283 = vld [vmem:[%s1 + $0x400] sm:$0xf]
    %v284 = vld [vmem:[%s1 + $0x404] sm:$0xf]
    %v285 = vld [vmem:[%s1 + $0x408] sm:$0xf]
    %v286 = vld [vmem:[%s1 + $0x40c] sm:$0xf]
    %v287 = vld [vmem:[%s1 + $0x410] sm:$0xf]
    %v288 = vld [vmem:[%s1 + $0x414] sm:$0xf]
    %v289 = vld [vmem:[%s1 + $0x418] sm:$0xf]
    %v290 = vld [vmem:[%s1 + $0x41c] sm:$0xf]
    %v291 = vld [vmem:[%s1 + $0x420] sm:$0xf]
    %v292 = vld [vmem:[%s1 + $0x424] sm:$0xf]
    %v293 = vld [vmem:[%s1 + $0x428] sm:$0xf]
    %v294 = vld [vmem:[%s1 + $0x42c] sm:$0xf]
    %v295 = vld [vmem:[%s1 + $0x430] sm:$0xf]
    %v296 = vld [vmem:[%s1 + $0x434] sm:$0xf]
    %v297 = vld [vmem:[%s1 + $0x438] sm:$0xf]
    %v298 = vld [vmem:[%s1 + $0x43c] sm:$0xf]
    %v299 = vld [vmem:[%s1 + $0x440] sm:$0xf]
    %v300 = vld [vmem:[%s1 + $0x444] sm:$0xf]
    %v301 = vld [vmem:[%s1 + $0x448] sm:$0xf]
    %v302 = vld [vmem:[%s1 + $0x44c] sm:$0xf]
    %v303 = vld [vmem:[%s1 + $0x450] sm:$0xf]
    %v304 = vld [vmem:[%s1 + $0x454] sm:$0xf]
    %v305 = vld [vmem:[%s1 + $0x458] sm:$0xf]
    %v306 = vld [vmem:[%s1 + $0x45c] sm:$0xf]
    %v307 = vld [vmem:[%s1 + $0x460] sm:$0xf]
    %v308 = vld [vmem:[%s1 + $0x464] sm:$0xf]
    %v309 = vld [vmem:[%s1 + $0x468] sm:$0xf]
    %v310 = vld [vmem:[%s1 + $0x46c] sm:$0xf]
    %v311 = vld [vmem:[%s1 + $0x470] sm:$0xf]
    %v312 = vld [vmem:[%s1 + $0x474] sm:$0xf]
    %v313 = vld [vmem:[%s1 + $0x478] sm:$0xf]
    %v314 = vld [vmem:[%s1 + $0x47c] sm:$0xf]
    %v315 = vld [vmem:[%s1 + $0x480] sm:$0xf]
    %v316 = vld [vmem:[%s1 + $0x484] sm:$0xf]
    %v317 = vld [vmem:[%s1 + $0x488] sm:$0xf]
    %v318 = vld [vmem:[%s1 + $0x48c] sm:$0xf]
    %v319 = vld [vmem:[%s1 + $0x490] sm:$0xf]
    %v320 = vld [vmem:[%s1 + $0x494] sm:$0xf]
    %v321 = vld [vmem:[%s1 + $0x498] sm:$0xf]
    %v322 = vld [vmem:[%s1 + $0x49c] sm:$0xf]
    %v323 = vld [vmem:[%s1 + $0x4a0] sm:$0xf]
    %v324 = vld [vmem:[%s1 + $0x4a4] sm:$0xf]
    %v325 = vld [vmem:[%s1 + $0x4a8] sm:$0xf]
    %v326 = vld [vmem:[%s1 + $0x4ac] sm:$0xf]
    %v327 = vld [vmem:[%s1 + $0x4b0] sm:$0xf]
    %v328 = vld [vmem:[%s1 + $0x4b4] sm:$0xf]
    %v329 = vld [vmem:[%s1 + $0x4b8] sm:$0xf]
    %v330 = vld [vmem:[%s1 + $0x4bc] sm:$0xf]
    %v331 = vld [vmem:[%s1 + $0x4c0] sm:$0xf]
    %v332 = vld [vmem:[%s1 + $0x4c4] sm:$0xf]
    %v333 = vld [vmem:[%s1 + $0x4c8] sm:$0xf]
    %v334 = vld [vmem:[%s1 + $0x4cc] sm:$0xf]
    %v335 = vld [vmem:[%s1 + $0x4d0] sm:$0xf]
    %v336 = vld [vmem:[%s1 + $0x4d4] sm:$0xf]
    %v337 = vld [vmem:[%s1 + $0x4d8] sm:$0xf]
    %v338 = vld [vmem:[%s1 + $0x4dc] sm:$0xf]
    %v339 = vld [vmem:[%s1 + $0x4e0] sm:$0xf]
    %v340 = vld [vmem:[%s1 + $0x4e4] sm:$0xf]
    %v341 = vld [vmem:[%s1 + $0x4e8] sm:$0xf]
    %v342 = vld [vmem:[%s1 + $0x4ec] sm:$0xf]
    %v343 = vld [vmem:[%s1 + $0x4f0] sm:$0xf]
    %v344 = vld [vmem:[%s1 + $0x4f4] sm:$0xf]
    %v345 = vld [vmem:[%s1 + $0x4f8] sm:$0xf]
    %v346 = vld [vmem:[%s1 + $0x4fc] sm:$0xf]
    %v347 = vld [vmem:[%s1 + $0x500] sm:$0xf]
    %v348 = vld [vmem:[%s1 + $0x504] sm:$0xf]
    %v349 = vld [vmem:[%s1 + $0x508] sm:$0xf]
    %v350 = vld [vmem:[%s1 + $0x50c] sm:$0xf]
    %v351 = vld [vmem:[%s1 + $0x510] sm:$0xf]
    %v352 = vld [vmem:[%s1 + $0x514] sm:$0xf]
    %v353 = vld [vmem:[%s1 + $0x518] sm:$0xf]
    %v354 = vld [vmem:[%s1 + $0x51c] sm:$0xf]
    %v355 = vld [vmem:[%s1 + $0x520] sm:$0xf]
    %v356 = vld [vmem:[%s1 + $0x524] sm:$0xf]
    %v357 = vld [vmem:[%s1 + $0x528] sm:$0xf]
    %v358 = vld [vmem:[%s1 + $0x52c] sm:$0xf]
    %v359 = vld [vmem:[%s1 + $0x530] sm:$0xf]
    %v360 = vld [vmem:[%s1 + $0x534] sm:$0xf]
    %v361 = vld [vmem:[%s1 + $0x538] sm:$0xf]
    %v362 = vld [vmem:[%s1 + $0x53c] sm:$0xf]
    %v363 = vld [vmem:[%s1 + $0x540] sm:$0xf]
    %v364 = vld [vmem:[%s1 + $0x544] sm:$0xf]
    %v365 = vld [vmem:[%s1 + $0x548] sm:$0xf]
    %v366 = vld [vmem:[%s1 + $0x54c] sm:$0xf]
    %v367 = vld [vmem:[%s1 + $0x550] sm:$0xf]
    %v368 = vld [vmem:[%s1 + $0x554] sm:$0xf]
    %v369 = vld [vmem:[%s1 + $0x558] sm:$0xf]
    %v370 = vld [vmem:[%s1 + $0x55c] sm:$0xf]
    %v371 = vld [vmem:[%s1 + $0x560] sm:$0xf]
    %v372 = vld [vmem:[%s1 + $0x564] sm:$0xf]
    %v373 = vld [vmem:[%s1 + $0x568] sm:$0xf]
    %v374 = vld [vmem:[%s1 + $0x56c] sm:$0xf]
    %v375 = vld [vmem:[%s1 + $0x570] sm:$0xf]
    %v376 = vld [vmem:[%s1 + $0x574] sm:$0xf]
    %v377 = vld [vmem:[%s1 + $0x578] sm:$0xf]
    %v378 = vld [vmem:[%s1 + $0x57c] sm:$0xf]
    %v379 = vld [vmem:[%s1 + $0x580] sm:$0xf]
    %v380 = vld [vmem:[%s1 + $0x584] sm:$0xf]
    %v381 = vld [vmem:[%s1 + $0x588] sm:$0xf]
    %v382 = vld [vmem:[%s1 + $0x58c] sm:$0xf]
    %v383 = vld [vmem:[%s1 + $0x590] sm:$0xf]
    %v384 = vld [vmem:[%s1 + $0x594] sm:$0xf]
    %v385 = vld [vmem:[%s1 + $0x598] sm:$0xf]
    %v386 = vld [vmem:[%s1 + $0x59c] sm:$0xf]
    %v387 = vld [vmem:[%s1 + $0x5a0] sm:$0xf]
    %v388 = vld [vmem:[%s1 + $0x5a4] sm:$0xf]
    %v389 = vld [vmem:[%s1 + $0x5a8] sm:$0xf]
    %v390 = vld [vmem:[%s1 + $0x5ac] sm:$0xf]
    %v391 = vld [vmem:[%s1 + $0x5b0] sm:$0xf]
    %v392 = vld [vmem:[%s1 + $0x5b4] sm:$0xf]
    %v393 = vld [vmem:[%s1 + $0x5b8] sm:$0xf]
    %v394 = vld [vmem:[%s1 + $0x5bc] sm:$0xf]
    %v395 = vld [vmem:[%s1 + $0x5c0] sm:$0xf]
    %v396 = vld [vmem:[%s1 + $0x5c4] sm:$0xf]
    %v397 = vld [vmem:[%s1 + $0x5c8] sm:$0xf]
    %v398 = vld [vmem:[%s1 + $0x5cc] sm:$0xf]
    %v399 = vld [vmem:[%s1 + $0x5d0] sm:$0xf]
    %v400 = vld [vmem:[%s1 + $0x5d4] sm:$0xf]
    %v401 = vld [vmem:[%s1 + $0x5d8] sm:$0xf]
    %v402 = vld [vmem:[%s1 + $0x5dc] sm:$0xf]
    %v403 = vld [vmem:[%s1 + $0x5e0] sm:$0xf]
    %v404 = vld [vmem:[%s1 + $0x5e4] sm:$0xf]
    %v405 = vld [vmem:[%s1 + $0x5e8] sm:$0xf]
    %v406 = vld [vmem:[%s1 + $0x5ec] sm:$0xf]
    %v407 = vld [vmem:[%s1 + $0x5f0] sm:$0xf]
    %v408 = vld [vmem:[%s1 + $0x5f4] sm:$0xf]
    %v409 = vld [vmem:[%s1 + $0x5f8] sm:$0xf]
    %v410 = vld [vmem:[%s1 + $0x5fc] sm:$0xf]
    %v411 = vld [vmem:[%s1 + $0x600] sm:$0xf]
    %v412 = vld [vmem:[%s1 + $0x604] sm:$0xf]
    %v413 = vld [vmem:[%s1 + $0x608] sm:$0xf]
    %v414 = vld [vmem:[%s1 + $0x60c] sm:$0xf]
    %v415 = vld [vmem:[%s1 + $0x610] sm:$0xf]
    %v416 = vld [vmem:[%s1 + $0x614] sm:$0xf]
    %v417 = vld [vmem:[%s1 + $0x618] sm:$0xf]
    %v418 = vld [vmem:[%s1 + $0x61c] sm:$0xf]
    %v419 = vld [vmem:[%s1 + $0x620] sm:$0xf]
    %v420 = vld [vmem:[%s1 + $0x624] sm:$0xf]
    %v421 = vld [vmem:[%s1 + $0x628] sm:$0xf]
    %v422 = vld [vmem:[%s1 + $0x62c] sm:$0xf]
    %v423 = vld [vmem:[%s1 + $0x630] sm:$0xf]
    %v424 = vld [vmem:[%s1 + $0x634] sm:$0xf]
    %v425 = vld [vmem:[%s1 + $0x638] sm:$0xf]
    %v426 = vld [vmem:[%s1 + $0x63c] sm:$0xf]
    %v427 = vld [vmem:[%s1 + $0x640] sm:$0xf]
    %v428 = vld [vmem:[%s1 + $0x644] sm:$0xf]
    %v429 = vld [vmem:[%s1 + $0x648] sm:$0xf]
    %v430 = vld [vmem:[%s1 + $0x64c] sm:$0xf]
    %v431 = vld [vmem:[%s1 + $0x650] sm:$0xf]
    %v432 = vld [vmem:[%s1 + $0x654] sm:$0xf]
    %v433 = vld [vmem:[%s1 + $0x658] sm:$0xf]
    %v434 = vld [vmem:[%s1 + $0x65c] sm:$0xf]
    %v435 = vld [vmem:[%s1 + $0x660] sm:$0xf]
    %v436 = vld [vmem:[%s1 + $0x664] sm:$0xf]
    %v437 = vld [vmem:[%s1 + $0x668] sm:$0xf]
    %v438 = vld [vmem:[%s1 + $0x66c] sm:$0xf]
    %v439 = vld [vmem:[%s1 + $0x670] sm:$0xf]
    %v440 = vld [vmem:[%s1 + $0x674] sm:$0xf]
    %v441 = vld [vmem:[%s1 + $0x678] sm:$0xf]
    %v442 = vld [vmem:[%s1 + $0x67c] sm:$0xf]
    %v443 = vld [vmem:[%s1 + $0x680] sm:$0xf]
    %v444 = vld [vmem:[%s1 + $0x684] sm:$0xf]
    %v445 = vld [vmem:[%s1 + $0x688] sm:$0xf]
    %v446 = vld [vmem:[%s1 + $0x68c] sm:$0xf]
    %v447 = vld [vmem:[%s1 + $0x690] sm:$0xf]
    %v448 = vld [vmem:[%s1 + $0x694] sm:$0xf]
    %v449 = vld [vmem:[%s1 + $0x698] sm:$0xf]
    %v450 = vld [vmem:[%s1 + $0x69c] sm:$0xf]
    %v451 = vld [vmem:[%s1 + $0x6a0] sm:$0xf]
    %v452 = vld [vmem:[%s1 + $0x6a4] sm:$0xf]
    %v453 = vld [vmem:[%s1 + $0x6a8] sm:$0xf]
    %v454 = vld [vmem:[%s1 + $0x6ac] sm:$0xf]
    %v455 = vld [vmem:[%s1 + $0x6b0] sm:$0xf]
    %v456 = vld [vmem:[%s1 + $0x6b4] sm:$0xf]
    %v457 = vld [vmem:[%s1 + $0x6b8] sm:$0xf]
    %v458 = vld [vmem:[%s1 + $0x6bc] sm:$0xf]
    %v459 = vld [vmem:[%s1 + $0x6c0] sm:$0xf]
    %v460 = vld [vmem:[%s1 + $0x6c4] sm:$0xf]
    %v461 = vld [vmem:[%s1 + $0x6c8] sm:$0xf]
    %v462 = vld [vmem:[%s1 + $0x6cc] sm:$0xf]
    %v463 = vld [vmem:[%s1 + $0x6d0] sm:$0xf]
    %v464 = vld [vmem:[%s1 + $0x6d4] sm:$0xf]
    %v465 = vld [vmem:[%s1 + $0x6d8] sm:$0xf]
    %v466 = vld [vmem:[%s1 + $0x6dc] sm:$0xf]
    %v467 = vld [vmem:[%s1 + $0x6e0] sm:$0xf]
    %v468 = vld [vmem:[%s1 + $0x6e4] sm:$0xf]
    %v469 = vld [vmem:[%s1 + $0x6e8] sm:$0xf]
    %v470 = vld [vmem:[%s1 + $0x6ec] sm:$0xf]
    %v471 = vld [vmem:[%s1 + $0x6f0] sm:$0xf]
    %v472 = vld [vmem:[%s1 + $0x6f4] sm:$0xf]
    %v473 = vld [vmem:[%s1 + $0x6f8] sm:$0xf]
    %v474 = vld [vmem:[%s1 + $0x6fc] sm:$0xf]
    %v475 = vld [vmem:[%s1 + $0x700] sm:$0xf]
    %v476 = vld [vmem:[%s1 + $0x704] sm:$0xf]
    %v477 = vld [vmem:[%s1 + $0x708] sm:$0xf]
    %v478 = vld [vmem:[%s1 + $0x70c] sm:$0xf]
    %v479 = vld [vmem:[%s1 + $0x710] sm:$0xf]
    %v480 = vld [vmem:[%s1 + $0x714] sm:$0xf]
    %v481 = vld [vmem:[%s1 + $0x718] sm:$0xf]
    %v482 = vld [vmem:[%s1 + $0x71c] sm:$0xf]
    %v483 = vld [vmem:[%s1 + $0x720] sm:$0xf]
    %v484 = vld [vmem:[%s1 + $0x724] sm:$0xf]
    %v485 = vld [vmem:[%s1 + $0x728] sm:$0xf]
    %v486 = vld [vmem:[%s1 + $0x72c] sm:$0xf]
    %v487 = vld [vmem:[%s1 + $0x730] sm:$0xf]
    %v488 = vld [vmem:[%s1 + $0x734] sm:$0xf]
    %v489 = vld [vmem:[%s1 + $0x738] sm:$0xf]
    %v490 = vld [vmem:[%s1 + $0x73c] sm:$0xf]
    %v491 = vld [vmem:[%s1 + $0x740] sm:$0xf]
    %v492 = vld [vmem:[%s1 + $0x744] sm:$0xf]
    %v493 = vld [vmem:[%s1 + $0x748] sm:$0xf]
    %v494 = vld [vmem:[%s1 + $0x74c] sm:$0xf]
    %v495 = vld [vmem:[%s1 + $0x750] sm:$0xf]
    %v496 = vld [vmem:[%s1 + $0x754] sm:$0xf]
    %v497 = vld [vmem:[%s1 + $0x758] sm:$0xf]
    %v498 = vld [vmem:[%s1 + $0x75c] sm:$0xf]
    %v499 = vld [vmem:[%s1 + $0x760] sm:$0xf]
    %v500 = vld [vmem:[%s1 + $0x764] sm:$0xf]
    %v501 = vld [vmem:[%s1 + $0x768] sm:$0xf]
    %v502 = vld [vmem:[%s1 + $0x76c] sm:$0xf]
    %v503 = vld [vmem:[%s1 + $0x770] sm:$0xf]
    %v504 = vld [vmem:[%s1 + $0x774] sm:$0xf]
    %v505 = vld [vmem:[%s1 + $0x778] sm:$0xf]
    %v506 = vld [vmem:[%s1 + $0x77c] sm:$0xf]
    %v507 = vld [vmem:[%s1 + $0x780] sm:$0xf]
    %v508 = vld [vmem:[%s1 + $0x784] sm:$0xf]
    %v509 = vld [vmem:[%s1 + $0x788] sm:$0xf]
    %v510 = vld [vmem:[%s1 + $0x78c] sm:$0xf]
    %v511 = vld [vmem:[%s1 + $0x790] sm:$0xf]
    %v512 = vld [vmem:[%s1 + $0x794] sm:$0xf]
    %v513 = vld [vmem:[%s1 + $0x798] sm:$0xf]
    %v514 = vld [vmem:[%s1 + $0x79c] sm:$0xf]
    %v515 = vld [vmem:[%s1 + $0x7a0] sm:$0xf]
    %v516 = vld [vmem:[%s1 + $0x7a4] sm:$0xf]
    %v517 = vld [vmem:[%s1 + $0x7a8] sm:$0xf]
    %v518 = vld [vmem:[%s1 + $0x7ac] sm:$0xf]
    %v519 = vld [vmem:[%s1 + $0x7b0] sm:$0xf]
    %v520 = vld [vmem:[%s1 + $0x7b4] sm:$0xf]
    %v521 = vld [vmem:[%s1 + $0x7b8] sm:$0xf]
    %v522 = vld [vmem:[%s1 + $0x7bc] sm:$0xf]
    %v523 = vld [vmem:[%s1 + $0x7c0] sm:$0xf]
    %v524 = vld [vmem:[%s1 + $0x7c4] sm:$0xf]
    %v525 = vld [vmem:[%s1 + $0x7c8] sm:$0xf]
    %v526 = vld [vmem:[%s1 + $0x7cc] sm:$0xf]
    %v527 = vld [vmem:[%s1 + $0x7d0] sm:$0xf]
    %v528 = vld [vmem:[%s1 + $0x7d4] sm:$0xf]
    %v529 = vld [vmem:[%s1 + $0x7d8] sm:$0xf]
    %v530 = vld [vmem:[%s1 + $0x7dc] sm:$0xf]
    %v531 = vld [vmem:[%s1 + $0x7e0] sm:$0xf]
    %v532 = vld [vmem:[%s1 + $0x7e4] sm:$0xf]
    %v533 = vld [vmem:[%s1 + $0x7e8] sm:$0xf]
    %v534 = vld [vmem:[%s1 + $0x7ec] sm:$0xf]
    %v535 = vld [vmem:[%s1 + $0x7f0] sm:$0xf]
    %v536 = vld [vmem:[%s1 + $0x7f4] sm:$0xf]
    %v537 = vld [vmem:[%s1 + $0x7f8] sm:$0xf]
    %v538 = vld [vmem:[%s1 + $0x7fc] sm:$0xf]
    %v539 = vld [vmem:[%s1 + $0x800] sm:$0xf]
    %v540 = vld [vmem:[%s1 + $0x804] sm:$0xf]
    %v541 = vld [vmem:[%s1 + $0x808] sm:$0xf]
    %v542 = vld [vmem:[%s1 + $0x80c] sm:$0xf]
    %v543 = vld [vmem:[%s1 + $0x810] sm:$0xf]
    %v544 = vld [vmem:[%s1 + $0x814] sm:$0xf]
    %v545 = vld [vmem:[%s1 + $0x818] sm:$0xf]
    %v546 = vld [vmem:[%s1 + $0x81c] sm:$0xf]
    %v547 = vld [vmem:[%s1 + $0x820] sm:$0xf]
    %v548 = vld [vmem:[%s1 + $0x824] sm:$0xf]
    %v549 = vld [vmem:[%s1 + $0x828] sm:$0xf]
    %v550 = vld [vmem:[%s1 + $0x82c] sm:$0xf]
    %v551 = vld [vmem:[%s1 + $0x830] sm:$0xf]
    %v552 = vld [vmem:[%s1 + $0x834] sm:$0xf]
    %v553 = vld [vmem:[%s1 + $0x838] sm:$0xf]
    %v554 = vld [vmem:[%s1 + $0x83c] sm:$0xf]
    %v555 = vld [vmem:[%s1 + $0x840] sm:$0xf]
    %v556 = vld [vmem:[%s1 + $0x844] sm:$0xf]
    %v557 = vld [vmem:[%s1 + $0x848] sm:$0xf]
    %v558 = vld [vmem:[%s1 + $0x84c] sm:$0xf]
    %v559 = vld [vmem:[%s1 + $0x850] sm:$0xf]
    %v560 = vld [vmem:[%s1 + $0x854] sm:$0xf]
    %v561 = vld [vmem:[%s1 + $0x858] sm:$0xf]
    %v562 = vld [vmem:[%s1 + $0x85c] sm:$0xf]
    %v563 = vld [vmem:[%s1 + $0x860] sm:$0xf]
    %v564 = vld [vmem:[%s1 + $0x864] sm:$0xf]
    %v565 = vld [vmem:[%s1 + $0x868] sm:$0xf]
    %v566 = vld [vmem:[%s1 + $0x86c] sm:$0xf]
    %v567 = vld [vmem:[%s1 + $0x870] sm:$0xf]
    %v568 = vld [vmem:[%s1 + $0x874] sm:$0xf]
    %v569 = vld [vmem:[%s1 + $0x878] sm:$0xf]
    %v570 = vld [vmem:[%s1 + $0x87c] sm:$0xf]
    %v571 = vld [vmem:[%s1 + $0x880] sm:$0xf]
    %v572 = vld [vmem:[%s1 + $0x884] sm:$0xf]
    %v573 = vld [vmem:[%s1 + $0x888] sm:$0xf]
    %v574 = vld [vmem:[%s1 + $0x88c] sm:$0xf]
    %v575 = vld [vmem:[%s1 + $0x890] sm:$0xf]
    %v576 = vld [vmem:[%s1 + $0x894] sm:$0xf]
    %v577 = vld [vmem:[%s1 + $0x898] sm:$0xf]
    %v578 = vld [vmem:[%s1 + $0x89c] sm:$0xf]
    %v579 = vld [vmem:[%s1 + $0x8a0] sm:$0xf]
    %v580 = vld [vmem:[%s1 + $0x8a4] sm:$0xf]
    %v581 = vld [vmem:[%s1 + $0x8a8] sm:$0xf]
    %v582 = vld [vmem:[%s1 + $0x8ac] sm:$0xf]
    %v583 = vld [vmem:[%s1 + $0x8b0] sm:$0xf]
    %v584 = vld [vmem:[%s1 + $0x8b4] sm:$0xf]
    %v585 = vld [vmem:[%s1 + $0x8b8] sm:$0xf]
    %v586 = vld [vmem:[%s1 + $0x8bc] sm:$0xf]
    %v587 = vld [vmem:[%s1 + $0x8c0] sm:$0xf]
    %v588 = vld [vmem:[%s1 + $0x8c4] sm:$0xf]
    %v589 = vld [vmem:[%s1 + $0x8c8] sm:$0xf]
    %v590 = vld [vmem:[%s1 + $0x8cc] sm:$0xf]
    %v591 = vld [vmem:[%s1 + $0x8d0] sm:$0xf]
    %v592 = vld [vmem:[%s1 + $0x8d4] sm:$0xf]
    %v593 = vld [vmem:[%s1 + $0x8d8] sm:$0xf]
    %v594 = vld [vmem:[%s1 + $0x8dc] sm:$0xf]
    %v595 = vld [vmem:[%s1 + $0x8e0] sm:$0xf]
    %v596 = vld [vmem:[%s1 + $0x8e4] sm:$0xf]
    %v597 = vld [vmem:[%s1 + $0x8e8] sm:$0xf]
    %v598 = vld [vmem:[%s1 + $0x8ec] sm:$0xf]
    %v599 = vld [vmem:[%s1 + $0x8f0] sm:$0xf]
    %v600 = vld [vmem:[%s1 + $0x8f4] sm:$0xf]
    %v601 = vld [vmem:[%s1 + $0x8f8] sm:$0xf]
    %v602 = vld [vmem:[%s1 + $0x8fc] sm:$0xf]
    %v603 = vld [vmem:[%s1 + $0x900] sm:$0xf]
    %v604 = vld [vmem:[%s1 + $0x904] sm:$0xf]
    %v605 = vld [vmem:[%s1 + $0x908] sm:$0xf]
    %v606 = vld [vmem:[%s1 + $0x90c] sm:$0xf]
    %v607 = vld [vmem:[%s1 + $0x910] sm:$0xf]
    %v608 = vld [vmem:[%s1 + $0x914] sm:$0xf]
    %v609 = vld [vmem:[%s1 + $0x918] sm:$0xf]
    %v610 = vld [vmem:[%s1 + $0x91c] sm:$0xf]
    %v611 = vld [vmem:[%s1 + $0x920] sm:$0xf]
    %v612 = vld [vmem:[%s1 + $0x924] sm:$0xf]
    %v613 = vld [vmem:[%s1 + $0x928] sm:$0xf]
    %v614 = vld [vmem:[%s1 + $0x92c] sm:$0xf]
    %v615 = vld [vmem:[%s1 + $0x930] sm:$0xf]
    %v616 = vld [vmem:[%s1 + $0x934] sm:$0xf]
    %v617 = vld [vmem:[%s1 + $0x938] sm:$0xf]
    %v618 = vld [vmem:[%s1 + $0x93c] sm:$0xf]
    %v619 = vld [vmem:[%s1 + $0x940] sm:$0xf]
    %v620 = vld [vmem:[%s1 + $0x944] sm:$0xf]
    %v621 = vld [vmem:[%s1 + $0x948] sm:$0xf]
    %v622 = vld [vmem:[%s1 + $0x94c] sm:$0xf]
    %v623 = vld [vmem:[%s1 + $0x950] sm:$0xf]
    %v624 = vld [vmem:[%s1 + $0x954] sm:$0xf]
    %v625 = vld [vmem:[%s1 + $0x958] sm:$0xf]
    %v626 = vld [vmem:[%s1 + $0x95c] sm:$0xf]
    %v627 = vld [vmem:[%s1 + $0x960] sm:$0xf]
    %v628 = vld [vmem:[%s1 + $0x964] sm:$0xf]
    %v629 = vld [vmem:[%s1 + $0x968] sm:$0xf]
    %v630 = vld [vmem:[%s1 + $0x96c] sm:$0xf]
    %v631 = vld [vmem:[%s1 + $0x970] sm:$0xf]
    %v632 = vld [vmem:[%s1 + $0x974] sm:$0xf]
    %v633 = vld [vmem:[%s1 + $0x978] sm:$0xf]
    %v634 = vld [vmem:[%s1 + $0x97c] sm:$0xf]
    %v635 = vld [vmem:[%s1 + $0x980] sm:$0xf]
    %v636 = vld [vmem:[%s1 + $0x984] sm:$0xf]
    %v637 = vld [vmem:[%s1 + $0x988] sm:$0xf]
    %v638 = vld [vmem:[%s1 + $0x98c] sm:$0xf]
    %v639 = vld [vmem:[%s1 + $0x990] sm:$0x3]
    %v640 = vld [vmem:[%s2] sm:$0x1]
    %v642 = vlaneseq
    %v643 = vshrl.u32 %v642, 7
    %v644 = vsub.s32 0, %v643
    %v645 = vrot.slane %v640, %v644
    %v652 = vcombine.high %v22, %v22
    %v654 = vunpack.c.l.s4 1966171168
    %v655 = vunpack.c.0.s8 %v654
    %v656 = vlaneseq
    %v657 = vshrl.u32 %v656, 7
    %v658 = vsub.s32 %v655, %v657
    %v659 = vrot.slane %v22, %v658
    %v661 = vunpack.c.l.s4 1966171168
    %v662 = vunpack.c.0.s8 %v661
    %v663 = vlaneseq
    %v664 = vshrl.u32 %v663, 7
    %v665 = vsub.s32 %v662, %v664
    %v666 = vrot.slane %v652, %v665
    %v667 = vcombine.high %v659, %v659
    %v668 = vcombine.high %v666, %v666
    %v670 = vunpack.c.l.s4 1966171168
    %v671 = vunpack.c.0.s8 %v670
    %v672 = vlaneseq
    %v673 = vshrl.u32 %v672, 7
    %v674 = vsub.s32 %v671, %v673
    %v675 = vrot.slane %v659, %v674
    %v677 = vunpack.c.l.s4 1966171168
    %v678 = vunpack.c.0.s8 %v677
    %v679 = vlaneseq
    %v680 = vshrl.u32 %v679, 7
    %v681 = vsub.s32 %v678, %v680
    %v682 = vrot.slane %v666, %v681
    %v684 = vunpack.c.l.s4 1966171168
    %v685 = vunpack.c.0.s8 %v684
    %v686 = vlaneseq
    %v687 = vshrl.u32 %v686, 7
    %v688 = vsub.s32 %v685, %v687
    %v689 = vrot.slane %v667, %v688
    %v691 = vunpack.c.l.s4 1966171168
    %v692 = vunpack.c.0.s8 %v691
    %v693 = vlaneseq
    %v694 = vshrl.u32 %v693, 7
    %v695 = vsub.s32 %v692, %v694
    %v696 = vrot.slane %v668, %v695
    %v697 = vcombine.high %v675, %v675
    %v698 = vcombine.high %v682, %v682
    %v699 = vcombine.high %v689, %v689
    %v700 = vcombine.high %v696, %v696
    %v701 = vcombine.high %v23, %v23
    %v703 = vunpack.c.l.s4 1966171168
    %v704 = vunpack.c.0.s8 %v703
    %v705 = vlaneseq
    %v706 = vshrl.u32 %v705, 7
    %v707 = vsub.s32 %v704, %v706
    %v708 = vrot.slane %v23, %v707
    %v710 = vunpack.c.l.s4 1966171168
    %v711 = vunpack.c.0.s8 %v710
    %v712 = vlaneseq
    %v713 = vshrl.u32 %v712, 7
    %v714 = vsub.s32 %v711, %v713
    %v715 = vrot.slane %v701, %v714
    %v716 = vcombine.high %v708, %v708
    %v717 = vcombine.high %v715, %v715
    %v719 = vunpack.c.l.s4 1966171168
    %v720 = vunpack.c.0.s8 %v719
    %v721 = vlaneseq
    %v722 = vshrl.u32 %v721, 7
    %v723 = vsub.s32 %v720, %v722
    %v724 = vrot.slane %v708, %v723
    %v726 = vunpack.c.l.s4 1966171168
    %v727 = vunpack.c.0.s8 %v726
    %v728 = vlaneseq
    %v729 = vshrl.u32 %v728, 7
    %v730 = vsub.s32 %v727, %v729
    %v731 = vrot.slane %v715, %v730
    %v733 = vunpack.c.l.s4 1966171168
    %v734 = vunpack.c.0.s8 %v733
    %v735 = vlaneseq
    %v736 = vshrl.u32 %v735, 7
    %v737 = vsub.s32 %v734, %v736
    %v738 = vrot.slane %v716, %v737
    %v740 = vunpack.c.l.s4 1966171168
    %v741 = vunpack.c.0.s8 %v740
    %v742 = vlaneseq
    %v743 = vshrl.u32 %v742, 7
    %v744 = vsub.s32 %v741, %v743
    %v745 = vrot.slane %v717, %v744
    %v746 = vcombine.high %v724, %v724
    %v747 = vcombine.high %v731, %v731
    %v748 = vcombine.high %v738, %v738
    %v749 = vcombine.high %v745, %v745
    %v750 = vcombine.high %v24, %v24
    %v752 = vunpack.c.l.s4 1966171168
    %v753 = vunpack.c.0.s8 %v752
    %v754 = vlaneseq
    %v755 = vshrl.u32 %v754, 7
    %v756 = vsub.s32 %v753, %v755
    %v757 = vrot.slane %v24, %v756
    %v759 = vunpack.c.l.s4 1966171168
    %v760 = vunpack.c.0.s8 %v759
    %v761 = vlaneseq
    %v762 = vshrl.u32 %v761, 7
    %v763 = vsub.s32 %v760, %v762
    %v764 = vrot.slane %v750, %v763
    %v765 = vcombine.high %v757, %v757
    %v766 = vcombine.high %v764, %v764
    %v768 = vunpack.c.l.s4 1966171168
    %v769 = vunpack.c.0.s8 %v768
    %v770 = vlaneseq
    %v771 = vshrl.u32 %v770, 7
    %v772 = vsub.s32 %v769, %v771
    %v773 = vrot.slane %v757, %v772
    %v775 = vunpack.c.l.s4 1966171168
    %v776 = vunpack.c.0.s8 %v775
    %v777 = vlaneseq
    %v778 = vshrl.u32 %v777, 7
    %v779 = vsub.s32 %v776, %v778
    %v780 = vrot.slane %v764, %v779
    %v782 = vunpack.c.l.s4 1966171168
    %v783 = vunpack.c.0.s8 %v782
    %v784 = vlaneseq
    %v785 = vshrl.u32 %v784, 7
    %v786 = vsub.s32 %v783, %v785
    %v787 = vrot.slane %v765, %v786
    %v789 = vunpack.c.l.s4 1966171168
    %v790 = vunpack.c.0.s8 %v789
    %v791 = vlaneseq
    %v792 = vshrl.u32 %v791, 7
    %v793 = vsub.s32 %v790, %v792
    %v794 = vrot.slane %v766, %v793
    %v795 = vcombine.high %v773, %v773
    %v796 = vcombine.high %v780, %v780
    %v797 = vcombine.high %v787, %v787
    %v798 = vcombine.high %v794, %v794
    %v799 = vcombine.high %v25, %v25
    %v801 = vunpack.c.l.s4 1966171168
    %v802 = vunpack.c.0.s8 %v801
    %v803 = vlaneseq
    %v804 = vshrl.u32 %v803, 7
    %v805 = vsub.s32 %v802, %v804
    %v806 = vrot.slane %v25, %v805
    %v808 = vunpack.c.l.s4 1966171168
    %v809 = vunpack.c.0.s8 %v808
    %v810 = vlaneseq
    %v811 = vshrl.u32 %v810, 7
    %v812 = vsub.s32 %v809, %v811
    %v813 = vrot.slane %v799, %v812
    %v814 = vcombine.high %v806, %v806
    %v815 = vcombine.high %v813, %v813
    %v817 = vunpack.c.l.s4 1966171168
    %v818 = vunpack.c.0.s8 %v817
    %v819 = vlaneseq
    %v820 = vshrl.u32 %v819, 7
    %v821 = vsub.s32 %v818, %v820
    %v822 = vrot.slane %v806, %v821
    %v824 = vunpack.c.l.s4 1966171168
    %v825 = vunpack.c.0.s8 %v824
    %v826 = vlaneseq
    %v827 = vshrl.u32 %v826, 7
    %v828 = vsub.s32 %v825, %v827
    %v829 = vrot.slane %v813, %v828
    %v831 = vunpack.c.l.s4 1966171168
    %v832 = vunpack.c.0.s8 %v831
    %v833 = vlaneseq
    %v834 = vshrl.u32 %v833, 7
    %v835 = vsub.s32 %v832, %v834
    %v836 = vrot.slane %v814, %v835
    %v838 = vunpack.c.l.s4 1966171168
    %v839 = vunpack.c.0.s8 %v838
    %v840 = vlaneseq
    %v841 = vshrl.u32 %v840, 7
    %v842 = vsub.s32 %v839, %v841
    %v843 = vrot.slane %v815, %v842
    %v844 = vcombine.high %v822, %v822
    %v845 = vcombine.high %v829, %v829
    %v846 = vcombine.high %v836, %v836
    %v847 = vcombine.high %v843, %v843
    %v848 = vcombine.high %v26, %v26
    %v850 = vunpack.c.l.s4 1966171168
    %v851 = vunpack.c.0.s8 %v850
    %v852 = vlaneseq
    %v853 = vshrl.u32 %v852, 7
    %v854 = vsub.s32 %v851, %v853
    %v855 = vrot.slane %v26, %v854
    %v857 = vunpack.c.l.s4 1966171168
    %v858 = vunpack.c.0.s8 %v857
    %v859 = vlaneseq
    %v860 = vshrl.u32 %v859, 7
    %v861 = vsub.s32 %v858, %v860
    %v862 = vrot.slane %v848, %v861
    %v863 = vcombine.high %v855, %v855
    %v864 = vcombine.high %v862, %v862
    %v866 = vunpack.c.l.s4 1966171168
    %v867 = vunpack.c.0.s8 %v866
    %v868 = vlaneseq
    %v869 = vshrl.u32 %v868, 7
    %v870 = vsub.s32 %v867, %v869
    %v871 = vrot.slane %v855, %v870
    %v873 = vunpack.c.l.s4 1966171168
    %v874 = vunpack.c.0.s8 %v873
    %v875 = vlaneseq
    %v876 = vshrl.u32 %v875, 7
    %v877 = vsub.s32 %v874, %v876
    %v878 = vrot.slane %v862, %v877
    %v880 = vunpack.c.l.s4 1966171168
    %v881 = vunpack.c.0.s8 %v880
    %v882 = vlaneseq
    %v883 = vshrl.u32 %v882, 7
    %v884 = vsub.s32 %v881, %v883
    %v885 = vrot.slane %v863, %v884
    %v887 = vunpack.c.l.s4 1966171168
    %v888 = vunpack.c.0.s8 %v887
    %v889 = vlaneseq
    %v890 = vshrl.u32 %v889, 7
    %v891 = vsub.s32 %v888, %v890
    %v892 = vrot.slane %v864, %v891
    %v893 = vcombine.high %v871, %v871
    %v894 = vcombine.high %v878, %v878
    %v895 = vcombine.high %v885, %v885
    %v1547 = vunpack.c.l.b16 %v27
    %v1548 = vunpack.c.l.b16 %v28
    %v1549 = vunpack.c.l.b16 %v29
    %v1550 = vunpack.c.l.b16 %v30
    %v1551 = vunpack.c.l.b16 %v31
    %v1552 = vunpack.c.l.b16 %v32
    %v1553 = vunpack.c.l.b16 %v33
    %v1554 = vunpack.c.l.b16 %v34
    %v1555 = vunpack.c.l.b16 %v35
    %v1556 = vunpack.c.l.b16 %v36
    %v1557 = vunpack.c.l.b16 %v37
    %v1558 = vunpack.c.l.b16 %v38
    %v1559 = vunpack.c.l.b16 %v39
    %v1560 = vunpack.c.l.b16 %v40
    %v1561 = vunpack.c.l.b16 %v41
    %v1562 = vunpack.c.l.b16 %v42
    %v1563 = vunpack.c.l.b16 %v43
    %v1564 = vunpack.c.l.b16 %v44
    %v1565 = vunpack.c.l.b16 %v45
    %v1566 = vunpack.c.l.b16 %v46
    %v1567 = vunpack.c.l.b16 %v47
    %v1568 = vunpack.c.l.b16 %v48
    %v1569 = vunpack.c.l.b16 %v49
    %v1570 = vunpack.c.l.b16 %v50
    %v1571 = vunpack.c.l.b16 %v51
    %v1572 = vunpack.c.l.b16 %v52
    %v1573 = vunpack.c.l.b16 %v53
    %v1574 = vunpack.c.l.b16 %v54
    %v1575 = vunpack.c.l.b16 %v55
    %v1576 = vunpack.c.l.b16 %v56
    %v1577 = vunpack.c.l.b16 %v57
    %v1578 = vunpack.c.l.b16 %v58
    %v1579 = vunpack.c.l.b16 %v59
    %v1580 = vunpack.c.l.b16 %v60
    %v1581 = vunpack.c.l.b16 %v61
    %v1582 = vunpack.c.l.b16 %v62
    %v1583 = vunpack.c.l.b16 %v63
    %v1584 = vunpack.c.l.b16 %v64
    %v1585 = vunpack.c.l.b16 %v65
    %v1586 = vunpack.c.l.b16 %v66
    %v1587 = vunpack.c.l.b16 %v67
    %v1588 = vunpack.c.l.b16 %v68
    %v1589 = vunpack.c.l.b16 %v69
    %v1590 = vunpack.c.l.b16 %v70
    %v1591 = vunpack.c.l.b16 %v71
    %v1592 = vunpack.c.l.b16 %v72
    %v1593 = vunpack.c.l.b16 %v73
    %v1594 = vunpack.c.l.b16 %v74
    %v1595 = vunpack.c.l.b16 %v75
    %v1596 = vunpack.c.l.b16 %v76
    %v1597 = vunpack.c.l.b16 %v77
    %v1598 = vunpack.c.l.b16 %v78
    %v1599 = vunpack.c.l.b16 %v79
    %v1600 = vunpack.c.l.b16 %v80
    %v1601 = vunpack.c.l.b16 %v81
    %v1602 = vunpack.c.l.b16 %v82
    %v1603 = vunpack.c.l.b16 %v83
    %v1604 = vunpack.c.l.b16 %v84
    %v1605 = vunpack.c.l.b16 %v85
    %v1606 = vunpack.c.l.b16 %v86
    %v1607 = vunpack.c.l.b16 %v87
    %v1608 = vunpack.c.l.b16 %v88
    %v1609 = vunpack.c.l.b16 %v89
    %v1610 = vunpack.c.l.b16 %v90
    %v1611 = vunpack.c.l.b16 %v91
    %v1612 = vunpack.c.l.b16 %v92
    %v1613 = vunpack.c.l.b16 %v93
    %v1614 = vunpack.c.l.b16 %v94
    %v1615 = vunpack.c.l.b16 %v95
    %v1616 = vunpack.c.l.b16 %v96
    %v1617 = vunpack.c.l.b16 %v97
    %v1618 = vunpack.c.l.b16 %v98
    %v1619 = vunpack.c.l.b16 %v99
    %v1620 = vunpack.c.l.b16 %v100
    %v1621 = vunpack.c.l.b16 %v101
    %v1622 = vunpack.c.l.b16 %v102
    %v1623 = vunpack.c.l.b16 %v103
    %v1624 = vunpack.c.l.b16 %v104
    %v1625 = vunpack.c.l.b16 %v105
    %v1626 = vunpack.c.l.b16 %v106
    %v1627 = vunpack.c.l.b16 %v107
    %v1628 = vunpack.c.l.b16 %v108
    %v1629 = vunpack.c.l.b16 %v109
    %v1630 = vunpack.c.l.b16 %v110
    %v1631 = vunpack.c.l.b16 %v111
    %v1632 = vunpack.c.l.b16 %v112
    %v1633 = vunpack.c.l.b16 %v113
    %v1634 = vunpack.c.l.b16 %v114
    %v1635 = vunpack.c.l.b16 %v115
    %v1636 = vunpack.c.l.b16 %v116
    %v1637 = vunpack.c.l.b16 %v117
    %v1638 = vunpack.c.l.b16 %v118
    %v1639 = vunpack.c.l.b16 %v119
    %v1640 = vunpack.c.l.b16 %v120
    %v1641 = vunpack.c.l.b16 %v121
    %v1642 = vunpack.c.l.b16 %v122
    %v1643 = vunpack.c.l.b16 %v123
    %v1644 = vunpack.c.l.b16 %v124
    %v1645 = vunpack.c.l.b16 %v125
    %v1646 = vunpack.c.l.b16 %v126
    %v1647 = vunpack.c.l.b16 %v127
    %v1648 = vunpack.c.l.b16 %v128
    %v1649 = vunpack.c.l.b16 %v129
    %v1650 = vunpack.c.l.b16 %v130
    %v1651 = vunpack.c.l.b16 %v131
    %v1652 = vunpack.c.l.b16 %v132
    %v1653 = vunpack.c.l.b16 %v133
    %v1654 = vunpack.c.l.b16 %v134
    %v1655 = vunpack.c.l.b16 %v135
    %v1656 = vunpack.c.l.b16 %v136
    %v1657 = vunpack.c.l.b16 %v137
    %v1658 = vunpack.c.l.b16 %v138
    %v1659 = vunpack.c.l.b16 %v139
    %v1660 = vunpack.c.l.b16 %v140
    %v1661 = vunpack.c.l.b16 %v141
    %v1662 = vunpack.c.l.b16 %v142
    %v1663 = vunpack.c.l.b16 %v143
    %v1664 = vunpack.c.l.b16 %v144
    %v1665 = vunpack.c.l.b16 %v145
    %v1666 = vunpack.c.l.b16 %v146
    %v1667 = vunpack.c.l.b16 %v147
    %v1668 = vunpack.c.l.b16 %v148
    %v1669 = vunpack.c.l.b16 %v149
    %v1670 = vunpack.c.l.b16 %v150
    %v1671 = vunpack.c.l.b16 %v151
    %v1672 = vunpack.c.l.b16 %v152
    %v1673 = vunpack.c.l.b16 %v153
    %v1674 = vunpack.c.l.b16 %v154
    %v1675 = vunpack.c.l.b16 %v155
    %v1676 = vunpack.c.l.b16 %v156
    %v1677 = vunpack.c.l.b16 %v157
    %v1678 = vunpack.c.l.b16 %v158
    %v1679 = vunpack.c.l.b16 %v159
    %v1680 = vunpack.c.l.b16 %v160
    %v1681 = vunpack.c.l.b16 %v161
    %v1682 = vunpack.c.l.b16 %v162
    %v1683 = vunpack.c.l.b16 %v163
    %v1684 = vunpack.c.l.b16 %v164
    %v1685 = vunpack.c.l.b16 %v165
    %v1686 = vunpack.c.l.b16 %v166
    %v1687 = vunpack.c.l.b16 %v167
    %v1688 = vunpack.c.l.b16 %v168
    %v1689 = vunpack.c.l.b16 %v169
    %v1690 = vunpack.c.l.b16 %v170
    %v1691 = vunpack.c.l.b16 %v171
    %v1692 = vunpack.c.l.b16 %v172
    %v1693 = vunpack.c.l.b16 %v173
    %v1694 = vunpack.c.l.b16 %v174
    %v1695 = vunpack.c.l.b16 %v175
    %v1696 = vunpack.c.l.b16 %v176
    %v1697 = vunpack.c.l.b16 %v177
    %v1698 = vunpack.c.l.b16 %v178
    %v1699 = vunpack.c.l.b16 %v179
    %v1700 = vunpack.c.l.b16 %v180
    %v1701 = vunpack.c.l.b16 %v181
    %v1702 = vunpack.c.l.b16 %v182
    %v1703 = vunpack.c.l.b16 %v183
    %v1704 = vunpack.c.l.b16 %v184
    %v1705 = vunpack.c.l.b16 %v185
    %v1706 = vunpack.c.l.b16 %v186
    %v1707 = vunpack.c.l.b16 %v187
    %v1708 = vunpack.c.l.b16 %v188
    %v1709 = vunpack.c.l.b16 %v189
    %v1710 = vunpack.c.l.b16 %v190
    %v1711 = vunpack.c.l.b16 %v191
    %v1712 = vunpack.c.l.b16 %v192
    %v1713 = vunpack.c.l.b16 %v193
    %v1714 = vunpack.c.l.b16 %v194
    %v1715 = vunpack.c.l.b16 %v195
    %v1716 = vunpack.c.l.b16 %v196
    %v1717 = vunpack.c.l.b16 %v197
    %v1718 = vunpack.c.l.b16 %v198
    %v1719 = vunpack.c.l.b16 %v199
    %v1720 = vunpack.c.l.b16 %v200
    %v1721 = vunpack.c.l.b16 %v201
    %v1722 = vunpack.c.l.b16 %v202
    %v1723 = vunpack.c.l.b16 %v203
    %v1724 = vunpack.c.l.b16 %v204
    %v1725 = vunpack.c.l.b16 %v205
    %v1726 = vunpack.c.l.b16 %v206
    %v1727 = vunpack.c.l.b16 %v207
    %v1728 = vunpack.c.l.b16 %v208
    %v1729 = vunpack.c.l.b16 %v209
    %v1730 = vunpack.c.l.b16 %v210
    %v1731 = vunpack.c.l.b16 %v211
    %v1732 = vunpack.c.l.b16 %v212
    %v1733 = vunpack.c.l.b16 %v213
    %v1734 = vunpack.c.l.b16 %v214
    %v1735 = vunpack.c.l.b16 %v215
    %v1736 = vunpack.c.l.b16 %v216
    %v1737 = vunpack.c.l.b16 %v217
    %v1738 = vunpack.c.l.b16 %v218
    %v1739 = vunpack.c.l.b16 %v219
    %v1740 = vunpack.c.l.b16 %v220
    %v1741 = vunpack.c.l.b16 %v221
    %v1742 = vunpack.c.l.b16 %v222
    %v1743 = vunpack.c.l.b16 %v223
    %v1744 = vunpack.c.l.b16 %v224
    %v1745 = vunpack.c.l.b16 %v225
    %v1746 = vunpack.c.l.b16 %v226
    %v1747 = vunpack.c.l.b16 %v227
    %v1748 = vunpack.c.l.b16 %v228
    %v1749 = vunpack.c.l.b16 %v229
    %v1750 = vunpack.c.l.b16 %v230
    %v1751 = vunpack.c.l.b16 %v231
    %v1752 = vunpack.c.l.b16 %v232
    %v1753 = vunpack.c.l.b16 %v233
    %v1754 = vunpack.c.l.b16 %v234
    %v1755 = vunpack.c.l.b16 %v235
    %v1756 = vunpack.c.l.b16 %v236
    %v1757 = vunpack.c.l.b16 %v237
    %v1758 = vunpack.c.l.b16 %v238
    %v1759 = vunpack.c.l.b16 %v239
    %v1760 = vunpack.c.l.b16 %v240
    %v1761 = vunpack.c.l.b16 %v241
    %v1762 = vunpack.c.l.b16 %v242
    %v1763 = vunpack.c.l.b16 %v243
    %v1764 = vunpack.c.l.b16 %v244
    %v1765 = vunpack.c.l.b16 %v245
    %v1766 = vunpack.c.l.b16 %v246
    %v1767 = vunpack.c.l.b16 %v247
    %v1768 = vunpack.c.l.b16 %v248
    %v1769 = vunpack.c.l.b16 %v249
    %v1770 = vunpack.c.l.b16 %v250
    %v1771 = vunpack.c.l.b16 %v251
    %v1772 = vunpack.c.l.b16 %v252
    %v1773 = vunpack.c.l.b16 %v253
    %v1774 = vunpack.c.l.b16 %v254
    %v1775 = vunpack.c.l.b16 %v255
    %v1776 = vunpack.c.l.b16 %v256
    %v1777 = vunpack.c.l.b16 %v257
    %v1778 = vunpack.c.l.b16 %v258
    %v1779 = vunpack.c.l.b16 %v259
    %v1780 = vunpack.c.l.b16 %v260
    %v1781 = vunpack.c.l.b16 %v261
    %v1782 = vunpack.c.l.b16 %v262
    %v1783 = vunpack.c.l.b16 %v263
    %v1784 = vunpack.c.l.b16 %v264
    %v1785 = vunpack.c.l.b16 %v265
    %v1786 = vunpack.c.l.b16 %v266
    %v1787 = vunpack.c.l.b16 %v267
    %v1788 = vunpack.c.l.b16 %v268
    %v1789 = vunpack.c.l.b16 %v269
    %v1790 = vunpack.c.l.b16 %v270
    %v1791 = vunpack.c.l.b16 %v271
    %v1792 = vunpack.c.l.b16 %v272
    %v1793 = vunpack.c.l.b16 %v273
    %v1794 = vunpack.c.l.b16 %v274
    %v1795 = vunpack.c.l.b16 %v275
    %v1796 = vunpack.c.l.b16 %v276
    %v1797 = vunpack.c.l.b16 %v277
    %v1798 = vunpack.c.l.b16 %v278
    %v1799 = vunpack.c.l.b16 %v279
    %v1800 = vunpack.c.l.b16 %v280
    %v1801 = vunpack.c.l.b16 %v281
    %v1802 = vunpack.c.l.b16 %v282
    %v1803 = vunpack.c.l.b16 %v283
    %v1804 = vunpack.c.l.b16 %v284
    %v1805 = vunpack.c.l.b16 %v285
    %v1806 = vunpack.c.l.b16 %v286
    %v1807 = vunpack.c.l.b16 %v287
    %v1808 = vunpack.c.l.b16 %v288
    %v1809 = vunpack.c.l.b16 %v289
    %v1810 = vunpack.c.l.b16 %v290
    %v1811 = vunpack.c.l.b16 %v291
    %v1812 = vunpack.c.l.b16 %v292
    %v1813 = vunpack.c.l.b16 %v293
    %v1814 = vunpack.c.l.b16 %v294
    %v1815 = vunpack.c.l.b16 %v295
    %v1816 = vunpack.c.l.b16 %v296
    %v1817 = vunpack.c.l.b16 %v297
    %v1818 = vunpack.c.l.b16 %v298
    %v1819 = vunpack.c.l.b16 %v299
    %v1820 = vunpack.c.l.b16 %v300
    %v1821 = vunpack.c.l.b16 %v301
    %v1822 = vunpack.c.l.b16 %v302
    %v1823 = vunpack.c.l.b16 %v303
    %v1824 = vunpack.c.l.b16 %v304
    %v1825 = vunpack.c.l.b16 %v305
    %v1826 = vunpack.c.l.b16 %v306
    %v1827 = vunpack.c.l.b16 %v307
    %v1828 = vunpack.c.l.b16 %v308
    %v1829 = vunpack.c.l.b16 %v309
    %v1830 = vunpack.c.l.b16 %v310
    %v1831 = vunpack.c.l.b16 %v311
    %v1832 = vunpack.c.l.b16 %v312
    %v1833 = vunpack.c.l.b16 %v313
    %v1834 = vunpack.c.l.b16 %v314
    %v1835 = vunpack.c.l.b16 %v315
    %v1836 = vunpack.c.l.b16 %v316
    %v1837 = vunpack.c.l.b16 %v317
    %v1838 = vunpack.c.l.b16 %v318
    %v1839 = vunpack.c.l.b16 %v319
    %v1840 = vunpack.c.l.b16 %v320
    %v1841 = vunpack.c.l.b16 %v321
    %v1842 = vunpack.c.l.b16 %v322
    %v1843 = vunpack.c.l.b16 %v323
    %v1844 = vunpack.c.l.b16 %v324
    %v1845 = vunpack.c.l.b16 %v325
    %v1846 = vunpack.c.l.b16 %v326
    %v1847 = vunpack.c.l.b16 %v327
    %v1848 = vunpack.c.l.b16 %v328
    %v1849 = vunpack.c.l.b16 %v329
    %v1850 = vunpack.c.l.b16 %v330
    %v1851 = vunpack.c.l.b16 %v331
    %v1852 = vunpack.c.l.b16 %v332
    %v1853 = vunpack.c.l.b16 %v333
    %v1854 = vunpack.c.l.b16 %v334
    %v1855 = vunpack.c.l.b16 %v335
    %v1856 = vunpack.c.l.b16 %v336
    %v1857 = vunpack.c.l.b16 %v337
    %v1858 = vunpack.c.l.b16 %v338
    %v1859 = vunpack.c.l.b16 %v339
    %v1860 = vunpack.c.l.b16 %v340
    %v1861 = vunpack.c.l.b16 %v341
    %v1862 = vunpack.c.l.b16 %v342
    %v1863 = vunpack.c.l.b16 %v343
    %v1864 = vunpack.c.l.b16 %v344
    %v1865 = vunpack.c.l.b16 %v345
    %v1866 = vunpack.c.l.b16 %v346
    %v1867 = vunpack.c.l.b16 %v347
    %v1868 = vunpack.c.l.b16 %v348
    %v1869 = vunpack.c.l.b16 %v349
    %v1870 = vunpack.c.l.b16 %v350
    %v1871 = vunpack.c.l.b16 %v351
    %v1872 = vunpack.c.l.b16 %v352
    %v1873 = vunpack.c.l.b16 %v353
    %v1874 = vunpack.c.l.b16 %v354
    %v1875 = vunpack.c.l.b16 %v355
    %v1876 = vunpack.c.l.b16 %v356
    %v1877 = vunpack.c.l.b16 %v357
    %v1878 = vunpack.c.l.b16 %v358
    %v1879 = vunpack.c.l.b16 %v359
    %v1880 = vunpack.c.l.b16 %v360
    %v1881 = vunpack.c.l.b16 %v361
    %v1882 = vunpack.c.l.b16 %v362
    %v1883 = vunpack.c.l.b16 %v363
    %v1884 = vunpack.c.l.b16 %v364
    %v1885 = vunpack.c.l.b16 %v365
    %v1886 = vunpack.c.l.b16 %v366
    %v1887 = vunpack.c.l.b16 %v367
    %v1888 = vunpack.c.l.b16 %v368
    %v1889 = vunpack.c.l.b16 %v369
    %v1890 = vunpack.c.l.b16 %v370
    %v1891 = vunpack.c.l.b16 %v371
    %v1892 = vunpack.c.l.b16 %v372
    %v1893 = vunpack.c.l.b16 %v373
    %v1894 = vunpack.c.l.b16 %v374
    %v1895 = vunpack.c.l.b16 %v375
    %v1896 = vunpack.c.l.b16 %v376
    %v1897 = vunpack.c.l.b16 %v377
    %v1898 = vunpack.c.l.b16 %v378
    %v1899 = vunpack.c.l.b16 %v379
    %v1900 = vunpack.c.l.b16 %v380
    %v1901 = vunpack.c.l.b16 %v381
    %v1902 = vunpack.c.l.b16 %v382
    %v1903 = vunpack.c.l.b16 %v383
    %v1904 = vunpack.c.l.b16 %v384
    %v1905 = vunpack.c.l.b16 %v385
    %v1906 = vunpack.c.l.b16 %v386
    %v1907 = vunpack.c.l.b16 %v387
    %v1908 = vunpack.c.l.b16 %v388
    %v1909 = vunpack.c.l.b16 %v389
    %v1910 = vunpack.c.l.b16 %v390
    %v1911 = vunpack.c.l.b16 %v391
    %v1912 = vunpack.c.l.b16 %v392
    %v1913 = vunpack.c.l.b16 %v393
    %v1914 = vunpack.c.l.b16 %v394
    %v1915 = vunpack.c.l.b16 %v395
    %v1916 = vunpack.c.l.b16 %v396
    %v1917 = vunpack.c.l.b16 %v397
    %v1918 = vunpack.c.l.b16 %v398
    %v1919 = vunpack.c.l.b16 %v399
    %v1920 = vunpack.c.l.b16 %v400
    %v1921 = vunpack.c.l.b16 %v401
    %v1922 = vunpack.c.l.b16 %v402
    %v1923 = vunpack.c.l.b16 %v403
    %v1924 = vunpack.c.l.b16 %v404
    %v1925 = vunpack.c.l.b16 %v405
    %v1926 = vunpack.c.l.b16 %v406
    %v1927 = vunpack.c.l.b16 %v407
    %v1928 = vunpack.c.l.b16 %v408
    %v1929 = vunpack.c.l.b16 %v409
    %v1930 = vunpack.c.l.b16 %v410
    %v1931 = vunpack.c.l.b16 %v411
    %v1932 = vunpack.c.l.b16 %v412
    %v1933 = vunpack.c.l.b16 %v413
    %v1934 = vunpack.c.l.b16 %v414
    %v1935 = vunpack.c.l.b16 %v415
    %v1936 = vunpack.c.l.b16 %v416
    %v1937 = vunpack.c.l.b16 %v417
    %v1938 = vunpack.c.l.b16 %v418
    %v1939 = vunpack.c.l.b16 %v419
    %v1940 = vunpack.c.l.b16 %v420
    %v1941 = vunpack.c.l.b16 %v421
    %v1942 = vunpack.c.l.b16 %v422
    %v1943 = vunpack.c.l.b16 %v423
    %v1944 = vunpack.c.l.b16 %v424
    %v1945 = vunpack.c.l.b16 %v425
    %v1946 = vunpack.c.l.b16 %v426
    %v1947 = vunpack.c.l.b16 %v427
    %v1948 = vunpack.c.l.b16 %v428
    %v1949 = vunpack.c.l.b16 %v429
    %v1950 = vunpack.c.l.b16 %v430
    %v1951 = vunpack.c.l.b16 %v431
    %v1952 = vunpack.c.l.b16 %v432
    %v1953 = vunpack.c.l.b16 %v433
    %v1954 = vunpack.c.l.b16 %v434
    %v1955 = vunpack.c.l.b16 %v435
    %v1956 = vunpack.c.l.b16 %v436
    %v1957 = vunpack.c.l.b16 %v437
    %v1958 = vunpack.c.l.b16 %v438
    %v1959 = vunpack.c.l.b16 %v439
    %v1960 = vunpack.c.l.b16 %v440
    %v1961 = vunpack.c.l.b16 %v441
    %v1962 = vunpack.c.l.b16 %v442
    %v1963 = vunpack.c.l.b16 %v443
    %v1964 = vunpack.c.l.b16 %v444
    %v1965 = vunpack.c.l.b16 %v445
    %v1966 = vunpack.c.l.b16 %v446
    %v1967 = vunpack.c.l.b16 %v447
    %v1968 = vunpack.c.l.b16 %v448
    %v1969 = vunpack.c.l.b16 %v449
    %v1970 = vunpack.c.l.b16 %v450
    %v1971 = vunpack.c.l.b16 %v451
    %v1972 = vunpack.c.l.b16 %v452
    %v1973 = vunpack.c.l.b16 %v453
    %v1974 = vunpack.c.l.b16 %v454
    %v1975 = vunpack.c.l.b16 %v455
    %v1976 = vunpack.c.l.b16 %v456
    %v1977 = vunpack.c.l.b16 %v457
    %v1978 = vunpack.c.l.b16 %v458
    %v1979 = vunpack.c.l.b16 %v459
    %v1980 = vunpack.c.l.b16 %v460
    %v1981 = vunpack.c.l.b16 %v461
    %v1982 = vunpack.c.l.b16 %v462
    %v1983 = vunpack.c.l.b16 %v463
    %v1984 = vunpack.c.l.b16 %v464
    %v1985 = vunpack.c.l.b16 %v465
    %v1986 = vunpack.c.l.b16 %v466
    %v1987 = vunpack.c.l.b16 %v467
    %v1988 = vunpack.c.l.b16 %v468
    %v1989 = vunpack.c.l.b16 %v469
    %v1990 = vunpack.c.l.b16 %v470
    %v1991 = vunpack.c.l.b16 %v471
    %v1992 = vunpack.c.l.b16 %v472
    %v1993 = vunpack.c.l.b16 %v473
    %v1994 = vunpack.c.l.b16 %v474
    %v1995 = vunpack.c.l.b16 %v475
    %v1996 = vunpack.c.l.b16 %v476
    %v1997 = vunpack.c.l.b16 %v477
    %v1998 = vunpack.c.l.b16 %v478
    %v1999 = vunpack.c.l.b16 %v479
    %v2000 = vunpack.c.l.b16 %v480
    %v2001 = vunpack.c.l.b16 %v481
    %v2002 = vunpack.c.l.b16 %v482
    %v2003 = vunpack.c.l.b16 %v483
    %v2004 = vunpack.c.l.b16 %v484
    %v2005 = vunpack.c.l.b16 %v485
    %v2006 = vunpack.c.l.b16 %v486
    %v2007 = vunpack.c.l.b16 %v487
    %v2008 = vunpack.c.l.b16 %v488
    %v2009 = vunpack.c.l.b16 %v489
    %v2010 = vunpack.c.l.b16 %v490
    %v2011 = vunpack.c.l.b16 %v491
    %v2012 = vunpack.c.l.b16 %v492
    %v2013 = vunpack.c.l.b16 %v493
    %v2014 = vunpack.c.l.b16 %v494
    %v2015 = vunpack.c.l.b16 %v495
    %v2016 = vunpack.c.l.b16 %v496
    %v2017 = vunpack.c.l.b16 %v497
    %v2018 = vunpack.c.l.b16 %v498
    %v2019 = vunpack.c.l.b16 %v499
    %v2020 = vunpack.c.l.b16 %v500
    %v2021 = vunpack.c.l.b16 %v501
    %v2022 = vunpack.c.l.b16 %v502
    %v2023 = vunpack.c.l.b16 %v503
    %v2024 = vunpack.c.l.b16 %v504
    %v2025 = vunpack.c.l.b16 %v505
    %v2026 = vunpack.c.l.b16 %v506
    %v2027 = vunpack.c.l.b16 %v507
    %v2028 = vunpack.c.l.b16 %v508
    %v2029 = vunpack.c.l.b16 %v509
    %v2030 = vunpack.c.l.b16 %v510
    %v2031 = vunpack.c.l.b16 %v511
    %v2032 = vunpack.c.l.b16 %v512
    %v2033 = vunpack.c.l.b16 %v513
    %v2034 = vunpack.c.l.b16 %v514
    %v2035 = vunpack.c.l.b16 %v515
    %v2036 = vunpack.c.l.b16 %v516
    %v2037 = vunpack.c.l.b16 %v517
    %v2038 = vunpack.c.l.b16 %v518
    %v2039 = vunpack.c.l.b16 %v519
    %v2040 = vunpack.c.l.b16 %v520
    %v2041 = vunpack.c.l.b16 %v521
    %v2042 = vunpack.c.l.b16 %v522
    %v2043 = vunpack.c.l.b16 %v523
    %v2044 = vunpack.c.l.b16 %v524
    %v2045 = vunpack.c.l.b16 %v525
    %v2046 = vunpack.c.l.b16 %v526
    %v2047 = vunpack.c.l.b16 %v527
    %v2048 = vunpack.c.l.b16 %v528
    %v2049 = vunpack.c.l.b16 %v529
    %v2050 = vunpack.c.l.b16 %v530
    %v2051 = vunpack.c.l.b16 %v531
    %v2052 = vunpack.c.l.b16 %v532
    %v2053 = vunpack.c.l.b16 %v533
    %v2054 = vunpack.c.l.b16 %v534
    %v2055 = vunpack.c.l.b16 %v535
    %v2056 = vunpack.c.l.b16 %v536
    %v2057 = vunpack.c.l.b16 %v537
    %v2058 = vunpack.c.l.b16 %v538
    %v2059 = vunpack.c.l.b16 %v539
    %v2060 = vunpack.c.l.b16 %v540
    %v2061 = vunpack.c.l.b16 %v541
    %v2062 = vunpack.c.l.b16 %v542
    %v2063 = vunpack.c.l.b16 %v543
    %v2064 = vunpack.c.l.b16 %v544
    %v2065 = vunpack.c.l.b16 %v545
    %v2066 = vunpack.c.l.b16 %v546
    %v2067 = vunpack.c.l.b16 %v547
    %v2068 = vunpack.c.l.b16 %v548
    %v2069 = vunpack.c.l.b16 %v549
    %v2070 = vunpack.c.l.b16 %v550
    %v2071 = vunpack.c.l.b16 %v551
    %v2072 = vunpack.c.l.b16 %v552
    %v2073 = vunpack.c.l.b16 %v553
    %v2074 = vunpack.c.l.b16 %v554
    %v2075 = vunpack.c.l.b16 %v555
    %v2076 = vunpack.c.l.b16 %v556
    %v2077 = vunpack.c.l.b16 %v557
    %v2078 = vunpack.c.l.b16 %v558
    %v2079 = vunpack.c.l.b16 %v559
    %v2080 = vunpack.c.l.b16 %v560
    %v2081 = vunpack.c.l.b16 %v561
    %v2082 = vunpack.c.l.b16 %v562
    %v2083 = vunpack.c.l.b16 %v563
    %v2084 = vunpack.c.l.b16 %v564
    %v2085 = vunpack.c.l.b16 %v565
    %v2086 = vunpack.c.l.b16 %v566
    %v2087 = vunpack.c.l.b16 %v567
    %v2088 = vunpack.c.l.b16 %v568
    %v2089 = vunpack.c.l.b16 %v569
    %v2090 = vunpack.c.l.b16 %v570
    %v2091 = vunpack.c.l.b16 %v571
    %v2092 = vunpack.c.l.b16 %v572
    %v2093 = vunpack.c.l.b16 %v573
    %v2094 = vunpack.c.l.b16 %v574
    %v2095 = vunpack.c.l.b16 %v575
    %v2096 = vunpack.c.l.b16 %v576
    %v2097 = vunpack.c.l.b16 %v577
    %v2098 = vunpack.c.l.b16 %v578
    %v2099 = vunpack.c.l.b16 %v579
    %v2100 = vunpack.c.l.b16 %v580
    %v2101 = vunpack.c.l.b16 %v581
    %v2102 = vunpack.c.l.b16 %v582
    %v2103 = vunpack.c.l.b16 %v583
    %v2104 = vunpack.c.l.b16 %v584
    %v2105 = vunpack.c.l.b16 %v585
    %v2106 = vunpack.c.l.b16 %v586
    %v2107 = vunpack.c.l.b16 %v587
    %v2108 = vunpack.c.l.b16 %v588
    %v2109 = vunpack.c.l.b16 %v589
    %v2110 = vunpack.c.l.b16 %v590
    %v2111 = vunpack.c.l.b16 %v591
    %v2112 = vunpack.c.l.b16 %v592
    %v2113 = vunpack.c.l.b16 %v593
    %v2114 = vunpack.c.l.b16 %v594
    %v2115 = vunpack.c.l.b16 %v595
    %v2116 = vunpack.c.l.b16 %v596
    %v2117 = vunpack.c.l.b16 %v597
    %v2118 = vunpack.c.l.b16 %v598
    %v2119 = vunpack.c.l.b16 %v599
    %v2120 = vunpack.c.l.b16 %v600
    %v2121 = vunpack.c.l.b16 %v601
    %v2122 = vunpack.c.l.b16 %v602
    %v2123 = vunpack.c.l.b16 %v603
    %v2124 = vunpack.c.l.b16 %v604
    %v2125 = vunpack.c.l.b16 %v605
    %v2126 = vunpack.c.l.b16 %v606
    %v2127 = vunpack.c.l.b16 %v607
    %v2128 = vunpack.c.l.b16 %v608
    %v2129 = vunpack.c.l.b16 %v609
    %v2130 = vunpack.c.l.b16 %v610
    %v2131 = vunpack.c.l.b16 %v611
    %v2132 = vunpack.c.l.b16 %v612
    %v2133 = vunpack.c.l.b16 %v613
    %v2134 = vunpack.c.l.b16 %v614
    %v2135 = vunpack.c.l.b16 %v615
    %v2136 = vunpack.c.l.b16 %v616
    %v2137 = vunpack.c.l.b16 %v617
    %v2138 = vunpack.c.l.b16 %v618
    %v2139 = vunpack.c.l.b16 %v619
    %v2140 = vunpack.c.l.b16 %v620
    %v2141 = vunpack.c.l.b16 %v621
    %v2142 = vunpack.c.l.b16 %v622
    %v2143 = vunpack.c.l.b16 %v623
    %v2144 = vunpack.c.l.b16 %v624
    %v2145 = vunpack.c.l.b16 %v625
    %v2146 = vunpack.c.l.b16 %v626
    %v2147 = vunpack.c.l.b16 %v627
    %v2148 = vunpack.c.l.b16 %v628
    %v2149 = vunpack.c.l.b16 %v629
    %v2150 = vunpack.c.l.b16 %v630
    %v2151 = vunpack.c.l.b16 %v631
    %v2152 = vunpack.c.l.b16 %v632
    %v2153 = vunpack.c.l.b16 %v633
    %v2154 = vunpack.c.l.b16 %v634
    %v2155 = vunpack.c.l.b16 %v635
    %v2156 = vunpack.c.l.b16 %v636
    %v2157 = vunpack.c.l.b16 %v637
    %v2158 = vunpack.c.l.b16 %v638
    %v2159 = vunpack.c.l.b16 %v639
    %v2160 = vpack.c.b16 %v1548, %v1547
    %v2161 = vpack.c.b16 %v1550, %v1549
    %v2162 = vpack.c.b16 %v1552, %v1551
    %v2163 = vpack.c.b16 %v1554, %v1553
    %v2164 = vpack.c.b16 %v1556, %v1555
    %v2165 = vpack.c.b16 %v1558, %v1557
    %v2166 = vpack.c.b16 %v1560, %v1559
    %v2167 = vpack.c.b16 %v1562, %v1561
    %v2168 = vpack.c.b16 %v1564, %v1563
    %v2169 = vpack.c.b16 %v1566, %v1565
    %v2170 = vpack.c.b16 %v1568, %v1567
    %v2171 = vpack.c.b16 %v1570, %v1569
    %v2172 = vpack.c.b16 %v1572, %v1571
    %v2173 = vpack.c.b16 %v1574, %v1573
    %v2174 = vpack.c.b16 %v1576, %v1575
    %v2175 = vpack.c.b16 %v1578, %v1577
    %v2176 = vpack.c.b16 %v1580, %v1579
    %v2177 = vpack.c.b16 %v1582, %v1581
    %v2178 = vpack.c.b16 %v1584, %v1583
    %v2179 = vpack.c.b16 %v1586, %v1585
    %v2180 = vpack.c.b16 %v1588, %v1587
    %v2181 = vpack.c.b16 %v1590, %v1589
    %v2182 = vpack.c.b16 %v1592, %v1591
    %v2183 = vpack.c.b16 %v1594, %v1593
    %v2184 = vpack.c.b16 %v1596, %v1595
    %v2185 = vpack.c.b16 %v1598, %v1597
    %v2186 = vpack.c.b16 %v1600, %v1599
    %v2187 = vpack.c.b16 %v1602, %v1601
    %v2188 = vpack.c.b16 %v1604, %v1603
    %v2189 = vpack.c.b16 %v1606, %v1605
    %v2190 = vpack.c.b16 %v1608, %v1607
    %v2191 = vpack.c.b16 %v1610, %v1609
    %v2192 = vpack.c.b16 %v1612, %v1611
    %v2193 = vpack.c.b16 %v1614, %v1613
    %v2194 = vpack.c.b16 %v1616, %v1615
    %v2195 = vpack.c.b16 %v1618, %v1617
    %v2196 = vpack.c.b16 %v1620, %v1619
    %v2197 = vpack.c.b16 %v1622, %v1621
    %v2198 = vpack.c.b16 %v1624, %v1623
    %v2199 = vpack.c.b16 %v1626, %v1625
    %v2200 = vpack.c.b16 %v1628, %v1627
    %v2201 = vpack.c.b16 %v1630, %v1629
    %v2202 = vpack.c.b16 %v1632, %v1631
    %v2203 = vpack.c.b16 %v1634, %v1633
    %v2204 = vpack.c.b16 %v1636, %v1635
    %v2205 = vpack.c.b16 %v1638, %v1637
    %v2206 = vpack.c.b16 %v1640, %v1639
    %v2207 = vpack.c.b16 %v1642, %v1641
    %v2208 = vpack.c.b16 %v1644, %v1643
    %v2209 = vpack.c.b16 %v1646, %v1645
    %v2210 = vpack.c.b16 %v1648, %v1647
    %v2211 = vpack.c.b16 %v1650, %v1649
    %v2212 = vpack.c.b16 %v1652, %v1651
    %v2213 = vpack.c.b16 %v1654, %v1653
    %v2214 = vpack.c.b16 %v1656, %v1655
    %v2215 = vpack.c.b16 %v1658, %v1657
    %v2216 = vpack.c.b16 %v1660, %v1659
    %v2217 = vpack.c.b16 %v1662, %v1661
    %v2218 = vpack.c.b16 %v1664, %v1663
    %v2219 = vpack.c.b16 %v1666, %v1665
    %v2220 = vpack.c.b16 %v1668, %v1667
    %v2221 = vpack.c.b16 %v1670, %v1669
    %v2222 = vpack.c.b16 %v1672, %v1671
    %v2223 = vpack.c.b16 %v1674, %v1673
    %v2224 = vpack.c.b16 %v1676, %v1675
    %v2225 = vpack.c.b16 %v1678, %v1677
    %v2226 = vpack.c.b16 %v1680, %v1679
    %v2227 = vpack.c.b16 %v1682, %v1681
    %v2228 = vpack.c.b16 %v1684, %v1683
    %v2229 = vpack.c.b16 %v1686, %v1685
    %v2230 = vpack.c.b16 %v1688, %v1687
    %v2231 = vpack.c.b16 %v1690, %v1689
    %v2232 = vpack.c.b16 %v1692, %v1691
    %v2233 = vpack.c.b16 %v1694, %v1693
    %v2234 = vpack.c.b16 %v1696, %v1695
    %v2235 = vpack.c.b16 %v1698, %v1697
    %v2236 = vpack.c.b16 %v1700, %v1699
    %v2237 = vpack.c.b16 %v1702, %v1701
    %v2238 = vpack.c.b16 %v1704, %v1703
    %v2239 = vpack.c.b16 %v1706, %v1705
    %v2240 = vpack.c.b16 %v1708, %v1707
    %v2241 = vpack.c.b16 %v1710, %v1709
    %v2242 = vpack.c.b16 %v1712, %v1711
    %v2243 = vpack.c.b16 %v1714, %v1713
    %v2244 = vpack.c.b16 %v1716, %v1715
    %v2245 = vpack.c.b16 %v1718, %v1717
    %v2246 = vpack.c.b16 %v1720, %v1719
    %v2247 = vpack.c.b16 %v1722, %v1721
    %v2248 = vpack.c.b16 %v1724, %v1723
    %v2249 = vpack.c.b16 %v1726, %v1725
    %v2250 = vpack.c.b16 %v1728, %v1727
    %v2251 = vpack.c.b16 %v1730, %v1729
    %v2252 = vpack.c.b16 %v1732, %v1731
    %v2253 = vpack.c.b16 %v1734, %v1733
    %v2254 = vpack.c.b16 %v1736, %v1735
    %v2255 = vpack.c.b16 %v1738, %v1737
    %v2256 = vpack.c.b16 %v1740, %v1739
    %v2257 = vpack.c.b16 %v1742, %v1741
    %v2258 = vpack.c.b16 %v1744, %v1743
    %v2259 = vpack.c.b16 %v1746, %v1745
    %v2260 = vpack.c.b16 %v1748, %v1747
    %v2261 = vpack.c.b16 %v1750, %v1749
    %v2262 = vpack.c.b16 %v1752, %v1751
    %v2263 = vpack.c.b16 %v1754, %v1753
    %v2264 = vpack.c.b16 %v1756, %v1755
    %v2265 = vpack.c.b16 %v1758, %v1757
    %v2266 = vpack.c.b16 %v1760, %v1759
    %v2267 = vpack.c.b16 %v1762, %v1761
    %v2268 = vpack.c.b16 %v1764, %v1763
    %v2269 = vpack.c.b16 %v1766, %v1765
    %v2270 = vpack.c.b16 %v1768, %v1767
    %v2271 = vpack.c.b16 %v1770, %v1769
    %v2272 = vpack.c.b16 %v1772, %v1771
    %v2273 = vpack.c.b16 %v1774, %v1773
    %v2274 = vpack.c.b16 %v1776, %v1775
    %v2275 = vpack.c.b16 %v1778, %v1777
    %v2276 = vpack.c.b16 %v1780, %v1779
    %v2277 = vpack.c.b16 %v1782, %v1781
    %v2278 = vpack.c.b16 %v1784, %v1783
    %v2279 = vpack.c.b16 %v1786, %v1785
    %v2280 = vpack.c.b16 %v1788, %v1787
    %v2281 = vpack.c.b16 %v1790, %v1789
    %v2282 = vpack.c.b16 %v1792, %v1791
    %v2283 = vpack.c.b16 %v1794, %v1793
    %v2284 = vpack.c.b16 %v1796, %v1795
    %v2285 = vpack.c.b16 %v1798, %v1797
    %v2286 = vpack.c.b16 %v1800, %v1799
    %v2287 = vpack.c.b16 %v1802, %v1801
    %v2288 = vpack.c.b16 %v1804, %v1803
    %v2289 = vpack.c.b16 %v1806, %v1805
    %v2290 = vpack.c.b16 %v1808, %v1807
    %v2291 = vpack.c.b16 %v1810, %v1809
    %v2292 = vpack.c.b16 %v1812, %v1811
    %v2293 = vpack.c.b16 %v1814, %v1813
    %v2294 = vpack.c.b16 %v1816, %v1815
    %v2295 = vpack.c.b16 %v1818, %v1817
    %v2296 = vpack.c.b16 %v1820, %v1819
    %v2297 = vpack.c.b16 %v1822, %v1821
    %v2298 = vpack.c.b16 %v1824, %v1823
    %v2299 = vpack.c.b16 %v1826, %v1825
    %v2300 = vpack.c.b16 %v1828, %v1827
    %v2301 = vpack.c.b16 %v1830, %v1829
    %v2302 = vpack.c.b16 %v1832, %v1831
    %v2303 = vpack.c.b16 %v1834, %v1833
    %v2304 = vpack.c.b16 %v1836, %v1835
    %v2305 = vpack.c.b16 %v1838, %v1837
    %v2306 = vpack.c.b16 %v1840, %v1839
    %v2307 = vpack.c.b16 %v1842, %v1841
    %v2308 = vpack.c.b16 %v1844, %v1843
    %v2309 = vpack.c.b16 %v1846, %v1845
    %v2310 = vpack.c.b16 %v1848, %v1847
    %v2311 = vpack.c.b16 %v1850, %v1849
    %v2312 = vpack.c.b16 %v1852, %v1851
    %v2313 = vpack.c.b16 %v1854, %v1853
    %v2314 = vpack.c.b16 %v1856, %v1855
    %v2315 = vpack.c.b16 %v1858, %v1857
    %v2316 = vpack.c.b16 %v1860, %v1859
    %v2317 = vpack.c.b16 %v1862, %v1861
    %v2318 = vpack.c.b16 %v1864, %v1863
    %v2319 = vpack.c.b16 %v1866, %v1865
    %v2320 = vpack.c.b16 %v1868, %v1867
    %v2321 = vpack.c.b16 %v1870, %v1869
    %v2322 = vpack.c.b16 %v1872, %v1871
    %v2323 = vpack.c.b16 %v1874, %v1873
    %v2324 = vpack.c.b16 %v1876, %v1875
    %v2325 = vpack.c.b16 %v1878, %v1877
    %v2326 = vpack.c.b16 %v1880, %v1879
    %v2327 = vpack.c.b16 %v1882, %v1881
    %v2328 = vpack.c.b16 %v1884, %v1883
    %v2329 = vpack.c.b16 %v1886, %v1885
    %v2330 = vpack.c.b16 %v1888, %v1887
    %v2331 = vpack.c.b16 %v1890, %v1889
    %v2332 = vpack.c.b16 %v1892, %v1891
    %v2333 = vpack.c.b16 %v1894, %v1893
    %v2334 = vpack.c.b16 %v1896, %v1895
    %v2335 = vpack.c.b16 %v1898, %v1897
    %v2336 = vpack.c.b16 %v1900, %v1899
    %v2337 = vpack.c.b16 %v1902, %v1901
    %v2338 = vpack.c.b16 %v1904, %v1903
    %v2339 = vpack.c.b16 %v1906, %v1905
    %v2340 = vpack.c.b16 %v1908, %v1907
    %v2341 = vpack.c.b16 %v1910, %v1909
    %v2342 = vpack.c.b16 %v1912, %v1911
    %v2343 = vpack.c.b16 %v1914, %v1913
    %v2344 = vpack.c.b16 %v1916, %v1915
    %v2345 = vpack.c.b16 %v1918, %v1917
    %v2346 = vpack.c.b16 %v1920, %v1919
    %v2347 = vpack.c.b16 %v1922, %v1921
    %v2348 = vpack.c.b16 %v1924, %v1923
    %v2349 = vpack.c.b16 %v1926, %v1925
    %v2350 = vpack.c.b16 %v1928, %v1927
    %v2351 = vpack.c.b16 %v1930, %v1929
    %v2352 = vpack.c.b16 %v1932, %v1931
    %v2353 = vpack.c.b16 %v1934, %v1933
    %v2354 = vpack.c.b16 %v1936, %v1935
    %v2355 = vpack.c.b16 %v1938, %v1937
    %v2356 = vpack.c.b16 %v1940, %v1939
    %v2357 = vpack.c.b16 %v1942, %v1941
    %v2358 = vpack.c.b16 %v1944, %v1943
    %v2359 = vpack.c.b16 %v1946, %v1945
    %v2360 = vpack.c.b16 %v1948, %v1947
    %v2361 = vpack.c.b16 %v1950, %v1949
    %v2362 = vpack.c.b16 %v1952, %v1951
    %v2363 = vpack.c.b16 %v1954, %v1953
    %v2364 = vpack.c.b16 %v1956, %v1955
    %v2365 = vpack.c.b16 %v1958, %v1957
    %v2366 = vpack.c.b16 %v1960, %v1959
    %v2367 = vpack.c.b16 %v1962, %v1961
    %v2368 = vpack.c.b16 %v1964, %v1963
    %v2369 = vpack.c.b16 %v1966, %v1965
    %v2370 = vpack.c.b16 %v1968, %v1967
    %v2371 = vpack.c.b16 %v1970, %v1969
    %v2372 = vpack.c.b16 %v1972, %v1971
    %v2373 = vpack.c.b16 %v1974, %v1973
    %v2374 = vpack.c.b16 %v1976, %v1975
    %v2375 = vpack.c.b16 %v1978, %v1977
    %v2376 = vpack.c.b16 %v1980, %v1979
    %v2377 = vpack.c.b16 %v1982, %v1981
    %v2378 = vpack.c.b16 %v1984, %v1983
    %v2379 = vpack.c.b16 %v1986, %v1985
    %v2380 = vpack.c.b16 %v1988, %v1987
    %v2381 = vpack.c.b16 %v1990, %v1989
    %v2382 = vpack.c.b16 %v1992, %v1991
    %v2383 = vpack.c.b16 %v1994, %v1993
    %v2384 = vpack.c.b16 %v1996, %v1995
    %v2385 = vpack.c.b16 %v1998, %v1997
    %v2386 = vpack.c.b16 %v2000, %v1999
    %v2387 = vpack.c.b16 %v2002, %v2001
    %v2388 = vpack.c.b16 %v2004, %v2003
    %v2389 = vpack.c.b16 %v2006, %v2005
    %v2390 = vpack.c.b16 %v2008, %v2007
    %v2391 = vpack.c.b16 %v2010, %v2009
    %v2392 = vpack.c.b16 %v2012, %v2011
    %v2393 = vpack.c.b16 %v2014, %v2013
    %v2394 = vpack.c.b16 %v2016, %v2015
    %v2395 = vpack.c.b16 %v2018, %v2017
    %v2396 = vpack.c.b16 %v2020, %v2019
    %v2397 = vpack.c.b16 %v2022, %v2021
    %v2398 = vpack.c.b16 %v2024, %v2023
    %v2399 = vpack.c.b16 %v2026, %v2025
    %v2400 = vpack.c.b16 %v2028, %v2027
    %v2401 = vpack.c.b16 %v2030, %v2029
    %v2402 = vpack.c.b16 %v2032, %v2031
    %v2403 = vpack.c.b16 %v2034, %v2033
    %v2404 = vpack.c.b16 %v2036, %v2035
    %v2405 = vpack.c.b16 %v2038, %v2037
    %v2406 = vpack.c.b16 %v2040, %v2039
    %v2407 = vpack.c.b16 %v2042, %v2041
    %v2408 = vpack.c.b16 %v2044, %v2043
    %v2409 = vpack.c.b16 %v2046, %v2045
    %v2410 = vpack.c.b16 %v2048, %v2047
    %v2411 = vpack.c.b16 %v2050, %v2049
    %v2412 = vpack.c.b16 %v2052, %v2051
    %v2413 = vpack.c.b16 %v2054, %v2053
    %v2414 = vpack.c.b16 %v2056, %v2055
    %v2415 = vpack.c.b16 %v2058, %v2057
    %v2416 = vpack.c.b16 %v2060, %v2059
    %v2417 = vpack.c.b16 %v2062, %v2061
    %v2418 = vpack.c.b16 %v2064, %v2063
    %v2419 = vpack.c.b16 %v2066, %v2065
    %v2420 = vpack.c.b16 %v2068, %v2067
    %v2421 = vpack.c.b16 %v2070, %v2069
    %v2422 = vpack.c.b16 %v2072, %v2071
    %v2423 = vpack.c.b16 %v2074, %v2073
    %v2424 = vpack.c.b16 %v2076, %v2075
    %v2425 = vpack.c.b16 %v2078, %v2077
    %v2426 = vpack.c.b16 %v2080, %v2079
    %v2427 = vpack.c.b16 %v2082, %v2081
    %v2428 = vpack.c.b16 %v2084, %v2083
    %v2429 = vpack.c.b16 %v2086, %v2085
    %v2430 = vpack.c.b16 %v2088, %v2087
    %v2431 = vpack.c.b16 %v2090, %v2089
    %v2432 = vpack.c.b16 %v2092, %v2091
    %v2433 = vpack.c.b16 %v2094, %v2093
    %v2434 = vpack.c.b16 %v2096, %v2095
    %v2435 = vpack.c.b16 %v2098, %v2097
    %v2436 = vpack.c.b16 %v2100, %v2099
    %v2437 = vpack.c.b16 %v2102, %v2101
    %v2438 = vpack.c.b16 %v2104, %v2103
    %v2439 = vpack.c.b16 %v2106, %v2105
    %v2440 = vpack.c.b16 %v2108, %v2107
    %v2441 = vpack.c.b16 %v2110, %v2109
    %v2442 = vpack.c.b16 %v2112, %v2111
    %v2443 = vpack.c.b16 %v2114, %v2113
    %v2444 = vpack.c.b16 %v2116, %v2115
    %v2445 = vpack.c.b16 %v2118, %v2117
    %v2446 = vpack.c.b16 %v2120, %v2119
    %v2447 = vpack.c.b16 %v2122, %v2121
    %v2448 = vpack.c.b16 %v2124, %v2123
    %v2449 = vpack.c.b16 %v2126, %v2125
    %v2450 = vpack.c.b16 %v2128, %v2127
    %v2451 = vpack.c.b16 %v2130, %v2129
    %v2452 = vpack.c.b16 %v2132, %v2131
    %v2453 = vpack.c.b16 %v2134, %v2133
    %v2454 = vpack.c.b16 %v2136, %v2135
    %v2455 = vpack.c.b16 %v2138, %v2137
    %v2456 = vpack.c.b16 %v2140, %v2139
    %v2457 = vpack.c.b16 %v2142, %v2141
    %v2458 = vpack.c.b16 %v2144, %v2143
    %v2459 = vpack.c.b16 %v2146, %v2145
    %v2460 = vpack.c.b16 %v2148, %v2147
    %v2461 = vpack.c.b16 %v2150, %v2149
    %v2462 = vpack.c.b16 %v2152, %v2151
    %v2463 = vpack.c.b16 %v2154, %v2153
    %v2464 = vpack.c.b16 %v2156, %v2155
    %v2465 = vpack.c.b16 %v2158, %v2157
    %v2466 = vpack.c.b16 %v2159, %v2159
    %vm2773 = vcmask 293888
    %v2775 = vsel %vm2773, %v894, 0
    %vm2777 = vcmask 1041408
    %v2779 = vsel %vm2777, %v2466, 0
    %2781 = vmatprep.subr.bf16.mxu0 0
    %2782 = vmatpush1.bf16.msra.mxu0 %v2167
    %2783 = vmatprep.subr.bf16.mxu0 0
    %2784 = vmatpush1.bf16.msra.mxu0 %v2166
    %2785 = vmatprep.subr.bf16.mxu0 0
    %2786 = vmatpush1.bf16.msra.mxu0 %v2165
    %2787 = vmatprep.subr.bf16.mxu0 0
    %2788 = vmatpush1.bf16.msra.mxu0 %v2164
    %2789 = vmatprep.subr.bf16.mxu0 0
    %2790 = vmatpush1.bf16.msra.mxu0 %v2163
    %2791 = vmatprep.subr.bf16.mxu0 0
    %2792 = vmatpush1.bf16.msra.mxu0 %v2162
    %2793 = vmatprep.subr.bf16.mxu0 0
    %2794 = vmatpush1.bf16.msra.mxu0 %v2161
    %2795 = vmatprep.subr.bf16.mxu0 0
    %2796 = vmatpush1.bf16.msra.mxu0 %v2160
    %2797 = vmatprep.subr.bf16.mxu0 0
    %2798 = vmatpush2.bf16.msra.mxu0 %v2175
    %2799 = vmatprep.subr.bf16.mxu0 0
    %2800 = vmatpush2.bf16.msra.mxu0 %v2174
    %2801 = vmatprep.subr.bf16.mxu0 0
    %2802 = vmatpush2.bf16.msra.mxu0 %v2173
    %2803 = vmatprep.subr.bf16.mxu0 0
    %2804 = vmatpush2.bf16.msra.mxu0 %v2172
    %2805 = vmatprep.subr.bf16.mxu0 0
    %2806 = vmatpush2.bf16.msra.mxu0 %v2171
    %2807 = vmatprep.subr.bf16.mxu0 0
    %2808 = vmatpush2.bf16.msra.mxu0 %v2170
    %2809 = vmatprep.subr.bf16.mxu0 0
    %2810 = vmatpush2.bf16.msra.mxu0 %v2169
    %2811 = vmatprep.subr.bf16.mxu0 0
    %2812 = vmatpush2.bf16.msra.mxu0 %v2168
    %2813 = vmatprep.mubr.bf16.mxu0 %v689
    %2814 = vmatmul.mubr.bf16.gmra.mxu0 %v675
    %v2815 = vpop.f32.mrf.mxu0
    %v2816 = vadd.f32 %v645, %v2815
    %v2817 = vpop.f32.mrf.mxu0
    %v2818 = vpop.f32.mrf.mxu0
    %v2819 = vpop.f32.mrf.mxu0
    %2820 = vdwg.mxu0
    %2821 = vmatprep.subr.bf16.mxu0 0
    %2822 = vmatpush1.bf16.msra.mxu0 %v2183
    %2823 = vmatprep.subr.bf16.mxu0 0
    %2824 = vmatpush1.bf16.msra.mxu0 %v2182
    %2825 = vmatprep.subr.bf16.mxu0 0
    %2826 = vmatpush1.bf16.msra.mxu0 %v2181
    %2827 = vmatprep.subr.bf16.mxu0 0
    %2828 = vmatpush1.bf16.msra.mxu0 %v2180
    %2829 = vmatprep.subr.bf16.mxu0 0
    %2830 = vmatpush1.bf16.msra.mxu0 %v2179
    %2831 = vmatprep.subr.bf16.mxu0 0
    %2832 = vmatpush1.bf16.msra.mxu0 %v2178
    %2833 = vmatprep.subr.bf16.mxu0 0
    %2834 = vmatpush1.bf16.msra.mxu0 %v2177
    %2835 = vmatprep.subr.bf16.mxu0 0
    %2836 = vmatpush1.bf16.msra.mxu0 %v2176
    %2837 = vmatprep.subr.bf16.mxu0 0
    %2838 = vmatpush2.bf16.msra.mxu0 %v2191
    %2839 = vmatprep.subr.bf16.mxu0 0
    %2840 = vmatpush2.bf16.msra.mxu0 %v2190
    %2841 = vmatprep.subr.bf16.mxu0 0
    %2842 = vmatpush2.bf16.msra.mxu0 %v2189
    %2843 = vmatprep.subr.bf16.mxu0 0
    %2844 = vmatpush2.bf16.msra.mxu0 %v2188
    %2845 = vmatprep.subr.bf16.mxu0 0
    %2846 = vmatpush2.bf16.msra.mxu0 %v2187
    %2847 = vmatprep.subr.bf16.mxu0 0
    %2848 = vmatpush2.bf16.msra.mxu0 %v2186
    %2849 = vmatprep.subr.bf16.mxu0 0
    %2850 = vmatpush2.bf16.msra.mxu0 %v2185
    %2851 = vmatprep.subr.bf16.mxu0 0
    %2852 = vmatpush2.bf16.msra.mxu0 %v2184
    %2853 = vmatprep.mubr.bf16.mxu0 %v699
    %2854 = vmatmul.mubr.bf16.gmra.mxu0 %v697
    %v2855 = vpop.f32.mrf.mxu0
    %v2856 = vadd.f32 %v2816, %v2855
    %v2857 = vpop.f32.mrf.mxu0
    %v2858 = vpop.f32.mrf.mxu0
    %v2859 = vpop.f32.mrf.mxu0
    %2860 = vdwg.mxu0
    %2861 = vmatprep.subr.bf16.mxu0 0
    %2862 = vmatpush1.bf16.msra.mxu0 %v2199
    %2863 = vmatprep.subr.bf16.mxu0 0
    %2864 = vmatpush1.bf16.msra.mxu0 %v2198
    %2865 = vmatprep.subr.bf16.mxu0 0
    %2866 = vmatpush1.bf16.msra.mxu0 %v2197
    %2867 = vmatprep.subr.bf16.mxu0 0
    %2868 = vmatpush1.bf16.msra.mxu0 %v2196
    %2869 = vmatprep.subr.bf16.mxu0 0
    %2870 = vmatpush1.bf16.msra.mxu0 %v2195
    %2871 = vmatprep.subr.bf16.mxu0 0
    %2872 = vmatpush1.bf16.msra.mxu0 %v2194
    %2873 = vmatprep.subr.bf16.mxu0 0
    %2874 = vmatpush1.bf16.msra.mxu0 %v2193
    %2875 = vmatprep.subr.bf16.mxu0 0
    %2876 = vmatpush1.bf16.msra.mxu0 %v2192
    %2877 = vmatprep.subr.bf16.mxu0 0
    %2878 = vmatpush2.bf16.msra.mxu0 %v2207
    %2879 = vmatprep.subr.bf16.mxu0 0
    %2880 = vmatpush2.bf16.msra.mxu0 %v2206
    %2881 = vmatprep.subr.bf16.mxu0 0
    %2882 = vmatpush2.bf16.msra.mxu0 %v2205
    %2883 = vmatprep.subr.bf16.mxu0 0
    %2884 = vmatpush2.bf16.msra.mxu0 %v2204
    %2885 = vmatprep.subr.bf16.mxu0 0
    %2886 = vmatpush2.bf16.msra.mxu0 %v2203
    %2887 = vmatprep.subr.bf16.mxu0 0
    %2888 = vmatpush2.bf16.msra.mxu0 %v2202
    %2889 = vmatprep.subr.bf16.mxu0 0
    %2890 = vmatpush2.bf16.msra.mxu0 %v2201
    %2891 = vmatprep.subr.bf16.mxu0 0
    %2892 = vmatpush2.bf16.msra.mxu0 %v2200
    %2893 = vmatprep.mubr.bf16.mxu0 %v696
    %2894 = vmatmul.mubr.bf16.gmra.mxu0 %v682
    %v2895 = vpop.f32.mrf.mxu0
    %v2896 = vadd.f32 %v2856, %v2895
    %v2897 = vpop.f32.mrf.mxu0
    %v2898 = vpop.f32.mrf.mxu0
    %v2899 = vpop.f32.mrf.mxu0
    %2900 = vdwg.mxu0
    %2901 = vmatprep.subr.bf16.mxu0 0
    %2902 = vmatpush1.bf16.msra.mxu0 %v2215
    %2903 = vmatprep.subr.bf16.mxu0 0
    %2904 = vmatpush1.bf16.msra.mxu0 %v2214
    %2905 = vmatprep.subr.bf16.mxu0 0
    %2906 = vmatpush1.bf16.msra.mxu0 %v2213
    %2907 = vmatprep.subr.bf16.mxu0 0
    %2908 = vmatpush1.bf16.msra.mxu0 %v2212
    %2909 = vmatprep.subr.bf16.mxu0 0
    %2910 = vmatpush1.bf16.msra.mxu0 %v2211
    %2911 = vmatprep.subr.bf16.mxu0 0
    %2912 = vmatpush1.bf16.msra.mxu0 %v2210
    %2913 = vmatprep.subr.bf16.mxu0 0
    %2914 = vmatpush1.bf16.msra.mxu0 %v2209
    %2915 = vmatprep.subr.bf16.mxu0 0
    %2916 = vmatpush1.bf16.msra.mxu0 %v2208
    %2917 = vmatprep.subr.bf16.mxu0 0
    %2918 = vmatpush2.bf16.msra.mxu0 %v2223
    %2919 = vmatprep.subr.bf16.mxu0 0
    %2920 = vmatpush2.bf16.msra.mxu0 %v2222
    %2921 = vmatprep.subr.bf16.mxu0 0
    %2922 = vmatpush2.bf16.msra.mxu0 %v2221
    %2923 = vmatprep.subr.bf16.mxu0 0
    %2924 = vmatpush2.bf16.msra.mxu0 %v2220
    %2925 = vmatprep.subr.bf16.mxu0 0
    %2926 = vmatpush2.bf16.msra.mxu0 %v2219
    %2927 = vmatprep.subr.bf16.mxu0 0
    %2928 = vmatpush2.bf16.msra.mxu0 %v2218
    %2929 = vmatprep.subr.bf16.mxu0 0
    %2930 = vmatpush2.bf16.msra.mxu0 %v2217
    %2931 = vmatprep.subr.bf16.mxu0 0
    %2932 = vmatpush2.bf16.msra.mxu0 %v2216
    %2933 = vmatprep.mubr.bf16.mxu0 %v700
    %2934 = vmatmul.mubr.bf16.gmra.mxu0 %v698
    %v2935 = vpop.f32.mrf.mxu0
    %v2936 = vadd.f32 %v2896, %v2935
    %v2937 = vpop.f32.mrf.mxu0
    %v2938 = vpop.f32.mrf.mxu0
    %v2939 = vpop.f32.mrf.mxu0
    %2940 = vdwg.mxu0
    %2941 = vmatprep.subr.bf16.mxu0 0
    %2942 = vmatpush1.bf16.msra.mxu0 %v2231
    %2943 = vmatprep.subr.bf16.mxu0 0
    %2944 = vmatpush1.bf16.msra.mxu0 %v2230
    %2945 = vmatprep.subr.bf16.mxu0 0
    %2946 = vmatpush1.bf16.msra.mxu0 %v2229
    %2947 = vmatprep.subr.bf16.mxu0 0
    %2948 = vmatpush1.bf16.msra.mxu0 %v2228
    %2949 = vmatprep.subr.bf16.mxu0 0
    %2950 = vmatpush1.bf16.msra.mxu0 %v2227
    %2951 = vmatprep.subr.bf16.mxu0 0
    %2952 = vmatpush1.bf16.msra.mxu0 %v2226
    %2953 = vmatprep.subr.bf16.mxu0 0
    %2954 = vmatpush1.bf16.msra.mxu0 %v2225
    %2955 = vmatprep.subr.bf16.mxu0 0
    %2956 = vmatpush1.bf16.msra.mxu0 %v2224
    %2957 = vmatprep.subr.bf16.mxu0 0
    %2958 = vmatpush2.bf16.msra.mxu0 %v2239
    %2959 = vmatprep.subr.bf16.mxu0 0
    %2960 = vmatpush2.bf16.msra.mxu0 %v2238
    %2961 = vmatprep.subr.bf16.mxu0 0
    %2962 = vmatpush2.bf16.msra.mxu0 %v2237
    %2963 = vmatprep.subr.bf16.mxu0 0
    %2964 = vmatpush2.bf16.msra.mxu0 %v2236
    %2965 = vmatprep.subr.bf16.mxu0 0
    %2966 = vmatpush2.bf16.msra.mxu0 %v2235
    %2967 = vmatprep.subr.bf16.mxu0 0
    %2968 = vmatpush2.bf16.msra.mxu0 %v2234
    %2969 = vmatprep.subr.bf16.mxu0 0
    %2970 = vmatpush2.bf16.msra.mxu0 %v2233
    %2971 = vmatprep.subr.bf16.mxu0 0
    %2972 = vmatpush2.bf16.msra.mxu0 %v2232
    %2973 = vmatprep.mubr.bf16.mxu0 %v738
    %2974 = vmatmul.mubr.bf16.gmra.mxu0 %v724
    %v2975 = vpop.f32.mrf.mxu0
    %v2976 = vadd.f32 %v2936, %v2975
    %v2977 = vpop.f32.mrf.mxu0
    %v2978 = vpop.f32.mrf.mxu0
    %v2979 = vpop.f32.mrf.mxu0
    %2980 = vdwg.mxu0
    %2981 = vmatprep.subr.bf16.mxu0 0
    %2982 = vmatpush1.bf16.msra.mxu0 %v2247
    %2983 = vmatprep.subr.bf16.mxu0 0
    %2984 = vmatpush1.bf16.msra.mxu0 %v2246
    %2985 = vmatprep.subr.bf16.mxu0 0
    %2986 = vmatpush1.bf16.msra.mxu0 %v2245
    %2987 = vmatprep.subr.bf16.mxu0 0
    %2988 = vmatpush1.bf16.msra.mxu0 %v2244
    %2989 = vmatprep.subr.bf16.mxu0 0
    %2990 = vmatpush1.bf16.msra.mxu0 %v2243
    %2991 = vmatprep.subr.bf16.mxu0 0
    %2992 = vmatpush1.bf16.msra.mxu0 %v2242
    %2993 = vmatprep.subr.bf16.mxu0 0
    %2994 = vmatpush1.bf16.msra.mxu0 %v2241
    %2995 = vmatprep.subr.bf16.mxu0 0
    %2996 = vmatpush1.bf16.msra.mxu0 %v2240
    %2997 = vmatprep.subr.bf16.mxu0 0
    %2998 = vmatpush2.bf16.msra.mxu0 %v2255
    %2999 = vmatprep.subr.bf16.mxu0 0
    %3000 = vmatpush2.bf16.msra.mxu0 %v2254
    %3001 = vmatprep.subr.bf16.mxu0 0
    %3002 = vmatpush2.bf16.msra.mxu0 %v2253
    %3003 = vmatprep.subr.bf16.mxu0 0
    %3004 = vmatpush2.bf16.msra.mxu0 %v2252
    %3005 = vmatprep.subr.bf16.mxu0 0
    %3006 = vmatpush2.bf16.msra.mxu0 %v2251
    %3007 = vmatprep.subr.bf16.mxu0 0
    %3008 = vmatpush2.bf16.msra.mxu0 %v2250
    %3009 = vmatprep.subr.bf16.mxu0 0
    %3010 = vmatpush2.bf16.msra.mxu0 %v2249
    %3011 = vmatprep.subr.bf16.mxu0 0
    %3012 = vmatpush2.bf16.msra.mxu0 %v2248
    %3013 = vmatprep.mubr.bf16.mxu0 %v748
    %3014 = vmatmul.mubr.bf16.gmra.mxu0 %v746
    %v3015 = vpop.f32.mrf.mxu0
    %v3016 = vadd.f32 %v2976, %v3015
    %v3017 = vpop.f32.mrf.mxu0
    %v3018 = vpop.f32.mrf.mxu0
    %v3019 = vpop.f32.mrf.mxu0
    %3020 = vdwg.mxu0
    %3021 = vmatprep.subr.bf16.mxu0 0
    %3022 = vmatpush1.bf16.msra.mxu0 %v2263
    %3023 = vmatprep.subr.bf16.mxu0 0
    %3024 = vmatpush1.bf16.msra.mxu0 %v2262
    %3025 = vmatprep.subr.bf16.mxu0 0
    %3026 = vmatpush1.bf16.msra.mxu0 %v2261
    %3027 = vmatprep.subr.bf16.mxu0 0
    %3028 = vmatpush1.bf16.msra.mxu0 %v2260
    %3029 = vmatprep.subr.bf16.mxu0 0
    %3030 = vmatpush1.bf16.msra.mxu0 %v2259
    %3031 = vmatprep.subr.bf16.mxu0 0
    %3032 = vmatpush1.bf16.msra.mxu0 %v2258
    %3033 = vmatprep.subr.bf16.mxu0 0
    %3034 = vmatpush1.bf16.msra.mxu0 %v2257
    %3035 = vmatprep.subr.bf16.mxu0 0
    %3036 = vmatpush1.bf16.msra.mxu0 %v2256
    %3037 = vmatprep.subr.bf16.mxu0 0
    %3038 = vmatpush2.bf16.msra.mxu0 %v2271
    %3039 = vmatprep.subr.bf16.mxu0 0
    %3040 = vmatpush2.bf16.msra.mxu0 %v2270
    %3041 = vmatprep.subr.bf16.mxu0 0
    %3042 = vmatpush2.bf16.msra.mxu0 %v2269
    %3043 = vmatprep.subr.bf16.mxu0 0
    %3044 = vmatpush2.bf16.msra.mxu0 %v2268
    %3045 = vmatprep.subr.bf16.mxu0 0
    %3046 = vmatpush2.bf16.msra.mxu0 %v2267
    %3047 = vmatprep.subr.bf16.mxu0 0
    %3048 = vmatpush2.bf16.msra.mxu0 %v2266
    %3049 = vmatprep.subr.bf16.mxu0 0
    %3050 = vmatpush2.bf16.msra.mxu0 %v2265
    %3051 = vmatprep.subr.bf16.mxu0 0
    %3052 = vmatpush2.bf16.msra.mxu0 %v2264
    %3053 = vmatprep.mubr.bf16.mxu0 %v745
    %3054 = vmatmul.mubr.bf16.gmra.mxu0 %v731
    %v3055 = vpop.f32.mrf.mxu0
    %v3056 = vadd.f32 %v3016, %v3055
    %v3057 = vpop.f32.mrf.mxu0
    %v3058 = vpop.f32.mrf.mxu0
    %v3059 = vpop.f32.mrf.mxu0
    %3060 = vdwg.mxu0
    %3061 = vmatprep.subr.bf16.mxu0 0
    %3062 = vmatpush1.bf16.msra.mxu0 %v2279
    %3063 = vmatprep.subr.bf16.mxu0 0
    %3064 = vmatpush1.bf16.msra.mxu0 %v2278
    %3065 = vmatprep.subr.bf16.mxu0 0
    %3066 = vmatpush1.bf16.msra.mxu0 %v2277
    %3067 = vmatprep.subr.bf16.mxu0 0
    %3068 = vmatpush1.bf16.msra.mxu0 %v2276
    %3069 = vmatprep.subr.bf16.mxu0 0
    %3070 = vmatpush1.bf16.msra.mxu0 %v2275
    %3071 = vmatprep.subr.bf16.mxu0 0
    %3072 = vmatpush1.bf16.msra.mxu0 %v2274
    %3073 = vmatprep.subr.bf16.mxu0 0
    %3074 = vmatpush1.bf16.msra.mxu0 %v2273
    %3075 = vmatprep.subr.bf16.mxu0 0
    %3076 = vmatpush1.bf16.msra.mxu0 %v2272
    %3077 = vmatprep.subr.bf16.mxu0 0
    %3078 = vmatpush2.bf16.msra.mxu0 %v2287
    %3079 = vmatprep.subr.bf16.mxu0 0
    %3080 = vmatpush2.bf16.msra.mxu0 %v2286
    %3081 = vmatprep.subr.bf16.mxu0 0
    %3082 = vmatpush2.bf16.msra.mxu0 %v2285
    %3083 = vmatprep.subr.bf16.mxu0 0
    %3084 = vmatpush2.bf16.msra.mxu0 %v2284
    %3085 = vmatprep.subr.bf16.mxu0 0
    %3086 = vmatpush2.bf16.msra.mxu0 %v2283
    %3087 = vmatprep.subr.bf16.mxu0 0
    %3088 = vmatpush2.bf16.msra.mxu0 %v2282
    %3089 = vmatprep.subr.bf16.mxu0 0
    %3090 = vmatpush2.bf16.msra.mxu0 %v2281
    %3091 = vmatprep.subr.bf16.mxu0 0
    %3092 = vmatpush2.bf16.msra.mxu0 %v2280
    %3093 = vmatprep.mubr.bf16.mxu0 %v749
    %3094 = vmatmul.mubr.bf16.gmra.mxu0 %v747
    %v3095 = vpop.f32.mrf.mxu0
    %v3096 = vadd.f32 %v3056, %v3095
    %v3097 = vpop.f32.mrf.mxu0
    %v3098 = vpop.f32.mrf.mxu0
    %v3099 = vpop.f32.mrf.mxu0
    %3100 = vdwg.mxu0
    %3101 = vmatprep.subr.bf16.mxu0 0
    %3102 = vmatpush1.bf16.msra.mxu0 %v2295
    %3103 = vmatprep.subr.bf16.mxu0 0
    %3104 = vmatpush1.bf16.msra.mxu0 %v2294
    %3105 = vmatprep.subr.bf16.mxu0 0
    %3106 = vmatpush1.bf16.msra.mxu0 %v2293
    %3107 = vmatprep.subr.bf16.mxu0 0
    %3108 = vmatpush1.bf16.msra.mxu0 %v2292
    %3109 = vmatprep.subr.bf16.mxu0 0
    %3110 = vmatpush1.bf16.msra.mxu0 %v2291
    %3111 = vmatprep.subr.bf16.mxu0 0
    %3112 = vmatpush1.bf16.msra.mxu0 %v2290
    %3113 = vmatprep.subr.bf16.mxu0 0
    %3114 = vmatpush1.bf16.msra.mxu0 %v2289
    %3115 = vmatprep.subr.bf16.mxu0 0
    %3116 = vmatpush1.bf16.msra.mxu0 %v2288
    %3117 = vmatprep.subr.bf16.mxu0 0
    %3118 = vmatpush2.bf16.msra.mxu0 %v2303
    %3119 = vmatprep.subr.bf16.mxu0 0
    %3120 = vmatpush2.bf16.msra.mxu0 %v2302
    %3121 = vmatprep.subr.bf16.mxu0 0
    %3122 = vmatpush2.bf16.msra.mxu0 %v2301
    %3123 = vmatprep.subr.bf16.mxu0 0
    %3124 = vmatpush2.bf16.msra.mxu0 %v2300
    %3125 = vmatprep.subr.bf16.mxu0 0
    %3126 = vmatpush2.bf16.msra.mxu0 %v2299
    %3127 = vmatprep.subr.bf16.mxu0 0
    %3128 = vmatpush2.bf16.msra.mxu0 %v2298
    %3129 = vmatprep.subr.bf16.mxu0 0
    %3130 = vmatpush2.bf16.msra.mxu0 %v2297
    %3131 = vmatprep.subr.bf16.mxu0 0
    %3132 = vmatpush2.bf16.msra.mxu0 %v2296
    %3133 = vmatprep.mubr.bf16.mxu0 %v787
    %3134 = vmatmul.mubr.bf16.gmra.mxu0 %v773
    %v3135 = vpop.f32.mrf.mxu0
    %v3136 = vadd.f32 %v3096, %v3135
    %v3137 = vpop.f32.mrf.mxu0
    %v3138 = vpop.f32.mrf.mxu0
    %v3139 = vpop.f32.mrf.mxu0
    %3140 = vdwg.mxu0
    %3141 = vmatprep.subr.bf16.mxu0 0
    %3142 = vmatpush1.bf16.msra.mxu0 %v2311
    %3143 = vmatprep.subr.bf16.mxu0 0
    %3144 = vmatpush1.bf16.msra.mxu0 %v2310
    %3145 = vmatprep.subr.bf16.mxu0 0
    %3146 = vmatpush1.bf16.msra.mxu0 %v2309
    %3147 = vmatprep.subr.bf16.mxu0 0
    %3148 = vmatpush1.bf16.msra.mxu0 %v2308
    %3149 = vmatprep.subr.bf16.mxu0 0
    %3150 = vmatpush1.bf16.msra.mxu0 %v2307
    %3151 = vmatprep.subr.bf16.mxu0 0
    %3152 = vmatpush1.bf16.msra.mxu0 %v2306
    %3153 = vmatprep.subr.bf16.mxu0 0
    %3154 = vmatpush1.bf16.msra.mxu0 %v2305
    %3155 = vmatprep.subr.bf16.mxu0 0
    %3156 = vmatpush1.bf16.msra.mxu0 %v2304
    %3157 = vmatprep.subr.bf16.mxu0 0
    %3158 = vmatpush2.bf16.msra.mxu0 %v2319
    %3159 = vmatprep.subr.bf16.mxu0 0
    %3160 = vmatpush2.bf16.msra.mxu0 %v2318
    %3161 = vmatprep.subr.bf16.mxu0 0
    %3162 = vmatpush2.bf16.msra.mxu0 %v2317
    %3163 = vmatprep.subr.bf16.mxu0 0
    %3164 = vmatpush2.bf16.msra.mxu0 %v2316
    %3165 = vmatprep.subr.bf16.mxu0 0
    %3166 = vmatpush2.bf16.msra.mxu0 %v2315
    %3167 = vmatprep.subr.bf16.mxu0 0
    %3168 = vmatpush2.bf16.msra.mxu0 %v2314
    %3169 = vmatprep.subr.bf16.mxu0 0
    %3170 = vmatpush2.bf16.msra.mxu0 %v2313
    %3171 = vmatprep.subr.bf16.mxu0 0
    %3172 = vmatpush2.bf16.msra.mxu0 %v2312
    %3173 = vmatprep.mubr.bf16.mxu0 %v797
    %3174 = vmatmul.mubr.bf16.gmra.mxu0 %v795
    %v3175 = vpop.f32.mrf.mxu0
    %v3176 = vadd.f32 %v3136, %v3175
    %v3177 = vpop.f32.mrf.mxu0
    %v3178 = vpop.f32.mrf.mxu0
    %v3179 = vpop.f32.mrf.mxu0
    %3180 = vdwg.mxu0
    %3181 = vmatprep.subr.bf16.mxu0 0
    %3182 = vmatpush1.bf16.msra.mxu0 %v2327
    %3183 = vmatprep.subr.bf16.mxu0 0
    %3184 = vmatpush1.bf16.msra.mxu0 %v2326
    %3185 = vmatprep.subr.bf16.mxu0 0
    %3186 = vmatpush1.bf16.msra.mxu0 %v2325
    %3187 = vmatprep.subr.bf16.mxu0 0
    %3188 = vmatpush1.bf16.msra.mxu0 %v2324
    %3189 = vmatprep.subr.bf16.mxu0 0
    %3190 = vmatpush1.bf16.msra.mxu0 %v2323
    %3191 = vmatprep.subr.bf16.mxu0 0
    %3192 = vmatpush1.bf16.msra.mxu0 %v2322
    %3193 = vmatprep.subr.bf16.mxu0 0
    %3194 = vmatpush1.bf16.msra.mxu0 %v2321
    %3195 = vmatprep.subr.bf16.mxu0 0
    %3196 = vmatpush1.bf16.msra.mxu0 %v2320
    %3197 = vmatprep.subr.bf16.mxu0 0
    %3198 = vmatpush2.bf16.msra.mxu0 %v2335
    %3199 = vmatprep.subr.bf16.mxu0 0
    %3200 = vmatpush2.bf16.msra.mxu0 %v2334
    %3201 = vmatprep.subr.bf16.mxu0 0
    %3202 = vmatpush2.bf16.msra.mxu0 %v2333
    %3203 = vmatprep.subr.bf16.mxu0 0
    %3204 = vmatpush2.bf16.msra.mxu0 %v2332
    %3205 = vmatprep.subr.bf16.mxu0 0
    %3206 = vmatpush2.bf16.msra.mxu0 %v2331
    %3207 = vmatprep.subr.bf16.mxu0 0
    %3208 = vmatpush2.bf16.msra.mxu0 %v2330
    %3209 = vmatprep.subr.bf16.mxu0 0
    %3210 = vmatpush2.bf16.msra.mxu0 %v2329
    %3211 = vmatprep.subr.bf16.mxu0 0
    %3212 = vmatpush2.bf16.msra.mxu0 %v2328
    %3213 = vmatprep.mubr.bf16.mxu0 %v794
    %3214 = vmatmul.mubr.bf16.gmra.mxu0 %v780
    %v3215 = vpop.f32.mrf.mxu0
    %v3216 = vadd.f32 %v3176, %v3215
    %v3217 = vpop.f32.mrf.mxu0
    %v3218 = vpop.f32.mrf.mxu0
    %v3219 = vpop.f32.mrf.mxu0
    %3220 = vdwg.mxu0
    %3221 = vmatprep.subr.bf16.mxu0 0
    %3222 = vmatpush1.bf16.msra.mxu0 %v2343
    %3223 = vmatprep.subr.bf16.mxu0 0
    %3224 = vmatpush1.bf16.msra.mxu0 %v2342
    %3225 = vmatprep.subr.bf16.mxu0 0
    %3226 = vmatpush1.bf16.msra.mxu0 %v2341
    %3227 = vmatprep.subr.bf16.mxu0 0
    %3228 = vmatpush1.bf16.msra.mxu0 %v2340
    %3229 = vmatprep.subr.bf16.mxu0 0
    %3230 = vmatpush1.bf16.msra.mxu0 %v2339
    %3231 = vmatprep.subr.bf16.mxu0 0
    %3232 = vmatpush1.bf16.msra.mxu0 %v2338
    %3233 = vmatprep.subr.bf16.mxu0 0
    %3234 = vmatpush1.bf16.msra.mxu0 %v2337
    %3235 = vmatprep.subr.bf16.mxu0 0
    %3236 = vmatpush1.bf16.msra.mxu0 %v2336
    %3237 = vmatprep.subr.bf16.mxu0 0
    %3238 = vmatpush2.bf16.msra.mxu0 %v2351
    %3239 = vmatprep.subr.bf16.mxu0 0
    %3240 = vmatpush2.bf16.msra.mxu0 %v2350
    %3241 = vmatprep.subr.bf16.mxu0 0
    %3242 = vmatpush2.bf16.msra.mxu0 %v2349
    %3243 = vmatprep.subr.bf16.mxu0 0
    %3244 = vmatpush2.bf16.msra.mxu0 %v2348
    %3245 = vmatprep.subr.bf16.mxu0 0
    %3246 = vmatpush2.bf16.msra.mxu0 %v2347
    %3247 = vmatprep.subr.bf16.mxu0 0
    %3248 = vmatpush2.bf16.msra.mxu0 %v2346
    %3249 = vmatprep.subr.bf16.mxu0 0
    %3250 = vmatpush2.bf16.msra.mxu0 %v2345
    %3251 = vmatprep.subr.bf16.mxu0 0
    %3252 = vmatpush2.bf16.msra.mxu0 %v2344
    %3253 = vmatprep.mubr.bf16.mxu0 %v798
    %3254 = vmatmul.mubr.bf16.gmra.mxu0 %v796
    %v3255 = vpop.f32.mrf.mxu0
    %v3256 = vadd.f32 %v3216, %v3255
    %v3257 = vpop.f32.mrf.mxu0
    %v3258 = vpop.f32.mrf.mxu0
    %v3259 = vpop.f32.mrf.mxu0
    %3260 = vdwg.mxu0
    %3261 = vmatprep.subr.bf16.mxu0 0
    %3262 = vmatpush1.bf16.msra.mxu0 %v2359
    %3263 = vmatprep.subr.bf16.mxu0 0
    %3264 = vmatpush1.bf16.msra.mxu0 %v2358
    %3265 = vmatprep.subr.bf16.mxu0 0
    %3266 = vmatpush1.bf16.msra.mxu0 %v2357
    %3267 = vmatprep.subr.bf16.mxu0 0
    %3268 = vmatpush1.bf16.msra.mxu0 %v2356
    %3269 = vmatprep.subr.bf16.mxu0 0
    %3270 = vmatpush1.bf16.msra.mxu0 %v2355
    %3271 = vmatprep.subr.bf16.mxu0 0
    %3272 = vmatpush1.bf16.msra.mxu0 %v2354
    %3273 = vmatprep.subr.bf16.mxu0 0
    %3274 = vmatpush1.bf16.msra.mxu0 %v2353
    %3275 = vmatprep.subr.bf16.mxu0 0
    %3276 = vmatpush1.bf16.msra.mxu0 %v2352
    %3277 = vmatprep.subr.bf16.mxu0 0
    %3278 = vmatpush2.bf16.msra.mxu0 %v2367
    %3279 = vmatprep.subr.bf16.mxu0 0
    %3280 = vmatpush2.bf16.msra.mxu0 %v2366
    %3281 = vmatprep.subr.bf16.mxu0 0
    %3282 = vmatpush2.bf16.msra.mxu0 %v2365
    %3283 = vmatprep.subr.bf16.mxu0 0
    %3284 = vmatpush2.bf16.msra.mxu0 %v2364
    %3285 = vmatprep.subr.bf16.mxu0 0
    %3286 = vmatpush2.bf16.msra.mxu0 %v2363
    %3287 = vmatprep.subr.bf16.mxu0 0
    %3288 = vmatpush2.bf16.msra.mxu0 %v2362
    %3289 = vmatprep.subr.bf16.mxu0 0
    %3290 = vmatpush2.bf16.msra.mxu0 %v2361
    %3291 = vmatprep.subr.bf16.mxu0 0
    %3292 = vmatpush2.bf16.msra.mxu0 %v2360
    %3293 = vmatprep.mubr.bf16.mxu0 %v836
    %3294 = vmatmul.mubr.bf16.gmra.mxu0 %v822
    %v3295 = vpop.f32.mrf.mxu0
    %v3296 = vadd.f32 %v3256, %v3295
    %v3297 = vpop.f32.mrf.mxu0
    %v3298 = vpop.f32.mrf.mxu0
    %v3299 = vpop.f32.mrf.mxu0
    %3300 = vdwg.mxu0
    %3301 = vmatprep.subr.bf16.mxu0 0
    %3302 = vmatpush1.bf16.msra.mxu0 %v2375
    %3303 = vmatprep.subr.bf16.mxu0 0
    %3304 = vmatpush1.bf16.msra.mxu0 %v2374
    %3305 = vmatprep.subr.bf16.mxu0 0
    %3306 = vmatpush1.bf16.msra.mxu0 %v2373
    %3307 = vmatprep.subr.bf16.mxu0 0
    %3308 = vmatpush1.bf16.msra.mxu0 %v2372
    %3309 = vmatprep.subr.bf16.mxu0 0
    %3310 = vmatpush1.bf16.msra.mxu0 %v2371
    %3311 = vmatprep.subr.bf16.mxu0 0
    %3312 = vmatpush1.bf16.msra.mxu0 %v2370
    %3313 = vmatprep.subr.bf16.mxu0 0
    %3314 = vmatpush1.bf16.msra.mxu0 %v2369
    %3315 = vmatprep.subr.bf16.mxu0 0
    %3316 = vmatpush1.bf16.msra.mxu0 %v2368
    %3317 = vmatprep.subr.bf16.mxu0 0
    %3318 = vmatpush2.bf16.msra.mxu0 %v2383
    %3319 = vmatprep.subr.bf16.mxu0 0
    %3320 = vmatpush2.bf16.msra.mxu0 %v2382
    %3321 = vmatprep.subr.bf16.mxu0 0
    %3322 = vmatpush2.bf16.msra.mxu0 %v2381
    %3323 = vmatprep.subr.bf16.mxu0 0
    %3324 = vmatpush2.bf16.msra.mxu0 %v2380
    %3325 = vmatprep.subr.bf16.mxu0 0
    %3326 = vmatpush2.bf16.msra.mxu0 %v2379
    %3327 = vmatprep.subr.bf16.mxu0 0
    %3328 = vmatpush2.bf16.msra.mxu0 %v2378
    %3329 = vmatprep.subr.bf16.mxu0 0
    %3330 = vmatpush2.bf16.msra.mxu0 %v2377
    %3331 = vmatprep.subr.bf16.mxu0 0
    %3332 = vmatpush2.bf16.msra.mxu0 %v2376
    %3333 = vmatprep.mubr.bf16.mxu0 %v846
    %3334 = vmatmul.mubr.bf16.gmra.mxu0 %v844
    %v3335 = vpop.f32.mrf.mxu0
    %v3336 = vadd.f32 %v3296, %v3335
    %v3337 = vpop.f32.mrf.mxu0
    %v3338 = vpop.f32.mrf.mxu0
    %v3339 = vpop.f32.mrf.mxu0
    %3340 = vdwg.mxu0
    %3341 = vmatprep.subr.bf16.mxu0 0
    %3342 = vmatpush1.bf16.msra.mxu0 %v2391
    %3343 = vmatprep.subr.bf16.mxu0 0
    %3344 = vmatpush1.bf16.msra.mxu0 %v2390
    %3345 = vmatprep.subr.bf16.mxu0 0
    %3346 = vmatpush1.bf16.msra.mxu0 %v2389
    %3347 = vmatprep.subr.bf16.mxu0 0
    %3348 = vmatpush1.bf16.msra.mxu0 %v2388
    %3349 = vmatprep.subr.bf16.mxu0 0
    %3350 = vmatpush1.bf16.msra.mxu0 %v2387
    %3351 = vmatprep.subr.bf16.mxu0 0
    %3352 = vmatpush1.bf16.msra.mxu0 %v2386
    %3353 = vmatprep.subr.bf16.mxu0 0
    %3354 = vmatpush1.bf16.msra.mxu0 %v2385
    %3355 = vmatprep.subr.bf16.mxu0 0
    %3356 = vmatpush1.bf16.msra.mxu0 %v2384
    %3357 = vmatprep.subr.bf16.mxu0 0
    %3358 = vmatpush2.bf16.msra.mxu0 %v2399
    %3359 = vmatprep.subr.bf16.mxu0 0
    %3360 = vmatpush2.bf16.msra.mxu0 %v2398
    %3361 = vmatprep.subr.bf16.mxu0 0
    %3362 = vmatpush2.bf16.msra.mxu0 %v2397
    %3363 = vmatprep.subr.bf16.mxu0 0
    %3364 = vmatpush2.bf16.msra.mxu0 %v2396
    %3365 = vmatprep.subr.bf16.mxu0 0
    %3366 = vmatpush2.bf16.msra.mxu0 %v2395
    %3367 = vmatprep.subr.bf16.mxu0 0
    %3368 = vmatpush2.bf16.msra.mxu0 %v2394
    %3369 = vmatprep.subr.bf16.mxu0 0
    %3370 = vmatpush2.bf16.msra.mxu0 %v2393
    %3371 = vmatprep.subr.bf16.mxu0 0
    %3372 = vmatpush2.bf16.msra.mxu0 %v2392
    %3373 = vmatprep.mubr.bf16.mxu0 %v843
    %3374 = vmatmul.mubr.bf16.gmra.mxu0 %v829
    %v3375 = vpop.f32.mrf.mxu0
    %v3376 = vadd.f32 %v3336, %v3375
    %v3377 = vpop.f32.mrf.mxu0
    %v3378 = vpop.f32.mrf.mxu0
    %v3379 = vpop.f32.mrf.mxu0
    %3380 = vdwg.mxu0
    %3381 = vmatprep.subr.bf16.mxu0 0
    %3382 = vmatpush1.bf16.msra.mxu0 %v2407
    %3383 = vmatprep.subr.bf16.mxu0 0
    %3384 = vmatpush1.bf16.msra.mxu0 %v2406
    %3385 = vmatprep.subr.bf16.mxu0 0
    %3386 = vmatpush1.bf16.msra.mxu0 %v2405
    %3387 = vmatprep.subr.bf16.mxu0 0
    %3388 = vmatpush1.bf16.msra.mxu0 %v2404
    %3389 = vmatprep.subr.bf16.mxu0 0
    %3390 = vmatpush1.bf16.msra.mxu0 %v2403
    %3391 = vmatprep.subr.bf16.mxu0 0
    %3392 = vmatpush1.bf16.msra.mxu0 %v2402
    %3393 = vmatprep.subr.bf16.mxu0 0
    %3394 = vmatpush1.bf16.msra.mxu0 %v2401
    %3395 = vmatprep.subr.bf16.mxu0 0
    %3396 = vmatpush1.bf16.msra.mxu0 %v2400
    %3397 = vmatprep.subr.bf16.mxu0 0
    %3398 = vmatpush2.bf16.msra.mxu0 %v2415
    %3399 = vmatprep.subr.bf16.mxu0 0
    %3400 = vmatpush2.bf16.msra.mxu0 %v2414
    %3401 = vmatprep.subr.bf16.mxu0 0
    %3402 = vmatpush2.bf16.msra.mxu0 %v2413
    %3403 = vmatprep.subr.bf16.mxu0 0
    %3404 = vmatpush2.bf16.msra.mxu0 %v2412
    %3405 = vmatprep.subr.bf16.mxu0 0
    %3406 = vmatpush2.bf16.msra.mxu0 %v2411
    %3407 = vmatprep.subr.bf16.mxu0 0
    %3408 = vmatpush2.bf16.msra.mxu0 %v2410
    %3409 = vmatprep.subr.bf16.mxu0 0
    %3410 = vmatpush2.bf16.msra.mxu0 %v2409
    %3411 = vmatprep.subr.bf16.mxu0 0
    %3412 = vmatpush2.bf16.msra.mxu0 %v2408
    %3413 = vmatprep.mubr.bf16.mxu0 %v847
    %3414 = vmatmul.mubr.bf16.gmra.mxu0 %v845
    %v3415 = vpop.f32.mrf.mxu0
    %v3416 = vadd.f32 %v3376, %v3415
    %v3417 = vpop.f32.mrf.mxu0
    %v3418 = vpop.f32.mrf.mxu0
    %v3419 = vpop.f32.mrf.mxu0
    %3420 = vdwg.mxu0
    %3421 = vmatprep.subr.bf16.mxu0 0
    %3422 = vmatpush1.bf16.msra.mxu0 %v2423
    %3423 = vmatprep.subr.bf16.mxu0 0
    %3424 = vmatpush1.bf16.msra.mxu0 %v2422
    %3425 = vmatprep.subr.bf16.mxu0 0
    %3426 = vmatpush1.bf16.msra.mxu0 %v2421
    %3427 = vmatprep.subr.bf16.mxu0 0
    %3428 = vmatpush1.bf16.msra.mxu0 %v2420
    %3429 = vmatprep.subr.bf16.mxu0 0
    %3430 = vmatpush1.bf16.msra.mxu0 %v2419
    %3431 = vmatprep.subr.bf16.mxu0 0
    %3432 = vmatpush1.bf16.msra.mxu0 %v2418
    %3433 = vmatprep.subr.bf16.mxu0 0
    %3434 = vmatpush1.bf16.msra.mxu0 %v2417
    %3435 = vmatprep.subr.bf16.mxu0 0
    %3436 = vmatpush1.bf16.msra.mxu0 %v2416
    %3437 = vmatprep.subr.bf16.mxu0 0
    %3438 = vmatpush2.bf16.msra.mxu0 %v2431
    %3439 = vmatprep.subr.bf16.mxu0 0
    %3440 = vmatpush2.bf16.msra.mxu0 %v2430
    %3441 = vmatprep.subr.bf16.mxu0 0
    %3442 = vmatpush2.bf16.msra.mxu0 %v2429
    %3443 = vmatprep.subr.bf16.mxu0 0
    %3444 = vmatpush2.bf16.msra.mxu0 %v2428
    %3445 = vmatprep.subr.bf16.mxu0 0
    %3446 = vmatpush2.bf16.msra.mxu0 %v2427
    %3447 = vmatprep.subr.bf16.mxu0 0
    %3448 = vmatpush2.bf16.msra.mxu0 %v2426
    %3449 = vmatprep.subr.bf16.mxu0 0
    %3450 = vmatpush2.bf16.msra.mxu0 %v2425
    %3451 = vmatprep.subr.bf16.mxu0 0
    %3452 = vmatpush2.bf16.msra.mxu0 %v2424
    %3453 = vmatprep.mubr.bf16.mxu0 %v885
    %3454 = vmatmul.mubr.bf16.gmra.mxu0 %v871
    %v3455 = vpop.f32.mrf.mxu0
    %v3456 = vadd.f32 %v3416, %v3455
    %v3457 = vpop.f32.mrf.mxu0
    %v3458 = vpop.f32.mrf.mxu0
    %v3459 = vpop.f32.mrf.mxu0
    %3460 = vdwg.mxu0
    %3461 = vmatprep.subr.bf16.mxu0 0
    %3462 = vmatpush1.bf16.msra.mxu0 %v2439
    %3463 = vmatprep.subr.bf16.mxu0 0
    %3464 = vmatpush1.bf16.msra.mxu0 %v2438
    %3465 = vmatprep.subr.bf16.mxu0 0
    %3466 = vmatpush1.bf16.msra.mxu0 %v2437
    %3467 = vmatprep.subr.bf16.mxu0 0
    %3468 = vmatpush1.bf16.msra.mxu0 %v2436
    %3469 = vmatprep.subr.bf16.mxu0 0
    %3470 = vmatpush1.bf16.msra.mxu0 %v2435
    %3471 = vmatprep.subr.bf16.mxu0 0
    %3472 = vmatpush1.bf16.msra.mxu0 %v2434
    %3473 = vmatprep.subr.bf16.mxu0 0
    %3474 = vmatpush1.bf16.msra.mxu0 %v2433
    %3475 = vmatprep.subr.bf16.mxu0 0
    %3476 = vmatpush1.bf16.msra.mxu0 %v2432
    %3477 = vmatprep.subr.bf16.mxu0 0
    %3478 = vmatpush2.bf16.msra.mxu0 %v2447
    %3479 = vmatprep.subr.bf16.mxu0 0
    %3480 = vmatpush2.bf16.msra.mxu0 %v2446
    %3481 = vmatprep.subr.bf16.mxu0 0
    %3482 = vmatpush2.bf16.msra.mxu0 %v2445
    %3483 = vmatprep.subr.bf16.mxu0 0
    %3484 = vmatpush2.bf16.msra.mxu0 %v2444
    %3485 = vmatprep.subr.bf16.mxu0 0
    %3486 = vmatpush2.bf16.msra.mxu0 %v2443
    %3487 = vmatprep.subr.bf16.mxu0 0
    %3488 = vmatpush2.bf16.msra.mxu0 %v2442
    %3489 = vmatprep.subr.bf16.mxu0 0
    %3490 = vmatpush2.bf16.msra.mxu0 %v2441
    %3491 = vmatprep.subr.bf16.mxu0 0
    %3492 = vmatpush2.bf16.msra.mxu0 %v2440
    %3493 = vmatprep.mubr.bf16.mxu0 %v895
    %3494 = vmatmul.mubr.bf16.gmra.mxu0 %v893
    %v3495 = vpop.f32.mrf.mxu0
    %v3496 = vadd.f32 %v3456, %v3495
    %v3497 = vpop.f32.mrf.mxu0
    %v3498 = vpop.f32.mrf.mxu0
    %v3499 = vpop.f32.mrf.mxu0
    %3500 = vdwg.mxu0
    %3501 = vmatprep.subr.bf16.mxu0 0
    %3502 = vmatpush1.bf16.msra.mxu0 %v2455
    %3503 = vmatprep.subr.bf16.mxu0 0
    %3504 = vmatpush1.bf16.msra.mxu0 %v2454
    %3505 = vmatprep.subr.bf16.mxu0 0
    %3506 = vmatpush1.bf16.msra.mxu0 %v2453
    %3507 = vmatprep.subr.bf16.mxu0 0
    %3508 = vmatpush1.bf16.msra.mxu0 %v2452
    %3509 = vmatprep.subr.bf16.mxu0 0
    %3510 = vmatpush1.bf16.msra.mxu0 %v2451
    %3511 = vmatprep.subr.bf16.mxu0 0
    %3512 = vmatpush1.bf16.msra.mxu0 %v2450
    %3513 = vmatprep.subr.bf16.mxu0 0
    %3514 = vmatpush1.bf16.msra.mxu0 %v2449
    %3515 = vmatprep.subr.bf16.mxu0 0
    %3516 = vmatpush1.bf16.msra.mxu0 %v2448
    %3517 = vmatprep.subr.bf16.mxu0 0
    %3518 = vmatpush2.bf16.msra.mxu0 %v2463
    %3519 = vmatprep.subr.bf16.mxu0 0
    %3520 = vmatpush2.bf16.msra.mxu0 %v2462
    %3521 = vmatprep.subr.bf16.mxu0 0
    %3522 = vmatpush2.bf16.msra.mxu0 %v2461
    %3523 = vmatprep.subr.bf16.mxu0 0
    %3524 = vmatpush2.bf16.msra.mxu0 %v2460
    %3525 = vmatprep.subr.bf16.mxu0 0
    %3526 = vmatpush2.bf16.msra.mxu0 %v2459
    %3527 = vmatprep.subr.bf16.mxu0 0
    %3528 = vmatpush2.bf16.msra.mxu0 %v2458
    %3529 = vmatprep.subr.bf16.mxu0 0
    %3530 = vmatpush2.bf16.msra.mxu0 %v2457
    %3531 = vmatprep.subr.bf16.mxu0 0
    %3532 = vmatpush2.bf16.msra.mxu0 %v2456
    %3533 = vmatprep.mubr.bf16.mxu0 %v892
    %3534 = vmatmul.mubr.bf16.gmra.mxu0 %v878
    %v3535 = vpop.f32.mrf.mxu0
    %v3536 = vadd.f32 %v3496, %v3535
    %v3537 = vpop.f32.mrf.mxu0
    %v3538 = vpop.f32.mrf.mxu0
    %v3539 = vpop.f32.mrf.mxu0
    %3540 = vdwg.mxu0
    %3541 = vmatprep.subr.bf16.mxu0 0
    %3542 = vmatpush1.bf16.msra.mxu0 0
    %3543 = vmatprep.subr.bf16.mxu0 0
    %3544 = vmatpush1.bf16.msra.mxu0 0
    %3545 = vmatprep.subr.bf16.mxu0 0
    %3546 = vmatpush1.bf16.msra.mxu0 0
    %3547 = vmatprep.subr.bf16.mxu0 0
    %3548 = vmatpush1.bf16.msra.mxu0 0
    %3549 = vmatprep.subr.bf16.mxu0 0
    %3550 = vmatpush1.bf16.msra.mxu0 0
    %3551 = vmatprep.subr.bf16.mxu0 0
    %3552 = vmatpush1.bf16.msra.mxu0 %v2779
    %3553 = vmatprep.subr.bf16.mxu0 0
    %3554 = vmatpush1.bf16.msra.mxu0 %v2465
    %3555 = vmatprep.subr.bf16.mxu0 0
    %3556 = vmatpush1.bf16.msra.mxu0 %v2464
    %3557 = vmatprep.subr.bf16.mxu0 0
    %3558 = vmatpush2.bf16.msra.mxu0 0
    %3559 = vmatprep.subr.bf16.mxu0 0
    %3560 = vmatpush2.bf16.msra.mxu0 0
    %3561 = vmatprep.subr.bf16.mxu0 0
    %3562 = vmatpush2.bf16.msra.mxu0 0
    %3563 = vmatprep.subr.bf16.mxu0 0
    %3564 = vmatpush2.bf16.msra.mxu0 0
    %3565 = vmatprep.subr.bf16.mxu0 0
    %3566 = vmatpush2.bf16.msra.mxu0 0
    %3567 = vmatprep.subr.bf16.mxu0 0
    %3568 = vmatpush2.bf16.msra.mxu0 0
    %3569 = vmatprep.subr.bf16.mxu0 0
    %3570 = vmatpush2.bf16.msra.mxu0 0
    %3571 = vmatprep.subr.bf16.mxu0 0
    %3572 = vmatpush2.bf16.msra.mxu0 0
    %3573 = vmatprep.mubr.bf16.mxu0 0
    %3574 = vmatmul.mubr.bf16.gmra.mxu0 %v2775
    %v3575 = vpop.f32.mrf.mxu0
    %v3576 = vadd.f32 %v3536, %v3575
    %v3577 = vpop.f32.mrf.mxu0
    %v3578 = vpop.f32.mrf.mxu0
    %v3579 = vpop.f32.mrf.mxu0
    %3580 = vdwg.mxu0
    %v3581 = vmax.f32 %v3576, 0.0
    %v3582 = vld [vmem:[%s3] sm:$0xff]
    %v3583 = vld [vmem:[%s3 + $0x8] sm:$0xff]
    %v3584 = vld [vmem:[%s3 + $0x10] sm:$0xff]
    %v3585 = vld [vmem:[%s3 + $0x18] sm:$0xff]
    %v3586 = vld [vmem:[%s3 + $0x20] sm:$0xff]
    %v3587 = vld [vmem:[%s3 + $0x28] sm:$0xff]
    %v3588 = vld [vmem:[%s3 + $0x30] sm:$0xff]
    %v3589 = vld [vmem:[%s3 + $0x38] sm:$0xff]
    %v3590 = vld [vmem:[%s3 + $0x40] sm:$0xff]
    %v3591 = vld [vmem:[%s3 + $0x48] sm:$0xff]
    %v3592 = vld [vmem:[%s3 + $0x50] sm:$0xff]
    %v3593 = vld [vmem:[%s3 + $0x58] sm:$0xff]
    %v3594 = vld [vmem:[%s3 + $0x60] sm:$0xff]
    %v3595 = vld [vmem:[%s3 + $0x68] sm:$0xff]
    %v3596 = vld [vmem:[%s3 + $0x70] sm:$0xff]
    %v3597 = vld [vmem:[%s3 + $0x78] sm:$0xff]
    %v3598 = vld [vmem:[%s4] sm:$0x1]
    %v3600 = vlaneseq
    %v3601 = vshrl.u32 %v3600, 7
    %v3602 = vsub.s32 0, %v3601
    %v3603 = vrot.slane %v3598, %v3602
    %3605 = vmatprep.subr.mxu0 0.0
    %3606 = vmatpush1.msra.mxu0 %v3597
    %3607 = vmatprep.subr.mxu0 0.0
    %3608 = vmatpush1.msra.mxu0 %v3596
    %3609 = vmatprep.subr.mxu0 0.0
    %3610 = vmatpush1.msra.mxu0 %v3595
    %3611 = vmatprep.subr.mxu0 0.0
    %3612 = vmatpush1.msra.mxu0 %v3594
    %3613 = vmatprep.subr.mxu0 0.0
    %3614 = vmatpush1.msra.mxu0 %v3593
    %3615 = vmatprep.subr.mxu0 0.0
    %3616 = vmatpush1.msra.mxu0 %v3592
    %3617 = vmatprep.subr.mxu0 0.0
    %3618 = vmatpush1.msra.mxu0 %v3591
    %3619 = vmatprep.subr.mxu0 0.0
    %3620 = vmatpush1.msra.mxu0 %v3590
    %3621 = vmatprep.subr.mxu0 0.0
    %3622 = vmatpush1.msra.mxu0 %v3589
    %3623 = vmatprep.subr.mxu0 0.0
    %3624 = vmatpush1.msra.mxu0 %v3588
    %3625 = vmatprep.subr.mxu0 0.0
    %3626 = vmatpush1.msra.mxu0 %v3587
    %3627 = vmatprep.subr.mxu0 0.0
    %3628 = vmatpush1.msra.mxu0 %v3586
    %3629 = vmatprep.subr.mxu0 0.0
    %3630 = vmatpush1.msra.mxu0 %v3585
    %3631 = vmatprep.subr.mxu0 0.0
    %3632 = vmatpush1.msra.mxu0 %v3584
    %3633 = vmatprep.subr.mxu0 0.0
    %3634 = vmatpush1.msra.mxu0 %v3583
    %3635 = vmatprep.subr.mxu0 0.0
    %3636 = vmatpush1.msra.mxu0 %v3582
    %3637 = vmatprep.subr.mxu0 0.0
    %3638 = vmatpush2.msra.mxu0 0.0
    %3639 = vmatprep.subr.mxu0 0.0
    %3640 = vmatpush2.msra.mxu0 0.0
    %3641 = vmatprep.subr.mxu0 0.0
    %3642 = vmatpush2.msra.mxu0 0.0
    %3643 = vmatprep.subr.mxu0 0.0
    %3644 = vmatpush2.msra.mxu0 0.0
    %3645 = vmatprep.subr.mxu0 0.0
    %3646 = vmatpush2.msra.mxu0 0.0
    %3647 = vmatprep.subr.mxu0 0.0
    %3648 = vmatpush2.msra.mxu0 0.0
    %3649 = vmatprep.subr.mxu0 0.0
    %3650 = vmatpush2.msra.mxu0 0.0
    %3651 = vmatprep.subr.mxu0 0.0
    %3652 = vmatpush2.msra.mxu0 0.0
    %3653 = vmatprep.subr.mxu0 0.0
    %3654 = vmatpush2.msra.mxu0 0.0
    %3655 = vmatprep.subr.mxu0 0.0
    %3656 = vmatpush2.msra.mxu0 0.0
    %3657 = vmatprep.subr.mxu0 0.0
    %3658 = vmatpush2.msra.mxu0 0.0
    %3659 = vmatprep.subr.mxu0 0.0
    %3660 = vmatpush2.msra.mxu0 0.0
    %3661 = vmatprep.subr.mxu0 0.0
    %3662 = vmatpush2.msra.mxu0 0.0
    %3663 = vmatprep.subr.mxu0 0.0
    %3664 = vmatpush2.msra.mxu0 0.0
    %3665 = vmatprep.subr.mxu0 0.0
    %3666 = vmatpush2.msra.mxu0 0.0
    %3667 = vmatprep.subr.mxu0 0.0
    %3668 = vmatpush2.msra.mxu0 0.0
    %3669 = vmatprep.mubr.f32.mxu0 0.0
    %3670 = vmatmul.mubr.f32.gmra.mxu0 %v3581
    %v3671 = vpop.f32.mrf.mxu0
    %v3672 = vadd.f32 %v3603, %v3671
    %v3673 = vpop.f32.mrf.mxu0
    %3674 = vdwg.mxu0
    %vm3675 = vcmask 74752
    %3676 = vst.msk [vmem:[#allocation2] sm:$0x3] %vm3675, %v3672
    // Predicated region
    $region22: #{gcn_forward.3} parent=1 // pred_check
      _
    $region23: #{gcn_forward.3} parent=1 // pred_check_branch
      %3678 = sbr.rel (0) target = $region25
    $region24: #{gcn_forward.3} parent=1 // pred_region
      %s3680 = ssub.s32 32, 32
      %3681 = vsyncadd [#allocation3], %s3680
      %s3683 = sshll.u32 [#allocation2], 4
      %s3684 = int_to_ptr.vmem [resolvable:$true] %s3683
      %3686 = dma.vmem_to_hbm [thread:$0]  %s3684, 32, %s5, [#allocation3]
    $region25: #{gcn_forward.3} parent=1 // pred_fallthru
      _
    // Predicated region
    $region26: #{gcn_forward.3} parent=1 // pred_check
      _
    $region27: #{gcn_forward.3} parent=1 // pred_check_branch
      %3688 = sbr.rel (0) target = $region29
    $region28: #{gcn_forward.3} parent=1 // pred_region
      %3689 = dma.done [#allocation3], 32
    $region29: #{gcn_forward.3} parent=1 // pred_fallthru
      _
    %3690 = vsyncpa [#allocation3], 1

</llo_original>
